<compile_context>
chip_gen: v7x
topology: tpu7x:2x2x1
jax: 0.10.0
libtpu: 0.0.40
codegen_flags: <defaults>
</compile_context>

<pallas_src>
import functools

import jax
import jax.numpy as jnp
from jax.experimental import pallas as pl
from jax.experimental.pallas import tpu as pltpu


# ------------------------------ helpers --------------------------------------
def _round_up(x, m):
    return ((x + m - 1) // m) * m


@functools.lru_cache(maxsize=None)
def _vmem_limit_bytes():
    # v5e/v6e: 128 MiB physical VMEM, v7x: 64 MiB -> use 3/4 of physical, capped.
    try:
        cap = int(getattr(pltpu.get_tpu_info(), "vmem_capacity_bytes",
                          64 * 1024 * 1024))
    except Exception:
        cap = 64 * 1024 * 1024
    return int(min(cap * 3 // 4, 100 * 1024 * 1024))


def _pick_div_tile(n, cap):
    """Largest divisor of n that is <= cap, preferring multiples of 8."""
    if n <= cap:
        return n
    div8 = [d for d in range(8, cap + 1, 8) if n % d == 0]
    if div8:
        return max(div8)
    return max(d for d in range(1, cap + 1) if n % d == 0)


# -------------------- fused 1x1-conv GEMM kernels (single K step) -------------
def _gemm_kernel(a_ref, b_ref, bias_ref, o_ref, *, relu):
    y = jnp.dot(a_ref[0], b_ref[...], preferred_element_type=jnp.float32)
    y = y + bias_ref[...]
    if relu:
        y = jnp.maximum(y, 0.0)
    o_ref[0] = y.astype(o_ref.dtype)


def _gemm_pool_kernel(a_ref, b_ref, bias_ref, o_ref, sum_ref, *, relu):
    y = jnp.dot(a_ref[0], b_ref[...], preferred_element_type=jnp.float32)
    y = y + bias_ref[...]
    if relu:
        y = jnp.maximum(y, 0.0)
    o_ref[0] = y.astype(o_ref.dtype)

    # Fused global-average-pool partial sums: accumulate per-image channel sums
    # across the innermost M-tile axis (sum block stays VMEM-resident).
    @pl.when(pl.program_id(2) == 0)
    def _():
        sum_ref[...] = jnp.zeros_like(sum_ref)

    sum_ref[0] += jnp.sum(y, axis=0, keepdims=True)


def _conv1x1(a, w, bias, *, relu, pool, out_dtype=jnp.bfloat16):
    """a: (N, HW, Kp) bf16 channel-padded; w: (Kp, Cp) bf16; bias: (1, Cp) f32.

    Returns y (N, HW, Cp) out_dtype, and per-image channel sums (N, 1, Cp) f32 if pool.
    """
    N, HW, Kp = a.shape
    Cp = w.shape[1]
    tm = _pick_div_tile(HW, 512)
    tn = 256 if Cp % 256 == 0 else 128
    # Grid order (n, j, m): m innermost so the weight block and (for pool) the sum
    # block stay resident across the M sweep; (n, j) give >=2 parallel tiles.
    grid = (N, Cp // tn, HW // tm)
    in_specs = [
        pl.BlockSpec((1, tm, Kp), lambda n, j, m: (n, m, 0)),
        pl.BlockSpec((Kp, tn), lambda n, j, m: (0, j)),
        pl.BlockSpec((1, tn), lambda n, j, m: (0, j)),
    ]
    y_spec = pl.BlockSpec((1, tm, tn), lambda n, j, m: (n, m, j))
    params = pltpu.CompilerParams(
        dimension_semantics=("parallel", "parallel", "arbitrary"),
        vmem_limit_bytes=_vmem_limit_bytes())
    cost = pl.CostEstimate(
        flops=2 * N * HW * Kp * Cp, transcendentals=0,
        bytes_accessed=(a.size + w.size) * 2 + N * HW * Cp * 2)

    if pool:
        y, sums = pl.pallas_call(
            functools.partial(_gemm_pool_kernel, relu=relu),
            out_shape=(jax.ShapeDtypeStruct((N, HW, Cp), out_dtype),
                       jax.ShapeDtypeStruct((N, 1, Cp), jnp.float32)),
            grid_spec=pltpu.PrefetchScalarGridSpec(
                num_scalar_prefetch=0, grid=grid, in_specs=in_specs,
                out_specs=(y_spec,
                           pl.BlockSpec((1, 1, tn), lambda n, j, m: (n, 0, j)))),
            compiler_params=params, cost_estimate=cost,
        )(a, w, bias)
        return y, sums

    y = pl.pallas_call(
        functools.partial(_gemm_kernel, relu=relu),
        out_shape=jax.ShapeDtypeStruct((N, HW, Cp), out_dtype),
        grid_spec=pltpu.PrefetchScalarGridSpec(
            num_scalar_prefetch=0, grid=grid, in_specs=in_specs, out_specs=y_spec),
        compiler_params=params, cost_estimate=cost,
    )(a, w, bias)
    return y


# ---------------- 3x3 conv with in-kernel tap gather (stride 1) ----------------
def _conv3x3_kernel(x_ref, w_ref, b_ref, o_ref, acc_ref, *, H, W):
    # x_ref: (1, H+2, W+2, Cin) bf16 (one spatially padded image, channel padded)
    # w_ref: (9, Cin, tn) bf16   b_ref: (1, tn) f32   o_ref: (1, H*W, tn) bf16
    cin = x_ref.shape[-1]
    acc_ref[...] = jnp.zeros_like(acc_ref)
    for t in range(9):
        di, dj = divmod(t, 3)
        tap = x_ref[0, di:di + H, dj:dj + W, :].reshape(H * W, cin)
        acc_ref[...] += jnp.dot(tap, w_ref[t], preferred_element_type=jnp.float32)
    y = jnp.maximum(acc_ref[...] + b_ref[...], 0.0)
    o_ref[0] = y.astype(o_ref.dtype)


def _conv3x3(y1, w9, bias, *, N, H, W, out_dtype=jnp.bfloat16):
    """y1: (N, HW, Cp_in) bf16; w9: (9, Cp_in, Cp_out) bf16; bias: (1, Cp_out) f32."""
    Cp_in = y1.shape[-1]
    Cp_out = w9.shape[-1]
    # Spatial zero-pad only (small, bf16); no im2col tensor is materialized.
    xp = jnp.pad(y1.reshape(N, H, W, Cp_in), ((0, 0), (1, 1), (1, 1), (0, 0)))
    tn = 256 if Cp_out % 256 == 0 else 128
    grid = (N, Cp_out // tn)
    return pl.pallas_call(
        functools.partial(_conv3x3_kernel, H=H, W=W),
        out_shape=jax.ShapeDtypeStruct((N, H * W, Cp_out), out_dtype),
        grid_spec=pltpu.PrefetchScalarGridSpec(
            num_scalar_prefetch=0, grid=grid,
            in_specs=[
                pl.BlockSpec((1, H + 2, W + 2, Cp_in), lambda n, j: (n, 0, 0, 0)),
                pl.BlockSpec((9, Cp_in, tn), lambda n, j: (0, 0, j)),
                pl.BlockSpec((1, tn), lambda n, j: (0, j)),
            ],
            out_specs=pl.BlockSpec((1, H * W, tn), lambda n, j: (n, 0, j)),
            scratch_shapes=[pltpu.VMEM((H * W, tn), jnp.float32)]),
        compiler_params=pltpu.CompilerParams(
            dimension_semantics=("parallel", "parallel"),
            vmem_limit_bytes=_vmem_limit_bytes()),
        cost_estimate=pl.CostEstimate(
            flops=2 * 9 * N * H * W * Cp_in * Cp_out, transcendentals=0,
            bytes_accessed=(xp.size + w9.size) * 2 + N * H * W * Cp_out * 2),
    )(xp, w9, bias)


# ------------------------------ SE gate MLP kernel ------------------------------
def _se_gate_kernel(p_ref, w1_ref, w2_ref, o_ref):
    h = jnp.dot(p_ref[...], w1_ref[...], preferred_element_type=jnp.float32)
    h = jnp.maximum(h, 0.0)
    z = jnp.dot(h, w2_ref[...], preferred_element_type=jnp.float32)
    o_ref[...] = pl.reciprocal(1.0 + jnp.exp(-z), approx=True)   # sigmoid on EUP


def _se_gate(pooled, w1, w2):
    # pooled: (N, Cp3) f32; w1: (Cp3, Crp) f32; w2: (Crp, Cp3) f32
    N, Cp3 = pooled.shape
    Np8 = _round_up(max(N, 8), 8)
    p = jnp.pad(pooled, ((0, Np8 - N), (0, 0)))
    gate = pl.pallas_call(
        _se_gate_kernel,
        out_shape=jax.ShapeDtypeStruct((Np8, Cp3), jnp.float32),
    )(p, w1, w2)
    return gate[:N]


# ---------------- fused SE channel-scale + residual add + ReLU ------------------
def _se_apply_kernel(y_ref, g_ref, r_ref, o_ref):
    o_ref[0] = jnp.maximum(
        y_ref[0].astype(jnp.float32) * g_ref[0] + r_ref[0], 0.0)


def _se_apply(y, gate, resid):
    # y: (N, HW, Cp3) bf16; gate: (N, Cp3) f32; resid: (N, HW, Cp3) f32
    N, HW, Cp3 = y.shape
    ts = _pick_div_tile(HW, 1024)
    g = gate.reshape(N, 1, Cp3)
    return pl.pallas_call(
        _se_apply_kernel,
        out_shape=jax.ShapeDtypeStruct((N, HW, Cp3), jnp.float32),
        grid_spec=pltpu.PrefetchScalarGridSpec(
            num_scalar_prefetch=0, grid=(N, HW // ts),
            in_specs=[
                pl.BlockSpec((1, ts, Cp3), lambda n, s: (n, s, 0)),
                pl.BlockSpec((1, 1, Cp3), lambda n, s: (n, 0, 0)),
                pl.BlockSpec((1, ts, Cp3), lambda n, s: (n, s, 0)),
            ],
            out_specs=pl.BlockSpec((1, ts, Cp3), lambda n, s: (n, s, 0))),
        compiler_params=pltpu.CompilerParams(
            dimension_semantics=("parallel", "parallel"),
            vmem_limit_bytes=_vmem_limit_bytes()),
    )(y, g, resid)


# ------------------------------ full forward ------------------------------------
@functools.partial(jax.jit, static_argnames=("stride", "eps"))
def se_bottleneck_forward(x_nchw, p, *, stride=1, eps=1e-5):
    """SEBottleneck forward (inference BN, downsample=None path). x: [N, C, H, W]."""
    if stride != 1:
        # TODO(synk): downsample branch / strided 3x3 path not implemented.
        raise ValueError("only stride=1 (downsample=None) is supported")

    N, Cin, H, W = x_nchw.shape
    planes = p["conv1_w"].shape[0]
    C3 = p["conv3_w"].shape[0]
    if Cin != C3:
        raise ValueError("residual add requires inplanes == planes*4 (downsample=None)")
    HW = H * W
    Cp_in = _round_up(Cin, 128)
    Cp_pl = _round_up(planes, 128)
    Cp_3 = _round_up(C3, 128)

    def fold(w_mat, g, b, m, v):
        s = g * jax.lax.rsqrt(v + eps)
        return w_mat * s[None, :], b - m * s

    # Internal layout: NHWC flattened to (N, H*W, C), channels zero-padded to x128,
    # bf16 activations everywhere between kernels.
    xh = jnp.transpose(x_nchw, (0, 2, 3, 1))                              # (N,H,W,Cin) f32
    a1 = jnp.pad(xh.astype(jnp.bfloat16),
                 ((0, 0), (0, 0), (0, 0), (0, Cp_in - Cin))).reshape(N, HW, Cp_in)

    # conv1 (1x1) + BN1 + ReLU
    w1, b1 = fold(p["conv1_w"].reshape(planes, Cin).T,
                  p["bn1_g"], p["bn1_b"], p["bn1_m"], p["bn1_v"])
    w1 = jnp.pad(w1, ((0, Cp_in - Cin), (0, Cp_pl - planes))).astype(jnp.bfloat16)
    b1 = jnp.pad(b1, (0, Cp_pl - planes)).astype(jnp.float32).reshape(1, Cp_pl)
    y1 = _conv1x1(a1, w1, b1, relu=True, pool=False)                      # (N,HW,Cp_pl) bf16

    # conv2 (3x3, stride 1) + BN2 + ReLU -- 9 taps fused in-kernel
    s2 = p["bn2_g"] * jax.lax.rsqrt(p["bn2_v"] + eps)
    w2 = p["conv2_w"].transpose(2, 3, 1, 0).reshape(9, planes, planes) * s2[None, None, :]
    b2 = p["bn2_b"] - p["bn2_m"] * s2
    w2 = jnp.pad(w2, ((0, 0), (0, Cp_pl - planes), (0, Cp_pl - planes))).astype(jnp.bfloat16)
    b2 = jnp.pad(b2, (0, Cp_pl - planes)).astype(jnp.float32).reshape(1, Cp_pl)
    y2 = _conv3x3(y1, w2, b2, N=N, H=H, W=W)                              # (N,HW,Cp_pl) bf16

    # conv3 (1x1) + BN3 (no ReLU) with fused global-average-pool partial sums
    w3, b3 = fold(p["conv3_w"].reshape(C3, planes).T,
                  p["bn3_g"], p["bn3_b"], p["bn3_m"], p["bn3_v"])
    w3 = jnp.pad(w3, ((0, Cp_pl - planes), (0, Cp_3 - C3))).astype(jnp.bfloat16)
    b3 = jnp.pad(b3, (0, Cp_3 - C3)).astype(jnp.float32).reshape(1, Cp_3)
    y3, sums = _conv1x1(y2, w3, b3, relu=False, pool=True)                # y3 bf16, sums f32

    # SE gate: FC -> ReLU -> FC -> sigmoid on the pooled means
    pooled = sums[:, 0, :] * (1.0 / HW)                                   # (N, Cp_3) f32
    Cr = p["fc1_w"].shape[0]
    Crp = _round_up(Cr, 128)
    fc1 = jnp.pad(p["fc1_w"].T, ((0, Cp_3 - C3), (0, Crp - Cr))).astype(jnp.float32)
    fc2 = jnp.pad(p["fc2_w"].T, ((0, Crp - Cr), (0, Cp_3 - C3))).astype(jnp.float32)
    gate = _se_gate(pooled, fc1, fc2)                                     # (N, Cp_3) f32

    # channel scale + residual add + ReLU (fused elementwise)
    if Cp_3 == Cin:
        resid = xh.reshape(N, HW, Cp_3)
    else:
        resid = jnp.pad(xh, ((0, 0), (0, 0), (0, 0), (0, Cp_3 - Cin))).reshape(N, HW, Cp_3)
    out = _se_apply(y3, gate, resid)                                      # (N, HW, Cp_3) f32

    out = out.reshape(N, H, W, Cp_3)[:, :, :, :C3]
    return jnp.transpose(out, (0, 3, 1, 2))                               # back to NCHW


# ------------------------------- reference ---------------------------------------
def _reference(x, p, *, stride=1, eps=1e-5):
    def conv_bn(z, w, g, b, m, v, s, pad, relu):
        y = jax.lax.conv_general_dilated(
            z, w, window_strides=(s, s), padding=[(pad, pad), (pad, pad)],
            dimension_numbers=("NCHW", "OIHW", "NCHW"))
        scale = (g / jnp.sqrt(v + eps))[None, :, None, None]
        bias = (b - m * g / jnp.sqrt(v + eps))[None, :, None, None]
        y = y * scale + bias
        return jnp.maximum(y, 0.0) if relu else y

    out = conv_bn(x, p["conv1_w"], p["bn1_g"], p["bn1_b"], p["bn1_m"], p["bn1_v"], 1, 0, True)
    out = conv_bn(out, p["conv2_w"], p["bn2_g"], p["bn2_b"], p["bn2_m"], p["bn2_v"], stride, 1, True)
    out = conv_bn(out, p["conv3_w"], p["bn3_g"], p["bn3_b"], p["bn3_m"], p["bn3_v"], 1, 0, False)
    pooled = jnp.mean(out, axis=(2, 3))
    h = jnp.maximum(pooled @ p["fc1_w"].T, 0.0)
    gate = jax.nn.sigmoid(h @ p["fc2_w"].T)
    out = out * gate[:, :, None, None] + x
    return jnp.maximum(out, 0.0)


# --------------------------------- main -------------------------------------------
if __name__ == "__main__":
    key = jax.random.PRNGKey(0)
    ks = jax.random.split(key, 16)

    # Small shapes consistent with SEBottleneck: inplanes = planes*expansion so the
    # residual add is valid with downsample=None, stride=1.
    N, planes, H, W = 2, 4, 16, 16
    inplanes = planes * 4          # 16
    C3 = planes * 4                # 16
    reduction = 4
    Cr = C3 // reduction           # 4
    stride = 1

    def rnd(k, shape, s=1.0):
        return s * jax.random.normal(k, shape, dtype=jnp.float32)

    x = rnd(ks[0], (N, inplanes, H, W))

    params = {
        "conv1_w": rnd(ks[1], (planes, inplanes, 1, 1), 0.25),
        "bn1_g": 1.0 + 0.1 * rnd(ks[2], (planes,)),
        "bn1_b": 0.1 * rnd(ks[3], (planes,)),
        "bn1_m": 0.1 * rnd(ks[4], (planes,)),
        "bn1_v": jnp.abs(rnd(ks[5], (planes,))) + 0.5,

        "conv2_w": rnd(ks[6], (planes, planes, 3, 3), 0.15),
        "bn2_g": 1.0 + 0.1 * rnd(ks[7], (planes,)),
        "bn2_b": 0.1 * rnd(ks[8], (planes,)),
        "bn2_m": 0.1 * rnd(ks[9], (planes,)),
        "bn2_v": jnp.abs(rnd(ks[10], (planes,))) + 0.5,

        "conv3_w": rnd(ks[11], (C3, planes, 1, 1), 0.3),
        "bn3_g": 1.0 + 0.1 * rnd(ks[12], (C3,)),
        "bn3_b": 0.1 * rnd(ks[13], (C3,)),
        "bn3_m": 0.1 * rnd(ks[14], (C3,)),
        "bn3_v": jnp.abs(rnd(ks[15], (C3,))) + 0.5,

        "fc1_w": rnd(jax.random.PRNGKey(1), (Cr, C3), 0.3),
        "fc2_w": rnd(jax.random.PRNGKey(2), (C3, Cr), 0.3),
    }

    out = se_bottleneck_forward(x, params, stride=stride)
    out = jax.block_until_ready(out)

    ref = _reference(x, params, stride=stride)
    assert out.shape == (N, C3, H, W), out.shape
    err = float(jnp.max(jnp.abs(out - ref)))
    scale = float(jnp.max(jnp.abs(ref))) + 1e-6
    # bf16 activations/weights across three chained convs, f32 accumulation/epilogue.
    assert err <= 5e-2 * max(1.0, scale), (err, scale)

    print("KERNEL_OK")
</pallas_src>

<mosaic_0001>
module attributes {stable_mosaic.version = 11 : i64} {
  func.func @_gemm_kernel(%arg0: i32, %arg1: i32, %arg2: i32, %arg3: memref<1x256x128xbf16, #tpu.memory_space<vmem>>, %arg4: memref<128x128xbf16, #tpu.memory_space<vmem>>, %arg5: memref<1x128xf32, #tpu.memory_space<vmem>>, %arg6: memref<1x256x128xbf16, #tpu.memory_space<vmem>>) attributes {dimension_semantics = [#tpu.dimension_semantics<parallel>, #tpu.dimension_semantics<parallel>, #tpu.dimension_semantics<arbitrary>], iteration_bounds = array<i64: 2, 1, 1>, scalar_prefetch = 0 : i64, scratch_operands = 0 : i64, tpu.core_type = #tpu.core_type<tc>, window_params = [{transform_indices = @transform_0, window_bounds = array<i64: 1, 256, 128>}, {transform_indices = @transform_1, window_bounds = array<i64: 128, 128>}, {transform_indices = @transform_2, window_bounds = array<i64: 1, 128>}, {transform_indices = @transform_3, window_bounds = array<i64: 1, 256, 128>}]} {
    %c0 = arith.constant 0 : index
    %c0_0 = arith.constant 0 : index
    %c0_1 = arith.constant 0 : index
    %0 = vector.load %arg3[%c0, %c0_0, %c0_1] : memref<1x256x128xbf16, #tpu.memory_space<vmem>>, vector<1x256x128xbf16>
    %1 = vector.shape_cast %0 : vector<1x256x128xbf16> to vector<256x128xbf16>
    %c0_2 = arith.constant 0 : index
    %c0_3 = arith.constant 0 : index
    %2 = vector.load %arg4[%c0_2, %c0_3] : memref<128x128xbf16, #tpu.memory_space<vmem>>, vector<128x128xbf16>
    %cst = arith.constant dense<0.000000e+00> : vector<256x128xf32>
    %3 = tpu.matmul %1, %2, %cst {dimension_numbers = #tpu.dot_dimension_numbers<[1], [0], [0], [1], [0, 0, 1, 1], [], []>} : vector<256x128xbf16>, vector<128x128xbf16>, vector<256x128xf32> -> vector<256x128xf32>
    %c0_4 = arith.constant 0 : index
    %c0_5 = arith.constant 0 : index
    %4 = vector.load %arg5[%c0_4, %c0_5] : memref<1x128xf32, #tpu.memory_space<vmem>>, vector<1x128xf32>
    %5 = vector.broadcast %4 : vector<1x128xf32> to vector<256x128xf32>
    %6 = arith.addf %3, %5 : vector<256x128xf32>
    %cst_6 = arith.constant 0.000000e+00 : f32
    %7 = vector.broadcast %cst_6 : f32 to vector<256x128xf32>
    %8 = arith.maximumf %6, %7 : vector<256x128xf32>
    %9 = arith.truncf %8 : vector<256x128xf32> to vector<256x128xbf16>
    %c0_7 = arith.constant 0 : index
    %c0_8 = arith.constant 0 : index
    %c0_9 = arith.constant 0 : index
    %10 = vector.load %arg6[%c0_7, %c0_8, %c0_9] : memref<1x256x128xbf16, #tpu.memory_space<vmem>>, vector<1x256x128xbf16>
    %11 = vector.shape_cast %10 : vector<1x256x128xbf16> to vector<256x128xbf16>
    %12 = vector.shape_cast %9 : vector<256x128xbf16> to vector<1x256x128xbf16>
    tpu.vector_store %arg6[%c0_7, %c0_8, %c0_9], %12 {strides = array<i32>} : memref<1x256x128xbf16, #tpu.memory_space<vmem>>, vector<1x256x128xbf16>,
    return
  }
  func.func @transform_0(%arg0: i32, %arg1: i32, %arg2: i32) -> (i32, i32, i32) {
    %c0_i32 = arith.constant 0 : i32
    %c0_i32_0 = arith.constant 0 : i32
    return %arg0, %arg2, %c0_i32 : i32, i32, i32
  }
  func.func @transform_1(%arg0: i32, %arg1: i32, %arg2: i32) -> (i32, i32) {
    %c0_i32 = arith.constant 0 : i32
    %c0_i32_0 = arith.constant 0 : i32
    return %c0_i32, %arg1 : i32, i32
  }
  func.func @transform_2(%arg0: i32, %arg1: i32, %arg2: i32) -> (i32, i32) {
    %c0_i32 = arith.constant 0 : i32
    %c0_i32_0 = arith.constant 0 : i32
    return %c0_i32, %arg1 : i32, i32
  }
  func.func @transform_3(%arg0: i32, %arg1: i32, %arg2: i32) -> (i32, i32, i32) {
    %c0_i32 = arith.constant 0 : i32
    return %arg0, %arg2, %arg1 : i32, i32, i32
  }
}

module attributes {stable_mosaic.version = 11 : i64} {
  func.func @_conv3x3_kernel(%arg0: i32, %arg1: i32, %arg2: memref<1x18x18x128xbf16, #tpu.memory_space<vmem>>, %arg3: memref<9x128x128xbf16, #tpu.memory_space<vmem>>, %arg4: memref<1x128xf32, #tpu.memory_space<vmem>>, %arg5: memref<1x256x128xbf16, #tpu.memory_space<vmem>>, %arg6: memref<256x128xf32, #tpu.memory_space<vmem>>) attributes {dimension_semantics = [#tpu.dimension_semantics<parallel>, #tpu.dimension_semantics<parallel>], iteration_bounds = array<i64: 2, 1>, scalar_prefetch = 0 : i64, scratch_operands = 1 : i64, tpu.core_type = #tpu.core_type<tc>, window_params = [{transform_indices = @transform_0, window_bounds = array<i64: 1, 18, 18, 128>}, {transform_indices = @transform_1, window_bounds = array<i64: 9, 128, 128>}, {transform_indices = @transform_2, window_bounds = array<i64: 1, 128>}, {transform_indices = @transform_3, window_bounds = array<i64: 1, 256, 128>}]} {
    %cst = arith.constant 0.000000e+00 : f32
    %0 = vector.broadcast %cst : f32 to vector<256x128xf32>
    %c0 = arith.constant 0 : index
    %c0_0 = arith.constant 0 : index
    %1 = vector.load %arg6[%c0, %c0_0] : memref<256x128xf32, #tpu.memory_space<vmem>>, vector<256x128xf32>
    tpu.vector_store %arg6[%c0, %c0_0], %0 {strides = array<i32>} : memref<256x128xf32, #tpu.memory_space<vmem>>, vector<256x128xf32>,
    %c0_1 = arith.constant 0 : index
    %c0_2 = arith.constant 0 : index
    %c0_3 = arith.constant 0 : index
    %c0_4 = arith.constant 0 : index
    %2 = vector.load %arg2[%c0_1, %c0_2, %c0_3, %c0_4] : memref<1x18x18x128xbf16, #tpu.memory_space<vmem>>, vector<1x16x16x128xbf16>
    %3 = vector.shape_cast %2 : vector<1x16x16x128xbf16> to vector<16x16x128xbf16>
    %4 = vector.shape_cast %3 : vector<16x16x128xbf16> to vector<256x128xbf16>
    %c0_5 = arith.constant 0 : index
    %c0_6 = arith.constant 0 : index
    %5 = vector.load %arg6[%c0_5, %c0_6] : memref<256x128xf32, #tpu.memory_space<vmem>>, vector<256x128xf32>
    %c0_7 = arith.constant 0 : index
    %c0_8 = arith.constant 0 : index
    %c0_9 = arith.constant 0 : index
    %6 = vector.load %arg3[%c0_7, %c0_8, %c0_9] : memref<9x128x128xbf16, #tpu.memory_space<vmem>>, vector<1x128x128xbf16>
    %7 = vector.shape_cast %6 : vector<1x128x128xbf16> to vector<128x128xbf16>
    %cst_10 = arith.constant dense<0.000000e+00> : vector<256x128xf32>
    %8 = tpu.matmul %4, %7, %cst_10 {dimension_numbers = #tpu.dot_dimension_numbers<[1], [0], [0], [1], [0, 0, 1, 1], [], []>} : vector<256x128xbf16>, vector<128x128xbf16>, vector<256x128xf32> -> vector<256x128xf32>
    %9 = arith.addf %5, %8 : vector<256x128xf32>
    %c0_11 = arith.constant 0 : index
    %c0_12 = arith.constant 0 : index
    %10 = vector.load %arg6[%c0_11, %c0_12] : memref<256x128xf32, #tpu.memory_space<vmem>>, vector<256x128xf32>
    tpu.vector_store %arg6[%c0_11, %c0_12], %9 {strides = array<i32>} : memref<256x128xf32, #tpu.memory_space<vmem>>, vector<256x128xf32>,
    %c0_13 = arith.constant 0 : index
    %c0_14 = arith.constant 0 : index
    %c1 = arith.constant 1 : index
    %c0_15 = arith.constant 0 : index
    %11 = vector.load %arg2[%c0_13, %c0_14, %c1, %c0_15] : memref<1x18x18x128xbf16, #tpu.memory_space<vmem>>, vector<1x16x16x128xbf16>
    %12 = vector.shape_cast %11 : vector<1x16x16x128xbf16> to vector<16x16x128xbf16>
    %13 = vector.shape_cast %12 : vector<16x16x128xbf16> to vector<256x128xbf16>
    %c0_16 = arith.constant 0 : index
    %c0_17 = arith.constant 0 : index
    %14 = vector.load %arg6[%c0_16, %c0_17] : memref<256x128xf32, #tpu.memory_space<vmem>>, vector<256x128xf32>
    %c1_18 = arith.constant 1 : index
    %c0_19 = arith.constant 0 : index
    %c0_20 = arith.constant 0 : index
    %15 = vector.load %arg3[%c1_18, %c0_19, %c0_20] : memref<9x128x128xbf16, #tpu.memory_space<vmem>>, vector<1x128x128xbf16>
    %16 = vector.shape_cast %15 : vector<1x128x128xbf16> to vector<128x128xbf16>
    %cst_21 = arith.constant dense<0.000000e+00> : vector<256x128xf32>
    %17 = tpu.matmul %13, %16, %cst_21 {dimension_numbers = #tpu.dot_dimension_numbers<[1], [0], [0], [1], [0, 0, 1, 1], [], []>} : vector<256x128xbf16>, vector<128x128xbf16>, vector<256x128xf32> -> vector<256x128xf32>
    %18 = arith.addf %14, %17 : vector<256x128xf32>
    %c0_22 = arith.constant 0 : index
    %c0_23 = arith.constant 0 : index
    %19 = vector.load %arg6[%c0_22, %c0_23] : memref<256x128xf32, #tpu.memory_space<vmem>>, vector<256x128xf32>
    tpu.vector_store %arg6[%c0_22, %c0_23], %18 {strides = array<i32>} : memref<256x128xf32, #tpu.memory_space<vmem>>, vector<256x128xf32>,
    %c0_24 = arith.constant 0 : index
    %c0_25 = arith.constant 0 : index
    %c2 = arith.constant 2 : index
    %c0_26 = arith.constant 0 : index
    %20 = vector.load %arg2[%c0_24, %c0_25, %c2, %c0_26] : memref<1x18x18x128xbf16, #tpu.memory_space<vmem>>, vector<1x16x16x128xbf16>
    %21 = vector.shape_cast %20 : vector<1x16x16x128xbf16> to vector<16x16x128xbf16>
    %22 = vector.shape_cast %21 : vector<16x16x128xbf16> to vector<256x128xbf16>
    %c0_27 = arith.constant 0 : index
    %c0_28 = arith.constant 0 : index
    %23 = vector.load %arg6[%c0_27, %c0_28] : memref<256x128xf32, #tpu.memory_space<vmem>>, vector<256x128xf32>
    %c2_29 = arith.constant 2 : index
    %c0_30 = arith.constant 0 : index
    %c0_31 = arith.constant 0 : index
    %24 = vector.load %arg3[%c2_29, %c0_30, %c0_31] : memref<9x128x128xbf16, #tpu.memory_space<vmem>>, vector<1x128x128xbf16>
    %25 = vector.shape_cast %24 : vector<1x128x128xbf16> to vector<128x128xbf16>
    %cst_32 = arith.constant dense<0.000000e+00> : vector<256x128xf32>
    %26 = tpu.matmul %22, %25, %cst_32 {dimension_numbers = #tpu.dot_dimension_numbers<[1], [0], [0], [1], [0, 0, 1, 1], [], []>} : vector<256x128xbf16>, vector<128x128xbf16>, vector<256x128xf32> -> vector<256x128xf32>
    %27 = arith.addf %23, %26 : vector<256x128xf32>
    %c0_33 = arith.constant 0 : index
    %c0_34 = arith.constant 0 : index
    %28 = vector.load %arg6[%c0_33, %c0_34] : memref<256x128xf32, #tpu.memory_space<vmem>>, vector<256x128xf32>
    tpu.vector_store %arg6[%c0_33, %c0_34], %27 {strides = array<i32>} : memref<256x128xf32, #tpu.memory_space<vmem>>, vector<256x128xf32>,
    %c0_35 = arith.constant 0 : index
    %c1_36 = arith.constant 1 : index
    %c0_37 = arith.constant 0 : index
    %c0_38 = arith.constant 0 : index
    %29 = vector.load %arg2[%c0_35, %c1_36, %c0_37, %c0_38] : memref<1x18x18x128xbf16, #tpu.memory_space<vmem>>, vector<1x16x16x128xbf16>
    %30 = vector.shape_cast %29 : vector<1x16x16x128xbf16> to vector<16x16x128xbf16>
    %31 = vector.shape_cast %30 : vector<16x16x128xbf16> to vector<256x128xbf16>
    %c0_39 = arith.constant 0 : index
    %c0_40 = arith.constant 0 : index
    %32 = vector.load %arg6[%c0_39, %c0_40] : memref<256x128xf32, #tpu.memory_space<vmem>>, vector<256x128xf32>
    %c3 = arith.constant 3 : index
    %c0_41 = arith.constant 0 : index
    %c0_42 = arith.constant 0 : index
    %33 = vector.load %arg3[%c3, %c0_41, %c0_42] : memref<9x128x128xbf16, #tpu.memory_space<vmem>>, vector<1x128x128xbf16>
    %34 = vector.shape_cast %33 : vector<1x128x128xbf16> to vector<128x128xbf16>
    %cst_43 = arith.constant dense<0.000000e+00> : vector<256x128xf32>
    %35 = tpu.matmul %31, %34, %cst_43 {dimension_numbers = #tpu.dot_dimension_numbers<[1], [0], [0], [1], [0, 0, 1, 1], [], []>} : vector<256x128xbf16>, vector<128x128xbf16>, vector<256x128xf32> -> vector<256x128xf32>
    %36 = arith.addf %32, %35 : vector<256x128xf32>
    %c0_44 = arith.constant 0 : index
    %c0_45 = arith.constant 0 : index
    %37 = vector.load %arg6[%c0_44, %c0_45] : memref<256x128xf32, #tpu.memory_space<vmem>>, vector<256x128xf32>
    tpu.vector_store %arg6[%c0_44, %c0_45], %36 {strides = array<i32>} : memref<256x128xf32, #tpu.memory_space<vmem>>, vector<256x128xf32>,
    %c0_46 = arith.constant 0 : index
    %c1_47 = arith.constant 1 : index
    %c1_48 = arith.constant 1 : index
    %c0_49 = arith.constant 0 : index
    %38 = vector.load %arg2[%c0_46, %c1_47, %c1_48, %c0_49] : memref<1x18x18x128xbf16, #tpu.memory_space<vmem>>, vector<1x16x16x128xbf16>
    %39 = vector.shape_cast %38 : vector<1x16x16x128xbf16> to vector<16x16x128xbf16>
    %40 = vector.shape_cast %39 : vector<16x16x128xbf16> to vector<256x128xbf16>
    %c0_50 = arith.constant 0 : index
    %c0_51 = arith.constant 0 : index
    %41 = vector.load %arg6[%c0_50, %c0_51] : memref<256x128xf32, #tpu.memory_space<vmem>>, vector<256x128xf32>
    %c4 = arith.constant 4 : index
    %c0_52 = arith.constant 0 : index
    %c0_53 = arith.constant 0 : index
    %42 = vector.load %arg3[%c4, %c0_52, %c0_53] : memref<9x128x128xbf16, #tpu.memory_space<vmem>>, vector<1x128x128xbf16>
    %43 = vector.shape_cast %42 : vector<1x128x128xbf16> to vector<128x128xbf16>
    %cst_54 = arith.constant dense<0.000000e+00> : vector<256x128xf32>
    %44 = tpu.matmul %40, %43, %cst_54 {dimension_numbers = #tpu.dot_dimension_numbers<[1], [0], [0], [1], [0, 0, 1, 1], [], []>} : vector<256x128xbf16>, vector<128x128xbf16>, vector<256x128xf32> -> vector<256x128xf32>
    %45 = arith.addf %41, %44 : vector<256x128xf32>
    %c0_55 = arith.constant 0 : index
    %c0_56 = arith.constant 0 : index
    %46 = vector.load %arg6[%c0_55, %c0_56] : memref<256x128xf32, #tpu.memory_space<vmem>>, vector<256x128xf32>
    tpu.vector_store %arg6[%c0_55, %c0_56], %45 {strides = array<i32>} : memref<256x128xf32, #tpu.memory_space<vmem>>, vector<256x128xf32>,
    %c0_57 = arith.constant 0 : index
    %c1_58 = arith.constant 1 : index
    %c2_59 = arith.constant 2 : index
    %c0_60 = arith.constant 0 : index
    %47 = vector.load %arg2[%c0_57, %c1_58, %c2_59, %c0_60] : memref<1x18x18x128xbf16, #tpu.memory_space<vmem>>, vector<1x16x16x128xbf16>
    %48 = vector.shape_cast %47 : vector<1x16x16x128xbf16> to vector<16x16x128xbf16>
    %49 = vector.shape_cast %48 : vector<16x16x128xbf16> to vector<256x128xbf16>
    %c0_61 = arith.constant 0 : index
    %c0_62 = arith.constant 0 : index
    %50 = vector.load %arg6[%c0_61, %c0_62] : memref<256x128xf32, #tpu.memory_space<vmem>>, vector<256x128xf32>
    %c5 = arith.constant 5 : index
    %c0_63 = arith.constant 0 : index
    %c0_64 = arith.constant 0 : index
    %51 = vector.load %arg3[%c5, %c0_63, %c0_64] : memref<9x128x128xbf16, #tpu.memory_space<vmem>>, vector<1x128x128xbf16>
    %52 = vector.shape_cast %51 : vector<1x128x128xbf16> to vector<128x128xbf16>
    %cst_65 = arith.constant dense<0.000000e+00> : vector<256x128xf32>
    %53 = tpu.matmul %49, %52, %cst_65 {dimension_numbers = #tpu.dot_dimension_numbers<[1], [0], [0], [1], [0, 0, 1, 1], [], []>} : vector<256x128xbf16>, vector<128x128xbf16>, vector<256x128xf32> -> vector<256x128xf32>
    %54 = arith.addf %50, %53 : vector<256x128xf32>
    %c0_66 = arith.constant 0 : index
    %c0_67 = arith.constant 0 : index
    %55 = vector.load %arg6[%c0_66, %c0_67] : memref<256x128xf32, #tpu.memory_space<vmem>>, vector<256x128xf32>
    tpu.vector_store %arg6[%c0_66, %c0_67], %54 {strides = array<i32>} : memref<256x128xf32, #tpu.memory_space<vmem>>, vector<256x128xf32>,
    %c0_68 = arith.constant 0 : index
    %c2_69 = arith.constant 2 : index
    %c0_70 = arith.constant 0 : index
    %c0_71 = arith.constant 0 : index
    %56 = vector.load %arg2[%c0_68, %c2_69, %c0_70, %c0_71] : memref<1x18x18x128xbf16, #tpu.memory_space<vmem>>, vector<1x16x16x128xbf16>
    %57 = vector.shape_cast %56 : vector<1x16x16x128xbf16> to vector<16x16x128xbf16>
    %58 = vector.shape_cast %57 : vector<16x16x128xbf16> to vector<256x128xbf16>
    %c0_72 = arith.constant 0 : index
    %c0_73 = arith.constant 0 : index
    %59 = vector.load %arg6[%c0_72, %c0_73] : memref<256x128xf32, #tpu.memory_space<vmem>>, vector<256x128xf32>
    %c6 = arith.constant 6 : index
    %c0_74 = arith.constant 0 : index
    %c0_75 = arith.constant 0 : index
    %60 = vector.load %arg3[%c6, %c0_74, %c0_75] : memref<9x128x128xbf16, #tpu.memory_space<vmem>>, vector<1x128x128xbf16>
    %61 = vector.shape_cast %60 : vector<1x128x128xbf16> to vector<128x128xbf16>
    %cst_76 = arith.constant dense<0.000000e+00> : vector<256x128xf32>
    %62 = tpu.matmul %58, %61, %cst_76 {dimension_numbers = #tpu.dot_dimension_numbers<[1], [0], [0], [1], [0, 0, 1, 1], [], []>} : vector<256x128xbf16>, vector<128x128xbf16>, vector<256x128xf32> -> vector<256x128xf32>
    %63 = arith.addf %59, %62 : vector<256x128xf32>
    %c0_77 = arith.constant 0 : index
    %c0_78 = arith.constant 0 : index
    %64 = vector.load %arg6[%c0_77, %c0_78] : memref<256x128xf32, #tpu.memory_space<vmem>>, vector<256x128xf32>
    tpu.vector_store %arg6[%c0_77, %c0_78], %63 {strides = array<i32>} : memref<256x128xf32, #tpu.memory_space<vmem>>, vector<256x128xf32>,
    %c0_79 = arith.constant 0 : index
    %c2_80 = arith.constant 2 : index
    %c1_81 = arith.constant 1 : index
    %c0_82 = arith.constant 0 : index
    %65 = vector.load %arg2[%c0_79, %c2_80, %c1_81, %c0_82] : memref<1x18x18x128xbf16, #tpu.memory_space<vmem>>, vector<1x16x16x128xbf16>
    %66 = vector.shape_cast %65 : vector<1x16x16x128xbf16> to vector<16x16x128xbf16>
    %67 = vector.shape_cast %66 : vector<16x16x128xbf16> to vector<256x128xbf16>
    %c0_83 = arith.constant 0 : index
    %c0_84 = arith.constant 0 : index
    %68 = vector.load %arg6[%c0_83, %c0_84] : memref<256x128xf32, #tpu.memory_space<vmem>>, vector<256x128xf32>
    %c7 = arith.constant 7 : index
    %c0_85 = arith.constant 0 : index
    %c0_86 = arith.constant 0 : index
    %69 = vector.load %arg3[%c7, %c0_85, %c0_86] : memref<9x128x128xbf16, #tpu.memory_space<vmem>>, vector<1x128x128xbf16>
    %70 = vector.shape_cast %69 : vector<1x128x128xbf16> to vector<128x128xbf16>
    %cst_87 = arith.constant dense<0.000000e+00> : vector<256x128xf32>
    %71 = tpu.matmul %67, %70, %cst_87 {dimension_numbers = #tpu.dot_dimension_numbers<[1], [0], [0], [1], [0, 0, 1, 1], [], []>} : vector<256x128xbf16>, vector<128x128xbf16>, vector<256x128xf32> -> vector<256x128xf32>
    %72 = arith.addf %68, %71 : vector<256x128xf32>
    %c0_88 = arith.constant 0 : index
    %c0_89 = arith.constant 0 : index
    %73 = vector.load %arg6[%c0_88, %c0_89] : memref<256x128xf32, #tpu.memory_space<vmem>>, vector<256x128xf32>
    tpu.vector_store %arg6[%c0_88, %c0_89], %72 {strides = array<i32>} : memref<256x128xf32, #tpu.memory_space<vmem>>, vector<256x128xf32>,
    %c0_90 = arith.constant 0 : index
    %c2_91 = arith.constant 2 : index
    %c2_92 = arith.constant 2 : index
    %c0_93 = arith.constant 0 : index
    %74 = vector.load %arg2[%c0_90, %c2_91, %c2_92, %c0_93] : memref<1x18x18x128xbf16, #tpu.memory_space<vmem>>, vector<1x16x16x128xbf16>
    %75 = vector.shape_cast %74 : vector<1x16x16x128xbf16> to vector<16x16x128xbf16>
    %76 = vector.shape_cast %75 : vector<16x16x128xbf16> to vector<256x128xbf16>
    %c0_94 = arith.constant 0 : index
    %c0_95 = arith.constant 0 : index
    %77 = vector.load %arg6[%c0_94, %c0_95] : memref<256x128xf32, #tpu.memory_space<vmem>>, vector<256x128xf32>
    %c8 = arith.constant 8 : index
    %c0_96 = arith.constant 0 : index
    %c0_97 = arith.constant 0 : index
    %78 = vector.load %arg3[%c8, %c0_96, %c0_97] : memref<9x128x128xbf16, #tpu.memory_space<vmem>>, vector<1x128x128xbf16>
    %79 = vector.shape_cast %78 : vector<1x128x128xbf16> to vector<128x128xbf16>
    %cst_98 = arith.constant dense<0.000000e+00> : vector<256x128xf32>
    %80 = tpu.matmul %76, %79, %cst_98 {dimension_numbers = #tpu.dot_dimension_numbers<[1], [0], [0], [1], [0, 0, 1, 1], [], []>} : vector<256x128xbf16>, vector<128x128xbf16>, vector<256x128xf32> -> vector<256x128xf32>
    %81 = arith.addf %77, %80 : vector<256x128xf32>
    %c0_99 = arith.constant 0 : index
    %c0_100 = arith.constant 0 : index
    %82 = vector.load %arg6[%c0_99, %c0_100] : memref<256x128xf32, #tpu.memory_space<vmem>>, vector<256x128xf32>
    tpu.vector_store %arg6[%c0_99, %c0_100], %81 {strides = array<i32>} : memref<256x128xf32, #tpu.memory_space<vmem>>, vector<256x128xf32>,
    %c0_101 = arith.constant 0 : index
    %c0_102 = arith.constant 0 : index
    %83 = vector.load %arg6[%c0_101, %c0_102] : memref<256x128xf32, #tpu.memory_space<vmem>>, vector<256x128xf32>
    %c0_103 = arith.constant 0 : index
    %c0_104 = arith.constant 0 : index
    %84 = vector.load %arg4[%c0_103, %c0_104] : memref<1x128xf32, #tpu.memory_space<vmem>>, vector<1x128xf32>
    %85 = vector.broadcast %84 : vector<1x128xf32> to vector<256x128xf32>
    %86 = arith.addf %83, %85 : vector<256x128xf32>
    %cst_105 = arith.constant 0.000000e+00 : f32
    %87 = vector.broadcast %cst_105 : f32 to vector<256x128xf32>
    %88 = arith.maximumf %86, %87 : vector<256x128xf32>
    %89 = arith.truncf %88 : vector<256x128xf32> to vector<256x128xbf16>
    %c0_106 = arith.constant 0 : index
    %c0_107 = arith.constant 0 : index
    %c0_108 = arith.constant 0 : index
    %90 = vector.load %arg5[%c0_106, %c0_107, %c0_108] : memref<1x256x128xbf16, #tpu.memory_space<vmem>>, vector<1x256x128xbf16>
    %91 = vector.shape_cast %90 : vector<1x256x128xbf16> to vector<256x128xbf16>
    %92 = vector.shape_cast %89 : vector<256x128xbf16> to vector<1x256x128xbf16>
    tpu.vector_store %arg5[%c0_106, %c0_107, %c0_108], %92 {strides = array<i32>} : memref<1x256x128xbf16, #tpu.memory_space<vmem>>, vector<1x256x128xbf16>,
    return
  }
  func.func @transform_0(%arg0: i32, %arg1: i32) -> (i32, i32, i32, i32) {
    %c0_i32 = arith.constant 0 : i32
    %c0_i32_0 = arith.constant 0 : i32
    %c0_i32_1 = arith.constant 0 : i32
    %c0_i32_2 = arith.constant 0 : i32
    return %arg0, %c0_i32, %c0_i32_0, %c0_i32_1 : i32, i32, i32, i32
  }
  func.func @transform_1(%arg0: i32, %arg1: i32) -> (i32, i32, i32) {
    %c0_i32 = arith.constant 0 : i32
    %c0_i32_0 = arith.constant 0 : i32
    %c0_i32_1 = arith.constant 0 : i32
    return %c0_i32, %c0_i32_0, %arg1 : i32, i32, i32
  }
  func.func @transform_2(%arg0: i32, %arg1: i32) -> (i32, i32) {
    %c0_i32 = arith.constant 0 : i32
    %c0_i32_0 = arith.constant 0 : i32
    return %c0_i32, %arg1 : i32, i32
  }
  func.func @transform_3(%arg0: i32, %arg1: i32) -> (i32, i32, i32) {
    %c0_i32 = arith.constant 0 : i32
    %c0_i32_0 = arith.constant 0 : i32
    return %arg0, %c0_i32, %arg1 : i32, i32, i32
  }
}

module attributes {stable_mosaic.version = 11 : i64} {
  func.func @_gemm_pool_kernel(%arg0: i32, %arg1: i32, %arg2: i32, %arg3: memref<1x256x128xbf16, #tpu.memory_space<vmem>>, %arg4: memref<128x128xbf16, #tpu.memory_space<vmem>>, %arg5: memref<1x128xf32, #tpu.memory_space<vmem>>, %arg6: memref<1x256x128xbf16, #tpu.memory_space<vmem>>, %arg7: memref<1x1x128xf32, #tpu.memory_space<vmem>>) attributes {dimension_semantics = [#tpu.dimension_semantics<parallel>, #tpu.dimension_semantics<parallel>, #tpu.dimension_semantics<arbitrary>], iteration_bounds = array<i64: 2, 1, 1>, scalar_prefetch = 0 : i64, scratch_operands = 0 : i64, tpu.core_type = #tpu.core_type<tc>, window_params = [{transform_indices = @transform_0, window_bounds = array<i64: 1, 256, 128>}, {transform_indices = @transform_1, window_bounds = array<i64: 128, 128>}, {transform_indices = @transform_2, window_bounds = array<i64: 1, 128>}, {transform_indices = @transform_3, window_bounds = array<i64: 1, 256, 128>}, {transform_indices = @transform_4, window_bounds = array<i64: 1, 1, 128>}]} {
    %c0 = arith.constant 0 : index
    %c0_0 = arith.constant 0 : index
    %c0_1 = arith.constant 0 : index
    %0 = vector.load %arg3[%c0, %c0_0, %c0_1] : memref<1x256x128xbf16, #tpu.memory_space<vmem>>, vector<1x256x128xbf16>
    %1 = vector.shape_cast %0 : vector<1x256x128xbf16> to vector<256x128xbf16>
    %c0_2 = arith.constant 0 : index
    %c0_3 = arith.constant 0 : index
    %2 = vector.load %arg4[%c0_2, %c0_3] : memref<128x128xbf16, #tpu.memory_space<vmem>>, vector<128x128xbf16>
    %cst = arith.constant dense<0.000000e+00> : vector<256x128xf32>
    %3 = tpu.matmul %1, %2, %cst {dimension_numbers = #tpu.dot_dimension_numbers<[1], [0], [0], [1], [0, 0, 1, 1], [], []>} : vector<256x128xbf16>, vector<128x128xbf16>, vector<256x128xf32> -> vector<256x128xf32>
    %c0_4 = arith.constant 0 : index
    %c0_5 = arith.constant 0 : index
    %4 = vector.load %arg5[%c0_4, %c0_5] : memref<1x128xf32, #tpu.memory_space<vmem>>, vector<1x128xf32>
    %5 = vector.broadcast %4 : vector<1x128xf32> to vector<256x128xf32>
    %6 = arith.addf %3, %5 : vector<256x128xf32>
    %7 = arith.truncf %6 : vector<256x128xf32> to vector<256x128xbf16>
    %c0_6 = arith.constant 0 : index
    %c0_7 = arith.constant 0 : index
    %c0_8 = arith.constant 0 : index
    %8 = vector.load %arg6[%c0_6, %c0_7, %c0_8] : memref<1x256x128xbf16, #tpu.memory_space<vmem>>, vector<1x256x128xbf16>
    %9 = vector.shape_cast %8 : vector<1x256x128xbf16> to vector<256x128xbf16>
    %10 = vector.shape_cast %7 : vector<256x128xbf16> to vector<1x256x128xbf16>
    tpu.vector_store %arg6[%c0_6, %c0_7, %c0_8], %10 {strides = array<i32>} : memref<1x256x128xbf16, #tpu.memory_space<vmem>>, vector<1x256x128xbf16>,
    %c0_i32 = arith.constant 0 : i32
    %11 = arith.cmpi eq, %arg2, %c0_i32 : i32
    %12 = arith.extui %11 : i1 to i32
    %c0_i32_9 = arith.constant 0 : i32
    %13 = arith.cmpi ne, %12, %c0_i32_9 : i32
    scf.if %13 {
      %cst_17 = arith.constant 0.000000e+00 : f32
      %22 = vector.broadcast %cst_17 : f32 to vector<1x1x128xf32>
      %c0_18 = arith.constant 0 : index
      %c0_19 = arith.constant 0 : index
      %c0_20 = arith.constant 0 : index
      %23 = vector.load %arg7[%c0_18, %c0_19, %c0_20] : memref<1x1x128xf32, #tpu.memory_space<vmem>>, vector<1x1x128xf32>
      tpu.vector_store %arg7[%c0_18, %c0_19, %c0_20], %22 {strides = array<i32>} : memref<1x1x128xf32, #tpu.memory_space<vmem>>, vector<1x1x128xf32>,
    } else {
    }
    %c0_10 = arith.constant 0 : index
    %c0_11 = arith.constant 0 : index
    %c0_12 = arith.constant 0 : index
    %14 = vector.load %arg7[%c0_10, %c0_11, %c0_12] : memref<1x1x128xf32, #tpu.memory_space<vmem>>, vector<1x1x128xf32>
    %15 = vector.shape_cast %14 : vector<1x1x128xf32> to vector<1x128xf32>
    %cst_13 = arith.constant dense<0.000000e+00> : vector<128xf32>
    %16 = vector.multi_reduction <add>, %6, %cst_13 [0] : vector<256x128xf32> to vector<128xf32>
    %17 = vector.shape_cast %16 : vector<128xf32> to vector<1x128xf32>
    %18 = arith.addf %15, %17 : vector<1x128xf32>
    %c0_14 = arith.constant 0 : index
    %c0_15 = arith.constant 0 : index
    %c0_16 = arith.constant 0 : index
    %19 = vector.load %arg7[%c0_14, %c0_15, %c0_16] : memref<1x1x128xf32, #tpu.memory_space<vmem>>, vector<1x1x128xf32>
    %20 = vector.shape_cast %19 : vector<1x1x128xf32> to vector<1x128xf32>
    %21 = vector.shape_cast %18 : vector<1x128xf32> to vector<1x1x128xf32>
    tpu.vector_store %arg7[%c0_14, %c0_15, %c0_16], %21 {strides = array<i32>} : memref<1x1x128xf32, #tpu.memory_space<vmem>>, vector<1x1x128xf32>,
    return
  }
  func.func @transform_0(%arg0: i32, %arg1: i32, %arg2: i32) -> (i32, i32, i32) {
    %c0_i32 = arith.constant 0 : i32
    %c0_i32_0 = arith.constant 0 : i32
    return %arg0, %arg2, %c0_i32 : i32, i32, i32
  }
  func.func @transform_1(%arg0: i32, %arg1: i32, %arg2: i32) -> (i32, i32) {
    %c0_i32 = arith.constant 0 : i32
    %c0_i32_0 = arith.constant 0 : i32
    return %c0_i32, %arg1 : i32, i32
  }
  func.func @transform_2(%arg0: i32, %arg1: i32, %arg2: i32) -> (i32, i32) {
    %c0_i32 = arith.constant 0 : i32
    %c0_i32_0 = arith.constant 0 : i32
    return %c0_i32, %arg1 : i32, i32
  }
  func.func @transform_3(%arg0: i32, %arg1: i32, %arg2: i32) -> (i32, i32, i32) {
    %c0_i32 = arith.constant 0 : i32
    return %arg0, %arg2, %arg1 : i32, i32, i32
  }
  func.func @transform_4(%arg0: i32, %arg1: i32, %arg2: i32) -> (i32, i32, i32) {
    %c0_i32 = arith.constant 0 : i32
    %c0_i32_0 = arith.constant 0 : i32
    return %arg0, %c0_i32, %arg1 : i32, i32, i32
  }
}

module attributes {stable_mosaic.version = 11 : i64} {
  func.func @_se_gate_kernel(%arg0: memref<8x128xf32, #tpu.memory_space<vmem>>, %arg1: memref<128x128xf32, #tpu.memory_space<vmem>>, %arg2: memref<128x128xf32, #tpu.memory_space<vmem>>, %arg3: memref<8x128xf32, #tpu.memory_space<vmem>>) attributes {dimension_semantics = [], scalar_prefetch = 0 : i64, scratch_operands = 0 : i64, tpu.core_type = #tpu.core_type<tc>} {
    %c0 = arith.constant 0 : index
    %c0_0 = arith.constant 0 : index
    %0 = vector.load %arg0[%c0, %c0_0] : memref<8x128xf32, #tpu.memory_space<vmem>>, vector<8x128xf32>
    %c0_1 = arith.constant 0 : index
    %c0_2 = arith.constant 0 : index
    %1 = vector.load %arg1[%c0_1, %c0_2] : memref<128x128xf32, #tpu.memory_space<vmem>>, vector<128x128xf32>
    %cst = arith.constant dense<0.000000e+00> : vector<8x128xf32>
    %2 = tpu.matmul %0, %1, %cst {dimension_numbers = #tpu.dot_dimension_numbers<[1], [0], [0], [1], [0, 0, 1, 1], [], []>} : vector<8x128xf32>, vector<128x128xf32>, vector<8x128xf32> -> vector<8x128xf32>
    %cst_3 = arith.constant 0.000000e+00 : f32
    %3 = vector.broadcast %cst_3 : f32 to vector<8x128xf32>
    %4 = arith.maximumf %2, %3 : vector<8x128xf32>
    %c0_4 = arith.constant 0 : index
    %c0_5 = arith.constant 0 : index
    %5 = vector.load %arg2[%c0_4, %c0_5] : memref<128x128xf32, #tpu.memory_space<vmem>>, vector<128x128xf32>
    %cst_6 = arith.constant dense<0.000000e+00> : vector<8x128xf32>
    %6 = tpu.matmul %4, %5, %cst_6 {dimension_numbers = #tpu.dot_dimension_numbers<[1], [0], [0], [1], [0, 0, 1, 1], [], []>} : vector<8x128xf32>, vector<128x128xf32>, vector<8x128xf32> -> vector<8x128xf32>
    %cst_7 = arith.constant 0.000000e+00 : f32
    %7 = vector.broadcast %cst_7 : f32 to vector<8x128xf32>
    %8 = arith.subf %7, %6 : vector<8x128xf32>
    %9 = math.exp %8 : vector<8x128xf32>
    %cst_8 = arith.constant 1.000000e+00 : f32
    %10 = vector.broadcast %cst_8 : f32 to vector<8x128xf32>
    %11 = arith.addf %10, %9 : vector<8x128xf32>
    %12 = tpu.reciprocal %11 {approx = true} : vector<8x128xf32> -> vector<8x128xf32>
    %c0_9 = arith.constant 0 : index
    %c0_10 = arith.constant 0 : index
    %13 = vector.load %arg3[%c0_9, %c0_10] : memref<8x128xf32, #tpu.memory_space<vmem>>, vector<8x128xf32>
    tpu.vector_store %arg3[%c0_9, %c0_10], %12 {strides = array<i32>} : memref<8x128xf32, #tpu.memory_space<vmem>>, vector<8x128xf32>,
    return
  }
}

module attributes {stable_mosaic.version = 11 : i64} {
  func.func @_se_apply_kernel(%arg0: i32, %arg1: i32, %arg2: memref<1x256x128xbf16, #tpu.memory_space<vmem>>, %arg3: memref<1x1x128xf32, #tpu.memory_space<vmem>>, %arg4: memref<1x256x128xf32, #tpu.memory_space<vmem>>, %arg5: memref<1x256x128xf32, #tpu.memory_space<vmem>>) attributes {dimension_semantics = [#tpu.dimension_semantics<parallel>, #tpu.dimension_semantics<parallel>], iteration_bounds = array<i64: 2, 1>, scalar_prefetch = 0 : i64, scratch_operands = 0 : i64, tpu.core_type = #tpu.core_type<tc>, window_params = [{transform_indices = @transform_0, window_bounds = array<i64: 1, 256, 128>}, {transform_indices = @transform_1, window_bounds = array<i64: 1, 1, 128>}, {transform_indices = @transform_2, window_bounds = array<i64: 1, 256, 128>}, {transform_indices = @transform_3, window_bounds = array<i64: 1, 256, 128>}]} {
    %c0 = arith.constant 0 : index
    %c0_0 = arith.constant 0 : index
    %c0_1 = arith.constant 0 : index
    %0 = vector.load %arg2[%c0, %c0_0, %c0_1] : memref<1x256x128xbf16, #tpu.memory_space<vmem>>, vector<1x256x128xbf16>
    %1 = vector.shape_cast %0 : vector<1x256x128xbf16> to vector<256x128xbf16>
    %2 = arith.extf %1 : vector<256x128xbf16> to vector<256x128xf32>
    %c0_2 = arith.constant 0 : index
    %c0_3 = arith.constant 0 : index
    %c0_4 = arith.constant 0 : index
    %3 = vector.load %arg3[%c0_2, %c0_3, %c0_4] : memref<1x1x128xf32, #tpu.memory_space<vmem>>, vector<1x1x128xf32>
    %4 = vector.shape_cast %3 : vector<1x1x128xf32> to vector<1x128xf32>
    %5 = vector.broadcast %4 : vector<1x128xf32> to vector<256x128xf32>
    %6 = arith.mulf %2, %5 : vector<256x128xf32>
    %c0_5 = arith.constant 0 : index
    %c0_6 = arith.constant 0 : index
    %c0_7 = arith.constant 0 : index
    %7 = vector.load %arg4[%c0_5, %c0_6, %c0_7] : memref<1x256x128xf32, #tpu.memory_space<vmem>>, vector<1x256x128xf32>
    %8 = vector.shape_cast %7 : vector<1x256x128xf32> to vector<256x128xf32>
    %9 = arith.addf %6, %8 : vector<256x128xf32>
    %cst = arith.constant 0.000000e+00 : f32
    %10 = vector.broadcast %cst : f32 to vector<256x128xf32>
    %11 = arith.maximumf %9, %10 : vector<256x128xf32>
    %c0_8 = arith.constant 0 : index
    %c0_9 = arith.constant 0 : index
    %c0_10 = arith.constant 0 : index
    %12 = vector.load %arg5[%c0_8, %c0_9, %c0_10] : memref<1x256x128xf32, #tpu.memory_space<vmem>>, vector<1x256x128xf32>
    %13 = vector.shape_cast %12 : vector<1x256x128xf32> to vector<256x128xf32>
    %14 = vector.shape_cast %11 : vector<256x128xf32> to vector<1x256x128xf32>
    tpu.vector_store %arg5[%c0_8, %c0_9, %c0_10], %14 {strides = array<i32>} : memref<1x256x128xf32, #tpu.memory_space<vmem>>, vector<1x256x128xf32>,
    return
  }
  func.func @transform_0(%arg0: i32, %arg1: i32) -> (i32, i32, i32) {
    %c0_i32 = arith.constant 0 : i32
    %c0_i32_0 = arith.constant 0 : i32
    return %arg0, %arg1, %c0_i32 : i32, i32, i32
  }
  func.func @transform_1(%arg0: i32, %arg1: i32) -> (i32, i32, i32) {
    %c0_i32 = arith.constant 0 : i32
    %c0_i32_0 = arith.constant 0 : i32
    %c0_i32_1 = arith.constant 0 : i32
    return %arg0, %c0_i32, %c0_i32_0 : i32, i32, i32
  }
  func.func @transform_2(%arg0: i32, %arg1: i32) -> (i32, i32, i32) {
    %c0_i32 = arith.constant 0 : i32
    %c0_i32_0 = arith.constant 0 : i32
    return %arg0, %arg1, %c0_i32 : i32, i32, i32
  }
  func.func @transform_3(%arg0: i32, %arg1: i32) -> (i32, i32, i32) {
    %c0_i32 = arith.constant 0 : i32
    %c0_i32_0 = arith.constant 0 : i32
    return %arg0, %arg1, %c0_i32 : i32, i32, i32
  }
}

</mosaic_0001>

<llo_original>
// kernel: se_bottleneck_forward.5
$region0: #{se_bottleneck_forward.5}
  #allocation0 [shape = 'u32[]', space=smem, size = 0x4, offset = 0x4, fixed_abs, tag = 'smem constant byte address 0x4 - core index']
  #allocation1 [shape = 'u32[144,128]{1,0:T(1,128)}', space=vmem, size = 0x12000, scoped, tag = 'internal scratch']
  %s0 = inlined_call_operand.vmem [shape: bf16[2,256,128], index: 0, kind: input, shape index: {}]
  %s1 = inlined_call_operand.vmem [shape: bf16[128,128], index: 1, kind: input, shape index: {}]
  %s2 = inlined_call_operand.vmem [shape: f32[1,128], index: 2, kind: input, shape index: {}]
  %s3 = inlined_call_operand.vmem [shape: bf16[2,256,128], index: 3, kind: output, shape index: {}]
  %s4 = sld [smem:[#allocation0]]
  $region45: #{se_bottleneck_forward.5} parent=0
    _
  %s6 = ssub.s32 1, %s4
  %s7 = scalar_select 0, %s6, %s4
  loop: start=0, step=1, limit=4
  $region2: #{se_bottleneck_forward.5} parent=0 // loop_pre_header
    _
  $region3: #{se_bottleneck_forward.5} parent=0 // loop_header
    %s9 = sphi 0, %s13
    %p10 = scmp.ge.s32.totalorder %s9, 4
    %s16 = sphi 0, %s35
    %s17 = sphi 0, %s31
    %s18 = sphi 0, %s27
    %s19 = sphi 0, %s16
    %s20 = sphi 0, %s17
    %s21 = sphi 0, %s18
    %s22 = sphi 0, %s19
    %s23 = sphi 0, %s20
    %s24 = sphi 0, %s21
    %s40 = sphi 0, %s42
    %s43 = sphi 0, %s40
    %s44 = sphi 0, %s43
    %s60 = sphi 0, %s44
    %s66 = sphi 0, %s68
    %s69 = sphi 0, %s66
    %s70 = sphi 0, %s69
    %s86 = sphi 0, %s70
    %s92 = sphi 0, %s94
    %s95 = sphi 0, %s92
    %s96 = sphi 0, %s95
    %s112 = sphi 0, %s96
    %s122 = sphi 0, %s124
    %s125 = sphi 0, %s122
    %s126 = sphi 0, %s125
    %s142 = sphi 0, %s126
  $region4: #{se_bottleneck_forward.5} parent=0 // loop_header_branch
    %12 = sbr.rel (%p10) target = $region8
  $region5: #{se_bottleneck_forward.5} parent=0 // loop_body
    %s14 = ssub.s32 %s9, 1
    %s15 = ssub.s32 %s9, 2
    %s25 = sadd.s32 1, %s18
    %p26 = scmp.ge.s32.totalorder %s25, 1
    %s27 = scalar_select %p26, 0, %s25
    %s28 = sadd.s32 1, %s17
    %s29 = scalar_select %p26, %s28, %s17
    %p30 = scmp.ge.s32.totalorder %s29, 1
    %s31 = scalar_select %p30, 0, %s29
    %s32 = sadd.s32 1, %s16
    %s33 = scalar_select %p30, %s32, %s16
    %p34 = scmp.ge.s32.totalorder %s33, 2
    %s35 = scalar_select %p34, 0, %s33
    %s36 = ssub.s32 %s16, %s35
    %s37 = ssub.s32 %s18, %s27
    %s38 = sor.u32 %s36, %s37
    %p39 = scmp.eq.s32.totalorder %s38, 0
    %s41 = sadd.s32 %s40, 1
    %s42 = scalar_select %p39, %s40, %s41
    %p45 = pneg %p39
    %p46 = scmp.eq.s32.totalorder %s9, 1
    %p47 = por %p45, %p46
    %p48 = scmp.ne.s32.totalorder %s40, %s43
    %p49 = scmp.eq.s32.totalorder %s9, 0
    %p50 = por %p48, %p49
    %p51 = scmp.ne.s32.totalorder %s40, %s43
    %p52 = scmp.eq.s32.totalorder %s14, 1
    %p53 = por %p51, %p52
    %p54 = scmp.ne.s32.totalorder %s43, %s44
    %p55 = scmp.eq.s32.totalorder %s14, 0
    %p56 = por %p54, %p55
    %p57 = scmp.ne.s32.totalorder %s43, %s44
    %p58 = scmp.eq.s32.totalorder %s15, 1
    %p59 = por %p57, %p58
    %p61 = scmp.ne.s32.totalorder %s44, %s60
    %p62 = scmp.eq.s32.totalorder %s15, 0
    %p63 = por %p61, %p62
    %s64 = ssub.s32 %s17, %s31
    %p65 = scmp.eq.s32.totalorder %s64, 0
    %s67 = sadd.s32 %s66, 1
    %s68 = scalar_select %p65, %s66, %s67
    %p71 = pneg %p65
    %p72 = scmp.eq.s32.totalorder %s9, 1
    %p73 = por %p71, %p72
    %p74 = scmp.ne.s32.totalorder %s66, %s69
    %p75 = scmp.eq.s32.totalorder %s9, 0
    %p76 = por %p74, %p75
    %p77 = scmp.ne.s32.totalorder %s66, %s69
    %p78 = scmp.eq.s32.totalorder %s14, 1
    %p79 = por %p77, %p78
    %p80 = scmp.ne.s32.totalorder %s69, %s70
    %p81 = scmp.eq.s32.totalorder %s14, 0
    %p82 = por %p80, %p81
    %p83 = scmp.ne.s32.totalorder %s69, %s70
    %p84 = scmp.eq.s32.totalorder %s15, 1
    %p85 = por %p83, %p84
    %p87 = scmp.ne.s32.totalorder %s70, %s86
    %p88 = scmp.eq.s32.totalorder %s15, 0
    %p89 = por %p87, %p88
    %s90 = ssub.s32 %s17, %s31
    %p91 = scmp.eq.s32.totalorder %s90, 0
    %s93 = sadd.s32 %s92, 1
    %s94 = scalar_select %p91, %s92, %s93
    %p97 = pneg %p91
    %p98 = scmp.eq.s32.totalorder %s9, 1
    %p99 = por %p97, %p98
    %p100 = scmp.ne.s32.totalorder %s92, %s95
    %p101 = scmp.eq.s32.totalorder %s9, 0
    %p102 = por %p100, %p101
    %p103 = scmp.ne.s32.totalorder %s92, %s95
    %p104 = scmp.eq.s32.totalorder %s14, 1
    %p105 = por %p103, %p104
    %p106 = scmp.ne.s32.totalorder %s95, %s96
    %p107 = scmp.eq.s32.totalorder %s14, 0
    %p108 = por %p106, %p107
    %p109 = scmp.ne.s32.totalorder %s95, %s96
    %p110 = scmp.eq.s32.totalorder %s15, 1
    %p111 = por %p109, %p110
    %p113 = scmp.ne.s32.totalorder %s96, %s112
    %p114 = scmp.eq.s32.totalorder %s15, 0
    %p115 = por %p113, %p114
    %s116 = ssub.s32 %s16, %s35
    %s117 = ssub.s32 %s18, %s27
    %s118 = sor.u32 %s116, %s117
    %s119 = ssub.s32 %s17, %s31
    %s120 = sor.u32 %s118, %s119
    %p121 = scmp.eq.s32.totalorder %s120, 0
    %s123 = sadd.s32 %s122, 1
    %s124 = scalar_select %p121, %s122, %s123
    %p127 = pneg %p121
    %p128 = scmp.eq.s32.totalorder %s9, 1
    %p129 = por %p127, %p128
    %p130 = scmp.ne.s32.totalorder %s122, %s125
    %p131 = scmp.eq.s32.totalorder %s9, 0
    %p132 = por %p130, %p131
    %p133 = scmp.ne.s32.totalorder %s122, %s125
    %p134 = scmp.eq.s32.totalorder %s14, 1
    %p135 = por %p133, %p134
    %p136 = scmp.ne.s32.totalorder %s125, %s126
    %p137 = scmp.eq.s32.totalorder %s14, 0
    %p138 = por %p136, %p137
    %p139 = scmp.ne.s32.totalorder %s125, %s126
    %p140 = scmp.eq.s32.totalorder %s15, 1
    %p141 = por %p139, %p140
    %p143 = scmp.ne.s32.totalorder %s126, %s142
    %p144 = scmp.eq.s32.totalorder %s15, 0
    %p145 = por %p143, %p144
    %p146 = scmp.le.s32.totalorder 1, %s9
    %p147 = scmp.lt.s32.totalorder %s9, 3
    %p148 = pnand %p146, %p147
    %p149 = pneg %p148
    // Predicated region
    $region9: #{se_bottleneck_forward.5} parent=5 // pred_check
      _
    $region10: #{se_bottleneck_forward.5} parent=5 // pred_check_branch
      %151 = sbr.rel (%p148) target = $region12
    $region11: #{se_bottleneck_forward.5} parent=5 // pred_region
      %s152 = ssub.s32 %s9, 1
      // Predicated region
      $region13: #{se_bottleneck_forward.5} parent=11 // pred_check
        %p153 = pneg %p82
      $region14: #{se_bottleneck_forward.5} parent=11 // pred_check_branch
        %155 = sbr.rel (%p153) target = $region16
      $region15: #{se_bottleneck_forward.5} parent=11 // pred_region
        %p156 = scmp.lt.s32.totalorder %s20, 0
        %s157 = scalar_select %p156, %s20, 0
        %s158 = smul.addr %s157, 4
        %s159 = scalar_lea.vmem %s1, %s158
      $region16: #{se_bottleneck_forward.5} parent=11 // pred_fallthru
        _
      // Predicated region
      $region17: #{se_bottleneck_forward.5} parent=11 // pred_check
        %p160 = pneg %p108
      $region18: #{se_bottleneck_forward.5} parent=11 // pred_check_branch
        %162 = sbr.rel (%p160) target = $region20
      $region19: #{se_bottleneck_forward.5} parent=11 // pred_region
        %p163 = scmp.lt.s32.totalorder %s20, 0
        %s164 = scalar_select %p163, %s20, 0
        %s165 = scalar_lea.vmem %s2, %s164
      $region20: #{se_bottleneck_forward.5} parent=11 // pred_fallthru
        _
    $region12: #{se_bottleneck_forward.5} parent=5 // pred_fallthru
      _
    %p166 = scmp.lt.s32.totalorder %s9, 2
    // Predicated region
    $region21: #{se_bottleneck_forward.5} parent=5 // pred_check
      %p167 = pneg %p166
    $region22: #{se_bottleneck_forward.5} parent=5 // pred_check_branch
      %169 = sbr.rel (%p167) target = $region24
    $region23: #{se_bottleneck_forward.5} parent=5 // pred_region
      // Predicated region
      $region25: #{se_bottleneck_forward.5} parent=23 // pred_check
        %p170 = pneg %p50
      $region26: #{se_bottleneck_forward.5} parent=23 // pred_check_branch
        %172 = sbr.rel (%p170) target = $region28
      $region27: #{se_bottleneck_forward.5} parent=23 // pred_region
        %s173 = smul.u32 32, %s18
        %p174 = scmp.lt.s32.totalorder %s16, 1
        %s175 = scalar_select %p174, %s16, 1
        %p176 = scmp.lt.s32.totalorder %s173, 31
        %s177 = scalar_select %p176, %s173, 31
        %s178 = smul.addr %s175, 32
        %s179 = sadd.s32 %s177, %s178
        %s180 = smul.addr %s179, 4
        %s181 = scalar_lea.vmem %s0, %s180
        %s182 = smul.u32 32, %s18
      $region28: #{se_bottleneck_forward.5} parent=23 // pred_fallthru
        _
    $region24: #{se_bottleneck_forward.5} parent=5 // pred_fallthru
      _
    %p183 = scmp.le.s32.totalorder 1, %s9
    %p184 = scmp.lt.s32.totalorder %s9, 3
    %p185 = pnand %p183, %p184
    %p186 = pneg %p185
    // Predicated region
    $region29: #{se_bottleneck_forward.5} parent=5 // pred_check
      _
    $region30: #{se_bottleneck_forward.5} parent=5 // pred_check_branch
      %188 = sbr.rel (%p185) target = $region32
    $region31: #{se_bottleneck_forward.5} parent=5 // pred_region
      %s189 = ssub.s32 %s9, 1
      %s190 = smul.u32 32, %s21
      %p191 = scmp.lt.s32.totalorder %s19, 1
      %s192 = scalar_select %p191, %s19, 1
      %p193 = scmp.lt.s32.totalorder %s190, 31
      %s194 = scalar_select %p193, %s190, 31
      %s195 = smul.addr %s192, 32
      %s196 = sadd.s32 %s194, %s195
      %s197 = smul.addr %s196, 4
      %s198 = scalar_lea.vmem %s0, %s197
      %p199 = pneg %p56
      %p200 = pneg %p53
      %p201 = scmp.lt.s32.totalorder %s20, 0
      %s202 = scalar_select %p201, %s20, 0
      %s203 = smul.addr %s202, 4
      %s204 = scalar_lea.vmem %s1, %s203
      %p205 = pneg %p82
      %p206 = pneg %p79
      %p207 = scmp.lt.s32.totalorder %s20, 0
      %s208 = scalar_select %p207, %s20, 0
      %s209 = scalar_lea.vmem %s2, %s208
      %p210 = pneg %p108
      %p211 = pneg %p105
      %p212 = pneg %p138
      %p213 = pneg %p135
      %s214 = smul.u32 32, %s21
      %p215 = scmp.lt.s32.totalorder %s19, 1
      %s216 = scalar_select %p215, %s19, 1
      %p217 = scmp.lt.s32.totalorder %s214, 31
      %s218 = scalar_select %p217, %s214, 31
      %p219 = scmp.lt.s32.totalorder %s20, 0
      %s220 = scalar_select %p219, %s20, 0
      %s221 = sadd.s32 %s220, %s218
      %s222 = smul.addr %s216, 32
      %s223 = sadd.s32 %s221, %s222
      %s224 = smul.addr %s223, 4
      %s225 = scalar_lea.vmem %s3, %s224
      %s226 = smul.u32 32, %s21
      %p227 = scmp.lt.s32.totalorder %s19, 1
      %s228 = scalar_select %p227, %s19, 1
      %p229 = scmp.lt.s32.totalorder %s226, 31
      %s230 = scalar_select %p229, %s226, 31
      %s231 = smul.addr %s228, 32
      %s232 = sadd.s32 %s230, %s231
      %s233 = smul.addr %s232, 4
      %s234 = scalar_lea.vmem %s0, %s233
      %s235 = smul.u32 32, %s21
      %p236 = scmp.lt.s32.totalorder %s20, 0
      %s237 = scalar_select %p236, %s20, 0
      %s238 = smul.addr %s237, 4
      %s239 = scalar_lea.vmem %s1, %s238
      %p240 = scmp.lt.s32.totalorder %s20, 0
      %s241 = scalar_select %p240, %s20, 0
      %s242 = scalar_lea.vmem %s2, %s241
      %s243 = smul.u32 32, %s21
      %p244 = scmp.lt.s32.totalorder %s19, 1
      %s245 = scalar_select %p244, %s19, 1
      %p246 = scmp.lt.s32.totalorder %s243, 31
      %s247 = scalar_select %p246, %s243, 31
      %p248 = scmp.lt.s32.totalorder %s20, 0
      %s249 = scalar_select %p248, %s20, 0
      %s250 = sadd.s32 %s249, %s247
      %s251 = smul.addr %s245, 32
      %s252 = sadd.s32 %s250, %s251
      %s253 = smul.addr %s252, 4
      %s254 = scalar_lea.vmem %s3, %s253
      %s255 = smul.u32 32, %s21
      %v257 = vld [vmem:[%s234] sm:$0xf]
      %v258 = vld [vmem:[%s234 + $0x4] sm:$0xf]
      %v259 = vld [vmem:[%s234 + $0x8] sm:$0xf]
      %v260 = vld [vmem:[%s234 + $0xc] sm:$0xf]
      %v261 = vld [vmem:[%s234 + $0x10] sm:$0xf]
      %v262 = vld [vmem:[%s234 + $0x14] sm:$0xf]
      %v263 = vld [vmem:[%s234 + $0x18] sm:$0xf]
      %v264 = vld [vmem:[%s234 + $0x1c] sm:$0xf]
      %v265 = vld [vmem:[%s234 + $0x20] sm:$0xf]
      %v266 = vld [vmem:[%s234 + $0x24] sm:$0xf]
      %v267 = vld [vmem:[%s234 + $0x28] sm:$0xf]
      %v268 = vld [vmem:[%s234 + $0x2c] sm:$0xf]
      %v269 = vld [vmem:[%s234 + $0x30] sm:$0xf]
      %v270 = vld [vmem:[%s234 + $0x34] sm:$0xf]
      %v271 = vld [vmem:[%s234 + $0x38] sm:$0xf]
      %v272 = vld [vmem:[%s234 + $0x3c] sm:$0xf]
      %v273 = vld [vmem:[%s234 + $0x40] sm:$0xf]
      %v274 = vld [vmem:[%s234 + $0x44] sm:$0xf]
      %v275 = vld [vmem:[%s234 + $0x48] sm:$0xf]
      %v276 = vld [vmem:[%s234 + $0x4c] sm:$0xf]
      %v277 = vld [vmem:[%s234 + $0x50] sm:$0xf]
      %v278 = vld [vmem:[%s234 + $0x54] sm:$0xf]
      %v279 = vld [vmem:[%s234 + $0x58] sm:$0xf]
      %v280 = vld [vmem:[%s234 + $0x5c] sm:$0xf]
      %v281 = vld [vmem:[%s234 + $0x60] sm:$0xf]
      %v282 = vld [vmem:[%s234 + $0x64] sm:$0xf]
      %v283 = vld [vmem:[%s234 + $0x68] sm:$0xf]
      %v284 = vld [vmem:[%s234 + $0x6c] sm:$0xf]
      %v285 = vld [vmem:[%s234 + $0x70] sm:$0xf]
      %v286 = vld [vmem:[%s234 + $0x74] sm:$0xf]
      %v287 = vld [vmem:[%s234 + $0x78] sm:$0xf]
      %v288 = vld [vmem:[%s234 + $0x7c] sm:$0xf]
      %v289 = vld [vmem:[%s239] sm:$0xf]
      %v290 = vld [vmem:[%s239 + $0x4] sm:$0xf]
      %v291 = vld [vmem:[%s239 + $0x8] sm:$0xf]
      %v292 = vld [vmem:[%s239 + $0xc] sm:$0xf]
      %v293 = vld [vmem:[%s239 + $0x10] sm:$0xf]
      %v294 = vld [vmem:[%s239 + $0x14] sm:$0xf]
      %v295 = vld [vmem:[%s239 + $0x18] sm:$0xf]
      %v296 = vld [vmem:[%s239 + $0x1c] sm:$0xf]
      %v297 = vld [vmem:[%s239 + $0x20] sm:$0xf]
      %v298 = vld [vmem:[%s239 + $0x24] sm:$0xf]
      %v299 = vld [vmem:[%s239 + $0x28] sm:$0xf]
      %v300 = vld [vmem:[%s239 + $0x2c] sm:$0xf]
      %v301 = vld [vmem:[%s239 + $0x30] sm:$0xf]
      %v302 = vld [vmem:[%s239 + $0x34] sm:$0xf]
      %v303 = vld [vmem:[%s239 + $0x38] sm:$0xf]
      %v304 = vld [vmem:[%s239 + $0x3c] sm:$0xf]
      %v305 = vld [vmem:[%s242] sm:$0x1]
      %v307 = vlaneseq
      %v308 = vshrl.u32 %v307, 7
      %v309 = vsub.s32 0, %v308
      %v310 = vrot.slane %v305, %v309
      %v344 = vunpack.c.l.b16 %v257
      %v345 = vunpack.c.l.b16 %v258
      %v346 = vunpack.c.l.b16 %v259
      %v347 = vunpack.c.l.b16 %v260
      %v348 = vunpack.c.l.b16 %v261
      %v349 = vunpack.c.l.b16 %v262
      %v350 = vunpack.c.l.b16 %v263
      %v351 = vunpack.c.l.b16 %v264
      %v352 = vunpack.c.l.b16 %v265
      %v353 = vunpack.c.l.b16 %v266
      %v354 = vunpack.c.l.b16 %v267
      %v355 = vunpack.c.l.b16 %v268
      %v356 = vunpack.c.l.b16 %v269
      %v357 = vunpack.c.l.b16 %v270
      %v358 = vunpack.c.l.b16 %v271
      %v359 = vunpack.c.l.b16 %v272
      %v360 = vunpack.c.l.b16 %v273
      %v361 = vunpack.c.l.b16 %v274
      %v362 = vunpack.c.l.b16 %v275
      %v363 = vunpack.c.l.b16 %v276
      %v364 = vunpack.c.l.b16 %v277
      %v365 = vunpack.c.l.b16 %v278
      %v366 = vunpack.c.l.b16 %v279
      %v367 = vunpack.c.l.b16 %v280
      %v368 = vunpack.c.l.b16 %v281
      %v369 = vunpack.c.l.b16 %v282
      %v370 = vunpack.c.l.b16 %v283
      %v371 = vunpack.c.l.b16 %v284
      %v372 = vunpack.c.l.b16 %v285
      %v373 = vunpack.c.l.b16 %v286
      %v374 = vunpack.c.l.b16 %v287
      %v375 = vunpack.c.l.b16 %v288
      %v376 = vpack.c.b16 %v345, %v344
      %v377 = vpack.c.b16 %v347, %v346
      %v378 = vpack.c.b16 %v349, %v348
      %v379 = vpack.c.b16 %v351, %v350
      %v380 = vpack.c.b16 %v353, %v352
      %v381 = vpack.c.b16 %v355, %v354
      %v382 = vpack.c.b16 %v357, %v356
      %v383 = vpack.c.b16 %v359, %v358
      %v384 = vpack.c.b16 %v361, %v360
      %v385 = vpack.c.b16 %v363, %v362
      %v386 = vpack.c.b16 %v365, %v364
      %v387 = vpack.c.b16 %v367, %v366
      %v388 = vpack.c.b16 %v369, %v368
      %v389 = vpack.c.b16 %v371, %v370
      %v390 = vpack.c.b16 %v373, %v372
      %v391 = vpack.c.b16 %v375, %v374
      %v424 = vunpack.c.l.b16 %v289
      %v425 = vunpack.c.l.b16 %v290
      %v426 = vunpack.c.l.b16 %v291
      %v427 = vunpack.c.l.b16 %v292
      %v428 = vunpack.c.l.b16 %v293
      %v429 = vunpack.c.l.b16 %v294
      %v430 = vunpack.c.l.b16 %v295
      %v431 = vunpack.c.l.b16 %v296
      %v432 = vunpack.c.l.b16 %v297
      %v433 = vunpack.c.l.b16 %v298
      %v434 = vunpack.c.l.b16 %v299
      %v435 = vunpack.c.l.b16 %v300
      %v436 = vunpack.c.l.b16 %v301
      %v437 = vunpack.c.l.b16 %v302
      %v438 = vunpack.c.l.b16 %v303
      %v439 = vunpack.c.l.b16 %v304
      %v440 = vpack.c.b16 %v425, %v424
      %v441 = vpack.c.b16 %v427, %v426
      %v442 = vpack.c.b16 %v429, %v428
      %v443 = vpack.c.b16 %v431, %v430
      %v444 = vpack.c.b16 %v433, %v432
      %v445 = vpack.c.b16 %v435, %v434
      %v446 = vpack.c.b16 %v437, %v436
      %v447 = vpack.c.b16 %v439, %v438
      %456 = vmatprep.subr.bf16.mxu0 0
      %457 = vmatpush1.bf16.msra.mxu0 %v440
      %458 = vmatprep.subr.bf16.mxu0 0
      %459 = vmatpush1.bf16.msra.mxu0 %v441
      %460 = vmatprep.subr.bf16.mxu0 0
      %461 = vmatpush1.bf16.msra.mxu0 %v442
      %462 = vmatprep.subr.bf16.mxu0 0
      %463 = vmatpush1.bf16.msra.mxu0 %v443
      %464 = vmatprep.subr.bf16.mxu0 0
      %465 = vmatpush1.bf16.msra.mxu0 %v444
      %466 = vmatprep.subr.bf16.mxu0 0
      %467 = vmatpush1.bf16.msra.mxu0 %v445
      %468 = vmatprep.subr.bf16.mxu0 0
      %469 = vmatpush1.bf16.msra.mxu0 %v446
      %470 = vmatprep.subr.bf16.mxu0 0
      %471 = vmatpush1.bf16.msra.mxu0 %v447
      %472 = vmatprep.subr.bf16.mxu0 0
      %473 = vmatpush1.bf16.msra.mxu0 0
      %474 = vmatprep.subr.bf16.mxu0 0
      %475 = vmatpush1.bf16.msra.mxu0 0
      %476 = vmatprep.subr.bf16.mxu0 0
      %477 = vmatpush1.bf16.msra.mxu0 0
      %478 = vmatprep.subr.bf16.mxu0 0
      %479 = vmatpush1.bf16.msra.mxu0 0
      %480 = vmatprep.subr.bf16.mxu0 0
      %481 = vmatpush1.bf16.msra.mxu0 0
      %482 = vmatprep.subr.bf16.mxu0 0
      %483 = vmatpush1.bf16.msra.mxu0 0
      %484 = vmatprep.subr.bf16.mxu0 0
      %485 = vmatpush1.bf16.msra.mxu0 0
      %486 = vmatprep.subr.bf16.mxu0 0
      %487 = vmatpush1.bf16.msra.mxu0 0
      %488 = vmatprep.mubr.bf16.mxu0 0
      %489 = vmatmul.mubr.bf16.gmra.mrb[0].mxu0 %v376
      %v490 = vpop.f32.mrb[0].mxu0
      %v491 = vadd.f32 %v310, %v490
      %v492 = vpop.f32.mrb[0].mxu0
      %v493 = vpop.f32.mrb[0].mxu0
      %v494 = vadd.f32 %v310, %v493
      %v495 = vpop.f32.mrb[0].mxu0
      %496 = vmatprep.mubr.bf16.mxu0 0
      %497 = vmatmul.mubr.bf16.gmra.mrb[0].mxu0 %v377
      %v498 = vpop.f32.mrb[0].mxu0
      %v499 = vadd.f32 %v310, %v498
      %v500 = vpop.f32.mrb[0].mxu0
      %v501 = vpop.f32.mrb[0].mxu0
      %v502 = vadd.f32 %v310, %v501
      %v503 = vpop.f32.mrb[0].mxu0
      %504 = vmatprep.mubr.bf16.mxu0 0
      %505 = vmatmul.mubr.bf16.gmra.mrb[0].mxu0 %v378
      %v506 = vpop.f32.mrb[0].mxu0
      %v507 = vadd.f32 %v310, %v506
      %v508 = vpop.f32.mrb[0].mxu0
      %v509 = vpop.f32.mrb[0].mxu0
      %v510 = vadd.f32 %v310, %v509
      %v511 = vpop.f32.mrb[0].mxu0
      %512 = vmatprep.mubr.bf16.mxu0 0
      %513 = vmatmul.mubr.bf16.gmra.mrb[0].mxu0 %v379
      %v514 = vpop.f32.mrb[0].mxu0
      %v515 = vadd.f32 %v310, %v514
      %v516 = vpop.f32.mrb[0].mxu0
      %v517 = vpop.f32.mrb[0].mxu0
      %v518 = vadd.f32 %v310, %v517
      %v519 = vpop.f32.mrb[0].mxu0
      %520 = vmatprep.mubr.bf16.mxu0 0
      %521 = vmatmul.mubr.bf16.gmra.mrb[0].mxu0 %v380
      %v522 = vpop.f32.mrb[0].mxu0
      %v523 = vadd.f32 %v310, %v522
      %v524 = vpop.f32.mrb[0].mxu0
      %v525 = vpop.f32.mrb[0].mxu0
      %v526 = vadd.f32 %v310, %v525
      %v527 = vpop.f32.mrb[0].mxu0
      %528 = vmatprep.mubr.bf16.mxu0 0
      %529 = vmatmul.mubr.bf16.gmra.mrb[0].mxu0 %v381
      %v530 = vpop.f32.mrb[0].mxu0
      %v531 = vadd.f32 %v310, %v530
      %v532 = vpop.f32.mrb[0].mxu0
      %v533 = vpop.f32.mrb[0].mxu0
      %v534 = vadd.f32 %v310, %v533
      %v535 = vpop.f32.mrb[0].mxu0
      %536 = vmatprep.mubr.bf16.mxu0 0
      %537 = vmatmul.mubr.bf16.gmra.mrb[0].mxu0 %v382
      %v538 = vpop.f32.mrb[0].mxu0
      %v539 = vadd.f32 %v310, %v538
      %v540 = vpop.f32.mrb[0].mxu0
      %v541 = vpop.f32.mrb[0].mxu0
      %v542 = vadd.f32 %v310, %v541
      %v543 = vpop.f32.mrb[0].mxu0
      %544 = vmatprep.mubr.bf16.mxu0 0
      %545 = vmatmul.mubr.bf16.gmra.mrb[0].mxu0 %v383
      %v546 = vpop.f32.mrb[0].mxu0
      %v547 = vadd.f32 %v310, %v546
      %v548 = vpop.f32.mrb[0].mxu0
      %v549 = vpop.f32.mrb[0].mxu0
      %v550 = vadd.f32 %v310, %v549
      %v551 = vpop.f32.mrb[0].mxu0
      %552 = vmatprep.mubr.bf16.mxu0 0
      %553 = vmatmul.mubr.bf16.gmra.mrb[0].mxu0 %v384
      %v554 = vpop.f32.mrb[0].mxu0
      %v555 = vadd.f32 %v310, %v554
      %v556 = vpop.f32.mrb[0].mxu0
      %v557 = vpop.f32.mrb[0].mxu0
      %v558 = vadd.f32 %v310, %v557
      %v559 = vpop.f32.mrb[0].mxu0
      %560 = vmatprep.mubr.bf16.mxu0 0
      %561 = vmatmul.mubr.bf16.gmra.mrb[0].mxu0 %v385
      %v562 = vpop.f32.mrb[0].mxu0
      %v563 = vadd.f32 %v310, %v562
      %v564 = vpop.f32.mrb[0].mxu0
      %v565 = vpop.f32.mrb[0].mxu0
      %v566 = vadd.f32 %v310, %v565
      %v567 = vpop.f32.mrb[0].mxu0
      %568 = vmatprep.mubr.bf16.mxu0 0
      %569 = vmatmul.mubr.bf16.gmra.mrb[0].mxu0 %v386
      %v570 = vpop.f32.mrb[0].mxu0
      %v571 = vadd.f32 %v310, %v570
      %v572 = vpop.f32.mrb[0].mxu0
      %v573 = vpop.f32.mrb[0].mxu0
      %v574 = vadd.f32 %v310, %v573
      %v575 = vpop.f32.mrb[0].mxu0
      %576 = vmatprep.mubr.bf16.mxu0 0
      %577 = vmatmul.mubr.bf16.gmra.mrb[0].mxu0 %v387
      %v578 = vpop.f32.mrb[0].mxu0
      %v579 = vadd.f32 %v310, %v578
      %v580 = vpop.f32.mrb[0].mxu0
      %v581 = vpop.f32.mrb[0].mxu0
      %v582 = vadd.f32 %v310, %v581
      %v583 = vpop.f32.mrb[0].mxu0
      %584 = vmatprep.mubr.bf16.mxu0 0
      %585 = vmatmul.mubr.bf16.gmra.mrb[0].mxu0 %v388
      %v586 = vpop.f32.mrb[0].mxu0
      %v587 = vadd.f32 %v310, %v586
      %v588 = vpop.f32.mrb[0].mxu0
      %v589 = vpop.f32.mrb[0].mxu0
      %v590 = vadd.f32 %v310, %v589
      %v591 = vpop.f32.mrb[0].mxu0
      %592 = vmatprep.mubr.bf16.mxu0 0
      %593 = vmatmul.mubr.bf16.gmra.mrb[0].mxu0 %v389
      %v594 = vpop.f32.mrb[0].mxu0
      %v595 = vadd.f32 %v310, %v594
      %v596 = vpop.f32.mrb[0].mxu0
      %v597 = vpop.f32.mrb[0].mxu0
      %v598 = vadd.f32 %v310, %v597
      %v599 = vpop.f32.mrb[0].mxu0
      %600 = vmatprep.mubr.bf16.mxu0 0
      %601 = vmatmul.mubr.bf16.gmra.mrb[0].mxu0 %v390
      %v602 = vpop.f32.mrb[0].mxu0
      %v603 = vadd.f32 %v310, %v602
      %v604 = vpop.f32.mrb[0].mxu0
      %v605 = vpop.f32.mrb[0].mxu0
      %v606 = vadd.f32 %v310, %v605
      %v607 = vpop.f32.mrb[0].mxu0
      %608 = vmatprep.mubr.bf16.mxu0 0
      %609 = vmatmul.mubr.bf16.gmra.mrb[0].mxu0 %v391
      %v610 = vpop.f32.mrb[0].mxu0
      %v611 = vadd.f32 %v310, %v610
      %v612 = vpop.f32.mrb[0].mxu0
      %v613 = vpop.f32.mrb[0].mxu0
      %v614 = vadd.f32 %v310, %v613
      %v615 = vpop.f32.mrb[0].mxu0
      %616 = vdwg.mxu0
      %v617 = vmax.f32 %v491, 0.0
      %v618 = vmax.f32 %v494, 0.0
      %v619 = vmax.f32 %v499, 0.0
      %v620 = vmax.f32 %v502, 0.0
      %v621 = vmax.f32 %v507, 0.0
      %v622 = vmax.f32 %v510, 0.0
      %v623 = vmax.f32 %v515, 0.0
      %v624 = vmax.f32 %v518, 0.0
      %v625 = vmax.f32 %v523, 0.0
      %v626 = vmax.f32 %v526, 0.0
      %v627 = vmax.f32 %v531, 0.0
      %v628 = vmax.f32 %v534, 0.0
      %v629 = vmax.f32 %v539, 0.0
      %v630 = vmax.f32 %v542, 0.0
      %v631 = vmax.f32 %v547, 0.0
      %v632 = vmax.f32 %v550, 0.0
      %v633 = vmax.f32 %v555, 0.0
      %v634 = vmax.f32 %v558, 0.0
      %v635 = vmax.f32 %v563, 0.0
      %v636 = vmax.f32 %v566, 0.0
      %v637 = vmax.f32 %v571, 0.0
      %v638 = vmax.f32 %v574, 0.0
      %v639 = vmax.f32 %v579, 0.0
      %v640 = vmax.f32 %v582, 0.0
      %v641 = vmax.f32 %v587, 0.0
      %v642 = vmax.f32 %v590, 0.0
      %v643 = vmax.f32 %v595, 0.0
      %v644 = vmax.f32 %v598, 0.0
      %v645 = vmax.f32 %v603, 0.0
      %v646 = vmax.f32 %v606, 0.0
      %v647 = vmax.f32 %v611, 0.0
      %v648 = vmax.f32 %v614, 0.0
      %v649 = vpack.c.bf16 %v618, %v617
      %v650 = vpack.c.bf16 %v620, %v619
      %v651 = vpack.c.bf16 %v622, %v621
      %v652 = vpack.c.bf16 %v624, %v623
      %v653 = vpack.c.bf16 %v626, %v625
      %v654 = vpack.c.bf16 %v628, %v627
      %v655 = vpack.c.bf16 %v630, %v629
      %v656 = vpack.c.bf16 %v632, %v631
      %v657 = vpack.c.bf16 %v634, %v633
      %v658 = vpack.c.bf16 %v636, %v635
      %v659 = vpack.c.bf16 %v638, %v637
      %v660 = vpack.c.bf16 %v640, %v639
      %v661 = vpack.c.bf16 %v642, %v641
      %v662 = vpack.c.bf16 %v644, %v643
      %v663 = vpack.c.bf16 %v646, %v645
      %v664 = vpack.c.bf16 %v648, %v647
      %v681 = vunpack.c.l.b16 %v649
      %v682 = vunpack.c.h.b16 %v649
      %v683 = vunpack.c.l.b16 %v650
      %v684 = vunpack.c.h.b16 %v650
      %v685 = vunpack.c.l.b16 %v651
      %v686 = vunpack.c.h.b16 %v651
      %v687 = vunpack.c.l.b16 %v652
      %v688 = vunpack.c.h.b16 %v652
      %v689 = vunpack.c.l.b16 %v653
      %v690 = vunpack.c.h.b16 %v653
      %v691 = vunpack.c.l.b16 %v654
      %v692 = vunpack.c.h.b16 %v654
      %v693 = vunpack.c.l.b16 %v655
      %v694 = vunpack.c.h.b16 %v655
      %v695 = vunpack.c.l.b16 %v656
      %v696 = vunpack.c.h.b16 %v656
      %v697 = vunpack.c.l.b16 %v657
      %v698 = vunpack.c.h.b16 %v657
      %v699 = vunpack.c.l.b16 %v658
      %v700 = vunpack.c.h.b16 %v658
      %v701 = vunpack.c.l.b16 %v659
      %v702 = vunpack.c.h.b16 %v659
      %v703 = vunpack.c.l.b16 %v660
      %v704 = vunpack.c.h.b16 %v660
      %v705 = vunpack.c.l.b16 %v661
      %v706 = vunpack.c.h.b16 %v661
      %v707 = vunpack.c.l.b16 %v662
      %v708 = vunpack.c.h.b16 %v662
      %v709 = vunpack.c.l.b16 %v663
      %v710 = vunpack.c.h.b16 %v663
      %v711 = vunpack.c.l.b16 %v664
      %v712 = vunpack.c.h.b16 %v664
      %v713 = vpack.c.b16 %v681, %v681
      %v714 = vpack.c.b16 %v682, %v682
      %v715 = vpack.c.b16 %v683, %v683
      %v716 = vpack.c.b16 %v684, %v684
      %v717 = vpack.c.b16 %v685, %v685
      %v718 = vpack.c.b16 %v686, %v686
      %v719 = vpack.c.b16 %v687, %v687
      %v720 = vpack.c.b16 %v688, %v688
      %v721 = vpack.c.b16 %v689, %v689
      %v722 = vpack.c.b16 %v690, %v690
      %v723 = vpack.c.b16 %v691, %v691
      %v724 = vpack.c.b16 %v692, %v692
      %v725 = vpack.c.b16 %v693, %v693
      %v726 = vpack.c.b16 %v694, %v694
      %v727 = vpack.c.b16 %v695, %v695
      %v728 = vpack.c.b16 %v696, %v696
      %v729 = vpack.c.b16 %v697, %v697
      %v730 = vpack.c.b16 %v698, %v698
      %v731 = vpack.c.b16 %v699, %v699
      %v732 = vpack.c.b16 %v700, %v700
      %v733 = vpack.c.b16 %v701, %v701
      %v734 = vpack.c.b16 %v702, %v702
      %v735 = vpack.c.b16 %v703, %v703
      %v736 = vpack.c.b16 %v704, %v704
      %v737 = vpack.c.b16 %v705, %v705
      %v738 = vpack.c.b16 %v706, %v706
      %v739 = vpack.c.b16 %v707, %v707
      %v740 = vpack.c.b16 %v708, %v708
      %v741 = vpack.c.b16 %v709, %v709
      %v742 = vpack.c.b16 %v710, %v710
      %v743 = vpack.c.b16 %v711, %v711
      %v744 = vpack.c.b16 %v712, %v712
      %777 = vst [vmem:[%s254] sm:$0xf] %v713
      %778 = vst [vmem:[%s254 + $0x4] sm:$0xf] %v714
      %779 = vst [vmem:[%s254 + $0x8] sm:$0xf] %v715
      %780 = vst [vmem:[%s254 + $0xc] sm:$0xf] %v716
      %781 = vst [vmem:[%s254 + $0x10] sm:$0xf] %v717
      %782 = vst [vmem:[%s254 + $0x14] sm:$0xf] %v718
      %783 = vst [vmem:[%s254 + $0x18] sm:$0xf] %v719
      %784 = vst [vmem:[%s254 + $0x1c] sm:$0xf] %v720
      %785 = vst [vmem:[%s254 + $0x20] sm:$0xf] %v721
      %786 = vst [vmem:[%s254 + $0x24] sm:$0xf] %v722
      %787 = vst [vmem:[%s254 + $0x28] sm:$0xf] %v723
      %788 = vst [vmem:[%s254 + $0x2c] sm:$0xf] %v724
      %789 = vst [vmem:[%s254 + $0x30] sm:$0xf] %v725
      %790 = vst [vmem:[%s254 + $0x34] sm:$0xf] %v726
      %791 = vst [vmem:[%s254 + $0x38] sm:$0xf] %v727
      %792 = vst [vmem:[%s254 + $0x3c] sm:$0xf] %v728
      %793 = vst [vmem:[%s254 + $0x40] sm:$0xf] %v729
      %794 = vst [vmem:[%s254 + $0x44] sm:$0xf] %v730
      %795 = vst [vmem:[%s254 + $0x48] sm:$0xf] %v731
      %796 = vst [vmem:[%s254 + $0x4c] sm:$0xf] %v732
      %797 = vst [vmem:[%s254 + $0x50] sm:$0xf] %v733
      %798 = vst [vmem:[%s254 + $0x54] sm:$0xf] %v734
      %799 = vst [vmem:[%s254 + $0x58] sm:$0xf] %v735
      %800 = vst [vmem:[%s254 + $0x5c] sm:$0xf] %v736
      %801 = vst [vmem:[%s254 + $0x60] sm:$0xf] %v737
      %802 = vst [vmem:[%s254 + $0x64] sm:$0xf] %v738
      %803 = vst [vmem:[%s254 + $0x68] sm:$0xf] %v739
      %804 = vst [vmem:[%s254 + $0x6c] sm:$0xf] %v740
      %805 = vst [vmem:[%s254 + $0x70] sm:$0xf] %v741
      %806 = vst [vmem:[%s254 + $0x74] sm:$0xf] %v742
      %807 = vst [vmem:[%s254 + $0x78] sm:$0xf] %v743
      %808 = vst [vmem:[%s254 + $0x7c] sm:$0xf] %v744
      %s809 = smul.u32 32, %s21
      %p810 = scmp.lt.s32.totalorder %s19, 1
      %s811 = scalar_select %p810, %s19, 1
      %p812 = scmp.lt.s32.totalorder %s809, 31
      %s813 = scalar_select %p812, %s809, 31
      %p814 = scmp.lt.s32.totalorder %s20, 0
      %s815 = scalar_select %p814, %s20, 0
      %s816 = sadd.s32 %s815, %s813
      %s817 = smul.addr %s811, 32
      %s818 = sadd.s32 %s816, %s817
      %s819 = smul.addr %s818, 4
      %s820 = scalar_lea.vmem %s3, %s819
      // Predicated region
      $region33: #{se_bottleneck_forward.5} parent=31 // pred_check
        %p821 = pneg %p135
      $region34: #{se_bottleneck_forward.5} parent=31 // pred_check_branch
        %823 = sbr.rel (%p821) target = $region36
      $region35: #{se_bottleneck_forward.5} parent=31 // pred_region
        %s824 = smul.u32 32, %s21
      $region36: #{se_bottleneck_forward.5} parent=31 // pred_fallthru
        _
    $region32: #{se_bottleneck_forward.5} parent=5 // pred_fallthru
      _
    %p825 = scmp.le.s32.totalorder 2, %s9
    // Predicated region
    $region37: #{se_bottleneck_forward.5} parent=5 // pred_check
      %p826 = pneg %p825
    $region38: #{se_bottleneck_forward.5} parent=5 // pred_check_branch
      %828 = sbr.rel (%p826) target = $region40
    $region39: #{se_bottleneck_forward.5} parent=5 // pred_region
      %s829 = ssub.s32 %s9, 2
      // Predicated region
      $region41: #{se_bottleneck_forward.5} parent=39 // pred_check
        %p830 = pneg %p141
      $region42: #{se_bottleneck_forward.5} parent=39 // pred_check_branch
        %832 = sbr.rel (%p830) target = $region44
      $region43: #{se_bottleneck_forward.5} parent=39 // pred_region
        %s833 = smul.u32 32, %s24
        %p834 = scmp.lt.s32.totalorder %s22, 1
        %s835 = scalar_select %p834, %s22, 1
        %p836 = scmp.lt.s32.totalorder %s833, 31
        %s837 = scalar_select %p836, %s833, 31
        %p838 = scmp.lt.s32.totalorder %s23, 0
        %s839 = scalar_select %p838, %s23, 0
        %s840 = sadd.s32 %s839, %s837
        %s841 = smul.addr %s835, 32
        %s842 = sadd.s32 %s840, %s841
        %s843 = smul.addr %s842, 4
        %s844 = scalar_lea.vmem %s3, %s843
      $region44: #{se_bottleneck_forward.5} parent=39 // pred_fallthru
        _
    $region40: #{se_bottleneck_forward.5} parent=5 // pred_fallthru
      _
  $region6: #{se_bottleneck_forward.5} parent=0 // loop_footer
    %s13 = sadd.s32 1, %s9
  $region7: #{se_bottleneck_forward.5} parent=0 // loop_footer_branch
    %8 = sbr.rel target = $region3
  $region8: #{se_bottleneck_forward.5} parent=0 // loop_exit
    _

// kernel: se_bottleneck_forward.7
$region0: #{se_bottleneck_forward.7}
  #allocation0 [shape = 'u32[]', space=smem, size = 0x4, offset = 0x4, fixed_abs, tag = 'smem constant byte address 0x4 - core index']
  #allocation1 [shape = 'u32[144,128]{1,0:T(1,128)}', space=vmem, size = 0x12000, scoped, tag = 'internal scratch']
  %s0 = inlined_call_operand.vmem [shape: bf16[2,256,128], index: 0, kind: input, shape index: {}]
  %s1 = inlined_call_operand.vmem [shape: bf16[128,128], index: 1, kind: input, shape index: {}]
  %s2 = inlined_call_operand.vmem [shape: f32[1,128], index: 2, kind: input, shape index: {}]
  %s3 = inlined_call_operand.vmem [shape: bf16[2,256,128], index: 3, kind: output, shape index: {0}]
  %s4 = inlined_call_operand.vmem [shape: f32[2,1,128], index: 4, kind: output, shape index: {1}]
  %5 = xla_tuple %s3, %s4
  %s6 = sld [smem:[#allocation0]]
  $region57: #{se_bottleneck_forward.7} parent=0
    _
  %s8 = ssub.s32 1, %s6
  %s9 = scalar_select 0, %s8, %s6
  loop: start=0, step=1, limit=4
  $region2: #{se_bottleneck_forward.7} parent=0 // loop_pre_header
    _
  $region3: #{se_bottleneck_forward.7} parent=0 // loop_header
    %s11 = sphi 0, %s15
    %p12 = scmp.ge.s32.totalorder %s11, 4
    %s18 = sphi 0, %s37
    %s19 = sphi 0, %s33
    %s20 = sphi 0, %s29
    %s21 = sphi 0, %s18
    %s22 = sphi 0, %s19
    %s23 = sphi 0, %s20
    %s24 = sphi 0, %s21
    %s25 = sphi 0, %s22
    %s26 = sphi 0, %s23
    %s42 = sphi 0, %s44
    %s45 = sphi 0, %s42
    %s46 = sphi 0, %s45
    %s62 = sphi 0, %s46
    %s68 = sphi 0, %s70
    %s71 = sphi 0, %s68
    %s72 = sphi 0, %s71
    %s88 = sphi 0, %s72
    %s94 = sphi 0, %s96
    %s97 = sphi 0, %s94
    %s98 = sphi 0, %s97
    %s114 = sphi 0, %s98
    %s124 = sphi 0, %s126
    %s127 = sphi 0, %s124
    %s128 = sphi 0, %s127
    %s144 = sphi 0, %s128
    %s152 = sphi 0, %s154
    %s155 = sphi 0, %s152
    %s156 = sphi 0, %s155
    %s172 = sphi 0, %s156
  $region4: #{se_bottleneck_forward.7} parent=0 // loop_header_branch
    %14 = sbr.rel (%p12) target = $region8
  $region5: #{se_bottleneck_forward.7} parent=0 // loop_body
    %s16 = ssub.s32 %s11, 1
    %s17 = ssub.s32 %s11, 2
    %s27 = sadd.s32 1, %s20
    %p28 = scmp.ge.s32.totalorder %s27, 1
    %s29 = scalar_select %p28, 0, %s27
    %s30 = sadd.s32 1, %s19
    %s31 = scalar_select %p28, %s30, %s19
    %p32 = scmp.ge.s32.totalorder %s31, 1
    %s33 = scalar_select %p32, 0, %s31
    %s34 = sadd.s32 1, %s18
    %s35 = scalar_select %p32, %s34, %s18
    %p36 = scmp.ge.s32.totalorder %s35, 2
    %s37 = scalar_select %p36, 0, %s35
    %s38 = ssub.s32 %s18, %s37
    %s39 = ssub.s32 %s20, %s29
    %s40 = sor.u32 %s38, %s39
    %p41 = scmp.eq.s32.totalorder %s40, 0
    %s43 = sadd.s32 %s42, 1
    %s44 = scalar_select %p41, %s42, %s43
    %p47 = pneg %p41
    %p48 = scmp.eq.s32.totalorder %s11, 1
    %p49 = por %p47, %p48
    %p50 = scmp.ne.s32.totalorder %s42, %s45
    %p51 = scmp.eq.s32.totalorder %s11, 0
    %p52 = por %p50, %p51
    %p53 = scmp.ne.s32.totalorder %s42, %s45
    %p54 = scmp.eq.s32.totalorder %s16, 1
    %p55 = por %p53, %p54
    %p56 = scmp.ne.s32.totalorder %s45, %s46
    %p57 = scmp.eq.s32.totalorder %s16, 0
    %p58 = por %p56, %p57
    %p59 = scmp.ne.s32.totalorder %s45, %s46
    %p60 = scmp.eq.s32.totalorder %s17, 1
    %p61 = por %p59, %p60
    %p63 = scmp.ne.s32.totalorder %s46, %s62
    %p64 = scmp.eq.s32.totalorder %s17, 0
    %p65 = por %p63, %p64
    %s66 = ssub.s32 %s19, %s33
    %p67 = scmp.eq.s32.totalorder %s66, 0
    %s69 = sadd.s32 %s68, 1
    %s70 = scalar_select %p67, %s68, %s69
    %p73 = pneg %p67
    %p74 = scmp.eq.s32.totalorder %s11, 1
    %p75 = por %p73, %p74
    %p76 = scmp.ne.s32.totalorder %s68, %s71
    %p77 = scmp.eq.s32.totalorder %s11, 0
    %p78 = por %p76, %p77
    %p79 = scmp.ne.s32.totalorder %s68, %s71
    %p80 = scmp.eq.s32.totalorder %s16, 1
    %p81 = por %p79, %p80
    %p82 = scmp.ne.s32.totalorder %s71, %s72
    %p83 = scmp.eq.s32.totalorder %s16, 0
    %p84 = por %p82, %p83
    %p85 = scmp.ne.s32.totalorder %s71, %s72
    %p86 = scmp.eq.s32.totalorder %s17, 1
    %p87 = por %p85, %p86
    %p89 = scmp.ne.s32.totalorder %s72, %s88
    %p90 = scmp.eq.s32.totalorder %s17, 0
    %p91 = por %p89, %p90
    %s92 = ssub.s32 %s19, %s33
    %p93 = scmp.eq.s32.totalorder %s92, 0
    %s95 = sadd.s32 %s94, 1
    %s96 = scalar_select %p93, %s94, %s95
    %p99 = pneg %p93
    %p100 = scmp.eq.s32.totalorder %s11, 1
    %p101 = por %p99, %p100
    %p102 = scmp.ne.s32.totalorder %s94, %s97
    %p103 = scmp.eq.s32.totalorder %s11, 0
    %p104 = por %p102, %p103
    %p105 = scmp.ne.s32.totalorder %s94, %s97
    %p106 = scmp.eq.s32.totalorder %s16, 1
    %p107 = por %p105, %p106
    %p108 = scmp.ne.s32.totalorder %s97, %s98
    %p109 = scmp.eq.s32.totalorder %s16, 0
    %p110 = por %p108, %p109
    %p111 = scmp.ne.s32.totalorder %s97, %s98
    %p112 = scmp.eq.s32.totalorder %s17, 1
    %p113 = por %p111, %p112
    %p115 = scmp.ne.s32.totalorder %s98, %s114
    %p116 = scmp.eq.s32.totalorder %s17, 0
    %p117 = por %p115, %p116
    %s118 = ssub.s32 %s18, %s37
    %s119 = ssub.s32 %s20, %s29
    %s120 = sor.u32 %s118, %s119
    %s121 = ssub.s32 %s19, %s33
    %s122 = sor.u32 %s120, %s121
    %p123 = scmp.eq.s32.totalorder %s122, 0
    %s125 = sadd.s32 %s124, 1
    %s126 = scalar_select %p123, %s124, %s125
    %p129 = pneg %p123
    %p130 = scmp.eq.s32.totalorder %s11, 1
    %p131 = por %p129, %p130
    %p132 = scmp.ne.s32.totalorder %s124, %s127
    %p133 = scmp.eq.s32.totalorder %s11, 0
    %p134 = por %p132, %p133
    %p135 = scmp.ne.s32.totalorder %s124, %s127
    %p136 = scmp.eq.s32.totalorder %s16, 1
    %p137 = por %p135, %p136
    %p138 = scmp.ne.s32.totalorder %s127, %s128
    %p139 = scmp.eq.s32.totalorder %s16, 0
    %p140 = por %p138, %p139
    %p141 = scmp.ne.s32.totalorder %s127, %s128
    %p142 = scmp.eq.s32.totalorder %s17, 1
    %p143 = por %p141, %p142
    %p145 = scmp.ne.s32.totalorder %s128, %s144
    %p146 = scmp.eq.s32.totalorder %s17, 0
    %p147 = por %p145, %p146
    %s148 = ssub.s32 %s18, %s37
    %s149 = ssub.s32 %s19, %s33
    %s150 = sor.u32 %s148, %s149
    %p151 = scmp.eq.s32.totalorder %s150, 0
    %s153 = sadd.s32 %s152, 1
    %s154 = scalar_select %p151, %s152, %s153
    %p157 = pneg %p151
    %p158 = scmp.eq.s32.totalorder %s11, 1
    %p159 = por %p157, %p158
    %p160 = scmp.ne.s32.totalorder %s152, %s155
    %p161 = scmp.eq.s32.totalorder %s11, 0
    %p162 = por %p160, %p161
    %p163 = scmp.ne.s32.totalorder %s152, %s155
    %p164 = scmp.eq.s32.totalorder %s16, 1
    %p165 = por %p163, %p164
    %p166 = scmp.ne.s32.totalorder %s155, %s156
    %p167 = scmp.eq.s32.totalorder %s16, 0
    %p168 = por %p166, %p167
    %p169 = scmp.ne.s32.totalorder %s155, %s156
    %p170 = scmp.eq.s32.totalorder %s17, 1
    %p171 = por %p169, %p170
    %p173 = scmp.ne.s32.totalorder %s156, %s172
    %p174 = scmp.eq.s32.totalorder %s17, 0
    %p175 = por %p173, %p174
    %p176 = scmp.le.s32.totalorder 1, %s11
    %p177 = scmp.lt.s32.totalorder %s11, 3
    %p178 = pnand %p176, %p177
    %p179 = pneg %p178
    // Predicated region
    $region9: #{se_bottleneck_forward.7} parent=5 // pred_check
      _
    $region10: #{se_bottleneck_forward.7} parent=5 // pred_check_branch
      %181 = sbr.rel (%p178) target = $region12
    $region11: #{se_bottleneck_forward.7} parent=5 // pred_region
      %s182 = ssub.s32 %s11, 1
      // Predicated region
      $region13: #{se_bottleneck_forward.7} parent=11 // pred_check
        %p183 = pneg %p84
      $region14: #{se_bottleneck_forward.7} parent=11 // pred_check_branch
        %185 = sbr.rel (%p183) target = $region16
      $region15: #{se_bottleneck_forward.7} parent=11 // pred_region
        %p186 = scmp.lt.s32.totalorder %s22, 0
        %s187 = scalar_select %p186, %s22, 0
        %s188 = smul.addr %s187, 4
        %s189 = scalar_lea.vmem %s1, %s188
      $region16: #{se_bottleneck_forward.7} parent=11 // pred_fallthru
        _
      // Predicated region
      $region17: #{se_bottleneck_forward.7} parent=11 // pred_check
        %p190 = pneg %p110
      $region18: #{se_bottleneck_forward.7} parent=11 // pred_check_branch
        %192 = sbr.rel (%p190) target = $region20
      $region19: #{se_bottleneck_forward.7} parent=11 // pred_region
        %p193 = scmp.lt.s32.totalorder %s22, 0
        %s194 = scalar_select %p193, %s22, 0
        %s195 = scalar_lea.vmem %s2, %s194
      $region20: #{se_bottleneck_forward.7} parent=11 // pred_fallthru
        _
    $region12: #{se_bottleneck_forward.7} parent=5 // pred_fallthru
      _
    %p196 = scmp.lt.s32.totalorder %s11, 2
    // Predicated region
    $region21: #{se_bottleneck_forward.7} parent=5 // pred_check
      %p197 = pneg %p196
    $region22: #{se_bottleneck_forward.7} parent=5 // pred_check_branch
      %199 = sbr.rel (%p197) target = $region24
    $region23: #{se_bottleneck_forward.7} parent=5 // pred_region
      // Predicated region
      $region25: #{se_bottleneck_forward.7} parent=23 // pred_check
        %p200 = pneg %p52
      $region26: #{se_bottleneck_forward.7} parent=23 // pred_check_branch
        %202 = sbr.rel (%p200) target = $region28
      $region27: #{se_bottleneck_forward.7} parent=23 // pred_region
        %s203 = smul.u32 32, %s20
        %p204 = scmp.lt.s32.totalorder %s18, 1
        %s205 = scalar_select %p204, %s18, 1
        %p206 = scmp.lt.s32.totalorder %s203, 31
        %s207 = scalar_select %p206, %s203, 31
        %s208 = smul.addr %s205, 32
        %s209 = sadd.s32 %s207, %s208
        %s210 = smul.addr %s209, 4
        %s211 = scalar_lea.vmem %s0, %s210
        %s212 = smul.u32 32, %s20
      $region28: #{se_bottleneck_forward.7} parent=23 // pred_fallthru
        _
    $region24: #{se_bottleneck_forward.7} parent=5 // pred_fallthru
      _
    %p213 = scmp.le.s32.totalorder 1, %s11
    %p214 = scmp.lt.s32.totalorder %s11, 3
    %p215 = pnand %p213, %p214
    %p216 = pneg %p215
    // Predicated region
    $region29: #{se_bottleneck_forward.7} parent=5 // pred_check
      _
    $region30: #{se_bottleneck_forward.7} parent=5 // pred_check_branch
      %218 = sbr.rel (%p215) target = $region32
    $region31: #{se_bottleneck_forward.7} parent=5 // pred_region
      %s219 = ssub.s32 %s11, 1
      %s220 = smul.u32 32, %s23
      %p221 = scmp.lt.s32.totalorder %s21, 1
      %s222 = scalar_select %p221, %s21, 1
      %p223 = scmp.lt.s32.totalorder %s220, 31
      %s224 = scalar_select %p223, %s220, 31
      %s225 = smul.addr %s222, 32
      %s226 = sadd.s32 %s224, %s225
      %s227 = smul.addr %s226, 4
      %s228 = scalar_lea.vmem %s0, %s227
      %p229 = pneg %p58
      %p230 = pneg %p55
      %p231 = scmp.lt.s32.totalorder %s22, 0
      %s232 = scalar_select %p231, %s22, 0
      %s233 = smul.addr %s232, 4
      %s234 = scalar_lea.vmem %s1, %s233
      %p235 = pneg %p84
      %p236 = pneg %p81
      %p237 = scmp.lt.s32.totalorder %s22, 0
      %s238 = scalar_select %p237, %s22, 0
      %s239 = scalar_lea.vmem %s2, %s238
      %p240 = pneg %p110
      %p241 = pneg %p107
      %p242 = pneg %p140
      %p243 = pneg %p137
      %s244 = smul.u32 32, %s23
      %p245 = scmp.lt.s32.totalorder %s21, 1
      %s246 = scalar_select %p245, %s21, 1
      %p247 = scmp.lt.s32.totalorder %s244, 31
      %s248 = scalar_select %p247, %s244, 31
      %p249 = scmp.lt.s32.totalorder %s22, 0
      %s250 = scalar_select %p249, %s22, 0
      %s251 = sadd.s32 %s250, %s248
      %s252 = smul.addr %s246, 32
      %s253 = sadd.s32 %s251, %s252
      %s254 = smul.addr %s253, 4
      %s255 = scalar_lea.vmem %s3, %s254
      %p256 = pneg %p168
      %p257 = pneg %p165
      %p258 = scmp.lt.s32.totalorder %s21, 1
      %s259 = scalar_select %p258, %s21, 1
      %p260 = scmp.lt.s32.totalorder %s22, 0
      %s261 = scalar_select %p260, %s22, 0
      %s262 = sadd.s32 %s261, %s259
      %s263 = scalar_lea.vmem %s4, %s262
      %s264 = smul.u32 32, %s23
      %p265 = scmp.lt.s32.totalorder %s21, 1
      %s266 = scalar_select %p265, %s21, 1
      %p267 = scmp.lt.s32.totalorder %s264, 31
      %s268 = scalar_select %p267, %s264, 31
      %s269 = smul.addr %s266, 32
      %s270 = sadd.s32 %s268, %s269
      %s271 = smul.addr %s270, 4
      %s272 = scalar_lea.vmem %s0, %s271
      %s273 = smul.u32 32, %s23
      %p274 = scmp.lt.s32.totalorder %s22, 0
      %s275 = scalar_select %p274, %s22, 0
      %s276 = smul.addr %s275, 4
      %s277 = scalar_lea.vmem %s1, %s276
      %p278 = scmp.lt.s32.totalorder %s22, 0
      %s279 = scalar_select %p278, %s22, 0
      %s280 = scalar_lea.vmem %s2, %s279
      %s281 = smul.u32 32, %s23
      %p282 = scmp.lt.s32.totalorder %s21, 1
      %s283 = scalar_select %p282, %s21, 1
      %p284 = scmp.lt.s32.totalorder %s281, 31
      %s285 = scalar_select %p284, %s281, 31
      %p286 = scmp.lt.s32.totalorder %s22, 0
      %s287 = scalar_select %p286, %s22, 0
      %s288 = sadd.s32 %s287, %s285
      %s289 = smul.addr %s283, 32
      %s290 = sadd.s32 %s288, %s289
      %s291 = smul.addr %s290, 4
      %s292 = scalar_lea.vmem %s3, %s291
      %s293 = smul.u32 32, %s23
      %p294 = scmp.lt.s32.totalorder %s21, 1
      %s295 = scalar_select %p294, %s21, 1
      %p296 = scmp.lt.s32.totalorder %s22, 0
      %s297 = scalar_select %p296, %s22, 0
      %s298 = sadd.s32 %s297, %s295
      %s299 = scalar_lea.vmem %s4, %s298
      %v301 = vld [vmem:[%s272] sm:$0xf]
      %v302 = vld [vmem:[%s272 + $0x4] sm:$0xf]
      %v303 = vld [vmem:[%s272 + $0x8] sm:$0xf]
      %v304 = vld [vmem:[%s272 + $0xc] sm:$0xf]
      %v305 = vld [vmem:[%s272 + $0x10] sm:$0xf]
      %v306 = vld [vmem:[%s272 + $0x14] sm:$0xf]
      %v307 = vld [vmem:[%s272 + $0x18] sm:$0xf]
      %v308 = vld [vmem:[%s272 + $0x1c] sm:$0xf]
      %v309 = vld [vmem:[%s272 + $0x20] sm:$0xf]
      %v310 = vld [vmem:[%s272 + $0x24] sm:$0xf]
      %v311 = vld [vmem:[%s272 + $0x28] sm:$0xf]
      %v312 = vld [vmem:[%s272 + $0x2c] sm:$0xf]
      %v313 = vld [vmem:[%s272 + $0x30] sm:$0xf]
      %v314 = vld [vmem:[%s272 + $0x34] sm:$0xf]
      %v315 = vld [vmem:[%s272 + $0x38] sm:$0xf]
      %v316 = vld [vmem:[%s272 + $0x3c] sm:$0xf]
      %v317 = vld [vmem:[%s272 + $0x40] sm:$0xf]
      %v318 = vld [vmem:[%s272 + $0x44] sm:$0xf]
      %v319 = vld [vmem:[%s272 + $0x48] sm:$0xf]
      %v320 = vld [vmem:[%s272 + $0x4c] sm:$0xf]
      %v321 = vld [vmem:[%s272 + $0x50] sm:$0xf]
      %v322 = vld [vmem:[%s272 + $0x54] sm:$0xf]
      %v323 = vld [vmem:[%s272 + $0x58] sm:$0xf]
      %v324 = vld [vmem:[%s272 + $0x5c] sm:$0xf]
      %v325 = vld [vmem:[%s272 + $0x60] sm:$0xf]
      %v326 = vld [vmem:[%s272 + $0x64] sm:$0xf]
      %v327 = vld [vmem:[%s272 + $0x68] sm:$0xf]
      %v328 = vld [vmem:[%s272 + $0x6c] sm:$0xf]
      %v329 = vld [vmem:[%s272 + $0x70] sm:$0xf]
      %v330 = vld [vmem:[%s272 + $0x74] sm:$0xf]
      %v331 = vld [vmem:[%s272 + $0x78] sm:$0xf]
      %v332 = vld [vmem:[%s272 + $0x7c] sm:$0xf]
      %v333 = vld [vmem:[%s277] sm:$0xf]
      %v334 = vld [vmem:[%s277 + $0x4] sm:$0xf]
      %v335 = vld [vmem:[%s277 + $0x8] sm:$0xf]
      %v336 = vld [vmem:[%s277 + $0xc] sm:$0xf]
      %v337 = vld [vmem:[%s277 + $0x10] sm:$0xf]
      %v338 = vld [vmem:[%s277 + $0x14] sm:$0xf]
      %v339 = vld [vmem:[%s277 + $0x18] sm:$0xf]
      %v340 = vld [vmem:[%s277 + $0x1c] sm:$0xf]
      %v341 = vld [vmem:[%s277 + $0x20] sm:$0xf]
      %v342 = vld [vmem:[%s277 + $0x24] sm:$0xf]
      %v343 = vld [vmem:[%s277 + $0x28] sm:$0xf]
      %v344 = vld [vmem:[%s277 + $0x2c] sm:$0xf]
      %v345 = vld [vmem:[%s277 + $0x30] sm:$0xf]
      %v346 = vld [vmem:[%s277 + $0x34] sm:$0xf]
      %v347 = vld [vmem:[%s277 + $0x38] sm:$0xf]
      %v348 = vld [vmem:[%s277 + $0x3c] sm:$0xf]
      %v349 = vld [vmem:[%s280] sm:$0x1]
      %v351 = vlaneseq
      %v352 = vshrl.u32 %v351, 7
      %v353 = vsub.s32 0, %v352
      %v354 = vrot.slane %v349, %v353
      %v388 = vunpack.c.l.b16 %v301
      %v389 = vunpack.c.l.b16 %v302
      %v390 = vunpack.c.l.b16 %v303
      %v391 = vunpack.c.l.b16 %v304
      %v392 = vunpack.c.l.b16 %v305
      %v393 = vunpack.c.l.b16 %v306
      %v394 = vunpack.c.l.b16 %v307
      %v395 = vunpack.c.l.b16 %v308
      %v396 = vunpack.c.l.b16 %v309
      %v397 = vunpack.c.l.b16 %v310
      %v398 = vunpack.c.l.b16 %v311
      %v399 = vunpack.c.l.b16 %v312
      %v400 = vunpack.c.l.b16 %v313
      %v401 = vunpack.c.l.b16 %v314
      %v402 = vunpack.c.l.b16 %v315
      %v403 = vunpack.c.l.b16 %v316
      %v404 = vunpack.c.l.b16 %v317
      %v405 = vunpack.c.l.b16 %v318
      %v406 = vunpack.c.l.b16 %v319
      %v407 = vunpack.c.l.b16 %v320
      %v408 = vunpack.c.l.b16 %v321
      %v409 = vunpack.c.l.b16 %v322
      %v410 = vunpack.c.l.b16 %v323
      %v411 = vunpack.c.l.b16 %v324
      %v412 = vunpack.c.l.b16 %v325
      %v413 = vunpack.c.l.b16 %v326
      %v414 = vunpack.c.l.b16 %v327
      %v415 = vunpack.c.l.b16 %v328
      %v416 = vunpack.c.l.b16 %v329
      %v417 = vunpack.c.l.b16 %v330
      %v418 = vunpack.c.l.b16 %v331
      %v419 = vunpack.c.l.b16 %v332
      %v420 = vpack.c.b16 %v389, %v388
      %v421 = vpack.c.b16 %v391, %v390
      %v422 = vpack.c.b16 %v393, %v392
      %v423 = vpack.c.b16 %v395, %v394
      %v424 = vpack.c.b16 %v397, %v396
      %v425 = vpack.c.b16 %v399, %v398
      %v426 = vpack.c.b16 %v401, %v400
      %v427 = vpack.c.b16 %v403, %v402
      %v428 = vpack.c.b16 %v405, %v404
      %v429 = vpack.c.b16 %v407, %v406
      %v430 = vpack.c.b16 %v409, %v408
      %v431 = vpack.c.b16 %v411, %v410
      %v432 = vpack.c.b16 %v413, %v412
      %v433 = vpack.c.b16 %v415, %v414
      %v434 = vpack.c.b16 %v417, %v416
      %v435 = vpack.c.b16 %v419, %v418
      %v468 = vunpack.c.l.b16 %v333
      %v469 = vunpack.c.l.b16 %v334
      %v470 = vunpack.c.l.b16 %v335
      %v471 = vunpack.c.l.b16 %v336
      %v472 = vunpack.c.l.b16 %v337
      %v473 = vunpack.c.l.b16 %v338
      %v474 = vunpack.c.l.b16 %v339
      %v475 = vunpack.c.l.b16 %v340
      %v476 = vunpack.c.l.b16 %v341
      %v477 = vunpack.c.l.b16 %v342
      %v478 = vunpack.c.l.b16 %v343
      %v479 = vunpack.c.l.b16 %v344
      %v480 = vunpack.c.l.b16 %v345
      %v481 = vunpack.c.l.b16 %v346
      %v482 = vunpack.c.l.b16 %v347
      %v483 = vunpack.c.l.b16 %v348
      %v484 = vpack.c.b16 %v469, %v468
      %v485 = vpack.c.b16 %v471, %v470
      %v486 = vpack.c.b16 %v473, %v472
      %v487 = vpack.c.b16 %v475, %v474
      %v488 = vpack.c.b16 %v477, %v476
      %v489 = vpack.c.b16 %v479, %v478
      %v490 = vpack.c.b16 %v481, %v480
      %v491 = vpack.c.b16 %v483, %v482
      %500 = vmatprep.subr.bf16.mxu0 0
      %501 = vmatpush1.bf16.msra.mxu0 %v484
      %502 = vmatprep.subr.bf16.mxu0 0
      %503 = vmatpush1.bf16.msra.mxu0 %v485
      %504 = vmatprep.subr.bf16.mxu0 0
      %505 = vmatpush1.bf16.msra.mxu0 %v486
      %506 = vmatprep.subr.bf16.mxu0 0
      %507 = vmatpush1.bf16.msra.mxu0 %v487
      %508 = vmatprep.subr.bf16.mxu0 0
      %509 = vmatpush1.bf16.msra.mxu0 %v488
      %510 = vmatprep.subr.bf16.mxu0 0
      %511 = vmatpush1.bf16.msra.mxu0 %v489
      %512 = vmatprep.subr.bf16.mxu0 0
      %513 = vmatpush1.bf16.msra.mxu0 %v490
      %514 = vmatprep.subr.bf16.mxu0 0
      %515 = vmatpush1.bf16.msra.mxu0 %v491
      %516 = vmatprep.subr.bf16.mxu0 0
      %517 = vmatpush1.bf16.msra.mxu0 0
      %518 = vmatprep.subr.bf16.mxu0 0
      %519 = vmatpush1.bf16.msra.mxu0 0
      %520 = vmatprep.subr.bf16.mxu0 0
      %521 = vmatpush1.bf16.msra.mxu0 0
      %522 = vmatprep.subr.bf16.mxu0 0
      %523 = vmatpush1.bf16.msra.mxu0 0
      %524 = vmatprep.subr.bf16.mxu0 0
      %525 = vmatpush1.bf16.msra.mxu0 0
      %526 = vmatprep.subr.bf16.mxu0 0
      %527 = vmatpush1.bf16.msra.mxu0 0
      %528 = vmatprep.subr.bf16.mxu0 0
      %529 = vmatpush1.bf16.msra.mxu0 0
      %530 = vmatprep.subr.bf16.mxu0 0
      %531 = vmatpush1.bf16.msra.mxu0 0
      %532 = vmatprep.mubr.bf16.mxu0 0
      %533 = vmatmul.mubr.bf16.gmra.mrb[0].mxu0 %v420
      %v534 = vpop.f32.mrb[0].mxu0
      %v535 = vadd.f32 %v354, %v534
      %v536 = vpop.f32.mrb[0].mxu0
      %v537 = vpop.f32.mrb[0].mxu0
      %v538 = vadd.f32 %v354, %v537
      %v539 = vpop.f32.mrb[0].mxu0
      %540 = vmatprep.mubr.bf16.mxu0 0
      %541 = vmatmul.mubr.bf16.gmra.mrb[0].mxu0 %v421
      %v542 = vpop.f32.mrb[0].mxu0
      %v543 = vadd.f32 %v354, %v542
      %v544 = vpop.f32.mrb[0].mxu0
      %v545 = vpop.f32.mrb[0].mxu0
      %v546 = vadd.f32 %v354, %v545
      %v547 = vpop.f32.mrb[0].mxu0
      %548 = vmatprep.mubr.bf16.mxu0 0
      %549 = vmatmul.mubr.bf16.gmra.mrb[0].mxu0 %v422
      %v550 = vpop.f32.mrb[0].mxu0
      %v551 = vadd.f32 %v354, %v550
      %v552 = vpop.f32.mrb[0].mxu0
      %v553 = vpop.f32.mrb[0].mxu0
      %v554 = vadd.f32 %v354, %v553
      %v555 = vpop.f32.mrb[0].mxu0
      %556 = vmatprep.mubr.bf16.mxu0 0
      %557 = vmatmul.mubr.bf16.gmra.mrb[0].mxu0 %v423
      %v558 = vpop.f32.mrb[0].mxu0
      %v559 = vadd.f32 %v354, %v558
      %v560 = vpop.f32.mrb[0].mxu0
      %v561 = vpop.f32.mrb[0].mxu0
      %v562 = vadd.f32 %v354, %v561
      %v563 = vpop.f32.mrb[0].mxu0
      %564 = vmatprep.mubr.bf16.mxu0 0
      %565 = vmatmul.mubr.bf16.gmra.mrb[0].mxu0 %v424
      %v566 = vpop.f32.mrb[0].mxu0
      %v567 = vadd.f32 %v354, %v566
      %v568 = vpop.f32.mrb[0].mxu0
      %v569 = vpop.f32.mrb[0].mxu0
      %v570 = vadd.f32 %v354, %v569
      %v571 = vpop.f32.mrb[0].mxu0
      %572 = vmatprep.mubr.bf16.mxu0 0
      %573 = vmatmul.mubr.bf16.gmra.mrb[0].mxu0 %v425
      %v574 = vpop.f32.mrb[0].mxu0
      %v575 = vadd.f32 %v354, %v574
      %v576 = vpop.f32.mrb[0].mxu0
      %v577 = vpop.f32.mrb[0].mxu0
      %v578 = vadd.f32 %v354, %v577
      %v579 = vpop.f32.mrb[0].mxu0
      %580 = vmatprep.mubr.bf16.mxu0 0
      %581 = vmatmul.mubr.bf16.gmra.mrb[0].mxu0 %v426
      %v582 = vpop.f32.mrb[0].mxu0
      %v583 = vadd.f32 %v354, %v582
      %v584 = vpop.f32.mrb[0].mxu0
      %v585 = vpop.f32.mrb[0].mxu0
      %v586 = vadd.f32 %v354, %v585
      %v587 = vpop.f32.mrb[0].mxu0
      %588 = vmatprep.mubr.bf16.mxu0 0
      %589 = vmatmul.mubr.bf16.gmra.mrb[0].mxu0 %v427
      %v590 = vpop.f32.mrb[0].mxu0
      %v591 = vadd.f32 %v354, %v590
      %v592 = vpop.f32.mrb[0].mxu0
      %v593 = vpop.f32.mrb[0].mxu0
      %v594 = vadd.f32 %v354, %v593
      %v595 = vpop.f32.mrb[0].mxu0
      %596 = vmatprep.mubr.bf16.mxu0 0
      %597 = vmatmul.mubr.bf16.gmra.mrb[0].mxu0 %v428
      %v598 = vpop.f32.mrb[0].mxu0
      %v599 = vadd.f32 %v354, %v598
      %v600 = vpop.f32.mrb[0].mxu0
      %v601 = vpop.f32.mrb[0].mxu0
      %v602 = vadd.f32 %v354, %v601
      %v603 = vpop.f32.mrb[0].mxu0
      %604 = vmatprep.mubr.bf16.mxu0 0
      %605 = vmatmul.mubr.bf16.gmra.mrb[0].mxu0 %v429
      %v606 = vpop.f32.mrb[0].mxu0
      %v607 = vadd.f32 %v354, %v606
      %v608 = vpop.f32.mrb[0].mxu0
      %v609 = vpop.f32.mrb[0].mxu0
      %v610 = vadd.f32 %v354, %v609
      %v611 = vpop.f32.mrb[0].mxu0
      %612 = vmatprep.mubr.bf16.mxu0 0
      %613 = vmatmul.mubr.bf16.gmra.mrb[0].mxu0 %v430
      %v614 = vpop.f32.mrb[0].mxu0
      %v615 = vadd.f32 %v354, %v614
      %v616 = vpop.f32.mrb[0].mxu0
      %v617 = vpop.f32.mrb[0].mxu0
      %v618 = vadd.f32 %v354, %v617
      %v619 = vpop.f32.mrb[0].mxu0
      %620 = vmatprep.mubr.bf16.mxu0 0
      %621 = vmatmul.mubr.bf16.gmra.mrb[0].mxu0 %v431
      %v622 = vpop.f32.mrb[0].mxu0
      %v623 = vadd.f32 %v354, %v622
      %v624 = vpop.f32.mrb[0].mxu0
      %v625 = vpop.f32.mrb[0].mxu0
      %v626 = vadd.f32 %v354, %v625
      %v627 = vpop.f32.mrb[0].mxu0
      %628 = vmatprep.mubr.bf16.mxu0 0
      %629 = vmatmul.mubr.bf16.gmra.mrb[0].mxu0 %v432
      %v630 = vpop.f32.mrb[0].mxu0
      %v631 = vadd.f32 %v354, %v630
      %v632 = vpop.f32.mrb[0].mxu0
      %v633 = vpop.f32.mrb[0].mxu0
      %v634 = vadd.f32 %v354, %v633
      %v635 = vpop.f32.mrb[0].mxu0
      %636 = vmatprep.mubr.bf16.mxu0 0
      %637 = vmatmul.mubr.bf16.gmra.mrb[0].mxu0 %v433
      %v638 = vpop.f32.mrb[0].mxu0
      %v639 = vadd.f32 %v354, %v638
      %v640 = vpop.f32.mrb[0].mxu0
      %v641 = vpop.f32.mrb[0].mxu0
      %v642 = vadd.f32 %v354, %v641
      %v643 = vpop.f32.mrb[0].mxu0
      %644 = vmatprep.mubr.bf16.mxu0 0
      %645 = vmatmul.mubr.bf16.gmra.mrb[0].mxu0 %v434
      %v646 = vpop.f32.mrb[0].mxu0
      %v647 = vadd.f32 %v354, %v646
      %v648 = vpop.f32.mrb[0].mxu0
      %v649 = vpop.f32.mrb[0].mxu0
      %v650 = vadd.f32 %v354, %v649
      %v651 = vpop.f32.mrb[0].mxu0
      %652 = vmatprep.mubr.bf16.mxu0 0
      %653 = vmatmul.mubr.bf16.gmra.mrb[0].mxu0 %v435
      %v654 = vpop.f32.mrb[0].mxu0
      %v655 = vadd.f32 %v354, %v654
      %v656 = vpop.f32.mrb[0].mxu0
      %v657 = vpop.f32.mrb[0].mxu0
      %v658 = vadd.f32 %v354, %v657
      %v659 = vpop.f32.mrb[0].mxu0
      %660 = vdwg.mxu0
      %v661 = vpack.c.bf16 %v538, %v535
      %v662 = vpack.c.bf16 %v546, %v543
      %v663 = vpack.c.bf16 %v554, %v551
      %v664 = vpack.c.bf16 %v562, %v559
      %v665 = vpack.c.bf16 %v570, %v567
      %v666 = vpack.c.bf16 %v578, %v575
      %v667 = vpack.c.bf16 %v586, %v583
      %v668 = vpack.c.bf16 %v594, %v591
      %v669 = vpack.c.bf16 %v602, %v599
      %v670 = vpack.c.bf16 %v610, %v607
      %v671 = vpack.c.bf16 %v618, %v615
      %v672 = vpack.c.bf16 %v626, %v623
      %v673 = vpack.c.bf16 %v634, %v631
      %v674 = vpack.c.bf16 %v642, %v639
      %v675 = vpack.c.bf16 %v650, %v647
      %v676 = vpack.c.bf16 %v658, %v655
      %v693 = vunpack.c.l.b16 %v661
      %v694 = vunpack.c.h.b16 %v661
      %v695 = vunpack.c.l.b16 %v662
      %v696 = vunpack.c.h.b16 %v662
      %v697 = vunpack.c.l.b16 %v663
      %v698 = vunpack.c.h.b16 %v663
      %v699 = vunpack.c.l.b16 %v664
      %v700 = vunpack.c.h.b16 %v664
      %v701 = vunpack.c.l.b16 %v665
      %v702 = vunpack.c.h.b16 %v665
      %v703 = vunpack.c.l.b16 %v666
      %v704 = vunpack.c.h.b16 %v666
      %v705 = vunpack.c.l.b16 %v667
      %v706 = vunpack.c.h.b16 %v667
      %v707 = vunpack.c.l.b16 %v668
      %v708 = vunpack.c.h.b16 %v668
      %v709 = vunpack.c.l.b16 %v669
      %v710 = vunpack.c.h.b16 %v669
      %v711 = vunpack.c.l.b16 %v670
      %v712 = vunpack.c.h.b16 %v670
      %v713 = vunpack.c.l.b16 %v671
      %v714 = vunpack.c.h.b16 %v671
      %v715 = vunpack.c.l.b16 %v672
      %v716 = vunpack.c.h.b16 %v672
      %v717 = vunpack.c.l.b16 %v673
      %v718 = vunpack.c.h.b16 %v673
      %v719 = vunpack.c.l.b16 %v674
      %v720 = vunpack.c.h.b16 %v674
      %v721 = vunpack.c.l.b16 %v675
      %v722 = vunpack.c.h.b16 %v675
      %v723 = vunpack.c.l.b16 %v676
      %v724 = vunpack.c.h.b16 %v676
      %v725 = vpack.c.b16 %v693, %v693
      %v726 = vpack.c.b16 %v694, %v694
      %v727 = vpack.c.b16 %v695, %v695
      %v728 = vpack.c.b16 %v696, %v696
      %v729 = vpack.c.b16 %v697, %v697
      %v730 = vpack.c.b16 %v698, %v698
      %v731 = vpack.c.b16 %v699, %v699
      %v732 = vpack.c.b16 %v700, %v700
      %v733 = vpack.c.b16 %v701, %v701
      %v734 = vpack.c.b16 %v702, %v702
      %v735 = vpack.c.b16 %v703, %v703
      %v736 = vpack.c.b16 %v704, %v704
      %v737 = vpack.c.b16 %v705, %v705
      %v738 = vpack.c.b16 %v706, %v706
      %v739 = vpack.c.b16 %v707, %v707
      %v740 = vpack.c.b16 %v708, %v708
      %v741 = vpack.c.b16 %v709, %v709
      %v742 = vpack.c.b16 %v710, %v710
      %v743 = vpack.c.b16 %v711, %v711
      %v744 = vpack.c.b16 %v712, %v712
      %v745 = vpack.c.b16 %v713, %v713
      %v746 = vpack.c.b16 %v714, %v714
      %v747 = vpack.c.b16 %v715, %v715
      %v748 = vpack.c.b16 %v716, %v716
      %v749 = vpack.c.b16 %v717, %v717
      %v750 = vpack.c.b16 %v718, %v718
      %v751 = vpack.c.b16 %v719, %v719
      %v752 = vpack.c.b16 %v720, %v720
      %v753 = vpack.c.b16 %v721, %v721
      %v754 = vpack.c.b16 %v722, %v722
      %v755 = vpack.c.b16 %v723, %v723
      %v756 = vpack.c.b16 %v724, %v724
      %789 = vst [vmem:[%s292] sm:$0xf] %v725
      %790 = vst [vmem:[%s292 + $0x4] sm:$0xf] %v726
      %791 = vst [vmem:[%s292 + $0x8] sm:$0xf] %v727
      %792 = vst [vmem:[%s292 + $0xc] sm:$0xf] %v728
      %793 = vst [vmem:[%s292 + $0x10] sm:$0xf] %v729
      %794 = vst [vmem:[%s292 + $0x14] sm:$0xf] %v730
      %795 = vst [vmem:[%s292 + $0x18] sm:$0xf] %v731
      %796 = vst [vmem:[%s292 + $0x1c] sm:$0xf] %v732
      %797 = vst [vmem:[%s292 + $0x20] sm:$0xf] %v733
      %798 = vst [vmem:[%s292 + $0x24] sm:$0xf] %v734
      %799 = vst [vmem:[%s292 + $0x28] sm:$0xf] %v735
      %800 = vst [vmem:[%s292 + $0x2c] sm:$0xf] %v736
      %801 = vst [vmem:[%s292 + $0x30] sm:$0xf] %v737
      %802 = vst [vmem:[%s292 + $0x34] sm:$0xf] %v738
      %803 = vst [vmem:[%s292 + $0x38] sm:$0xf] %v739
      %804 = vst [vmem:[%s292 + $0x3c] sm:$0xf] %v740
      %805 = vst [vmem:[%s292 + $0x40] sm:$0xf] %v741
      %806 = vst [vmem:[%s292 + $0x44] sm:$0xf] %v742
      %807 = vst [vmem:[%s292 + $0x48] sm:$0xf] %v743
      %808 = vst [vmem:[%s292 + $0x4c] sm:$0xf] %v744
      %809 = vst [vmem:[%s292 + $0x50] sm:$0xf] %v745
      %810 = vst [vmem:[%s292 + $0x54] sm:$0xf] %v746
      %811 = vst [vmem:[%s292 + $0x58] sm:$0xf] %v747
      %812 = vst [vmem:[%s292 + $0x5c] sm:$0xf] %v748
      %813 = vst [vmem:[%s292 + $0x60] sm:$0xf] %v749
      %814 = vst [vmem:[%s292 + $0x64] sm:$0xf] %v750
      %815 = vst [vmem:[%s292 + $0x68] sm:$0xf] %v751
      %816 = vst [vmem:[%s292 + $0x6c] sm:$0xf] %v752
      %817 = vst [vmem:[%s292 + $0x70] sm:$0xf] %v753
      %818 = vst [vmem:[%s292 + $0x74] sm:$0xf] %v754
      %819 = vst [vmem:[%s292 + $0x78] sm:$0xf] %v755
      %820 = vst [vmem:[%s292 + $0x7c] sm:$0xf] %v756
      %p821 = scmp.eq.s32.totalorder %s23, 0
      // Predicated region
      $region33: #{se_bottleneck_forward.7} parent=31 // pred_check
        %p822 = pneg %p821
      $region34: #{se_bottleneck_forward.7} parent=31 // pred_check_branch
        %824 = sbr.rel (%p822) target = $region36
      $region35: #{se_bottleneck_forward.7} parent=31 // pred_region
        %825 = vst [vmem:[%s299] sm:$0x1] 0.0
      $region36: #{se_bottleneck_forward.7} parent=31 // pred_fallthru
        _
      %v826 = vld [vmem:[%s299] sm:$0x1]
      %v827 = vadd.f32 %v535, %v538
      %v828 = vadd.f32 %v827, %v543
      %v829 = vadd.f32 %v828, %v546
      %v830 = vadd.f32 %v829, %v551
      %v831 = vadd.f32 %v830, %v554
      %v832 = vadd.f32 %v831, %v559
      %v833 = vadd.f32 %v832, %v562
      %v834 = vadd.f32 %v833, %v567
      %v835 = vadd.f32 %v834, %v570
      %v836 = vadd.f32 %v835, %v575
      %v837 = vadd.f32 %v836, %v578
      %v838 = vadd.f32 %v837, %v583
      %v839 = vadd.f32 %v838, %v586
      %v840 = vadd.f32 %v839, %v591
      %v841 = vadd.f32 %v840, %v594
      %v842 = vadd.f32 %v841, %v599
      %v843 = vadd.f32 %v842, %v602
      %v844 = vadd.f32 %v843, %v607
      %v845 = vadd.f32 %v844, %v610
      %v846 = vadd.f32 %v845, %v615
      %v847 = vadd.f32 %v846, %v618
      %v848 = vadd.f32 %v847, %v623
      %v849 = vadd.f32 %v848, %v626
      %v850 = vadd.f32 %v849, %v631
      %v851 = vadd.f32 %v850, %v634
      %v852 = vadd.f32 %v851, %v639
      %v853 = vadd.f32 %v852, %v642
      %v854 = vadd.f32 %v853, %v647
      %v855 = vadd.f32 %v854, %v650
      %v856 = vadd.f32 %v855, %v655
      %v857 = vadd.f32 %v856, %v658
      %v858 = vrot.slane %v857, 4
      %v859 = vadd.f32 %v857, %v858
      %v860 = vrot.slane %v859, 2
      %v861 = vadd.f32 %v859, %v860
      %v862 = vrot.slane %v861, 1
      %v863 = vadd.f32 %v861, %v862
      %v864 = vadd.f32 %v826, %v863
      %865 = vst [vmem:[%s299] sm:$0x1] %v864
      %s866 = smul.u32 32, %s23
      %p867 = scmp.lt.s32.totalorder %s21, 1
      %s868 = scalar_select %p867, %s21, 1
      %p869 = scmp.lt.s32.totalorder %s866, 31
      %s870 = scalar_select %p869, %s866, 31
      %p871 = scmp.lt.s32.totalorder %s22, 0
      %s872 = scalar_select %p871, %s22, 0
      %s873 = sadd.s32 %s872, %s870
      %s874 = smul.addr %s868, 32
      %s875 = sadd.s32 %s873, %s874
      %s876 = smul.addr %s875, 4
      %s877 = scalar_lea.vmem %s3, %s876
      %p878 = scmp.lt.s32.totalorder %s21, 1
      %s879 = scalar_select %p878, %s21, 1
      %p880 = scmp.lt.s32.totalorder %s22, 0
      %s881 = scalar_select %p880, %s22, 0
      %s882 = sadd.s32 %s881, %s879
      %s883 = scalar_lea.vmem %s4, %s882
      // Predicated region
      $region37: #{se_bottleneck_forward.7} parent=31 // pred_check
        %p884 = pneg %p137
      $region38: #{se_bottleneck_forward.7} parent=31 // pred_check_branch
        %886 = sbr.rel (%p884) target = $region40
      $region39: #{se_bottleneck_forward.7} parent=31 // pred_region
        %s887 = smul.u32 32, %s23
      $region40: #{se_bottleneck_forward.7} parent=31 // pred_fallthru
        _
      // Predicated region
      $region41: #{se_bottleneck_forward.7} parent=31 // pred_check
        %p888 = pneg %p165
      $region42: #{se_bottleneck_forward.7} parent=31 // pred_check_branch
        %890 = sbr.rel (%p888) target = $region44
      $region43: #{se_bottleneck_forward.7} parent=31 // pred_region
        _
      $region44: #{se_bottleneck_forward.7} parent=31 // pred_fallthru
        _
    $region32: #{se_bottleneck_forward.7} parent=5 // pred_fallthru
      _
    %p891 = scmp.le.s32.totalorder 2, %s11
    // Predicated region
    $region45: #{se_bottleneck_forward.7} parent=5 // pred_check
      %p892 = pneg %p891
    $region46: #{se_bottleneck_forward.7} parent=5 // pred_check_branch
      %894 = sbr.rel (%p892) target = $region48
    $region47: #{se_bottleneck_forward.7} parent=5 // pred_region
      %s895 = ssub.s32 %s11, 2
      // Predicated region
      $region49: #{se_bottleneck_forward.7} parent=47 // pred_check
        %p896 = pneg %p143
      $region50: #{se_bottleneck_forward.7} parent=47 // pred_check_branch
        %898 = sbr.rel (%p896) target = $region52
      $region51: #{se_bottleneck_forward.7} parent=47 // pred_region
        %s899 = smul.u32 32, %s26
        %p900 = scmp.lt.s32.totalorder %s24, 1
        %s901 = scalar_select %p900, %s24, 1
        %p902 = scmp.lt.s32.totalorder %s899, 31
        %s903 = scalar_select %p902, %s899, 31
        %p904 = scmp.lt.s32.totalorder %s25, 0
        %s905 = scalar_select %p904, %s25, 0
        %s906 = sadd.s32 %s905, %s903
        %s907 = smul.addr %s901, 32
        %s908 = sadd.s32 %s906, %s907
        %s909 = smul.addr %s908, 4
        %s910 = scalar_lea.vmem %s3, %s909
      $region52: #{se_bottleneck_forward.7} parent=47 // pred_fallthru
        _
      // Predicated region
      $region53: #{se_bottleneck_forward.7} parent=47 // pred_check
        %p911 = pneg %p171
      $region54: #{se_bottleneck_forward.7} parent=47 // pred_check_branch
        %913 = sbr.rel (%p911) target = $region56
      $region55: #{se_bottleneck_forward.7} parent=47 // pred_region
        %p914 = scmp.lt.s32.totalorder %s24, 1
        %s915 = scalar_select %p914, %s24, 1
        %p916 = scmp.lt.s32.totalorder %s25, 0
        %s917 = scalar_select %p916, %s25, 0
        %s918 = sadd.s32 %s917, %s915
        %s919 = scalar_lea.vmem %s4, %s918
      $region56: #{se_bottleneck_forward.7} parent=47 // pred_fallthru
        _
    $region48: #{se_bottleneck_forward.7} parent=5 // pred_fallthru
      _
  $region6: #{se_bottleneck_forward.7} parent=0 // loop_footer
    %s15 = sadd.s32 1, %s11
  $region7: #{se_bottleneck_forward.7} parent=0 // loop_footer_branch
    %10 = sbr.rel target = $region3
  $region8: #{se_bottleneck_forward.7} parent=0 // loop_exit
    _

// kernel: se_bottleneck_forward.8
$region0: #{se_bottleneck_forward.8}
  #allocation0 [shape = 'u32[]', space=smem, size = 0x4, offset = 0x4, fixed_abs, tag = 'smem constant byte address 0x4 - core index']
  #allocation1 [shape = 'u32[144,128]{1,0:T(1,128)}', space=vmem, size = 0x12000, scoped, tag = 'internal scratch']
  %s0 = inlined_call_operand.vmem [shape: f32[8,128], index: 0, kind: input, shape index: {}]
  %s1 = inlined_call_operand.vmem [shape: f32[128,128], index: 1, kind: input, shape index: {}]
  %s2 = inlined_call_operand.vmem [shape: f32[128,128], index: 2, kind: input, shape index: {}]
  %s3 = inlined_call_operand.vmem [shape: f32[8,128], index: 3, kind: output, shape index: {}]
  %s4 = sld [smem:[#allocation0]]
  $region22: #{se_bottleneck_forward.8} parent=0
    _
  %s6 = ssub.s32 1, %s4
  %s7 = scalar_select 0, %s6, %s4
  // Predicated region
  $region2: #{se_bottleneck_forward.8} parent=0 // pred_check
    _
  $region3: #{se_bottleneck_forward.8} parent=0 // pred_check_branch
    %9 = sbr.rel (0) target = $region5
  $region4: #{se_bottleneck_forward.8} parent=0 // pred_region
    _
  $region5: #{se_bottleneck_forward.8} parent=0 // pred_fallthru
    _
  // Predicated region
  $region6: #{se_bottleneck_forward.8} parent=0 // pred_check
    _
  $region7: #{se_bottleneck_forward.8} parent=0 // pred_check_branch
    %11 = sbr.rel (0) target = $region9
  $region8: #{se_bottleneck_forward.8} parent=0 // pred_region
    _
  $region9: #{se_bottleneck_forward.8} parent=0 // pred_fallthru
    _
  // Predicated region
  $region10: #{se_bottleneck_forward.8} parent=0 // pred_check
    _
  $region11: #{se_bottleneck_forward.8} parent=0 // pred_check_branch
    %13 = sbr.rel (0) target = $region13
  $region12: #{se_bottleneck_forward.8} parent=0 // pred_region
    _
  $region13: #{se_bottleneck_forward.8} parent=0 // pred_fallthru
    _
  %v14 = vld [vmem:[%s0] sm:$0xff]
  %v15 = vld [vmem:[%s1] sm:$0xff]
  %v16 = vld [vmem:[%s1 + $0x8] sm:$0xff]
  %v17 = vld [vmem:[%s1 + $0x10] sm:$0xff]
  %v18 = vld [vmem:[%s1 + $0x18] sm:$0xff]
  %v19 = vld [vmem:[%s1 + $0x20] sm:$0xff]
  %v20 = vld [vmem:[%s1 + $0x28] sm:$0xff]
  %v21 = vld [vmem:[%s1 + $0x30] sm:$0xff]
  %v22 = vld [vmem:[%s1 + $0x38] sm:$0xff]
  %v23 = vld [vmem:[%s1 + $0x40] sm:$0xff]
  %v24 = vld [vmem:[%s1 + $0x48] sm:$0xff]
  %v25 = vld [vmem:[%s1 + $0x50] sm:$0xff]
  %v26 = vld [vmem:[%s1 + $0x58] sm:$0xff]
  %v27 = vld [vmem:[%s1 + $0x60] sm:$0xff]
  %v28 = vld [vmem:[%s1 + $0x68] sm:$0xff]
  %v29 = vld [vmem:[%s1 + $0x70] sm:$0xff]
  %v30 = vld [vmem:[%s1 + $0x78] sm:$0xff]
  %31 = vmatprep.subr.mxu0 0.0
  %32 = vmatpush1.msra.mxu0 %v15
  %33 = vmatprep.subr.mxu0 0.0
  %34 = vmatpush1.msra.mxu0 %v16
  %35 = vmatprep.subr.mxu0 0.0
  %36 = vmatpush1.msra.mxu0 %v17
  %37 = vmatprep.subr.mxu0 0.0
  %38 = vmatpush1.msra.mxu0 %v18
  %39 = vmatprep.subr.mxu0 0.0
  %40 = vmatpush1.msra.mxu0 %v19
  %41 = vmatprep.subr.mxu0 0.0
  %42 = vmatpush1.msra.mxu0 %v20
  %43 = vmatprep.subr.mxu0 0.0
  %44 = vmatpush1.msra.mxu0 %v21
  %45 = vmatprep.subr.mxu0 0.0
  %46 = vmatpush1.msra.mxu0 %v22
  %47 = vmatprep.subr.mxu0 0.0
  %48 = vmatpush1.msra.mxu0 %v23
  %49 = vmatprep.subr.mxu0 0.0
  %50 = vmatpush1.msra.mxu0 %v24
  %51 = vmatprep.subr.mxu0 0.0
  %52 = vmatpush1.msra.mxu0 %v25
  %53 = vmatprep.subr.mxu0 0.0
  %54 = vmatpush1.msra.mxu0 %v26
  %55 = vmatprep.subr.mxu0 0.0
  %56 = vmatpush1.msra.mxu0 %v27
  %57 = vmatprep.subr.mxu0 0.0
  %58 = vmatpush1.msra.mxu0 %v28
  %59 = vmatprep.subr.mxu0 0.0
  %60 = vmatpush1.msra.mxu0 %v29
  %61 = vmatprep.subr.mxu0 0.0
  %62 = vmatpush1.msra.mxu0 %v30
  %63 = vmatprep.subr.mxu0 0.0
  %64 = vmatpush1.msra.mxu0 0.0
  %65 = vmatprep.subr.mxu0 0.0
  %66 = vmatpush1.msra.mxu0 0.0
  %67 = vmatprep.subr.mxu0 0.0
  %68 = vmatpush1.msra.mxu0 0.0
  %69 = vmatprep.subr.mxu0 0.0
  %70 = vmatpush1.msra.mxu0 0.0
  %71 = vmatprep.subr.mxu0 0.0
  %72 = vmatpush1.msra.mxu0 0.0
  %73 = vmatprep.subr.mxu0 0.0
  %74 = vmatpush1.msra.mxu0 0.0
  %75 = vmatprep.subr.mxu0 0.0
  %76 = vmatpush1.msra.mxu0 0.0
  %77 = vmatprep.subr.mxu0 0.0
  %78 = vmatpush1.msra.mxu0 0.0
  %79 = vmatprep.subr.mxu0 0.0
  %80 = vmatpush1.msra.mxu0 0.0
  %81 = vmatprep.subr.mxu0 0.0
  %82 = vmatpush1.msra.mxu0 0.0
  %83 = vmatprep.subr.mxu0 0.0
  %84 = vmatpush1.msra.mxu0 0.0
  %85 = vmatprep.subr.mxu0 0.0
  %86 = vmatpush1.msra.mxu0 0.0
  %87 = vmatprep.subr.mxu0 0.0
  %88 = vmatpush1.msra.mxu0 0.0
  %89 = vmatprep.subr.mxu0 0.0
  %90 = vmatpush1.msra.mxu0 0.0
  %91 = vmatprep.subr.mxu0 0.0
  %92 = vmatpush1.msra.mxu0 0.0
  %93 = vmatprep.subr.mxu0 0.0
  %94 = vmatpush1.msra.mxu0 0.0
  %95 = vmatprep.mubr.f32.mxu0 0.0
  %96 = vmatmul.mubr.f32.gmra.mrb[0].mxu0 %v14
  %v97 = vpop.f32.mrb[0].mxu0
  %v98 = vadd.f32 0.0, %v97
  %v99 = vpop.f32.mrb[0].mxu0
  %100 = vdwg.mxu0
  %v101 = vmax.f32 %v98, 0.0
  %v102 = vld [vmem:[%s2] sm:$0xff]
  %v103 = vld [vmem:[%s2 + $0x8] sm:$0xff]
  %v104 = vld [vmem:[%s2 + $0x10] sm:$0xff]
  %v105 = vld [vmem:[%s2 + $0x18] sm:$0xff]
  %v106 = vld [vmem:[%s2 + $0x20] sm:$0xff]
  %v107 = vld [vmem:[%s2 + $0x28] sm:$0xff]
  %v108 = vld [vmem:[%s2 + $0x30] sm:$0xff]
  %v109 = vld [vmem:[%s2 + $0x38] sm:$0xff]
  %v110 = vld [vmem:[%s2 + $0x40] sm:$0xff]
  %v111 = vld [vmem:[%s2 + $0x48] sm:$0xff]
  %v112 = vld [vmem:[%s2 + $0x50] sm:$0xff]
  %v113 = vld [vmem:[%s2 + $0x58] sm:$0xff]
  %v114 = vld [vmem:[%s2 + $0x60] sm:$0xff]
  %v115 = vld [vmem:[%s2 + $0x68] sm:$0xff]
  %v116 = vld [vmem:[%s2 + $0x70] sm:$0xff]
  %v117 = vld [vmem:[%s2 + $0x78] sm:$0xff]
  %118 = vmatprep.subr.mxu0 0.0
  %119 = vmatpush1.msra.mxu0 %v102
  %120 = vmatprep.subr.mxu0 0.0
  %121 = vmatpush1.msra.mxu0 %v103
  %122 = vmatprep.subr.mxu0 0.0
  %123 = vmatpush1.msra.mxu0 %v104
  %124 = vmatprep.subr.mxu0 0.0
  %125 = vmatpush1.msra.mxu0 %v105
  %126 = vmatprep.subr.mxu0 0.0
  %127 = vmatpush1.msra.mxu0 %v106
  %128 = vmatprep.subr.mxu0 0.0
  %129 = vmatpush1.msra.mxu0 %v107
  %130 = vmatprep.subr.mxu0 0.0
  %131 = vmatpush1.msra.mxu0 %v108
  %132 = vmatprep.subr.mxu0 0.0
  %133 = vmatpush1.msra.mxu0 %v109
  %134 = vmatprep.subr.mxu0 0.0
  %135 = vmatpush1.msra.mxu0 %v110
  %136 = vmatprep.subr.mxu0 0.0
  %137 = vmatpush1.msra.mxu0 %v111
  %138 = vmatprep.subr.mxu0 0.0
  %139 = vmatpush1.msra.mxu0 %v112
  %140 = vmatprep.subr.mxu0 0.0
  %141 = vmatpush1.msra.mxu0 %v113
  %142 = vmatprep.subr.mxu0 0.0
  %143 = vmatpush1.msra.mxu0 %v114
  %144 = vmatprep.subr.mxu0 0.0
  %145 = vmatpush1.msra.mxu0 %v115
  %146 = vmatprep.subr.mxu0 0.0
  %147 = vmatpush1.msra.mxu0 %v116
  %148 = vmatprep.subr.mxu0 0.0
  %149 = vmatpush1.msra.mxu0 %v117
  %150 = vmatprep.subr.mxu0 0.0
  %151 = vmatpush1.msra.mxu0 0.0
  %152 = vmatprep.subr.mxu0 0.0
  %153 = vmatpush1.msra.mxu0 0.0
  %154 = vmatprep.subr.mxu0 0.0
  %155 = vmatpush1.msra.mxu0 0.0
  %156 = vmatprep.subr.mxu0 0.0
  %157 = vmatpush1.msra.mxu0 0.0
  %158 = vmatprep.subr.mxu0 0.0
  %159 = vmatpush1.msra.mxu0 0.0
  %160 = vmatprep.subr.mxu0 0.0
  %161 = vmatpush1.msra.mxu0 0.0
  %162 = vmatprep.subr.mxu0 0.0
  %163 = vmatpush1.msra.mxu0 0.0
  %164 = vmatprep.subr.mxu0 0.0
  %165 = vmatpush1.msra.mxu0 0.0
  %166 = vmatprep.subr.mxu0 0.0
  %167 = vmatpush1.msra.mxu0 0.0
  %168 = vmatprep.subr.mxu0 0.0
  %169 = vmatpush1.msra.mxu0 0.0
  %170 = vmatprep.subr.mxu0 0.0
  %171 = vmatpush1.msra.mxu0 0.0
  %172 = vmatprep.subr.mxu0 0.0
  %173 = vmatpush1.msra.mxu0 0.0
  %174 = vmatprep.subr.mxu0 0.0
  %175 = vmatpush1.msra.mxu0 0.0
  %176 = vmatprep.subr.mxu0 0.0
  %177 = vmatpush1.msra.mxu0 0.0
  %178 = vmatprep.subr.mxu0 0.0
  %179 = vmatpush1.msra.mxu0 0.0
  %180 = vmatprep.subr.mxu0 0.0
  %181 = vmatpush1.msra.mxu0 0.0
  %182 = vmatprep.mubr.f32.mxu0 0.0
  %183 = vmatmul.mubr.f32.gmra.mrb[0].mxu0 %v101
  %v184 = vpop.f32.mrb[0].mxu0
  %v185 = vadd.f32 0.0, %v184
  %v186 = vpop.f32.mrb[0].mxu0
  %187 = vdwg.mxu0
  %v188 = vsub.f32 0.0, %v185
  %v189 = vmul.f32 %v188, 1.442695
  %v190 = vpow.pop %v189
  %v191 = vadd.f32 %v190, 1.0
  %v192 = vrcp.pop %v191
  %193 = vst [vmem:[%s3] sm:$0xff] %v192
  // Predicated region
  $region14: #{se_bottleneck_forward.8} parent=0 // pred_check
    _
  $region15: #{se_bottleneck_forward.8} parent=0 // pred_check_branch
    %195 = sbr.rel (0) target = $region17
  $region16: #{se_bottleneck_forward.8} parent=0 // pred_region
    _
  $region17: #{se_bottleneck_forward.8} parent=0 // pred_fallthru
    _
  // Predicated region
  $region18: #{se_bottleneck_forward.8} parent=0 // pred_check
    _
  $region19: #{se_bottleneck_forward.8} parent=0 // pred_check_branch
    %197 = sbr.rel (0) target = $region21
  $region20: #{se_bottleneck_forward.8} parent=0 // pred_region
    _
  $region21: #{se_bottleneck_forward.8} parent=0 // pred_fallthru
    _

// kernel: se_bottleneck_forward.9
$region0: #{se_bottleneck_forward.9}
  #allocation0 [shape = 'u32[]', space=smem, size = 0x4, offset = 0x4, fixed_abs, tag = 'smem constant byte address 0x4 - core index']
  #allocation1 [shape = 'u32[144,128]{1,0:T(1,128)}', space=vmem, size = 0x12000, scoped, tag = 'internal scratch']
  %s0 = inlined_call_operand.vmem [shape: bf16[2,256,128], index: 0, kind: input, shape index: {}]
  %s1 = inlined_call_operand.vmem [shape: f32[2,1,128], index: 1, kind: input, shape index: {}]
  %s2 = inlined_call_operand.vmem [shape: f32[2,256,128], index: 2, kind: input, shape index: {}]
  %s3 = inlined_call_operand.vmem [shape: f32[2,256,128], index: 3, kind: output, shape index: {}]
  %s4 = sld [smem:[#allocation0]]
  $region45: #{se_bottleneck_forward.9} parent=0
    _
  %s6 = ssub.s32 1, %s4
  %s7 = scalar_select 0, %s6, %s4
  loop: start=0, step=1, limit=4
  $region2: #{se_bottleneck_forward.9} parent=0 // loop_pre_header
    _
  $region3: #{se_bottleneck_forward.9} parent=0 // loop_header
    %s9 = sphi 0, %s13
    %p10 = scmp.ge.s32.totalorder %s9, 4
    %s16 = sphi 0, %s28
    %s17 = sphi 0, %s24
    %s18 = sphi 0, %s16
    %s19 = sphi 0, %s17
    %s20 = sphi 0, %s18
    %s21 = sphi 0, %s19
    %s33 = sphi 0, %s35
    %s36 = sphi 0, %s33
    %s37 = sphi 0, %s36
    %s53 = sphi 0, %s37
    %s59 = sphi 0, %s61
    %s62 = sphi 0, %s59
    %s63 = sphi 0, %s62
    %s79 = sphi 0, %s63
    %s87 = sphi 0, %s89
    %s90 = sphi 0, %s87
    %s91 = sphi 0, %s90
    %s107 = sphi 0, %s91
    %s115 = sphi 0, %s117
    %s118 = sphi 0, %s115
    %s119 = sphi 0, %s118
    %s135 = sphi 0, %s119
  $region4: #{se_bottleneck_forward.9} parent=0 // loop_header_branch
    %12 = sbr.rel (%p10) target = $region8
  $region5: #{se_bottleneck_forward.9} parent=0 // loop_body
    %s14 = ssub.s32 %s9, 1
    %s15 = ssub.s32 %s9, 2
    %s22 = sadd.s32 1, %s17
    %p23 = scmp.ge.s32.totalorder %s22, 1
    %s24 = scalar_select %p23, 0, %s22
    %s25 = sadd.s32 1, %s16
    %s26 = scalar_select %p23, %s25, %s16
    %p27 = scmp.ge.s32.totalorder %s26, 2
    %s28 = scalar_select %p27, 0, %s26
    %s29 = ssub.s32 %s16, %s28
    %s30 = ssub.s32 %s17, %s24
    %s31 = sor.u32 %s29, %s30
    %p32 = scmp.eq.s32.totalorder %s31, 0
    %s34 = sadd.s32 %s33, 1
    %s35 = scalar_select %p32, %s33, %s34
    %p38 = pneg %p32
    %p39 = scmp.eq.s32.totalorder %s9, 1
    %p40 = por %p38, %p39
    %p41 = scmp.ne.s32.totalorder %s33, %s36
    %p42 = scmp.eq.s32.totalorder %s9, 0
    %p43 = por %p41, %p42
    %p44 = scmp.ne.s32.totalorder %s33, %s36
    %p45 = scmp.eq.s32.totalorder %s14, 1
    %p46 = por %p44, %p45
    %p47 = scmp.ne.s32.totalorder %s36, %s37
    %p48 = scmp.eq.s32.totalorder %s14, 0
    %p49 = por %p47, %p48
    %p50 = scmp.ne.s32.totalorder %s36, %s37
    %p51 = scmp.eq.s32.totalorder %s15, 1
    %p52 = por %p50, %p51
    %p54 = scmp.ne.s32.totalorder %s37, %s53
    %p55 = scmp.eq.s32.totalorder %s15, 0
    %p56 = por %p54, %p55
    %s57 = ssub.s32 %s16, %s28
    %p58 = scmp.eq.s32.totalorder %s57, 0
    %s60 = sadd.s32 %s59, 1
    %s61 = scalar_select %p58, %s59, %s60
    %p64 = pneg %p58
    %p65 = scmp.eq.s32.totalorder %s9, 1
    %p66 = por %p64, %p65
    %p67 = scmp.ne.s32.totalorder %s59, %s62
    %p68 = scmp.eq.s32.totalorder %s9, 0
    %p69 = por %p67, %p68
    %p70 = scmp.ne.s32.totalorder %s59, %s62
    %p71 = scmp.eq.s32.totalorder %s14, 1
    %p72 = por %p70, %p71
    %p73 = scmp.ne.s32.totalorder %s62, %s63
    %p74 = scmp.eq.s32.totalorder %s14, 0
    %p75 = por %p73, %p74
    %p76 = scmp.ne.s32.totalorder %s62, %s63
    %p77 = scmp.eq.s32.totalorder %s15, 1
    %p78 = por %p76, %p77
    %p80 = scmp.ne.s32.totalorder %s63, %s79
    %p81 = scmp.eq.s32.totalorder %s15, 0
    %p82 = por %p80, %p81
    %s83 = ssub.s32 %s16, %s28
    %s84 = ssub.s32 %s17, %s24
    %s85 = sor.u32 %s83, %s84
    %p86 = scmp.eq.s32.totalorder %s85, 0
    %s88 = sadd.s32 %s87, 1
    %s89 = scalar_select %p86, %s87, %s88
    %p92 = pneg %p86
    %p93 = scmp.eq.s32.totalorder %s9, 1
    %p94 = por %p92, %p93
    %p95 = scmp.ne.s32.totalorder %s87, %s90
    %p96 = scmp.eq.s32.totalorder %s9, 0
    %p97 = por %p95, %p96
    %p98 = scmp.ne.s32.totalorder %s87, %s90
    %p99 = scmp.eq.s32.totalorder %s14, 1
    %p100 = por %p98, %p99
    %p101 = scmp.ne.s32.totalorder %s90, %s91
    %p102 = scmp.eq.s32.totalorder %s14, 0
    %p103 = por %p101, %p102
    %p104 = scmp.ne.s32.totalorder %s90, %s91
    %p105 = scmp.eq.s32.totalorder %s15, 1
    %p106 = por %p104, %p105
    %p108 = scmp.ne.s32.totalorder %s91, %s107
    %p109 = scmp.eq.s32.totalorder %s15, 0
    %p110 = por %p108, %p109
    %s111 = ssub.s32 %s16, %s28
    %s112 = ssub.s32 %s17, %s24
    %s113 = sor.u32 %s111, %s112
    %p114 = scmp.eq.s32.totalorder %s113, 0
    %s116 = sadd.s32 %s115, 1
    %s117 = scalar_select %p114, %s115, %s116
    %p120 = pneg %p114
    %p121 = scmp.eq.s32.totalorder %s9, 1
    %p122 = por %p120, %p121
    %p123 = scmp.ne.s32.totalorder %s115, %s118
    %p124 = scmp.eq.s32.totalorder %s9, 0
    %p125 = por %p123, %p124
    %p126 = scmp.ne.s32.totalorder %s115, %s118
    %p127 = scmp.eq.s32.totalorder %s14, 1
    %p128 = por %p126, %p127
    %p129 = scmp.ne.s32.totalorder %s118, %s119
    %p130 = scmp.eq.s32.totalorder %s14, 0
    %p131 = por %p129, %p130
    %p132 = scmp.ne.s32.totalorder %s118, %s119
    %p133 = scmp.eq.s32.totalorder %s15, 1
    %p134 = por %p132, %p133
    %p136 = scmp.ne.s32.totalorder %s119, %s135
    %p137 = scmp.eq.s32.totalorder %s15, 0
    %p138 = por %p136, %p137
    %p139 = scmp.le.s32.totalorder 1, %s9
    %p140 = scmp.lt.s32.totalorder %s9, 3
    %p141 = pnand %p139, %p140
    %p142 = pneg %p141
    // Predicated region
    $region9: #{se_bottleneck_forward.9} parent=5 // pred_check
      _
    $region10: #{se_bottleneck_forward.9} parent=5 // pred_check_branch
      %144 = sbr.rel (%p141) target = $region12
    $region11: #{se_bottleneck_forward.9} parent=5 // pred_region
      %s145 = ssub.s32 %s9, 1
    $region12: #{se_bottleneck_forward.9} parent=5 // pred_fallthru
      _
    %p146 = scmp.lt.s32.totalorder %s9, 2
    // Predicated region
    $region13: #{se_bottleneck_forward.9} parent=5 // pred_check
      %p147 = pneg %p146
    $region14: #{se_bottleneck_forward.9} parent=5 // pred_check_branch
      %149 = sbr.rel (%p147) target = $region16
    $region15: #{se_bottleneck_forward.9} parent=5 // pred_region
      // Predicated region
      $region17: #{se_bottleneck_forward.9} parent=15 // pred_check
        %p150 = pneg %p43
      $region18: #{se_bottleneck_forward.9} parent=15 // pred_check_branch
        %152 = sbr.rel (%p150) target = $region20
      $region19: #{se_bottleneck_forward.9} parent=15 // pred_region
        %s153 = smul.u32 32, %s17
        %p154 = scmp.lt.s32.totalorder %s16, 1
        %s155 = scalar_select %p154, %s16, 1
        %p156 = scmp.lt.s32.totalorder %s153, 31
        %s157 = scalar_select %p156, %s153, 31
        %s158 = smul.addr %s155, 32
        %s159 = sadd.s32 %s157, %s158
        %s160 = smul.addr %s159, 4
        %s161 = scalar_lea.vmem %s0, %s160
        %s162 = smul.u32 32, %s17
      $region20: #{se_bottleneck_forward.9} parent=15 // pred_fallthru
        _
      // Predicated region
      $region21: #{se_bottleneck_forward.9} parent=15 // pred_check
        %p163 = pneg %p69
      $region22: #{se_bottleneck_forward.9} parent=15 // pred_check_branch
        %165 = sbr.rel (%p163) target = $region24
      $region23: #{se_bottleneck_forward.9} parent=15 // pred_region
        %p166 = scmp.lt.s32.totalorder %s16, 1
        %s167 = scalar_select %p166, %s16, 1
        %s168 = scalar_lea.vmem %s1, %s167
      $region24: #{se_bottleneck_forward.9} parent=15 // pred_fallthru
        _
      // Predicated region
      $region25: #{se_bottleneck_forward.9} parent=15 // pred_check
        %p169 = pneg %p97
      $region26: #{se_bottleneck_forward.9} parent=15 // pred_check_branch
        %171 = sbr.rel (%p169) target = $region28
      $region27: #{se_bottleneck_forward.9} parent=15 // pred_region
        %s172 = smul.u32 32, %s17
        %p173 = scmp.lt.s32.totalorder %s16, 1
        %s174 = scalar_select %p173, %s16, 1
        %p175 = scmp.lt.s32.totalorder %s172, 31
        %s176 = scalar_select %p175, %s172, 31
        %s177 = smul.addr %s174, 32
        %s178 = sadd.s32 %s176, %s177
        %s179 = smul.addr %s178, 8
        %s180 = scalar_lea.vmem %s2, %s179
        %s181 = smul.u32 32, %s17
      $region28: #{se_bottleneck_forward.9} parent=15 // pred_fallthru
        _
    $region16: #{se_bottleneck_forward.9} parent=5 // pred_fallthru
      _
    %p182 = scmp.le.s32.totalorder 1, %s9
    %p183 = scmp.lt.s32.totalorder %s9, 3
    %p184 = pnand %p182, %p183
    %p185 = pneg %p184
    // Predicated region
    $region29: #{se_bottleneck_forward.9} parent=5 // pred_check
      _
    $region30: #{se_bottleneck_forward.9} parent=5 // pred_check_branch
      %187 = sbr.rel (%p184) target = $region32
    $region31: #{se_bottleneck_forward.9} parent=5 // pred_region
      %s188 = ssub.s32 %s9, 1
      %s189 = smul.u32 32, %s19
      %p190 = scmp.lt.s32.totalorder %s18, 1
      %s191 = scalar_select %p190, %s18, 1
      %p192 = scmp.lt.s32.totalorder %s189, 31
      %s193 = scalar_select %p192, %s189, 31
      %s194 = smul.addr %s191, 32
      %s195 = sadd.s32 %s193, %s194
      %s196 = smul.addr %s195, 4
      %s197 = scalar_lea.vmem %s0, %s196
      %p198 = pneg %p49
      %p199 = pneg %p46
      %p200 = scmp.lt.s32.totalorder %s18, 1
      %s201 = scalar_select %p200, %s18, 1
      %s202 = scalar_lea.vmem %s1, %s201
      %p203 = pneg %p75
      %p204 = pneg %p72
      %s205 = smul.u32 32, %s19
      %p206 = scmp.lt.s32.totalorder %s18, 1
      %s207 = scalar_select %p206, %s18, 1
      %p208 = scmp.lt.s32.totalorder %s205, 31
      %s209 = scalar_select %p208, %s205, 31
      %s210 = smul.addr %s207, 32
      %s211 = sadd.s32 %s209, %s210
      %s212 = smul.addr %s211, 8
      %s213 = scalar_lea.vmem %s2, %s212
      %p214 = pneg %p103
      %p215 = pneg %p100
      %p216 = pneg %p131
      %p217 = pneg %p128
      %s218 = smul.u32 32, %s19
      %p219 = scmp.lt.s32.totalorder %s18, 1
      %s220 = scalar_select %p219, %s18, 1
      %p221 = scmp.lt.s32.totalorder %s218, 31
      %s222 = scalar_select %p221, %s218, 31
      %s223 = smul.addr %s220, 32
      %s224 = sadd.s32 %s222, %s223
      %s225 = smul.addr %s224, 8
      %s226 = scalar_lea.vmem %s3, %s225
      %s227 = smul.u32 32, %s19
      %p228 = scmp.lt.s32.totalorder %s18, 1
      %s229 = scalar_select %p228, %s18, 1
      %p230 = scmp.lt.s32.totalorder %s227, 31
      %s231 = scalar_select %p230, %s227, 31
      %s232 = smul.addr %s229, 32
      %s233 = sadd.s32 %s231, %s232
      %s234 = smul.addr %s233, 4
      %s235 = scalar_lea.vmem %s0, %s234
      %s236 = smul.u32 32, %s19
      %p237 = scmp.lt.s32.totalorder %s18, 1
      %s238 = scalar_select %p237, %s18, 1
      %s239 = scalar_lea.vmem %s1, %s238
      %s240 = smul.u32 32, %s19
      %p241 = scmp.lt.s32.totalorder %s18, 1
      %s242 = scalar_select %p241, %s18, 1
      %p243 = scmp.lt.s32.totalorder %s240, 31
      %s244 = scalar_select %p243, %s240, 31
      %s245 = smul.addr %s242, 32
      %s246 = sadd.s32 %s244, %s245
      %s247 = smul.addr %s246, 8
      %s248 = scalar_lea.vmem %s2, %s247
      %s249 = smul.u32 32, %s19
      %s250 = smul.u32 32, %s19
      %p251 = scmp.lt.s32.totalorder %s18, 1
      %s252 = scalar_select %p251, %s18, 1
      %p253 = scmp.lt.s32.totalorder %s250, 31
      %s254 = scalar_select %p253, %s250, 31
      %s255 = smul.addr %s252, 32
      %s256 = sadd.s32 %s254, %s255
      %s257 = smul.addr %s256, 8
      %s258 = scalar_lea.vmem %s3, %s257
      %s259 = smul.u32 32, %s19
      %v260 = vld [vmem:[%s235] sm:$0xf]
      %v261 = vld [vmem:[%s235 + $0x4] sm:$0xf]
      %v262 = vld [vmem:[%s235 + $0x8] sm:$0xf]
      %v263 = vld [vmem:[%s235 + $0xc] sm:$0xf]
      %v264 = vld [vmem:[%s235 + $0x10] sm:$0xf]
      %v265 = vld [vmem:[%s235 + $0x14] sm:$0xf]
      %v266 = vld [vmem:[%s235 + $0x18] sm:$0xf]
      %v267 = vld [vmem:[%s235 + $0x1c] sm:$0xf]
      %v268 = vld [vmem:[%s235 + $0x20] sm:$0xf]
      %v269 = vld [vmem:[%s235 + $0x24] sm:$0xf]
      %v270 = vld [vmem:[%s235 + $0x28] sm:$0xf]
      %v271 = vld [vmem:[%s235 + $0x2c] sm:$0xf]
      %v272 = vld [vmem:[%s235 + $0x30] sm:$0xf]
      %v273 = vld [vmem:[%s235 + $0x34] sm:$0xf]
      %v274 = vld [vmem:[%s235 + $0x38] sm:$0xf]
      %v275 = vld [vmem:[%s235 + $0x3c] sm:$0xf]
      %v276 = vld [vmem:[%s235 + $0x40] sm:$0xf]
      %v277 = vld [vmem:[%s235 + $0x44] sm:$0xf]
      %v278 = vld [vmem:[%s235 + $0x48] sm:$0xf]
      %v279 = vld [vmem:[%s235 + $0x4c] sm:$0xf]
      %v280 = vld [vmem:[%s235 + $0x50] sm:$0xf]
      %v281 = vld [vmem:[%s235 + $0x54] sm:$0xf]
      %v282 = vld [vmem:[%s235 + $0x58] sm:$0xf]
      %v283 = vld [vmem:[%s235 + $0x5c] sm:$0xf]
      %v284 = vld [vmem:[%s235 + $0x60] sm:$0xf]
      %v285 = vld [vmem:[%s235 + $0x64] sm:$0xf]
      %v286 = vld [vmem:[%s235 + $0x68] sm:$0xf]
      %v287 = vld [vmem:[%s235 + $0x6c] sm:$0xf]
      %v288 = vld [vmem:[%s235 + $0x70] sm:$0xf]
      %v289 = vld [vmem:[%s235 + $0x74] sm:$0xf]
      %v290 = vld [vmem:[%s235 + $0x78] sm:$0xf]
      %v291 = vld [vmem:[%s235 + $0x7c] sm:$0xf]
      %v292 = vunpack.c.l.bf16 %v260
      %v293 = vunpack.c.l.bf16 %v261
      %v294 = vunpack.c.l.bf16 %v262
      %v295 = vunpack.c.l.bf16 %v263
      %v296 = vunpack.c.l.bf16 %v264
      %v297 = vunpack.c.l.bf16 %v265
      %v298 = vunpack.c.l.bf16 %v266
      %v299 = vunpack.c.l.bf16 %v267
      %v300 = vunpack.c.l.bf16 %v268
      %v301 = vunpack.c.l.bf16 %v269
      %v302 = vunpack.c.l.bf16 %v270
      %v303 = vunpack.c.l.bf16 %v271
      %v304 = vunpack.c.l.bf16 %v272
      %v305 = vunpack.c.l.bf16 %v273
      %v306 = vunpack.c.l.bf16 %v274
      %v307 = vunpack.c.l.bf16 %v275
      %v308 = vunpack.c.l.bf16 %v276
      %v309 = vunpack.c.l.bf16 %v277
      %v310 = vunpack.c.l.bf16 %v278
      %v311 = vunpack.c.l.bf16 %v279
      %v312 = vunpack.c.l.bf16 %v280
      %v313 = vunpack.c.l.bf16 %v281
      %v314 = vunpack.c.l.bf16 %v282
      %v315 = vunpack.c.l.bf16 %v283
      %v316 = vunpack.c.l.bf16 %v284
      %v317 = vunpack.c.l.bf16 %v285
      %v318 = vunpack.c.l.bf16 %v286
      %v319 = vunpack.c.l.bf16 %v287
      %v320 = vunpack.c.l.bf16 %v288
      %v321 = vunpack.c.l.bf16 %v289
      %v322 = vunpack.c.l.bf16 %v290
      %v323 = vunpack.c.l.bf16 %v291
      %v324 = vld [vmem:[%s239] sm:$0x1]
      %v326 = vlaneseq
      %v327 = vshrl.u32 %v326, 7
      %v328 = vsub.s32 0, %v327
      %v329 = vrot.slane %v324, %v328
      %v331 = vmul.f32 %v292, %v329
      %v332 = vmul.f32 %v293, %v329
      %v333 = vmul.f32 %v294, %v329
      %v334 = vmul.f32 %v295, %v329
      %v335 = vmul.f32 %v296, %v329
      %v336 = vmul.f32 %v297, %v329
      %v337 = vmul.f32 %v298, %v329
      %v338 = vmul.f32 %v299, %v329
      %v339 = vmul.f32 %v300, %v329
      %v340 = vmul.f32 %v301, %v329
      %v341 = vmul.f32 %v302, %v329
      %v342 = vmul.f32 %v303, %v329
      %v343 = vmul.f32 %v304, %v329
      %v344 = vmul.f32 %v305, %v329
      %v345 = vmul.f32 %v306, %v329
      %v346 = vmul.f32 %v307, %v329
      %v347 = vmul.f32 %v308, %v329
      %v348 = vmul.f32 %v309, %v329
      %v349 = vmul.f32 %v310, %v329
      %v350 = vmul.f32 %v311, %v329
      %v351 = vmul.f32 %v312, %v329
      %v352 = vmul.f32 %v313, %v329
      %v353 = vmul.f32 %v314, %v329
      %v354 = vmul.f32 %v315, %v329
      %v355 = vmul.f32 %v316, %v329
      %v356 = vmul.f32 %v317, %v329
      %v357 = vmul.f32 %v318, %v329
      %v358 = vmul.f32 %v319, %v329
      %v359 = vmul.f32 %v320, %v329
      %v360 = vmul.f32 %v321, %v329
      %v361 = vmul.f32 %v322, %v329
      %v362 = vmul.f32 %v323, %v329
      %v363 = vld [vmem:[%s248] sm:$0xff]
      %v364 = vld [vmem:[%s248 + $0x8] sm:$0xff]
      %v365 = vld [vmem:[%s248 + $0x10] sm:$0xff]
      %v366 = vld [vmem:[%s248 + $0x18] sm:$0xff]
      %v367 = vld [vmem:[%s248 + $0x20] sm:$0xff]
      %v368 = vld [vmem:[%s248 + $0x28] sm:$0xff]
      %v369 = vld [vmem:[%s248 + $0x30] sm:$0xff]
      %v370 = vld [vmem:[%s248 + $0x38] sm:$0xff]
      %v371 = vld [vmem:[%s248 + $0x40] sm:$0xff]
      %v372 = vld [vmem:[%s248 + $0x48] sm:$0xff]
      %v373 = vld [vmem:[%s248 + $0x50] sm:$0xff]
      %v374 = vld [vmem:[%s248 + $0x58] sm:$0xff]
      %v375 = vld [vmem:[%s248 + $0x60] sm:$0xff]
      %v376 = vld [vmem:[%s248 + $0x68] sm:$0xff]
      %v377 = vld [vmem:[%s248 + $0x70] sm:$0xff]
      %v378 = vld [vmem:[%s248 + $0x78] sm:$0xff]
      %v379 = vld [vmem:[%s248 + $0x80] sm:$0xff]
      %v380 = vld [vmem:[%s248 + $0x88] sm:$0xff]
      %v381 = vld [vmem:[%s248 + $0x90] sm:$0xff]
      %v382 = vld [vmem:[%s248 + $0x98] sm:$0xff]
      %v383 = vld [vmem:[%s248 + $0xa0] sm:$0xff]
      %v384 = vld [vmem:[%s248 + $0xa8] sm:$0xff]
      %v385 = vld [vmem:[%s248 + $0xb0] sm:$0xff]
      %v386 = vld [vmem:[%s248 + $0xb8] sm:$0xff]
      %v387 = vld [vmem:[%s248 + $0xc0] sm:$0xff]
      %v388 = vld [vmem:[%s248 + $0xc8] sm:$0xff]
      %v389 = vld [vmem:[%s248 + $0xd0] sm:$0xff]
      %v390 = vld [vmem:[%s248 + $0xd8] sm:$0xff]
      %v391 = vld [vmem:[%s248 + $0xe0] sm:$0xff]
      %v392 = vld [vmem:[%s248 + $0xe8] sm:$0xff]
      %v393 = vld [vmem:[%s248 + $0xf0] sm:$0xff]
      %v394 = vld [vmem:[%s248 + $0xf8] sm:$0xff]
      %v395 = vadd.f32 %v331, %v363
      %v396 = vadd.f32 %v332, %v364
      %v397 = vadd.f32 %v333, %v365
      %v398 = vadd.f32 %v334, %v366
      %v399 = vadd.f32 %v335, %v367
      %v400 = vadd.f32 %v336, %v368
      %v401 = vadd.f32 %v337, %v369
      %v402 = vadd.f32 %v338, %v370
      %v403 = vadd.f32 %v339, %v371
      %v404 = vadd.f32 %v340, %v372
      %v405 = vadd.f32 %v341, %v373
      %v406 = vadd.f32 %v342, %v374
      %v407 = vadd.f32 %v343, %v375
      %v408 = vadd.f32 %v344, %v376
      %v409 = vadd.f32 %v345, %v377
      %v410 = vadd.f32 %v346, %v378
      %v411 = vadd.f32 %v347, %v379
      %v412 = vadd.f32 %v348, %v380
      %v413 = vadd.f32 %v349, %v381
      %v414 = vadd.f32 %v350, %v382
      %v415 = vadd.f32 %v351, %v383
      %v416 = vadd.f32 %v352, %v384
      %v417 = vadd.f32 %v353, %v385
      %v418 = vadd.f32 %v354, %v386
      %v419 = vadd.f32 %v355, %v387
      %v420 = vadd.f32 %v356, %v388
      %v421 = vadd.f32 %v357, %v389
      %v422 = vadd.f32 %v358, %v390
      %v423 = vadd.f32 %v359, %v391
      %v424 = vadd.f32 %v360, %v392
      %v425 = vadd.f32 %v361, %v393
      %v426 = vadd.f32 %v362, %v394
      %v427 = vmax.f32 %v395, 0.0
      %v428 = vmax.f32 %v396, 0.0
      %v429 = vmax.f32 %v397, 0.0
      %v430 = vmax.f32 %v398, 0.0
      %v431 = vmax.f32 %v399, 0.0
      %v432 = vmax.f32 %v400, 0.0
      %v433 = vmax.f32 %v401, 0.0
      %v434 = vmax.f32 %v402, 0.0
      %v435 = vmax.f32 %v403, 0.0
      %v436 = vmax.f32 %v404, 0.0
      %v437 = vmax.f32 %v405, 0.0
      %v438 = vmax.f32 %v406, 0.0
      %v439 = vmax.f32 %v407, 0.0
      %v440 = vmax.f32 %v408, 0.0
      %v441 = vmax.f32 %v409, 0.0
      %v442 = vmax.f32 %v410, 0.0
      %v443 = vmax.f32 %v411, 0.0
      %v444 = vmax.f32 %v412, 0.0
      %v445 = vmax.f32 %v413, 0.0
      %v446 = vmax.f32 %v414, 0.0
      %v447 = vmax.f32 %v415, 0.0
      %v448 = vmax.f32 %v416, 0.0
      %v449 = vmax.f32 %v417, 0.0
      %v450 = vmax.f32 %v418, 0.0
      %v451 = vmax.f32 %v419, 0.0
      %v452 = vmax.f32 %v420, 0.0
      %v453 = vmax.f32 %v421, 0.0
      %v454 = vmax.f32 %v422, 0.0
      %v455 = vmax.f32 %v423, 0.0
      %v456 = vmax.f32 %v424, 0.0
      %v457 = vmax.f32 %v425, 0.0
      %v458 = vmax.f32 %v426, 0.0
      %459 = vst [vmem:[%s258] sm:$0xff] %v427
      %460 = vst [vmem:[%s258 + $0x8] sm:$0xff] %v428
      %461 = vst [vmem:[%s258 + $0x10] sm:$0xff] %v429
      %462 = vst [vmem:[%s258 + $0x18] sm:$0xff] %v430
      %463 = vst [vmem:[%s258 + $0x20] sm:$0xff] %v431
      %464 = vst [vmem:[%s258 + $0x28] sm:$0xff] %v432
      %465 = vst [vmem:[%s258 + $0x30] sm:$0xff] %v433
      %466 = vst [vmem:[%s258 + $0x38] sm:$0xff] %v434
      %467 = vst [vmem:[%s258 + $0x40] sm:$0xff] %v435
      %468 = vst [vmem:[%s258 + $0x48] sm:$0xff] %v436
      %469 = vst [vmem:[%s258 + $0x50] sm:$0xff] %v437
      %470 = vst [vmem:[%s258 + $0x58] sm:$0xff] %v438
      %471 = vst [vmem:[%s258 + $0x60] sm:$0xff] %v439
      %472 = vst [vmem:[%s258 + $0x68] sm:$0xff] %v440
      %473 = vst [vmem:[%s258 + $0x70] sm:$0xff] %v441
      %474 = vst [vmem:[%s258 + $0x78] sm:$0xff] %v442
      %475 = vst [vmem:[%s258 + $0x80] sm:$0xff] %v443
      %476 = vst [vmem:[%s258 + $0x88] sm:$0xff] %v444
      %477 = vst [vmem:[%s258 + $0x90] sm:$0xff] %v445
      %478 = vst [vmem:[%s258 + $0x98] sm:$0xff] %v446
      %479 = vst [vmem:[%s258 + $0xa0] sm:$0xff] %v447
      %480 = vst [vmem:[%s258 + $0xa8] sm:$0xff] %v448
      %481 = vst [vmem:[%s258 + $0xb0] sm:$0xff] %v449
      %482 = vst [vmem:[%s258 + $0xb8] sm:$0xff] %v450
      %483 = vst [vmem:[%s258 + $0xc0] sm:$0xff] %v451
      %484 = vst [vmem:[%s258 + $0xc8] sm:$0xff] %v452
      %485 = vst [vmem:[%s258 + $0xd0] sm:$0xff] %v453
      %486 = vst [vmem:[%s258 + $0xd8] sm:$0xff] %v454
      %487 = vst [vmem:[%s258 + $0xe0] sm:$0xff] %v455
      %488 = vst [vmem:[%s258 + $0xe8] sm:$0xff] %v456
      %489 = vst [vmem:[%s258 + $0xf0] sm:$0xff] %v457
      %490 = vst [vmem:[%s258 + $0xf8] sm:$0xff] %v458
      %s491 = smul.u32 32, %s19
      %p492 = scmp.lt.s32.totalorder %s18, 1
      %s493 = scalar_select %p492, %s18, 1
      %p494 = scmp.lt.s32.totalorder %s491, 31
      %s495 = scalar_select %p494, %s491, 31
      %s496 = smul.addr %s493, 32
      %s497 = sadd.s32 %s495, %s496
      %s498 = smul.addr %s497, 8
      %s499 = scalar_lea.vmem %s3, %s498
      // Predicated region
      $region33: #{se_bottleneck_forward.9} parent=31 // pred_check
        %p500 = pneg %p128
      $region34: #{se_bottleneck_forward.9} parent=31 // pred_check_branch
        %502 = sbr.rel (%p500) target = $region36
      $region35: #{se_bottleneck_forward.9} parent=31 // pred_region
        %s503 = smul.u32 32, %s19
      $region36: #{se_bottleneck_forward.9} parent=31 // pred_fallthru
        _
    $region32: #{se_bottleneck_forward.9} parent=5 // pred_fallthru
      _
    %p504 = scmp.le.s32.totalorder 2, %s9
    // Predicated region
    $region37: #{se_bottleneck_forward.9} parent=5 // pred_check
      %p505 = pneg %p504
    $region38: #{se_bottleneck_forward.9} parent=5 // pred_check_branch
      %507 = sbr.rel (%p505) target = $region40
    $region39: #{se_bottleneck_forward.9} parent=5 // pred_region
      %s508 = ssub.s32 %s9, 2
      // Predicated region
      $region41: #{se_bottleneck_forward.9} parent=39 // pred_check
        %p509 = pneg %p134
      $region42: #{se_bottleneck_forward.9} parent=39 // pred_check_branch
        %511 = sbr.rel (%p509) target = $region44
      $region43: #{se_bottleneck_forward.9} parent=39 // pred_region
        %s512 = smul.u32 32, %s21
        %p513 = scmp.lt.s32.totalorder %s20, 1
        %s514 = scalar_select %p513, %s20, 1
        %p515 = scmp.lt.s32.totalorder %s512, 31
        %s516 = scalar_select %p515, %s512, 31
        %s517 = smul.addr %s514, 32
        %s518 = sadd.s32 %s516, %s517
        %s519 = smul.addr %s518, 8
        %s520 = scalar_lea.vmem %s3, %s519
      $region44: #{se_bottleneck_forward.9} parent=39 // pred_fallthru
        _
    $region40: #{se_bottleneck_forward.9} parent=5 // pred_fallthru
      _
  $region6: #{se_bottleneck_forward.9} parent=0 // loop_footer
    %s13 = sadd.s32 1, %s9
  $region7: #{se_bottleneck_forward.9} parent=0 // loop_footer_branch
    %8 = sbr.rel target = $region3
  $region8: #{se_bottleneck_forward.9} parent=0 // loop_exit
    _

// kernel: se_bottleneck_forward.6
$region0: #{se_bottleneck_forward.6}
  #allocation0 [shape = 'u32[]', space=smem, size = 0x4, offset = 0x4, fixed_abs, tag = 'smem constant byte address 0x4 - core index']
  #allocation1 [shape = 'u32[144,128]{1,0:T(1,128)}', space=vmem, size = 0x12000, scoped, tag = 'internal scratch']
  #allocation2 [shape = 'f32[256,128]{1,0:T(8,128)}', space=vmem, size = 0x20000, scoped, tag = 'scratch operand']
  %s0 = inlined_call_operand.vmem [shape: bf16[2,18,18,128], index: 0, kind: input, shape index: {}]
  %s1 = inlined_call_operand.vmem [shape: bf16[9,128,128], index: 1, kind: input, shape index: {}]
  %s2 = inlined_call_operand.vmem [shape: f32[1,128], index: 2, kind: input, shape index: {}]
  %s3 = inlined_call_operand.vmem [shape: bf16[2,256,128], index: 3, kind: output, shape index: {}]
  %s4 = sld [smem:[#allocation0]]
  $region45: #{se_bottleneck_forward.6} parent=0
    _
  %s6 = ssub.s32 1, %s4
  %s7 = scalar_select 0, %s6, %s4
  loop: start=0, step=1, limit=4
  $region2: #{se_bottleneck_forward.6} parent=0 // loop_pre_header
    _
  $region3: #{se_bottleneck_forward.6} parent=0 // loop_header
    %s9 = sphi 0, %s13
    %p10 = scmp.ge.s32.totalorder %s9, 4
    %s16 = sphi 0, %s28
    %s17 = sphi 0, %s24
    %s18 = sphi 0, %s16
    %s19 = sphi 0, %s17
    %s20 = sphi 0, %s18
    %s21 = sphi 0, %s19
    %s31 = sphi 0, %s33
    %s34 = sphi 0, %s31
    %s35 = sphi 0, %s34
    %s51 = sphi 0, %s35
    %s57 = sphi 0, %s59
    %s60 = sphi 0, %s57
    %s61 = sphi 0, %s60
    %s77 = sphi 0, %s61
    %s83 = sphi 0, %s85
    %s86 = sphi 0, %s83
    %s87 = sphi 0, %s86
    %s103 = sphi 0, %s87
    %s111 = sphi 0, %s113
    %s114 = sphi 0, %s111
    %s115 = sphi 0, %s114
    %s131 = sphi 0, %s115
  $region4: #{se_bottleneck_forward.6} parent=0 // loop_header_branch
    %12 = sbr.rel (%p10) target = $region8
  $region5: #{se_bottleneck_forward.6} parent=0 // loop_body
    %s14 = ssub.s32 %s9, 1
    %s15 = ssub.s32 %s9, 2
    %s22 = sadd.s32 1, %s17
    %p23 = scmp.ge.s32.totalorder %s22, 1
    %s24 = scalar_select %p23, 0, %s22
    %s25 = sadd.s32 1, %s16
    %s26 = scalar_select %p23, %s25, %s16
    %p27 = scmp.ge.s32.totalorder %s26, 2
    %s28 = scalar_select %p27, 0, %s26
    %s29 = ssub.s32 %s16, %s28
    %p30 = scmp.eq.s32.totalorder %s29, 0
    %s32 = sadd.s32 %s31, 1
    %s33 = scalar_select %p30, %s31, %s32
    %p36 = pneg %p30
    %p37 = scmp.eq.s32.totalorder %s9, 1
    %p38 = por %p36, %p37
    %p39 = scmp.ne.s32.totalorder %s31, %s34
    %p40 = scmp.eq.s32.totalorder %s9, 0
    %p41 = por %p39, %p40
    %p42 = scmp.ne.s32.totalorder %s31, %s34
    %p43 = scmp.eq.s32.totalorder %s14, 1
    %p44 = por %p42, %p43
    %p45 = scmp.ne.s32.totalorder %s34, %s35
    %p46 = scmp.eq.s32.totalorder %s14, 0
    %p47 = por %p45, %p46
    %p48 = scmp.ne.s32.totalorder %s34, %s35
    %p49 = scmp.eq.s32.totalorder %s15, 1
    %p50 = por %p48, %p49
    %p52 = scmp.ne.s32.totalorder %s35, %s51
    %p53 = scmp.eq.s32.totalorder %s15, 0
    %p54 = por %p52, %p53
    %s55 = ssub.s32 %s17, %s24
    %p56 = scmp.eq.s32.totalorder %s55, 0
    %s58 = sadd.s32 %s57, 1
    %s59 = scalar_select %p56, %s57, %s58
    %p62 = pneg %p56
    %p63 = scmp.eq.s32.totalorder %s9, 1
    %p64 = por %p62, %p63
    %p65 = scmp.ne.s32.totalorder %s57, %s60
    %p66 = scmp.eq.s32.totalorder %s9, 0
    %p67 = por %p65, %p66
    %p68 = scmp.ne.s32.totalorder %s57, %s60
    %p69 = scmp.eq.s32.totalorder %s14, 1
    %p70 = por %p68, %p69
    %p71 = scmp.ne.s32.totalorder %s60, %s61
    %p72 = scmp.eq.s32.totalorder %s14, 0
    %p73 = por %p71, %p72
    %p74 = scmp.ne.s32.totalorder %s60, %s61
    %p75 = scmp.eq.s32.totalorder %s15, 1
    %p76 = por %p74, %p75
    %p78 = scmp.ne.s32.totalorder %s61, %s77
    %p79 = scmp.eq.s32.totalorder %s15, 0
    %p80 = por %p78, %p79
    %s81 = ssub.s32 %s17, %s24
    %p82 = scmp.eq.s32.totalorder %s81, 0
    %s84 = sadd.s32 %s83, 1
    %s85 = scalar_select %p82, %s83, %s84
    %p88 = pneg %p82
    %p89 = scmp.eq.s32.totalorder %s9, 1
    %p90 = por %p88, %p89
    %p91 = scmp.ne.s32.totalorder %s83, %s86
    %p92 = scmp.eq.s32.totalorder %s9, 0
    %p93 = por %p91, %p92
    %p94 = scmp.ne.s32.totalorder %s83, %s86
    %p95 = scmp.eq.s32.totalorder %s14, 1
    %p96 = por %p94, %p95
    %p97 = scmp.ne.s32.totalorder %s86, %s87
    %p98 = scmp.eq.s32.totalorder %s14, 0
    %p99 = por %p97, %p98
    %p100 = scmp.ne.s32.totalorder %s86, %s87
    %p101 = scmp.eq.s32.totalorder %s15, 1
    %p102 = por %p100, %p101
    %p104 = scmp.ne.s32.totalorder %s87, %s103
    %p105 = scmp.eq.s32.totalorder %s15, 0
    %p106 = por %p104, %p105
    %s107 = ssub.s32 %s16, %s28
    %s108 = ssub.s32 %s17, %s24
    %s109 = sor.u32 %s107, %s108
    %p110 = scmp.eq.s32.totalorder %s109, 0
    %s112 = sadd.s32 %s111, 1
    %s113 = scalar_select %p110, %s111, %s112
    %p116 = pneg %p110
    %p117 = scmp.eq.s32.totalorder %s9, 1
    %p118 = por %p116, %p117
    %p119 = scmp.ne.s32.totalorder %s111, %s114
    %p120 = scmp.eq.s32.totalorder %s9, 0
    %p121 = por %p119, %p120
    %p122 = scmp.ne.s32.totalorder %s111, %s114
    %p123 = scmp.eq.s32.totalorder %s14, 1
    %p124 = por %p122, %p123
    %p125 = scmp.ne.s32.totalorder %s114, %s115
    %p126 = scmp.eq.s32.totalorder %s14, 0
    %p127 = por %p125, %p126
    %p128 = scmp.ne.s32.totalorder %s114, %s115
    %p129 = scmp.eq.s32.totalorder %s15, 1
    %p130 = por %p128, %p129
    %p132 = scmp.ne.s32.totalorder %s115, %s131
    %p133 = scmp.eq.s32.totalorder %s15, 0
    %p134 = por %p132, %p133
    %p135 = scmp.le.s32.totalorder 1, %s9
    %p136 = scmp.lt.s32.totalorder %s9, 3
    %p137 = pnand %p135, %p136
    %p138 = pneg %p137
    // Predicated region
    $region9: #{se_bottleneck_forward.6} parent=5 // pred_check
      _
    $region10: #{se_bottleneck_forward.6} parent=5 // pred_check_branch
      %140 = sbr.rel (%p137) target = $region12
    $region11: #{se_bottleneck_forward.6} parent=5 // pred_region
      %s141 = ssub.s32 %s9, 1
      // Predicated region
      $region13: #{se_bottleneck_forward.6} parent=11 // pred_check
        %p142 = pneg %p73
      $region14: #{se_bottleneck_forward.6} parent=11 // pred_check_branch
        %144 = sbr.rel (%p142) target = $region16
      $region15: #{se_bottleneck_forward.6} parent=11 // pred_region
        %p145 = scmp.lt.s32.totalorder %s19, 0
        %s146 = scalar_select %p145, %s19, 0
        %s147 = smul.addr %s146, 4
        %s148 = scalar_lea.vmem %s1, %s147
      $region16: #{se_bottleneck_forward.6} parent=11 // pred_fallthru
        _
      // Predicated region
      $region17: #{se_bottleneck_forward.6} parent=11 // pred_check
        %p149 = pneg %p99
      $region18: #{se_bottleneck_forward.6} parent=11 // pred_check_branch
        %151 = sbr.rel (%p149) target = $region20
      $region19: #{se_bottleneck_forward.6} parent=11 // pred_region
        %p152 = scmp.lt.s32.totalorder %s19, 0
        %s153 = scalar_select %p152, %s19, 0
        %s154 = scalar_lea.vmem %s2, %s153
      $region20: #{se_bottleneck_forward.6} parent=11 // pred_fallthru
        _
    $region12: #{se_bottleneck_forward.6} parent=5 // pred_fallthru
      _
    %p155 = scmp.lt.s32.totalorder %s9, 2
    // Predicated region
    $region21: #{se_bottleneck_forward.6} parent=5 // pred_check
      %p156 = pneg %p155
    $region22: #{se_bottleneck_forward.6} parent=5 // pred_check_branch
      %158 = sbr.rel (%p156) target = $region24
    $region23: #{se_bottleneck_forward.6} parent=5 // pred_region
      // Predicated region
      $region25: #{se_bottleneck_forward.6} parent=23 // pred_check
        %p159 = pneg %p41
      $region26: #{se_bottleneck_forward.6} parent=23 // pred_check_branch
        %161 = sbr.rel (%p159) target = $region28
      $region27: #{se_bottleneck_forward.6} parent=23 // pred_region
        %p162 = scmp.lt.s32.totalorder %s16, 1
        %s163 = scalar_select %p162, %s16, 1
        %s164 = smul.addr %s163, 54
        %s165 = smul.addr %s164, 4
        %s166 = scalar_lea.vmem %s0, %s165
      $region28: #{se_bottleneck_forward.6} parent=23 // pred_fallthru
        _
    $region24: #{se_bottleneck_forward.6} parent=5 // pred_fallthru
      _
    %p167 = scmp.le.s32.totalorder 1, %s9
    %p168 = scmp.lt.s32.totalorder %s9, 3
    %p169 = pnand %p167, %p168
    %p170 = pneg %p169
    // Predicated region
    $region29: #{se_bottleneck_forward.6} parent=5 // pred_check
      _
    $region30: #{se_bottleneck_forward.6} parent=5 // pred_check_branch
      %172 = sbr.rel (%p169) target = $region32
    $region31: #{se_bottleneck_forward.6} parent=5 // pred_region
      %s173 = ssub.s32 %s9, 1
      %p174 = scmp.lt.s32.totalorder %s18, 1
      %s175 = scalar_select %p174, %s18, 1
      %s176 = smul.addr %s175, 54
      %s177 = smul.addr %s176, 4
      %s178 = scalar_lea.vmem %s0, %s177
      %p179 = pneg %p47
      %p180 = pneg %p44
      %p181 = scmp.lt.s32.totalorder %s19, 0
      %s182 = scalar_select %p181, %s19, 0
      %s183 = smul.addr %s182, 4
      %s184 = scalar_lea.vmem %s1, %s183
      %p185 = pneg %p73
      %p186 = pneg %p70
      %p187 = scmp.lt.s32.totalorder %s19, 0
      %s188 = scalar_select %p187, %s19, 0
      %s189 = scalar_lea.vmem %s2, %s188
      %p190 = pneg %p99
      %p191 = pneg %p96
      %p192 = pneg %p127
      %p193 = pneg %p124
      %p194 = scmp.lt.s32.totalorder %s18, 1
      %s195 = scalar_select %p194, %s18, 1
      %p196 = scmp.lt.s32.totalorder %s19, 0
      %s197 = scalar_select %p196, %s19, 0
      %s198 = smul.addr %s195, 32
      %s199 = sadd.s32 %s197, %s198
      %s200 = smul.addr %s199, 4
      %s201 = scalar_lea.vmem %s3, %s200
      %p202 = scmp.lt.s32.totalorder %s18, 1
      %s203 = scalar_select %p202, %s18, 1
      %s204 = smul.addr %s203, 54
      %s205 = smul.addr %s204, 4
      %s206 = scalar_lea.vmem %s0, %s205
      %p207 = scmp.lt.s32.totalorder %s19, 0
      %s208 = scalar_select %p207, %s19, 0
      %s209 = smul.addr %s208, 4
      %s210 = scalar_lea.vmem %s1, %s209
      %p211 = scmp.lt.s32.totalorder %s19, 0
      %s212 = scalar_select %p211, %s19, 0
      %s213 = scalar_lea.vmem %s2, %s212
      %p214 = scmp.lt.s32.totalorder %s18, 1
      %s215 = scalar_select %p214, %s18, 1
      %p216 = scmp.lt.s32.totalorder %s19, 0
      %s217 = scalar_select %p216, %s19, 0
      %s218 = smul.addr %s215, 32
      %s219 = sadd.s32 %s217, %s218
      %s220 = smul.addr %s219, 4
      %s221 = scalar_lea.vmem %s3, %s220
      %223 = vst [vmem:[#allocation2] sm:$0xff] 0.0
      %224 = vst [vmem:[#allocation2 + $0x8] sm:$0xff] 0.0
      %225 = vst [vmem:[#allocation2 + $0x10] sm:$0xff] 0.0
      %226 = vst [vmem:[#allocation2 + $0x18] sm:$0xff] 0.0
      %227 = vst [vmem:[#allocation2 + $0x20] sm:$0xff] 0.0
      %228 = vst [vmem:[#allocation2 + $0x28] sm:$0xff] 0.0
      %229 = vst [vmem:[#allocation2 + $0x30] sm:$0xff] 0.0
      %230 = vst [vmem:[#allocation2 + $0x38] sm:$0xff] 0.0
      %231 = vst [vmem:[#allocation2 + $0x40] sm:$0xff] 0.0
      %232 = vst [vmem:[#allocation2 + $0x48] sm:$0xff] 0.0
      %233 = vst [vmem:[#allocation2 + $0x50] sm:$0xff] 0.0
      %234 = vst [vmem:[#allocation2 + $0x58] sm:$0xff] 0.0
      %235 = vst [vmem:[#allocation2 + $0x60] sm:$0xff] 0.0
      %236 = vst [vmem:[#allocation2 + $0x68] sm:$0xff] 0.0
      %237 = vst [vmem:[#allocation2 + $0x70] sm:$0xff] 0.0
      %238 = vst [vmem:[#allocation2 + $0x78] sm:$0xff] 0.0
      %239 = vst [vmem:[#allocation2 + $0x80] sm:$0xff] 0.0
      %240 = vst [vmem:[#allocation2 + $0x88] sm:$0xff] 0.0
      %241 = vst [vmem:[#allocation2 + $0x90] sm:$0xff] 0.0
      %242 = vst [vmem:[#allocation2 + $0x98] sm:$0xff] 0.0
      %243 = vst [vmem:[#allocation2 + $0xa0] sm:$0xff] 0.0
      %244 = vst [vmem:[#allocation2 + $0xa8] sm:$0xff] 0.0
      %245 = vst [vmem:[#allocation2 + $0xb0] sm:$0xff] 0.0
      %246 = vst [vmem:[#allocation2 + $0xb8] sm:$0xff] 0.0
      %247 = vst [vmem:[#allocation2 + $0xc0] sm:$0xff] 0.0
      %248 = vst [vmem:[#allocation2 + $0xc8] sm:$0xff] 0.0
      %249 = vst [vmem:[#allocation2 + $0xd0] sm:$0xff] 0.0
      %250 = vst [vmem:[#allocation2 + $0xd8] sm:$0xff] 0.0
      %251 = vst [vmem:[#allocation2 + $0xe0] sm:$0xff] 0.0
      %252 = vst [vmem:[#allocation2 + $0xe8] sm:$0xff] 0.0
      %253 = vst [vmem:[#allocation2 + $0xf0] sm:$0xff] 0.0
      %254 = vst [vmem:[#allocation2 + $0xf8] sm:$0xff] 0.0
      %v255 = vld [vmem:[%s206] sm:$0xf]
      %v256 = vld [vmem:[%s206 + $0x4] sm:$0xf]
      %v257 = vld [vmem:[%s206 + $0xc] sm:$0xf]
      %v258 = vld [vmem:[%s206 + $0x10] sm:$0xf]
      %v259 = vld [vmem:[%s206 + $0x18] sm:$0xf]
      %v260 = vld [vmem:[%s206 + $0x1c] sm:$0xf]
      %v261 = vld [vmem:[%s206 + $0x24] sm:$0xf]
      %v262 = vld [vmem:[%s206 + $0x28] sm:$0xf]
      %v263 = vld [vmem:[%s206 + $0x30] sm:$0xf]
      %v264 = vld [vmem:[%s206 + $0x34] sm:$0xf]
      %v265 = vld [vmem:[%s206 + $0x3c] sm:$0xf]
      %v266 = vld [vmem:[%s206 + $0x40] sm:$0xf]
      %v267 = vld [vmem:[%s206 + $0x48] sm:$0xf]
      %v268 = vld [vmem:[%s206 + $0x4c] sm:$0xf]
      %v269 = vld [vmem:[%s206 + $0x54] sm:$0xf]
      %v270 = vld [vmem:[%s206 + $0x58] sm:$0xf]
      %v271 = vld [vmem:[%s206 + $0x60] sm:$0xf]
      %v272 = vld [vmem:[%s206 + $0x64] sm:$0xf]
      %v273 = vld [vmem:[%s206 + $0x6c] sm:$0xf]
      %v274 = vld [vmem:[%s206 + $0x70] sm:$0xf]
      %v275 = vld [vmem:[%s206 + $0x78] sm:$0xf]
      %v276 = vld [vmem:[%s206 + $0x7c] sm:$0xf]
      %v277 = vld [vmem:[%s206 + $0x84] sm:$0xf]
      %v278 = vld [vmem:[%s206 + $0x88] sm:$0xf]
      %v279 = vld [vmem:[%s206 + $0x90] sm:$0xf]
      %v280 = vld [vmem:[%s206 + $0x94] sm:$0xf]
      %v281 = vld [vmem:[%s206 + $0x9c] sm:$0xf]
      %v282 = vld [vmem:[%s206 + $0xa0] sm:$0xf]
      %v283 = vld [vmem:[%s206 + $0xa8] sm:$0xf]
      %v284 = vld [vmem:[%s206 + $0xac] sm:$0xf]
      %v285 = vld [vmem:[%s206 + $0xb4] sm:$0xf]
      %v286 = vld [vmem:[%s206 + $0xb8] sm:$0xf]
      %v287 = vld [vmem:[#allocation2] sm:$0xff]
      %v288 = vld [vmem:[#allocation2 + $0x8] sm:$0xff]
      %v289 = vld [vmem:[#allocation2 + $0x10] sm:$0xff]
      %v290 = vld [vmem:[#allocation2 + $0x18] sm:$0xff]
      %v291 = vld [vmem:[#allocation2 + $0x20] sm:$0xff]
      %v292 = vld [vmem:[#allocation2 + $0x28] sm:$0xff]
      %v293 = vld [vmem:[#allocation2 + $0x30] sm:$0xff]
      %v294 = vld [vmem:[#allocation2 + $0x38] sm:$0xff]
      %v295 = vld [vmem:[#allocation2 + $0x40] sm:$0xff]
      %v296 = vld [vmem:[#allocation2 + $0x48] sm:$0xff]
      %v297 = vld [vmem:[#allocation2 + $0x50] sm:$0xff]
      %v298 = vld [vmem:[#allocation2 + $0x58] sm:$0xff]
      %v299 = vld [vmem:[#allocation2 + $0x60] sm:$0xff]
      %v300 = vld [vmem:[#allocation2 + $0x68] sm:$0xff]
      %v301 = vld [vmem:[#allocation2 + $0x70] sm:$0xff]
      %v302 = vld [vmem:[#allocation2 + $0x78] sm:$0xff]
      %v303 = vld [vmem:[#allocation2 + $0x80] sm:$0xff]
      %v304 = vld [vmem:[#allocation2 + $0x88] sm:$0xff]
      %v305 = vld [vmem:[#allocation2 + $0x90] sm:$0xff]
      %v306 = vld [vmem:[#allocation2 + $0x98] sm:$0xff]
      %v307 = vld [vmem:[#allocation2 + $0xa0] sm:$0xff]
      %v308 = vld [vmem:[#allocation2 + $0xa8] sm:$0xff]
      %v309 = vld [vmem:[#allocation2 + $0xb0] sm:$0xff]
      %v310 = vld [vmem:[#allocation2 + $0xb8] sm:$0xff]
      %v311 = vld [vmem:[#allocation2 + $0xc0] sm:$0xff]
      %v312 = vld [vmem:[#allocation2 + $0xc8] sm:$0xff]
      %v313 = vld [vmem:[#allocation2 + $0xd0] sm:$0xff]
      %v314 = vld [vmem:[#allocation2 + $0xd8] sm:$0xff]
      %v315 = vld [vmem:[#allocation2 + $0xe0] sm:$0xff]
      %v316 = vld [vmem:[#allocation2 + $0xe8] sm:$0xff]
      %v317 = vld [vmem:[#allocation2 + $0xf0] sm:$0xff]
      %v318 = vld [vmem:[#allocation2 + $0xf8] sm:$0xff]
      %v319 = vld [vmem:[%s210] sm:$0xf]
      %v320 = vld [vmem:[%s210 + $0x4] sm:$0xf]
      %v321 = vld [vmem:[%s210 + $0x8] sm:$0xf]
      %v322 = vld [vmem:[%s210 + $0xc] sm:$0xf]
      %v323 = vld [vmem:[%s210 + $0x10] sm:$0xf]
      %v324 = vld [vmem:[%s210 + $0x14] sm:$0xf]
      %v325 = vld [vmem:[%s210 + $0x18] sm:$0xf]
      %v326 = vld [vmem:[%s210 + $0x1c] sm:$0xf]
      %v327 = vld [vmem:[%s210 + $0x20] sm:$0xf]
      %v328 = vld [vmem:[%s210 + $0x24] sm:$0xf]
      %v329 = vld [vmem:[%s210 + $0x28] sm:$0xf]
      %v330 = vld [vmem:[%s210 + $0x2c] sm:$0xf]
      %v331 = vld [vmem:[%s210 + $0x30] sm:$0xf]
      %v332 = vld [vmem:[%s210 + $0x34] sm:$0xf]
      %v333 = vld [vmem:[%s210 + $0x38] sm:$0xf]
      %v334 = vld [vmem:[%s210 + $0x3c] sm:$0xf]
      %v367 = vunpack.c.l.b16 %v255
      %v368 = vunpack.c.l.b16 %v256
      %v369 = vunpack.c.l.b16 %v257
      %v370 = vunpack.c.l.b16 %v258
      %v371 = vunpack.c.l.b16 %v259
      %v372 = vunpack.c.l.b16 %v260
      %v373 = vunpack.c.l.b16 %v261
      %v374 = vunpack.c.l.b16 %v262
      %v375 = vunpack.c.l.b16 %v263
      %v376 = vunpack.c.l.b16 %v264
      %v377 = vunpack.c.l.b16 %v265
      %v378 = vunpack.c.l.b16 %v266
      %v379 = vunpack.c.l.b16 %v267
      %v380 = vunpack.c.l.b16 %v268
      %v381 = vunpack.c.l.b16 %v269
      %v382 = vunpack.c.l.b16 %v270
      %v383 = vunpack.c.l.b16 %v271
      %v384 = vunpack.c.l.b16 %v272
      %v385 = vunpack.c.l.b16 %v273
      %v386 = vunpack.c.l.b16 %v274
      %v387 = vunpack.c.l.b16 %v275
      %v388 = vunpack.c.l.b16 %v276
      %v389 = vunpack.c.l.b16 %v277
      %v390 = vunpack.c.l.b16 %v278
      %v391 = vunpack.c.l.b16 %v279
      %v392 = vunpack.c.l.b16 %v280
      %v393 = vunpack.c.l.b16 %v281
      %v394 = vunpack.c.l.b16 %v282
      %v395 = vunpack.c.l.b16 %v283
      %v396 = vunpack.c.l.b16 %v284
      %v397 = vunpack.c.l.b16 %v285
      %v398 = vunpack.c.l.b16 %v286
      %v399 = vpack.c.b16 %v368, %v367
      %v400 = vpack.c.b16 %v370, %v369
      %v401 = vpack.c.b16 %v372, %v371
      %v402 = vpack.c.b16 %v374, %v373
      %v403 = vpack.c.b16 %v376, %v375
      %v404 = vpack.c.b16 %v378, %v377
      %v405 = vpack.c.b16 %v380, %v379
      %v406 = vpack.c.b16 %v382, %v381
      %v407 = vpack.c.b16 %v384, %v383
      %v408 = vpack.c.b16 %v386, %v385
      %v409 = vpack.c.b16 %v388, %v387
      %v410 = vpack.c.b16 %v390, %v389
      %v411 = vpack.c.b16 %v392, %v391
      %v412 = vpack.c.b16 %v394, %v393
      %v413 = vpack.c.b16 %v396, %v395
      %v414 = vpack.c.b16 %v398, %v397
      %v447 = vunpack.c.l.b16 %v319
      %v448 = vunpack.c.l.b16 %v320
      %v449 = vunpack.c.l.b16 %v321
      %v450 = vunpack.c.l.b16 %v322
      %v451 = vunpack.c.l.b16 %v323
      %v452 = vunpack.c.l.b16 %v324
      %v453 = vunpack.c.l.b16 %v325
      %v454 = vunpack.c.l.b16 %v326
      %v455 = vunpack.c.l.b16 %v327
      %v456 = vunpack.c.l.b16 %v328
      %v457 = vunpack.c.l.b16 %v329
      %v458 = vunpack.c.l.b16 %v330
      %v459 = vunpack.c.l.b16 %v331
      %v460 = vunpack.c.l.b16 %v332
      %v461 = vunpack.c.l.b16 %v333
      %v462 = vunpack.c.l.b16 %v334
      %v463 = vpack.c.b16 %v448, %v447
      %v464 = vpack.c.b16 %v450, %v449
      %v465 = vpack.c.b16 %v452, %v451
      %v466 = vpack.c.b16 %v454, %v453
      %v467 = vpack.c.b16 %v456, %v455
      %v468 = vpack.c.b16 %v458, %v457
      %v469 = vpack.c.b16 %v460, %v459
      %v470 = vpack.c.b16 %v462, %v461
      %479 = vmatprep.subr.bf16.mxu0 0
      %480 = vmatpush1.bf16.msra.mxu0 %v463
      %481 = vmatprep.subr.bf16.mxu0 0
      %482 = vmatpush1.bf16.msra.mxu0 %v464
      %483 = vmatprep.subr.bf16.mxu0 0
      %484 = vmatpush1.bf16.msra.mxu0 %v465
      %485 = vmatprep.subr.bf16.mxu0 0
      %486 = vmatpush1.bf16.msra.mxu0 %v466
      %487 = vmatprep.subr.bf16.mxu0 0
      %488 = vmatpush1.bf16.msra.mxu0 %v467
      %489 = vmatprep.subr.bf16.mxu0 0
      %490 = vmatpush1.bf16.msra.mxu0 %v468
      %491 = vmatprep.subr.bf16.mxu0 0
      %492 = vmatpush1.bf16.msra.mxu0 %v469
      %493 = vmatprep.subr.bf16.mxu0 0
      %494 = vmatpush1.bf16.msra.mxu0 %v470
      %495 = vmatprep.subr.bf16.mxu0 0
      %496 = vmatpush1.bf16.msra.mxu0 0
      %497 = vmatprep.subr.bf16.mxu0 0
      %498 = vmatpush1.bf16.msra.mxu0 0
      %499 = vmatprep.subr.bf16.mxu0 0
      %500 = vmatpush1.bf16.msra.mxu0 0
      %501 = vmatprep.subr.bf16.mxu0 0
      %502 = vmatpush1.bf16.msra.mxu0 0
      %503 = vmatprep.subr.bf16.mxu0 0
      %504 = vmatpush1.bf16.msra.mxu0 0
      %505 = vmatprep.subr.bf16.mxu0 0
      %506 = vmatpush1.bf16.msra.mxu0 0
      %507 = vmatprep.subr.bf16.mxu0 0
      %508 = vmatpush1.bf16.msra.mxu0 0
      %509 = vmatprep.subr.bf16.mxu0 0
      %510 = vmatpush1.bf16.msra.mxu0 0
      %511 = vmatprep.mubr.bf16.mxu0 0
      %512 = vmatmul.mubr.bf16.gmra.mrb[0].mxu0 %v399
      %v513 = vpop.f32.mrb[0].mxu0
      %v514 = vadd.f32 0.0, %v513
      %v515 = vpop.f32.mrb[0].mxu0
      %v516 = vpop.f32.mrb[0].mxu0
      %v517 = vadd.f32 0.0, %v516
      %v518 = vpop.f32.mrb[0].mxu0
      %519 = vmatprep.mubr.bf16.mxu0 0
      %520 = vmatmul.mubr.bf16.gmra.mrb[0].mxu0 %v400
      %v521 = vpop.f32.mrb[0].mxu0
      %v522 = vadd.f32 0.0, %v521
      %v523 = vpop.f32.mrb[0].mxu0
      %v524 = vpop.f32.mrb[0].mxu0
      %v525 = vadd.f32 0.0, %v524
      %v526 = vpop.f32.mrb[0].mxu0
      %527 = vmatprep.mubr.bf16.mxu0 0
      %528 = vmatmul.mubr.bf16.gmra.mrb[0].mxu0 %v401
      %v529 = vpop.f32.mrb[0].mxu0
      %v530 = vadd.f32 0.0, %v529
      %v531 = vpop.f32.mrb[0].mxu0
      %v532 = vpop.f32.mrb[0].mxu0
      %v533 = vadd.f32 0.0, %v532
      %v534 = vpop.f32.mrb[0].mxu0
      %535 = vmatprep.mubr.bf16.mxu0 0
      %536 = vmatmul.mubr.bf16.gmra.mrb[0].mxu0 %v402
      %v537 = vpop.f32.mrb[0].mxu0
      %v538 = vadd.f32 0.0, %v537
      %v539 = vpop.f32.mrb[0].mxu0
      %v540 = vpop.f32.mrb[0].mxu0
      %v541 = vadd.f32 0.0, %v540
      %v542 = vpop.f32.mrb[0].mxu0
      %543 = vmatprep.mubr.bf16.mxu0 0
      %544 = vmatmul.mubr.bf16.gmra.mrb[0].mxu0 %v403
      %v545 = vpop.f32.mrb[0].mxu0
      %v546 = vadd.f32 0.0, %v545
      %v547 = vpop.f32.mrb[0].mxu0
      %v548 = vpop.f32.mrb[0].mxu0
      %v549 = vadd.f32 0.0, %v548
      %v550 = vpop.f32.mrb[0].mxu0
      %551 = vmatprep.mubr.bf16.mxu0 0
      %552 = vmatmul.mubr.bf16.gmra.mrb[0].mxu0 %v404
      %v553 = vpop.f32.mrb[0].mxu0
      %v554 = vadd.f32 0.0, %v553
      %v555 = vpop.f32.mrb[0].mxu0
      %v556 = vpop.f32.mrb[0].mxu0
      %v557 = vadd.f32 0.0, %v556
      %v558 = vpop.f32.mrb[0].mxu0
      %559 = vmatprep.mubr.bf16.mxu0 0
      %560 = vmatmul.mubr.bf16.gmra.mrb[0].mxu0 %v405
      %v561 = vpop.f32.mrb[0].mxu0
      %v562 = vadd.f32 0.0, %v561
      %v563 = vpop.f32.mrb[0].mxu0
      %v564 = vpop.f32.mrb[0].mxu0
      %v565 = vadd.f32 0.0, %v564
      %v566 = vpop.f32.mrb[0].mxu0
      %567 = vmatprep.mubr.bf16.mxu0 0
      %568 = vmatmul.mubr.bf16.gmra.mrb[0].mxu0 %v406
      %v569 = vpop.f32.mrb[0].mxu0
      %v570 = vadd.f32 0.0, %v569
      %v571 = vpop.f32.mrb[0].mxu0
      %v572 = vpop.f32.mrb[0].mxu0
      %v573 = vadd.f32 0.0, %v572
      %v574 = vpop.f32.mrb[0].mxu0
      %575 = vmatprep.mubr.bf16.mxu0 0
      %576 = vmatmul.mubr.bf16.gmra.mrb[0].mxu0 %v407
      %v577 = vpop.f32.mrb[0].mxu0
      %v578 = vadd.f32 0.0, %v577
      %v579 = vpop.f32.mrb[0].mxu0
      %v580 = vpop.f32.mrb[0].mxu0
      %v581 = vadd.f32 0.0, %v580
      %v582 = vpop.f32.mrb[0].mxu0
      %583 = vmatprep.mubr.bf16.mxu0 0
      %584 = vmatmul.mubr.bf16.gmra.mrb[0].mxu0 %v408
      %v585 = vpop.f32.mrb[0].mxu0
      %v586 = vadd.f32 0.0, %v585
      %v587 = vpop.f32.mrb[0].mxu0
      %v588 = vpop.f32.mrb[0].mxu0
      %v589 = vadd.f32 0.0, %v588
      %v590 = vpop.f32.mrb[0].mxu0
      %591 = vmatprep.mubr.bf16.mxu0 0
      %592 = vmatmul.mubr.bf16.gmra.mrb[0].mxu0 %v409
      %v593 = vpop.f32.mrb[0].mxu0
      %v594 = vadd.f32 0.0, %v593
      %v595 = vpop.f32.mrb[0].mxu0
      %v596 = vpop.f32.mrb[0].mxu0
      %v597 = vadd.f32 0.0, %v596
      %v598 = vpop.f32.mrb[0].mxu0
      %599 = vmatprep.mubr.bf16.mxu0 0
      %600 = vmatmul.mubr.bf16.gmra.mrb[0].mxu0 %v410
      %v601 = vpop.f32.mrb[0].mxu0
      %v602 = vadd.f32 0.0, %v601
      %v603 = vpop.f32.mrb[0].mxu0
      %v604 = vpop.f32.mrb[0].mxu0
      %v605 = vadd.f32 0.0, %v604
      %v606 = vpop.f32.mrb[0].mxu0
      %607 = vmatprep.mubr.bf16.mxu0 0
      %608 = vmatmul.mubr.bf16.gmra.mrb[0].mxu0 %v411
      %v609 = vpop.f32.mrb[0].mxu0
      %v610 = vadd.f32 0.0, %v609
      %v611 = vpop.f32.mrb[0].mxu0
      %v612 = vpop.f32.mrb[0].mxu0
      %v613 = vadd.f32 0.0, %v612
      %v614 = vpop.f32.mrb[0].mxu0
      %615 = vmatprep.mubr.bf16.mxu0 0
      %616 = vmatmul.mubr.bf16.gmra.mrb[0].mxu0 %v412
      %v617 = vpop.f32.mrb[0].mxu0
      %v618 = vadd.f32 0.0, %v617
      %v619 = vpop.f32.mrb[0].mxu0
      %v620 = vpop.f32.mrb[0].mxu0
      %v621 = vadd.f32 0.0, %v620
      %v622 = vpop.f32.mrb[0].mxu0
      %623 = vmatprep.mubr.bf16.mxu0 0
      %624 = vmatmul.mubr.bf16.gmra.mrb[0].mxu0 %v413
      %v625 = vpop.f32.mrb[0].mxu0
      %v626 = vadd.f32 0.0, %v625
      %v627 = vpop.f32.mrb[0].mxu0
      %v628 = vpop.f32.mrb[0].mxu0
      %v629 = vadd.f32 0.0, %v628
      %v630 = vpop.f32.mrb[0].mxu0
      %631 = vmatprep.mubr.bf16.mxu0 0
      %632 = vmatmul.mubr.bf16.gmra.mrb[0].mxu0 %v414
      %v633 = vpop.f32.mrb[0].mxu0
      %v634 = vadd.f32 0.0, %v633
      %v635 = vpop.f32.mrb[0].mxu0
      %v636 = vpop.f32.mrb[0].mxu0
      %v637 = vadd.f32 0.0, %v636
      %v638 = vpop.f32.mrb[0].mxu0
      %639 = vdwg.mxu0
      %v640 = vadd.f32 %v287, %v514
      %v641 = vadd.f32 %v288, %v517
      %v642 = vadd.f32 %v289, %v522
      %v643 = vadd.f32 %v290, %v525
      %v644 = vadd.f32 %v291, %v530
      %v645 = vadd.f32 %v292, %v533
      %v646 = vadd.f32 %v293, %v538
      %v647 = vadd.f32 %v294, %v541
      %v648 = vadd.f32 %v295, %v546
      %v649 = vadd.f32 %v296, %v549
      %v650 = vadd.f32 %v297, %v554
      %v651 = vadd.f32 %v298, %v557
      %v652 = vadd.f32 %v299, %v562
      %v653 = vadd.f32 %v300, %v565
      %v654 = vadd.f32 %v301, %v570
      %v655 = vadd.f32 %v302, %v573
      %v656 = vadd.f32 %v303, %v578
      %v657 = vadd.f32 %v304, %v581
      %v658 = vadd.f32 %v305, %v586
      %v659 = vadd.f32 %v306, %v589
      %v660 = vadd.f32 %v307, %v594
      %v661 = vadd.f32 %v308, %v597
      %v662 = vadd.f32 %v309, %v602
      %v663 = vadd.f32 %v310, %v605
      %v664 = vadd.f32 %v311, %v610
      %v665 = vadd.f32 %v312, %v613
      %v666 = vadd.f32 %v313, %v618
      %v667 = vadd.f32 %v314, %v621
      %v668 = vadd.f32 %v315, %v626
      %v669 = vadd.f32 %v316, %v629
      %v670 = vadd.f32 %v317, %v634
      %v671 = vadd.f32 %v318, %v637
      %672 = vst [vmem:[#allocation2] sm:$0xff] %v640
      %673 = vst [vmem:[#allocation2 + $0x8] sm:$0xff] %v641
      %674 = vst [vmem:[#allocation2 + $0x10] sm:$0xff] %v642
      %675 = vst [vmem:[#allocation2 + $0x18] sm:$0xff] %v643
      %676 = vst [vmem:[#allocation2 + $0x20] sm:$0xff] %v644
      %677 = vst [vmem:[#allocation2 + $0x28] sm:$0xff] %v645
      %678 = vst [vmem:[#allocation2 + $0x30] sm:$0xff] %v646
      %679 = vst [vmem:[#allocation2 + $0x38] sm:$0xff] %v647
      %680 = vst [vmem:[#allocation2 + $0x40] sm:$0xff] %v648
      %681 = vst [vmem:[#allocation2 + $0x48] sm:$0xff] %v649
      %682 = vst [vmem:[#allocation2 + $0x50] sm:$0xff] %v650
      %683 = vst [vmem:[#allocation2 + $0x58] sm:$0xff] %v651
      %684 = vst [vmem:[#allocation2 + $0x60] sm:$0xff] %v652
      %685 = vst [vmem:[#allocation2 + $0x68] sm:$0xff] %v653
      %686 = vst [vmem:[#allocation2 + $0x70] sm:$0xff] %v654
      %687 = vst [vmem:[#allocation2 + $0x78] sm:$0xff] %v655
      %688 = vst [vmem:[#allocation2 + $0x80] sm:$0xff] %v656
      %689 = vst [vmem:[#allocation2 + $0x88] sm:$0xff] %v657
      %690 = vst [vmem:[#allocation2 + $0x90] sm:$0xff] %v658
      %691 = vst [vmem:[#allocation2 + $0x98] sm:$0xff] %v659
      %692 = vst [vmem:[#allocation2 + $0xa0] sm:$0xff] %v660
      %693 = vst [vmem:[#allocation2 + $0xa8] sm:$0xff] %v661
      %694 = vst [vmem:[#allocation2 + $0xb0] sm:$0xff] %v662
      %695 = vst [vmem:[#allocation2 + $0xb8] sm:$0xff] %v663
      %696 = vst [vmem:[#allocation2 + $0xc0] sm:$0xff] %v664
      %697 = vst [vmem:[#allocation2 + $0xc8] sm:$0xff] %v665
      %698 = vst [vmem:[#allocation2 + $0xd0] sm:$0xff] %v666
      %699 = vst [vmem:[#allocation2 + $0xd8] sm:$0xff] %v667
      %700 = vst [vmem:[#allocation2 + $0xe0] sm:$0xff] %v668
      %701 = vst [vmem:[#allocation2 + $0xe8] sm:$0xff] %v669
      %702 = vst [vmem:[#allocation2 + $0xf0] sm:$0xff] %v670
      %703 = vst [vmem:[#allocation2 + $0xf8] sm:$0xff] %v671
      %v704 = vld [vmem:[%s206] sm:$0xf]
      %v705 = vld [vmem:[%s206 + $0x4] sm:$0xf]
      %v706 = vld [vmem:[%s206 + $0x8] sm:$0x1]
      %v707 = vld [vmem:[%s206 + $0xc] sm:$0xf]
      %v708 = vld [vmem:[%s206 + $0x10] sm:$0xf]
      %v709 = vld [vmem:[%s206 + $0x14] sm:$0x1]
      %v710 = vld [vmem:[%s206 + $0x18] sm:$0xf]
      %v711 = vld [vmem:[%s206 + $0x1c] sm:$0xf]
      %v712 = vld [vmem:[%s206 + $0x20] sm:$0x1]
      %v713 = vld [vmem:[%s206 + $0x24] sm:$0xf]
      %v714 = vld [vmem:[%s206 + $0x28] sm:$0xf]
      %v715 = vld [vmem:[%s206 + $0x2c] sm:$0x1]
      %v716 = vld [vmem:[%s206 + $0x30] sm:$0xf]
      %v717 = vld [vmem:[%s206 + $0x34] sm:$0xf]
      %v718 = vld [vmem:[%s206 + $0x38] sm:$0x1]
      %v719 = vld [vmem:[%s206 + $0x3c] sm:$0xf]
      %v720 = vld [vmem:[%s206 + $0x40] sm:$0xf]
      %v721 = vld [vmem:[%s206 + $0x44] sm:$0x1]
      %v722 = vld [vmem:[%s206 + $0x48] sm:$0xf]
      %v723 = vld [vmem:[%s206 + $0x4c] sm:$0xf]
      %v724 = vld [vmem:[%s206 + $0x50] sm:$0x1]
      %v725 = vld [vmem:[%s206 + $0x54] sm:$0xf]
      %v726 = vld [vmem:[%s206 + $0x58] sm:$0xf]
      %v727 = vld [vmem:[%s206 + $0x5c] sm:$0x1]
      %v728 = vld [vmem:[%s206 + $0x60] sm:$0xf]
      %v729 = vld [vmem:[%s206 + $0x64] sm:$0xf]
      %v730 = vld [vmem:[%s206 + $0x68] sm:$0x1]
      %v731 = vld [vmem:[%s206 + $0x6c] sm:$0xf]
      %v732 = vld [vmem:[%s206 + $0x70] sm:$0xf]
      %v733 = vld [vmem:[%s206 + $0x74] sm:$0x1]
      %v734 = vld [vmem:[%s206 + $0x78] sm:$0xf]
      %v735 = vld [vmem:[%s206 + $0x7c] sm:$0xf]
      %v736 = vld [vmem:[%s206 + $0x80] sm:$0x1]
      %v737 = vld [vmem:[%s206 + $0x84] sm:$0xf]
      %v738 = vld [vmem:[%s206 + $0x88] sm:$0xf]
      %v739 = vld [vmem:[%s206 + $0x8c] sm:$0x1]
      %v740 = vld [vmem:[%s206 + $0x90] sm:$0xf]
      %v741 = vld [vmem:[%s206 + $0x94] sm:$0xf]
      %v742 = vld [vmem:[%s206 + $0x98] sm:$0x1]
      %v743 = vld [vmem:[%s206 + $0x9c] sm:$0xf]
      %v744 = vld [vmem:[%s206 + $0xa0] sm:$0xf]
      %v745 = vld [vmem:[%s206 + $0xa4] sm:$0x1]
      %v746 = vld [vmem:[%s206 + $0xa8] sm:$0xf]
      %v747 = vld [vmem:[%s206 + $0xac] sm:$0xf]
      %v748 = vld [vmem:[%s206 + $0xb0] sm:$0x1]
      %v749 = vld [vmem:[%s206 + $0xb4] sm:$0xf]
      %v750 = vld [vmem:[%s206 + $0xb8] sm:$0xf]
      %v751 = vld [vmem:[%s206 + $0xbc] sm:$0x1]
      %vm752 = vsmask.f32 3328
      %vm753 = vsmask.f32 7440
      %vm754 = vmor %vm752, %vm753
      %v756 = vshrl.u32 %v704, 16
      %v758 = vrot.slane %v756, 4
      %v759 = vshll.u32 %v704, 16
      %v761 = vrot.slane %v759, 5
      %v762 = vor.u32 %v758, %v761
      %v763 = vrot.slane %v762, 4
      %v765 = vshll.u32 %v705, 16
      %v767 = vrot.slane %v765, 5
      %v768 = vsel %vm754, %v763, %v767
      %v769 = vshrl.u32 %v705, 16
      %v771 = vrot.slane %v769, 4
      %v772 = vor.u32 %v771, %v767
      %v773 = vrot.slane %v772, 4
      %v775 = vshll.u32 %v706, 16
      %v777 = vrot.slane %v775, 5
      %v778 = vsel %vm754, %v773, %v777
      %v780 = vshrl.u32 %v707, 16
      %v782 = vrot.slane %v780, 4
      %v783 = vshll.u32 %v707, 16
      %v785 = vrot.slane %v783, 5
      %v786 = vor.u32 %v782, %v785
      %v787 = vrot.slane %v786, 4
      %v789 = vshll.u32 %v708, 16
      %v791 = vrot.slane %v789, 5
      %v792 = vsel %vm754, %v787, %v791
      %v793 = vshrl.u32 %v708, 16
      %v795 = vrot.slane %v793, 4
      %v796 = vor.u32 %v795, %v791
      %v797 = vrot.slane %v796, 4
      %v799 = vshll.u32 %v709, 16
      %v801 = vrot.slane %v799, 5
      %v802 = vsel %vm754, %v797, %v801
      %v804 = vshrl.u32 %v710, 16
      %v806 = vrot.slane %v804, 4
      %v807 = vshll.u32 %v710, 16
      %v809 = vrot.slane %v807, 5
      %v810 = vor.u32 %v806, %v809
      %v811 = vrot.slane %v810, 4
      %v813 = vshll.u32 %v711, 16
      %v815 = vrot.slane %v813, 5
      %v816 = vsel %vm754, %v811, %v815
      %v817 = vshrl.u32 %v711, 16
      %v819 = vrot.slane %v817, 4
      %v820 = vor.u32 %v819, %v815
      %v821 = vrot.slane %v820, 4
      %v823 = vshll.u32 %v712, 16
      %v825 = vrot.slane %v823, 5
      %v826 = vsel %vm754, %v821, %v825
      %v828 = vshrl.u32 %v713, 16
      %v830 = vrot.slane %v828, 4
      %v831 = vshll.u32 %v713, 16
      %v833 = vrot.slane %v831, 5
      %v834 = vor.u32 %v830, %v833
      %v835 = vrot.slane %v834, 4
      %v837 = vshll.u32 %v714, 16
      %v839 = vrot.slane %v837, 5
      %v840 = vsel %vm754, %v835, %v839
      %v841 = vshrl.u32 %v714, 16
      %v843 = vrot.slane %v841, 4
      %v844 = vor.u32 %v843, %v839
      %v845 = vrot.slane %v844, 4
      %v847 = vshll.u32 %v715, 16
      %v849 = vrot.slane %v847, 5
      %v850 = vsel %vm754, %v845, %v849
      %v852 = vshrl.u32 %v716, 16
      %v854 = vrot.slane %v852, 4
      %v855 = vshll.u32 %v716, 16
      %v857 = vrot.slane %v855, 5
      %v858 = vor.u32 %v854, %v857
      %v859 = vrot.slane %v858, 4
      %v861 = vshll.u32 %v717, 16
      %v863 = vrot.slane %v861, 5
      %v864 = vsel %vm754, %v859, %v863
      %v865 = vshrl.u32 %v717, 16
      %v867 = vrot.slane %v865, 4
      %v868 = vor.u32 %v867, %v863
      %v869 = vrot.slane %v868, 4
      %v871 = vshll.u32 %v718, 16
      %v873 = vrot.slane %v871, 5
      %v874 = vsel %vm754, %v869, %v873
      %v876 = vshrl.u32 %v719, 16
      %v878 = vrot.slane %v876, 4
      %v879 = vshll.u32 %v719, 16
      %v881 = vrot.slane %v879, 5
      %v882 = vor.u32 %v878, %v881
      %v883 = vrot.slane %v882, 4
      %v885 = vshll.u32 %v720, 16
      %v887 = vrot.slane %v885, 5
      %v888 = vsel %vm754, %v883, %v887
      %v889 = vshrl.u32 %v720, 16
      %v891 = vrot.slane %v889, 4
      %v892 = vor.u32 %v891, %v887
      %v893 = vrot.slane %v892, 4
      %v895 = vshll.u32 %v721, 16
      %v897 = vrot.slane %v895, 5
      %v898 = vsel %vm754, %v893, %v897
      %v900 = vshrl.u32 %v722, 16
      %v902 = vrot.slane %v900, 4
      %v903 = vshll.u32 %v722, 16
      %v905 = vrot.slane %v903, 5
      %v906 = vor.u32 %v902, %v905
      %v907 = vrot.slane %v906, 4
      %v909 = vshll.u32 %v723, 16
      %v911 = vrot.slane %v909, 5
      %v912 = vsel %vm754, %v907, %v911
      %v913 = vshrl.u32 %v723, 16
      %v915 = vrot.slane %v913, 4
      %v916 = vor.u32 %v915, %v911
      %v917 = vrot.slane %v916, 4
      %v919 = vshll.u32 %v724, 16
      %v921 = vrot.slane %v919, 5
      %v922 = vsel %vm754, %v917, %v921
      %v924 = vshrl.u32 %v725, 16
      %v926 = vrot.slane %v924, 4
      %v927 = vshll.u32 %v725, 16
      %v929 = vrot.slane %v927, 5
      %v930 = vor.u32 %v926, %v929
      %v931 = vrot.slane %v930, 4
      %v933 = vshll.u32 %v726, 16
      %v935 = vrot.slane %v933, 5
      %v936 = vsel %vm754, %v931, %v935
      %v937 = vshrl.u32 %v726, 16
      %v939 = vrot.slane %v937, 4
      %v940 = vor.u32 %v939, %v935
      %v941 = vrot.slane %v940, 4
      %v943 = vshll.u32 %v727, 16
      %v945 = vrot.slane %v943, 5
      %v946 = vsel %vm754, %v941, %v945
      %v948 = vshrl.u32 %v728, 16
      %v950 = vrot.slane %v948, 4
      %v951 = vshll.u32 %v728, 16
      %v953 = vrot.slane %v951, 5
      %v954 = vor.u32 %v950, %v953
      %v955 = vrot.slane %v954, 4
      %v957 = vshll.u32 %v729, 16
      %v959 = vrot.slane %v957, 5
      %v960 = vsel %vm754, %v955, %v959
      %v961 = vshrl.u32 %v729, 16
      %v963 = vrot.slane %v961, 4
      %v964 = vor.u32 %v963, %v959
      %v965 = vrot.slane %v964, 4
      %v967 = vshll.u32 %v730, 16
      %v969 = vrot.slane %v967, 5
      %v970 = vsel %vm754, %v965, %v969
      %v972 = vshrl.u32 %v731, 16
      %v974 = vrot.slane %v972, 4
      %v975 = vshll.u32 %v731, 16
      %v977 = vrot.slane %v975, 5
      %v978 = vor.u32 %v974, %v977
      %v979 = vrot.slane %v978, 4
      %v981 = vshll.u32 %v732, 16
      %v983 = vrot.slane %v981, 5
      %v984 = vsel %vm754, %v979, %v983
      %v985 = vshrl.u32 %v732, 16
      %v987 = vrot.slane %v985, 4
      %v988 = vor.u32 %v987, %v983
      %v989 = vrot.slane %v988, 4
      %v991 = vshll.u32 %v733, 16
      %v993 = vrot.slane %v991, 5
      %v994 = vsel %vm754, %v989, %v993
      %v996 = vshrl.u32 %v734, 16
      %v998 = vrot.slane %v996, 4
      %v999 = vshll.u32 %v734, 16
      %v1001 = vrot.slane %v999, 5
      %v1002 = vor.u32 %v998, %v1001
      %v1003 = vrot.slane %v1002, 4
      %v1005 = vshll.u32 %v735, 16
      %v1007 = vrot.slane %v1005, 5
      %v1008 = vsel %vm754, %v1003, %v1007
      %v1009 = vshrl.u32 %v735, 16
      %v1011 = vrot.slane %v1009, 4
      %v1012 = vor.u32 %v1011, %v1007
      %v1013 = vrot.slane %v1012, 4
      %v1015 = vshll.u32 %v736, 16
      %v1017 = vrot.slane %v1015, 5
      %v1018 = vsel %vm754, %v1013, %v1017
      %v1020 = vshrl.u32 %v737, 16
      %v1022 = vrot.slane %v1020, 4
      %v1023 = vshll.u32 %v737, 16
      %v1025 = vrot.slane %v1023, 5
      %v1026 = vor.u32 %v1022, %v1025
      %v1027 = vrot.slane %v1026, 4
      %v1029 = vshll.u32 %v738, 16
      %v1031 = vrot.slane %v1029, 5
      %v1032 = vsel %vm754, %v1027, %v1031
      %v1033 = vshrl.u32 %v738, 16
      %v1035 = vrot.slane %v1033, 4
      %v1036 = vor.u32 %v1035, %v1031
      %v1037 = vrot.slane %v1036, 4
      %v1039 = vshll.u32 %v739, 16
      %v1041 = vrot.slane %v1039, 5
      %v1042 = vsel %vm754, %v1037, %v1041
      %v1044 = vshrl.u32 %v740, 16
      %v1046 = vrot.slane %v1044, 4
      %v1047 = vshll.u32 %v740, 16
      %v1049 = vrot.slane %v1047, 5
      %v1050 = vor.u32 %v1046, %v1049
      %v1051 = vrot.slane %v1050, 4
      %v1053 = vshll.u32 %v741, 16
      %v1055 = vrot.slane %v1053, 5
      %v1056 = vsel %vm754, %v1051, %v1055
      %v1057 = vshrl.u32 %v741, 16
      %v1059 = vrot.slane %v1057, 4
      %v1060 = vor.u32 %v1059, %v1055
      %v1061 = vrot.slane %v1060, 4
      %v1063 = vshll.u32 %v742, 16
      %v1065 = vrot.slane %v1063, 5
      %v1066 = vsel %vm754, %v1061, %v1065
      %v1068 = vshrl.u32 %v743, 16
      %v1070 = vrot.slane %v1068, 4
      %v1071 = vshll.u32 %v743, 16
      %v1073 = vrot.slane %v1071, 5
      %v1074 = vor.u32 %v1070, %v1073
      %v1075 = vrot.slane %v1074, 4
      %v1077 = vshll.u32 %v744, 16
      %v1079 = vrot.slane %v1077, 5
      %v1080 = vsel %vm754, %v1075, %v1079
      %v1081 = vshrl.u32 %v744, 16
      %v1083 = vrot.slane %v1081, 4
      %v1084 = vor.u32 %v1083, %v1079
      %v1085 = vrot.slane %v1084, 4
      %v1087 = vshll.u32 %v745, 16
      %v1089 = vrot.slane %v1087, 5
      %v1090 = vsel %vm754, %v1085, %v1089
      %v1092 = vshrl.u32 %v746, 16
      %v1094 = vrot.slane %v1092, 4
      %v1095 = vshll.u32 %v746, 16
      %v1097 = vrot.slane %v1095, 5
      %v1098 = vor.u32 %v1094, %v1097
      %v1099 = vrot.slane %v1098, 4
      %v1101 = vshll.u32 %v747, 16
      %v1103 = vrot.slane %v1101, 5
      %v1104 = vsel %vm754, %v1099, %v1103
      %v1105 = vshrl.u32 %v747, 16
      %v1107 = vrot.slane %v1105, 4
      %v1108 = vor.u32 %v1107, %v1103
      %v1109 = vrot.slane %v1108, 4
      %v1111 = vshll.u32 %v748, 16
      %v1113 = vrot.slane %v1111, 5
      %v1114 = vsel %vm754, %v1109, %v1113
      %v1116 = vshrl.u32 %v749, 16
      %v1118 = vrot.slane %v1116, 4
      %v1119 = vshll.u32 %v749, 16
      %v1121 = vrot.slane %v1119, 5
      %v1122 = vor.u32 %v1118, %v1121
      %v1123 = vrot.slane %v1122, 4
      %v1125 = vshll.u32 %v750, 16
      %v1127 = vrot.slane %v1125, 5
      %v1128 = vsel %vm754, %v1123, %v1127
      %v1129 = vshrl.u32 %v750, 16
      %v1131 = vrot.slane %v1129, 4
      %v1132 = vor.u32 %v1131, %v1127
      %v1133 = vrot.slane %v1132, 4
      %v1135 = vshll.u32 %v751, 16
      %v1137 = vrot.slane %v1135, 5
      %v1138 = vsel %vm754, %v1133, %v1137
      %v1139 = vld [vmem:[#allocation2] sm:$0xff]
      %v1140 = vld [vmem:[#allocation2 + $0x8] sm:$0xff]
      %v1141 = vld [vmem:[#allocation2 + $0x10] sm:$0xff]
      %v1142 = vld [vmem:[#allocation2 + $0x18] sm:$0xff]
      %v1143 = vld [vmem:[#allocation2 + $0x20] sm:$0xff]
      %v1144 = vld [vmem:[#allocation2 + $0x28] sm:$0xff]
      %v1145 = vld [vmem:[#allocation2 + $0x30] sm:$0xff]
      %v1146 = vld [vmem:[#allocation2 + $0x38] sm:$0xff]
      %v1147 = vld [vmem:[#allocation2 + $0x40] sm:$0xff]
      %v1148 = vld [vmem:[#allocation2 + $0x48] sm:$0xff]
      %v1149 = vld [vmem:[#allocation2 + $0x50] sm:$0xff]
      %v1150 = vld [vmem:[#allocation2 + $0x58] sm:$0xff]
      %v1151 = vld [vmem:[#allocation2 + $0x60] sm:$0xff]
      %v1152 = vld [vmem:[#allocation2 + $0x68] sm:$0xff]
      %v1153 = vld [vmem:[#allocation2 + $0x70] sm:$0xff]
      %v1154 = vld [vmem:[#allocation2 + $0x78] sm:$0xff]
      %v1155 = vld [vmem:[#allocation2 + $0x80] sm:$0xff]
      %v1156 = vld [vmem:[#allocation2 + $0x88] sm:$0xff]
      %v1157 = vld [vmem:[#allocation2 + $0x90] sm:$0xff]
      %v1158 = vld [vmem:[#allocation2 + $0x98] sm:$0xff]
      %v1159 = vld [vmem:[#allocation2 + $0xa0] sm:$0xff]
      %v1160 = vld [vmem:[#allocation2 + $0xa8] sm:$0xff]
      %v1161 = vld [vmem:[#allocation2 + $0xb0] sm:$0xff]
      %v1162 = vld [vmem:[#allocation2 + $0xb8] sm:$0xff]
      %v1163 = vld [vmem:[#allocation2 + $0xc0] sm:$0xff]
      %v1164 = vld [vmem:[#allocation2 + $0xc8] sm:$0xff]
      %v1165 = vld [vmem:[#allocation2 + $0xd0] sm:$0xff]
      %v1166 = vld [vmem:[#allocation2 + $0xd8] sm:$0xff]
      %v1167 = vld [vmem:[#allocation2 + $0xe0] sm:$0xff]
      %v1168 = vld [vmem:[#allocation2 + $0xe8] sm:$0xff]
      %v1169 = vld [vmem:[#allocation2 + $0xf0] sm:$0xff]
      %v1170 = vld [vmem:[#allocation2 + $0xf8] sm:$0xff]
      %s1171 = scalar_lea.vmem %s210, 64
      %v1172 = vld [vmem:[%s1171] sm:$0xf]
      %v1173 = vld [vmem:[%s1171 + $0x4] sm:$0xf]
      %v1174 = vld [vmem:[%s1171 + $0x8] sm:$0xf]
      %v1175 = vld [vmem:[%s1171 + $0xc] sm:$0xf]
      %v1176 = vld [vmem:[%s1171 + $0x10] sm:$0xf]
      %v1177 = vld [vmem:[%s1171 + $0x14] sm:$0xf]
      %v1178 = vld [vmem:[%s1171 + $0x18] sm:$0xf]
      %v1179 = vld [vmem:[%s1171 + $0x1c] sm:$0xf]
      %v1180 = vld [vmem:[%s1171 + $0x20] sm:$0xf]
      %v1181 = vld [vmem:[%s1171 + $0x24] sm:$0xf]
      %v1182 = vld [vmem:[%s1171 + $0x28] sm:$0xf]
      %v1183 = vld [vmem:[%s1171 + $0x2c] sm:$0xf]
      %v1184 = vld [vmem:[%s1171 + $0x30] sm:$0xf]
      %v1185 = vld [vmem:[%s1171 + $0x34] sm:$0xf]
      %v1186 = vld [vmem:[%s1171 + $0x38] sm:$0xf]
      %v1187 = vld [vmem:[%s1171 + $0x3c] sm:$0xf]
      %v1188 = vunpack.c.l.b16 %v768
      %v1189 = vunpack.c.l.b16 %v778
      %v1190 = vunpack.c.l.b16 %v792
      %v1191 = vunpack.c.l.b16 %v802
      %v1192 = vunpack.c.l.b16 %v816
      %v1193 = vunpack.c.l.b16 %v826
      %v1194 = vunpack.c.l.b16 %v840
      %v1195 = vunpack.c.l.b16 %v850
      %v1196 = vunpack.c.l.b16 %v864
      %v1197 = vunpack.c.l.b16 %v874
      %v1198 = vunpack.c.l.b16 %v888
      %v1199 = vunpack.c.l.b16 %v898
      %v1200 = vunpack.c.l.b16 %v912
      %v1201 = vunpack.c.l.b16 %v922
      %v1202 = vunpack.c.l.b16 %v936
      %v1203 = vunpack.c.l.b16 %v946
      %v1204 = vunpack.c.l.b16 %v960
      %v1205 = vunpack.c.l.b16 %v970
      %v1206 = vunpack.c.l.b16 %v984
      %v1207 = vunpack.c.l.b16 %v994
      %v1208 = vunpack.c.l.b16 %v1008
      %v1209 = vunpack.c.l.b16 %v1018
      %v1210 = vunpack.c.l.b16 %v1032
      %v1211 = vunpack.c.l.b16 %v1042
      %v1212 = vunpack.c.l.b16 %v1056
      %v1213 = vunpack.c.l.b16 %v1066
      %v1214 = vunpack.c.l.b16 %v1080
      %v1215 = vunpack.c.l.b16 %v1090
      %v1216 = vunpack.c.l.b16 %v1104
      %v1217 = vunpack.c.l.b16 %v1114
      %v1218 = vunpack.c.l.b16 %v1128
      %v1219 = vunpack.c.l.b16 %v1138
      %v1220 = vpack.c.b16 %v1189, %v1188
      %v1221 = vpack.c.b16 %v1191, %v1190
      %v1222 = vpack.c.b16 %v1193, %v1192
      %v1223 = vpack.c.b16 %v1195, %v1194
      %v1224 = vpack.c.b16 %v1197, %v1196
      %v1225 = vpack.c.b16 %v1199, %v1198
      %v1226 = vpack.c.b16 %v1201, %v1200
      %v1227 = vpack.c.b16 %v1203, %v1202
      %v1228 = vpack.c.b16 %v1205, %v1204
      %v1229 = vpack.c.b16 %v1207, %v1206
      %v1230 = vpack.c.b16 %v1209, %v1208
      %v1231 = vpack.c.b16 %v1211, %v1210
      %v1232 = vpack.c.b16 %v1213, %v1212
      %v1233 = vpack.c.b16 %v1215, %v1214
      %v1234 = vpack.c.b16 %v1217, %v1216
      %v1235 = vpack.c.b16 %v1219, %v1218
      %v1268 = vunpack.c.l.b16 %v1172
      %v1269 = vunpack.c.l.b16 %v1173
      %v1270 = vunpack.c.l.b16 %v1174
      %v1271 = vunpack.c.l.b16 %v1175
      %v1272 = vunpack.c.l.b16 %v1176
      %v1273 = vunpack.c.l.b16 %v1177
      %v1274 = vunpack.c.l.b16 %v1178
      %v1275 = vunpack.c.l.b16 %v1179
      %v1276 = vunpack.c.l.b16 %v1180
      %v1277 = vunpack.c.l.b16 %v1181
      %v1278 = vunpack.c.l.b16 %v1182
      %v1279 = vunpack.c.l.b16 %v1183
      %v1280 = vunpack.c.l.b16 %v1184
      %v1281 = vunpack.c.l.b16 %v1185
      %v1282 = vunpack.c.l.b16 %v1186
      %v1283 = vunpack.c.l.b16 %v1187
      %v1284 = vpack.c.b16 %v1269, %v1268
      %v1285 = vpack.c.b16 %v1271, %v1270
      %v1286 = vpack.c.b16 %v1273, %v1272
      %v1287 = vpack.c.b16 %v1275, %v1274
      %v1288 = vpack.c.b16 %v1277, %v1276
      %v1289 = vpack.c.b16 %v1279, %v1278
      %v1290 = vpack.c.b16 %v1281, %v1280
      %v1291 = vpack.c.b16 %v1283, %v1282
      %1300 = vmatprep.subr.bf16.mxu0 0
      %1301 = vmatpush1.bf16.msra.mxu0 %v1284
      %1302 = vmatprep.subr.bf16.mxu0 0
      %1303 = vmatpush1.bf16.msra.mxu0 %v1285
      %1304 = vmatprep.subr.bf16.mxu0 0
      %1305 = vmatpush1.bf16.msra.mxu0 %v1286
      %1306 = vmatprep.subr.bf16.mxu0 0
      %1307 = vmatpush1.bf16.msra.mxu0 %v1287
      %1308 = vmatprep.subr.bf16.mxu0 0
      %1309 = vmatpush1.bf16.msra.mxu0 %v1288
      %1310 = vmatprep.subr.bf16.mxu0 0
      %1311 = vmatpush1.bf16.msra.mxu0 %v1289
      %1312 = vmatprep.subr.bf16.mxu0 0
      %1313 = vmatpush1.bf16.msra.mxu0 %v1290
      %1314 = vmatprep.subr.bf16.mxu0 0
      %1315 = vmatpush1.bf16.msra.mxu0 %v1291
      %1316 = vmatprep.subr.bf16.mxu0 0
      %1317 = vmatpush1.bf16.msra.mxu0 0
      %1318 = vmatprep.subr.bf16.mxu0 0
      %1319 = vmatpush1.bf16.msra.mxu0 0
      %1320 = vmatprep.subr.bf16.mxu0 0
      %1321 = vmatpush1.bf16.msra.mxu0 0
      %1322 = vmatprep.subr.bf16.mxu0 0
      %1323 = vmatpush1.bf16.msra.mxu0 0
      %1324 = vmatprep.subr.bf16.mxu0 0
      %1325 = vmatpush1.bf16.msra.mxu0 0
      %1326 = vmatprep.subr.bf16.mxu0 0
      %1327 = vmatpush1.bf16.msra.mxu0 0
      %1328 = vmatprep.subr.bf16.mxu0 0
      %1329 = vmatpush1.bf16.msra.mxu0 0
      %1330 = vmatprep.subr.bf16.mxu0 0
      %1331 = vmatpush1.bf16.msra.mxu0 0
      %1332 = vmatprep.mubr.bf16.mxu0 0
      %1333 = vmatmul.mubr.bf16.gmra.mrb[0].mxu0 %v1220
      %v1334 = vpop.f32.mrb[0].mxu0
      %v1335 = vadd.f32 0.0, %v1334
      %v1336 = vpop.f32.mrb[0].mxu0
      %v1337 = vpop.f32.mrb[0].mxu0
      %v1338 = vadd.f32 0.0, %v1337
      %v1339 = vpop.f32.mrb[0].mxu0
      %1340 = vmatprep.mubr.bf16.mxu0 0
      %1341 = vmatmul.mubr.bf16.gmra.mrb[0].mxu0 %v1221
      %v1342 = vpop.f32.mrb[0].mxu0
      %v1343 = vadd.f32 0.0, %v1342
      %v1344 = vpop.f32.mrb[0].mxu0
      %v1345 = vpop.f32.mrb[0].mxu0
      %v1346 = vadd.f32 0.0, %v1345
      %v1347 = vpop.f32.mrb[0].mxu0
      %1348 = vmatprep.mubr.bf16.mxu0 0
      %1349 = vmatmul.mubr.bf16.gmra.mrb[0].mxu0 %v1222
      %v1350 = vpop.f32.mrb[0].mxu0
      %v1351 = vadd.f32 0.0, %v1350
      %v1352 = vpop.f32.mrb[0].mxu0
      %v1353 = vpop.f32.mrb[0].mxu0
      %v1354 = vadd.f32 0.0, %v1353
      %v1355 = vpop.f32.mrb[0].mxu0
      %1356 = vmatprep.mubr.bf16.mxu0 0
      %1357 = vmatmul.mubr.bf16.gmra.mrb[0].mxu0 %v1223
      %v1358 = vpop.f32.mrb[0].mxu0
      %v1359 = vadd.f32 0.0, %v1358
      %v1360 = vpop.f32.mrb[0].mxu0
      %v1361 = vpop.f32.mrb[0].mxu0
      %v1362 = vadd.f32 0.0, %v1361
      %v1363 = vpop.f32.mrb[0].mxu0
      %1364 = vmatprep.mubr.bf16.mxu0 0
      %1365 = vmatmul.mubr.bf16.gmra.mrb[0].mxu0 %v1224
      %v1366 = vpop.f32.mrb[0].mxu0
      %v1367 = vadd.f32 0.0, %v1366
      %v1368 = vpop.f32.mrb[0].mxu0
      %v1369 = vpop.f32.mrb[0].mxu0
      %v1370 = vadd.f32 0.0, %v1369
      %v1371 = vpop.f32.mrb[0].mxu0
      %1372 = vmatprep.mubr.bf16.mxu0 0
      %1373 = vmatmul.mubr.bf16.gmra.mrb[0].mxu0 %v1225
      %v1374 = vpop.f32.mrb[0].mxu0
      %v1375 = vadd.f32 0.0, %v1374
      %v1376 = vpop.f32.mrb[0].mxu0
      %v1377 = vpop.f32.mrb[0].mxu0
      %v1378 = vadd.f32 0.0, %v1377
      %v1379 = vpop.f32.mrb[0].mxu0
      %1380 = vmatprep.mubr.bf16.mxu0 0
      %1381 = vmatmul.mubr.bf16.gmra.mrb[0].mxu0 %v1226
      %v1382 = vpop.f32.mrb[0].mxu0
      %v1383 = vadd.f32 0.0, %v1382
      %v1384 = vpop.f32.mrb[0].mxu0
      %v1385 = vpop.f32.mrb[0].mxu0
      %v1386 = vadd.f32 0.0, %v1385
      %v1387 = vpop.f32.mrb[0].mxu0
      %1388 = vmatprep.mubr.bf16.mxu0 0
      %1389 = vmatmul.mubr.bf16.gmra.mrb[0].mxu0 %v1227
      %v1390 = vpop.f32.mrb[0].mxu0
      %v1391 = vadd.f32 0.0, %v1390
      %v1392 = vpop.f32.mrb[0].mxu0
      %v1393 = vpop.f32.mrb[0].mxu0
      %v1394 = vadd.f32 0.0, %v1393
      %v1395 = vpop.f32.mrb[0].mxu0
      %1396 = vmatprep.mubr.bf16.mxu0 0
      %1397 = vmatmul.mubr.bf16.gmra.mrb[0].mxu0 %v1228
      %v1398 = vpop.f32.mrb[0].mxu0
      %v1399 = vadd.f32 0.0, %v1398
      %v1400 = vpop.f32.mrb[0].mxu0
      %v1401 = vpop.f32.mrb[0].mxu0
      %v1402 = vadd.f32 0.0, %v1401
      %v1403 = vpop.f32.mrb[0].mxu0
      %1404 = vmatprep.mubr.bf16.mxu0 0
      %1405 = vmatmul.mubr.bf16.gmra.mrb[0].mxu0 %v1229
      %v1406 = vpop.f32.mrb[0].mxu0
      %v1407 = vadd.f32 0.0, %v1406
      %v1408 = vpop.f32.mrb[0].mxu0
      %v1409 = vpop.f32.mrb[0].mxu0
      %v1410 = vadd.f32 0.0, %v1409
      %v1411 = vpop.f32.mrb[0].mxu0
      %1412 = vmatprep.mubr.bf16.mxu0 0
      %1413 = vmatmul.mubr.bf16.gmra.mrb[0].mxu0 %v1230
      %v1414 = vpop.f32.mrb[0].mxu0
      %v1415 = vadd.f32 0.0, %v1414
      %v1416 = vpop.f32.mrb[0].mxu0
      %v1417 = vpop.f32.mrb[0].mxu0
      %v1418 = vadd.f32 0.0, %v1417
      %v1419 = vpop.f32.mrb[0].mxu0
      %1420 = vmatprep.mubr.bf16.mxu0 0
      %1421 = vmatmul.mubr.bf16.gmra.mrb[0].mxu0 %v1231
      %v1422 = vpop.f32.mrb[0].mxu0
      %v1423 = vadd.f32 0.0, %v1422
      %v1424 = vpop.f32.mrb[0].mxu0
      %v1425 = vpop.f32.mrb[0].mxu0
      %v1426 = vadd.f32 0.0, %v1425
      %v1427 = vpop.f32.mrb[0].mxu0
      %1428 = vmatprep.mubr.bf16.mxu0 0
      %1429 = vmatmul.mubr.bf16.gmra.mrb[0].mxu0 %v1232
      %v1430 = vpop.f32.mrb[0].mxu0
      %v1431 = vadd.f32 0.0, %v1430
      %v1432 = vpop.f32.mrb[0].mxu0
      %v1433 = vpop.f32.mrb[0].mxu0
      %v1434 = vadd.f32 0.0, %v1433
      %v1435 = vpop.f32.mrb[0].mxu0
      %1436 = vmatprep.mubr.bf16.mxu0 0
      %1437 = vmatmul.mubr.bf16.gmra.mrb[0].mxu0 %v1233
      %v1438 = vpop.f32.mrb[0].mxu0
      %v1439 = vadd.f32 0.0, %v1438
      %v1440 = vpop.f32.mrb[0].mxu0
      %v1441 = vpop.f32.mrb[0].mxu0
      %v1442 = vadd.f32 0.0, %v1441
      %v1443 = vpop.f32.mrb[0].mxu0
      %1444 = vmatprep.mubr.bf16.mxu0 0
      %1445 = vmatmul.mubr.bf16.gmra.mrb[0].mxu0 %v1234
      %v1446 = vpop.f32.mrb[0].mxu0
      %v1447 = vadd.f32 0.0, %v1446
      %v1448 = vpop.f32.mrb[0].mxu0
      %v1449 = vpop.f32.mrb[0].mxu0
      %v1450 = vadd.f32 0.0, %v1449
      %v1451 = vpop.f32.mrb[0].mxu0
      %1452 = vmatprep.mubr.bf16.mxu0 0
      %1453 = vmatmul.mubr.bf16.gmra.mrb[0].mxu0 %v1235
      %v1454 = vpop.f32.mrb[0].mxu0
      %v1455 = vadd.f32 0.0, %v1454
      %v1456 = vpop.f32.mrb[0].mxu0
      %v1457 = vpop.f32.mrb[0].mxu0
      %v1458 = vadd.f32 0.0, %v1457
      %v1459 = vpop.f32.mrb[0].mxu0
      %1460 = vdwg.mxu0
      %v1461 = vadd.f32 %v1139, %v1335
      %v1462 = vadd.f32 %v1140, %v1338
      %v1463 = vadd.f32 %v1141, %v1343
      %v1464 = vadd.f32 %v1142, %v1346
      %v1465 = vadd.f32 %v1143, %v1351
      %v1466 = vadd.f32 %v1144, %v1354
      %v1467 = vadd.f32 %v1145, %v1359
      %v1468 = vadd.f32 %v1146, %v1362
      %v1469 = vadd.f32 %v1147, %v1367
      %v1470 = vadd.f32 %v1148, %v1370
      %v1471 = vadd.f32 %v1149, %v1375
      %v1472 = vadd.f32 %v1150, %v1378
      %v1473 = vadd.f32 %v1151, %v1383
      %v1474 = vadd.f32 %v1152, %v1386
      %v1475 = vadd.f32 %v1153, %v1391
      %v1476 = vadd.f32 %v1154, %v1394
      %v1477 = vadd.f32 %v1155, %v1399
      %v1478 = vadd.f32 %v1156, %v1402
      %v1479 = vadd.f32 %v1157, %v1407
      %v1480 = vadd.f32 %v1158, %v1410
      %v1481 = vadd.f32 %v1159, %v1415
      %v1482 = vadd.f32 %v1160, %v1418
      %v1483 = vadd.f32 %v1161, %v1423
      %v1484 = vadd.f32 %v1162, %v1426
      %v1485 = vadd.f32 %v1163, %v1431
      %v1486 = vadd.f32 %v1164, %v1434
      %v1487 = vadd.f32 %v1165, %v1439
      %v1488 = vadd.f32 %v1166, %v1442
      %v1489 = vadd.f32 %v1167, %v1447
      %v1490 = vadd.f32 %v1168, %v1450
      %v1491 = vadd.f32 %v1169, %v1455
      %v1492 = vadd.f32 %v1170, %v1458
      %1493 = vst [vmem:[#allocation2] sm:$0xff] %v1461
      %1494 = vst [vmem:[#allocation2 + $0x8] sm:$0xff] %v1462
      %1495 = vst [vmem:[#allocation2 + $0x10] sm:$0xff] %v1463
      %1496 = vst [vmem:[#allocation2 + $0x18] sm:$0xff] %v1464
      %1497 = vst [vmem:[#allocation2 + $0x20] sm:$0xff] %v1465
      %1498 = vst [vmem:[#allocation2 + $0x28] sm:$0xff] %v1466
      %1499 = vst [vmem:[#allocation2 + $0x30] sm:$0xff] %v1467
      %1500 = vst [vmem:[#allocation2 + $0x38] sm:$0xff] %v1468
      %1501 = vst [vmem:[#allocation2 + $0x40] sm:$0xff] %v1469
      %1502 = vst [vmem:[#allocation2 + $0x48] sm:$0xff] %v1470
      %1503 = vst [vmem:[#allocation2 + $0x50] sm:$0xff] %v1471
      %1504 = vst [vmem:[#allocation2 + $0x58] sm:$0xff] %v1472
      %1505 = vst [vmem:[#allocation2 + $0x60] sm:$0xff] %v1473
      %1506 = vst [vmem:[#allocation2 + $0x68] sm:$0xff] %v1474
      %1507 = vst [vmem:[#allocation2 + $0x70] sm:$0xff] %v1475
      %1508 = vst [vmem:[#allocation2 + $0x78] sm:$0xff] %v1476
      %1509 = vst [vmem:[#allocation2 + $0x80] sm:$0xff] %v1477
      %1510 = vst [vmem:[#allocation2 + $0x88] sm:$0xff] %v1478
      %1511 = vst [vmem:[#allocation2 + $0x90] sm:$0xff] %v1479
      %1512 = vst [vmem:[#allocation2 + $0x98] sm:$0xff] %v1480
      %1513 = vst [vmem:[#allocation2 + $0xa0] sm:$0xff] %v1481
      %1514 = vst [vmem:[#allocation2 + $0xa8] sm:$0xff] %v1482
      %1515 = vst [vmem:[#allocation2 + $0xb0] sm:$0xff] %v1483
      %1516 = vst [vmem:[#allocation2 + $0xb8] sm:$0xff] %v1484
      %1517 = vst [vmem:[#allocation2 + $0xc0] sm:$0xff] %v1485
      %1518 = vst [vmem:[#allocation2 + $0xc8] sm:$0xff] %v1486
      %1519 = vst [vmem:[#allocation2 + $0xd0] sm:$0xff] %v1487
      %1520 = vst [vmem:[#allocation2 + $0xd8] sm:$0xff] %v1488
      %1521 = vst [vmem:[#allocation2 + $0xe0] sm:$0xff] %v1489
      %1522 = vst [vmem:[#allocation2 + $0xe8] sm:$0xff] %v1490
      %1523 = vst [vmem:[#allocation2 + $0xf0] sm:$0xff] %v1491
      %1524 = vst [vmem:[#allocation2 + $0xf8] sm:$0xff] %v1492
      %v1525 = vld [vmem:[%s206] sm:$0xe]
      %v1526 = vld [vmem:[%s206 + $0x4] sm:$0xf]
      %v1527 = vld [vmem:[%s206 + $0x8] sm:$0x1]
      %v1528 = vld [vmem:[%s206 + $0xc] sm:$0xe]
      %v1529 = vld [vmem:[%s206 + $0x10] sm:$0xf]
      %v1530 = vld [vmem:[%s206 + $0x14] sm:$0x1]
      %v1531 = vld [vmem:[%s206 + $0x18] sm:$0xe]
      %v1532 = vld [vmem:[%s206 + $0x1c] sm:$0xf]
      %v1533 = vld [vmem:[%s206 + $0x20] sm:$0x1]
      %v1534 = vld [vmem:[%s206 + $0x24] sm:$0xe]
      %v1535 = vld [vmem:[%s206 + $0x28] sm:$0xf]
      %v1536 = vld [vmem:[%s206 + $0x2c] sm:$0x1]
      %v1537 = vld [vmem:[%s206 + $0x30] sm:$0xe]
      %v1538 = vld [vmem:[%s206 + $0x34] sm:$0xf]
      %v1539 = vld [vmem:[%s206 + $0x38] sm:$0x1]
      %v1540 = vld [vmem:[%s206 + $0x3c] sm:$0xe]
      %v1541 = vld [vmem:[%s206 + $0x40] sm:$0xf]
      %v1542 = vld [vmem:[%s206 + $0x44] sm:$0x1]
      %v1543 = vld [vmem:[%s206 + $0x48] sm:$0xe]
      %v1544 = vld [vmem:[%s206 + $0x4c] sm:$0xf]
      %v1545 = vld [vmem:[%s206 + $0x50] sm:$0x1]
      %v1546 = vld [vmem:[%s206 + $0x54] sm:$0xe]
      %v1547 = vld [vmem:[%s206 + $0x58] sm:$0xf]
      %v1548 = vld [vmem:[%s206 + $0x5c] sm:$0x1]
      %v1549 = vld [vmem:[%s206 + $0x60] sm:$0xe]
      %v1550 = vld [vmem:[%s206 + $0x64] sm:$0xf]
      %v1551 = vld [vmem:[%s206 + $0x68] sm:$0x1]
      %v1552 = vld [vmem:[%s206 + $0x6c] sm:$0xe]
      %v1553 = vld [vmem:[%s206 + $0x70] sm:$0xf]
      %v1554 = vld [vmem:[%s206 + $0x74] sm:$0x1]
      %v1555 = vld [vmem:[%s206 + $0x78] sm:$0xe]
      %v1556 = vld [vmem:[%s206 + $0x7c] sm:$0xf]
      %v1557 = vld [vmem:[%s206 + $0x80] sm:$0x1]
      %v1558 = vld [vmem:[%s206 + $0x84] sm:$0xe]
      %v1559 = vld [vmem:[%s206 + $0x88] sm:$0xf]
      %v1560 = vld [vmem:[%s206 + $0x8c] sm:$0x1]
      %v1561 = vld [vmem:[%s206 + $0x90] sm:$0xe]
      %v1562 = vld [vmem:[%s206 + $0x94] sm:$0xf]
      %v1563 = vld [vmem:[%s206 + $0x98] sm:$0x1]
      %v1564 = vld [vmem:[%s206 + $0x9c] sm:$0xe]
      %v1565 = vld [vmem:[%s206 + $0xa0] sm:$0xf]
      %v1566 = vld [vmem:[%s206 + $0xa4] sm:$0x1]
      %v1567 = vld [vmem:[%s206 + $0xa8] sm:$0xe]
      %v1568 = vld [vmem:[%s206 + $0xac] sm:$0xf]
      %v1569 = vld [vmem:[%s206 + $0xb0] sm:$0x1]
      %v1570 = vld [vmem:[%s206 + $0xb4] sm:$0xe]
      %v1571 = vld [vmem:[%s206 + $0xb8] sm:$0xf]
      %v1572 = vld [vmem:[%s206 + $0xbc] sm:$0x1]
      %vm1621 = vcmask 1042432
      %vm1622 = vcmask 1046532
      %vm1623 = vmor %vm1621, %vm1622
      %v1624 = vrot.slane %v1525, 5
      %v1625 = vrot.slane %v1624, 4
      %v1626 = vrot.slane %v1526, 5
      %v1627 = vsel %vm1623, %v1625, %v1626
      %v1628 = vrot.slane %v1626, 4
      %v1629 = vrot.slane %v1527, 5
      %v1630 = vsel %vm1623, %v1628, %v1629
      %v1631 = vrot.slane %v1528, 5
      %v1632 = vrot.slane %v1631, 4
      %v1633 = vrot.slane %v1529, 5
      %v1634 = vsel %vm1623, %v1632, %v1633
      %v1635 = vrot.slane %v1633, 4
      %v1636 = vrot.slane %v1530, 5
      %v1637 = vsel %vm1623, %v1635, %v1636
      %v1638 = vrot.slane %v1531, 5
      %v1639 = vrot.slane %v1638, 4
      %v1640 = vrot.slane %v1532, 5
      %v1641 = vsel %vm1623, %v1639, %v1640
      %v1642 = vrot.slane %v1640, 4
      %v1643 = vrot.slane %v1533, 5
      %v1644 = vsel %vm1623, %v1642, %v1643
      %v1645 = vrot.slane %v1534, 5
      %v1646 = vrot.slane %v1645, 4
      %v1647 = vrot.slane %v1535, 5
      %v1648 = vsel %vm1623, %v1646, %v1647
      %v1649 = vrot.slane %v1647, 4
      %v1650 = vrot.slane %v1536, 5
      %v1651 = vsel %vm1623, %v1649, %v1650
      %v1652 = vrot.slane %v1537, 5
      %v1653 = vrot.slane %v1652, 4
      %v1654 = vrot.slane %v1538, 5
      %v1655 = vsel %vm1623, %v1653, %v1654
      %v1656 = vrot.slane %v1654, 4
      %v1657 = vrot.slane %v1539, 5
      %v1658 = vsel %vm1623, %v1656, %v1657
      %v1659 = vrot.slane %v1540, 5
      %v1660 = vrot.slane %v1659, 4
      %v1661 = vrot.slane %v1541, 5
      %v1662 = vsel %vm1623, %v1660, %v1661
      %v1663 = vrot.slane %v1661, 4
      %v1664 = vrot.slane %v1542, 5
      %v1665 = vsel %vm1623, %v1663, %v1664
      %v1666 = vrot.slane %v1543, 5
      %v1667 = vrot.slane %v1666, 4
      %v1668 = vrot.slane %v1544, 5
      %v1669 = vsel %vm1623, %v1667, %v1668
      %v1670 = vrot.slane %v1668, 4
      %v1671 = vrot.slane %v1545, 5
      %v1672 = vsel %vm1623, %v1670, %v1671
      %v1673 = vrot.slane %v1546, 5
      %v1674 = vrot.slane %v1673, 4
      %v1675 = vrot.slane %v1547, 5
      %v1676 = vsel %vm1623, %v1674, %v1675
      %v1677 = vrot.slane %v1675, 4
      %v1678 = vrot.slane %v1548, 5
      %v1679 = vsel %vm1623, %v1677, %v1678
      %v1680 = vrot.slane %v1549, 5
      %v1681 = vrot.slane %v1680, 4
      %v1682 = vrot.slane %v1550, 5
      %v1683 = vsel %vm1623, %v1681, %v1682
      %v1684 = vrot.slane %v1682, 4
      %v1685 = vrot.slane %v1551, 5
      %v1686 = vsel %vm1623, %v1684, %v1685
      %v1687 = vrot.slane %v1552, 5
      %v1688 = vrot.slane %v1687, 4
      %v1689 = vrot.slane %v1553, 5
      %v1690 = vsel %vm1623, %v1688, %v1689
      %v1691 = vrot.slane %v1689, 4
      %v1692 = vrot.slane %v1554, 5
      %v1693 = vsel %vm1623, %v1691, %v1692
      %v1694 = vrot.slane %v1555, 5
      %v1695 = vrot.slane %v1694, 4
      %v1696 = vrot.slane %v1556, 5
      %v1697 = vsel %vm1623, %v1695, %v1696
      %v1698 = vrot.slane %v1696, 4
      %v1699 = vrot.slane %v1557, 5
      %v1700 = vsel %vm1623, %v1698, %v1699
      %v1701 = vrot.slane %v1558, 5
      %v1702 = vrot.slane %v1701, 4
      %v1703 = vrot.slane %v1559, 5
      %v1704 = vsel %vm1623, %v1702, %v1703
      %v1705 = vrot.slane %v1703, 4
      %v1706 = vrot.slane %v1560, 5
      %v1707 = vsel %vm1623, %v1705, %v1706
      %v1708 = vrot.slane %v1561, 5
      %v1709 = vrot.slane %v1708, 4
      %v1710 = vrot.slane %v1562, 5
      %v1711 = vsel %vm1623, %v1709, %v1710
      %v1712 = vrot.slane %v1710, 4
      %v1713 = vrot.slane %v1563, 5
      %v1714 = vsel %vm1623, %v1712, %v1713
      %v1715 = vrot.slane %v1564, 5
      %v1716 = vrot.slane %v1715, 4
      %v1717 = vrot.slane %v1565, 5
      %v1718 = vsel %vm1623, %v1716, %v1717
      %v1719 = vrot.slane %v1717, 4
      %v1720 = vrot.slane %v1566, 5
      %v1721 = vsel %vm1623, %v1719, %v1720
      %v1722 = vrot.slane %v1567, 5
      %v1723 = vrot.slane %v1722, 4
      %v1724 = vrot.slane %v1568, 5
      %v1725 = vsel %vm1623, %v1723, %v1724
      %v1726 = vrot.slane %v1724, 4
      %v1727 = vrot.slane %v1569, 5
      %v1728 = vsel %vm1623, %v1726, %v1727
      %v1729 = vrot.slane %v1570, 5
      %v1730 = vrot.slane %v1729, 4
      %v1731 = vrot.slane %v1571, 5
      %v1732 = vsel %vm1623, %v1730, %v1731
      %v1733 = vrot.slane %v1731, 4
      %v1734 = vrot.slane %v1572, 5
      %v1735 = vsel %vm1623, %v1733, %v1734
      %v1736 = vld [vmem:[#allocation2] sm:$0xff]
      %v1737 = vld [vmem:[#allocation2 + $0x8] sm:$0xff]
      %v1738 = vld [vmem:[#allocation2 + $0x10] sm:$0xff]
      %v1739 = vld [vmem:[#allocation2 + $0x18] sm:$0xff]
      %v1740 = vld [vmem:[#allocation2 + $0x20] sm:$0xff]
      %v1741 = vld [vmem:[#allocation2 + $0x28] sm:$0xff]
      %v1742 = vld [vmem:[#allocation2 + $0x30] sm:$0xff]
      %v1743 = vld [vmem:[#allocation2 + $0x38] sm:$0xff]
      %v1744 = vld [vmem:[#allocation2 + $0x40] sm:$0xff]
      %v1745 = vld [vmem:[#allocation2 + $0x48] sm:$0xff]
      %v1746 = vld [vmem:[#allocation2 + $0x50] sm:$0xff]
      %v1747 = vld [vmem:[#allocation2 + $0x58] sm:$0xff]
      %v1748 = vld [vmem:[#allocation2 + $0x60] sm:$0xff]
      %v1749 = vld [vmem:[#allocation2 + $0x68] sm:$0xff]
      %v1750 = vld [vmem:[#allocation2 + $0x70] sm:$0xff]
      %v1751 = vld [vmem:[#allocation2 + $0x78] sm:$0xff]
      %v1752 = vld [vmem:[#allocation2 + $0x80] sm:$0xff]
      %v1753 = vld [vmem:[#allocation2 + $0x88] sm:$0xff]
      %v1754 = vld [vmem:[#allocation2 + $0x90] sm:$0xff]
      %v1755 = vld [vmem:[#allocation2 + $0x98] sm:$0xff]
      %v1756 = vld [vmem:[#allocation2 + $0xa0] sm:$0xff]
      %v1757 = vld [vmem:[#allocation2 + $0xa8] sm:$0xff]
      %v1758 = vld [vmem:[#allocation2 + $0xb0] sm:$0xff]
      %v1759 = vld [vmem:[#allocation2 + $0xb8] sm:$0xff]
      %v1760 = vld [vmem:[#allocation2 + $0xc0] sm:$0xff]
      %v1761 = vld [vmem:[#allocation2 + $0xc8] sm:$0xff]
      %v1762 = vld [vmem:[#allocation2 + $0xd0] sm:$0xff]
      %v1763 = vld [vmem:[#allocation2 + $0xd8] sm:$0xff]
      %v1764 = vld [vmem:[#allocation2 + $0xe0] sm:$0xff]
      %v1765 = vld [vmem:[#allocation2 + $0xe8] sm:$0xff]
      %v1766 = vld [vmem:[#allocation2 + $0xf0] sm:$0xff]
      %v1767 = vld [vmem:[#allocation2 + $0xf8] sm:$0xff]
      %s1768 = scalar_lea.vmem %s210, 128
      %v1769 = vld [vmem:[%s1768] sm:$0xf]
      %v1770 = vld [vmem:[%s1768 + $0x4] sm:$0xf]
      %v1771 = vld [vmem:[%s1768 + $0x8] sm:$0xf]
      %v1772 = vld [vmem:[%s1768 + $0xc] sm:$0xf]
      %v1773 = vld [vmem:[%s1768 + $0x10] sm:$0xf]
      %v1774 = vld [vmem:[%s1768 + $0x14] sm:$0xf]
      %v1775 = vld [vmem:[%s1768 + $0x18] sm:$0xf]
      %v1776 = vld [vmem:[%s1768 + $0x1c] sm:$0xf]
      %v1777 = vld [vmem:[%s1768 + $0x20] sm:$0xf]
      %v1778 = vld [vmem:[%s1768 + $0x24] sm:$0xf]
      %v1779 = vld [vmem:[%s1768 + $0x28] sm:$0xf]
      %v1780 = vld [vmem:[%s1768 + $0x2c] sm:$0xf]
      %v1781 = vld [vmem:[%s1768 + $0x30] sm:$0xf]
      %v1782 = vld [vmem:[%s1768 + $0x34] sm:$0xf]
      %v1783 = vld [vmem:[%s1768 + $0x38] sm:$0xf]
      %v1784 = vld [vmem:[%s1768 + $0x3c] sm:$0xf]
      %v1785 = vunpack.c.l.b16 %v1627
      %v1786 = vunpack.c.l.b16 %v1630
      %v1787 = vunpack.c.l.b16 %v1634
      %v1788 = vunpack.c.l.b16 %v1637
      %v1789 = vunpack.c.l.b16 %v1641
      %v1790 = vunpack.c.l.b16 %v1644
      %v1791 = vunpack.c.l.b16 %v1648
      %v1792 = vunpack.c.l.b16 %v1651
      %v1793 = vunpack.c.l.b16 %v1655
      %v1794 = vunpack.c.l.b16 %v1658
      %v1795 = vunpack.c.l.b16 %v1662
      %v1796 = vunpack.c.l.b16 %v1665
      %v1797 = vunpack.c.l.b16 %v1669
      %v1798 = vunpack.c.l.b16 %v1672
      %v1799 = vunpack.c.l.b16 %v1676
      %v1800 = vunpack.c.l.b16 %v1679
      %v1801 = vunpack.c.l.b16 %v1683
      %v1802 = vunpack.c.l.b16 %v1686
      %v1803 = vunpack.c.l.b16 %v1690
      %v1804 = vunpack.c.l.b16 %v1693
      %v1805 = vunpack.c.l.b16 %v1697
      %v1806 = vunpack.c.l.b16 %v1700
      %v1807 = vunpack.c.l.b16 %v1704
      %v1808 = vunpack.c.l.b16 %v1707
      %v1809 = vunpack.c.l.b16 %v1711
      %v1810 = vunpack.c.l.b16 %v1714
      %v1811 = vunpack.c.l.b16 %v1718
      %v1812 = vunpack.c.l.b16 %v1721
      %v1813 = vunpack.c.l.b16 %v1725
      %v1814 = vunpack.c.l.b16 %v1728
      %v1815 = vunpack.c.l.b16 %v1732
      %v1816 = vunpack.c.l.b16 %v1735
      %v1817 = vpack.c.b16 %v1786, %v1785
      %v1818 = vpack.c.b16 %v1788, %v1787
      %v1819 = vpack.c.b16 %v1790, %v1789
      %v1820 = vpack.c.b16 %v1792, %v1791
      %v1821 = vpack.c.b16 %v1794, %v1793
      %v1822 = vpack.c.b16 %v1796, %v1795
      %v1823 = vpack.c.b16 %v1798, %v1797
      %v1824 = vpack.c.b16 %v1800, %v1799
      %v1825 = vpack.c.b16 %v1802, %v1801
      %v1826 = vpack.c.b16 %v1804, %v1803
      %v1827 = vpack.c.b16 %v1806, %v1805
      %v1828 = vpack.c.b16 %v1808, %v1807
      %v1829 = vpack.c.b16 %v1810, %v1809
      %v1830 = vpack.c.b16 %v1812, %v1811
      %v1831 = vpack.c.b16 %v1814, %v1813
      %v1832 = vpack.c.b16 %v1816, %v1815
      %v1865 = vunpack.c.l.b16 %v1769
      %v1866 = vunpack.c.l.b16 %v1770
      %v1867 = vunpack.c.l.b16 %v1771
      %v1868 = vunpack.c.l.b16 %v1772
      %v1869 = vunpack.c.l.b16 %v1773
      %v1870 = vunpack.c.l.b16 %v1774
      %v1871 = vunpack.c.l.b16 %v1775
      %v1872 = vunpack.c.l.b16 %v1776
      %v1873 = vunpack.c.l.b16 %v1777
      %v1874 = vunpack.c.l.b16 %v1778
      %v1875 = vunpack.c.l.b16 %v1779
      %v1876 = vunpack.c.l.b16 %v1780
      %v1877 = vunpack.c.l.b16 %v1781
      %v1878 = vunpack.c.l.b16 %v1782
      %v1879 = vunpack.c.l.b16 %v1783
      %v1880 = vunpack.c.l.b16 %v1784
      %v1881 = vpack.c.b16 %v1866, %v1865
      %v1882 = vpack.c.b16 %v1868, %v1867
      %v1883 = vpack.c.b16 %v1870, %v1869
      %v1884 = vpack.c.b16 %v1872, %v1871
      %v1885 = vpack.c.b16 %v1874, %v1873
      %v1886 = vpack.c.b16 %v1876, %v1875
      %v1887 = vpack.c.b16 %v1878, %v1877
      %v1888 = vpack.c.b16 %v1880, %v1879
      %1897 = vmatprep.subr.bf16.mxu0 0
      %1898 = vmatpush1.bf16.msra.mxu0 %v1881
      %1899 = vmatprep.subr.bf16.mxu0 0
      %1900 = vmatpush1.bf16.msra.mxu0 %v1882
      %1901 = vmatprep.subr.bf16.mxu0 0
      %1902 = vmatpush1.bf16.msra.mxu0 %v1883
      %1903 = vmatprep.subr.bf16.mxu0 0
      %1904 = vmatpush1.bf16.msra.mxu0 %v1884
      %1905 = vmatprep.subr.bf16.mxu0 0
      %1906 = vmatpush1.bf16.msra.mxu0 %v1885
      %1907 = vmatprep.subr.bf16.mxu0 0
      %1908 = vmatpush1.bf16.msra.mxu0 %v1886
      %1909 = vmatprep.subr.bf16.mxu0 0
      %1910 = vmatpush1.bf16.msra.mxu0 %v1887
      %1911 = vmatprep.subr.bf16.mxu0 0
      %1912 = vmatpush1.bf16.msra.mxu0 %v1888
      %1913 = vmatprep.subr.bf16.mxu0 0
      %1914 = vmatpush1.bf16.msra.mxu0 0
      %1915 = vmatprep.subr.bf16.mxu0 0
      %1916 = vmatpush1.bf16.msra.mxu0 0
      %1917 = vmatprep.subr.bf16.mxu0 0
      %1918 = vmatpush1.bf16.msra.mxu0 0
      %1919 = vmatprep.subr.bf16.mxu0 0
      %1920 = vmatpush1.bf16.msra.mxu0 0
      %1921 = vmatprep.subr.bf16.mxu0 0
      %1922 = vmatpush1.bf16.msra.mxu0 0
      %1923 = vmatprep.subr.bf16.mxu0 0
      %1924 = vmatpush1.bf16.msra.mxu0 0
      %1925 = vmatprep.subr.bf16.mxu0 0
      %1926 = vmatpush1.bf16.msra.mxu0 0
      %1927 = vmatprep.subr.bf16.mxu0 0
      %1928 = vmatpush1.bf16.msra.mxu0 0
      %1929 = vmatprep.mubr.bf16.mxu0 0
      %1930 = vmatmul.mubr.bf16.gmra.mrb[0].mxu0 %v1817
      %v1931 = vpop.f32.mrb[0].mxu0
      %v1932 = vadd.f32 0.0, %v1931
      %v1933 = vpop.f32.mrb[0].mxu0
      %v1934 = vpop.f32.mrb[0].mxu0
      %v1935 = vadd.f32 0.0, %v1934
      %v1936 = vpop.f32.mrb[0].mxu0
      %1937 = vmatprep.mubr.bf16.mxu0 0
      %1938 = vmatmul.mubr.bf16.gmra.mrb[0].mxu0 %v1818
      %v1939 = vpop.f32.mrb[0].mxu0
      %v1940 = vadd.f32 0.0, %v1939
      %v1941 = vpop.f32.mrb[0].mxu0
      %v1942 = vpop.f32.mrb[0].mxu0
      %v1943 = vadd.f32 0.0, %v1942
      %v1944 = vpop.f32.mrb[0].mxu0
      %1945 = vmatprep.mubr.bf16.mxu0 0
      %1946 = vmatmul.mubr.bf16.gmra.mrb[0].mxu0 %v1819
      %v1947 = vpop.f32.mrb[0].mxu0
      %v1948 = vadd.f32 0.0, %v1947
      %v1949 = vpop.f32.mrb[0].mxu0
      %v1950 = vpop.f32.mrb[0].mxu0
      %v1951 = vadd.f32 0.0, %v1950
      %v1952 = vpop.f32.mrb[0].mxu0
      %1953 = vmatprep.mubr.bf16.mxu0 0
      %1954 = vmatmul.mubr.bf16.gmra.mrb[0].mxu0 %v1820
      %v1955 = vpop.f32.mrb[0].mxu0
      %v1956 = vadd.f32 0.0, %v1955
      %v1957 = vpop.f32.mrb[0].mxu0
      %v1958 = vpop.f32.mrb[0].mxu0
      %v1959 = vadd.f32 0.0, %v1958
      %v1960 = vpop.f32.mrb[0].mxu0
      %1961 = vmatprep.mubr.bf16.mxu0 0
      %1962 = vmatmul.mubr.bf16.gmra.mrb[0].mxu0 %v1821
      %v1963 = vpop.f32.mrb[0].mxu0
      %v1964 = vadd.f32 0.0, %v1963
      %v1965 = vpop.f32.mrb[0].mxu0
      %v1966 = vpop.f32.mrb[0].mxu0
      %v1967 = vadd.f32 0.0, %v1966
      %v1968 = vpop.f32.mrb[0].mxu0
      %1969 = vmatprep.mubr.bf16.mxu0 0
      %1970 = vmatmul.mubr.bf16.gmra.mrb[0].mxu0 %v1822
      %v1971 = vpop.f32.mrb[0].mxu0
      %v1972 = vadd.f32 0.0, %v1971
      %v1973 = vpop.f32.mrb[0].mxu0
      %v1974 = vpop.f32.mrb[0].mxu0
      %v1975 = vadd.f32 0.0, %v1974
      %v1976 = vpop.f32.mrb[0].mxu0
      %1977 = vmatprep.mubr.bf16.mxu0 0
      %1978 = vmatmul.mubr.bf16.gmra.mrb[0].mxu0 %v1823
      %v1979 = vpop.f32.mrb[0].mxu0
      %v1980 = vadd.f32 0.0, %v1979
      %v1981 = vpop.f32.mrb[0].mxu0
      %v1982 = vpop.f32.mrb[0].mxu0
      %v1983 = vadd.f32 0.0, %v1982
      %v1984 = vpop.f32.mrb[0].mxu0
      %1985 = vmatprep.mubr.bf16.mxu0 0
      %1986 = vmatmul.mubr.bf16.gmra.mrb[0].mxu0 %v1824
      %v1987 = vpop.f32.mrb[0].mxu0
      %v1988 = vadd.f32 0.0, %v1987
      %v1989 = vpop.f32.mrb[0].mxu0
      %v1990 = vpop.f32.mrb[0].mxu0
      %v1991 = vadd.f32 0.0, %v1990
      %v1992 = vpop.f32.mrb[0].mxu0
      %1993 = vmatprep.mubr.bf16.mxu0 0
      %1994 = vmatmul.mubr.bf16.gmra.mrb[0].mxu0 %v1825
      %v1995 = vpop.f32.mrb[0].mxu0
      %v1996 = vadd.f32 0.0, %v1995
      %v1997 = vpop.f32.mrb[0].mxu0
      %v1998 = vpop.f32.mrb[0].mxu0
      %v1999 = vadd.f32 0.0, %v1998
      %v2000 = vpop.f32.mrb[0].mxu0
      %2001 = vmatprep.mubr.bf16.mxu0 0
      %2002 = vmatmul.mubr.bf16.gmra.mrb[0].mxu0 %v1826
      %v2003 = vpop.f32.mrb[0].mxu0
      %v2004 = vadd.f32 0.0, %v2003
      %v2005 = vpop.f32.mrb[0].mxu0
      %v2006 = vpop.f32.mrb[0].mxu0
      %v2007 = vadd.f32 0.0, %v2006
      %v2008 = vpop.f32.mrb[0].mxu0
      %2009 = vmatprep.mubr.bf16.mxu0 0
      %2010 = vmatmul.mubr.bf16.gmra.mrb[0].mxu0 %v1827
      %v2011 = vpop.f32.mrb[0].mxu0
      %v2012 = vadd.f32 0.0, %v2011
      %v2013 = vpop.f32.mrb[0].mxu0
      %v2014 = vpop.f32.mrb[0].mxu0
      %v2015 = vadd.f32 0.0, %v2014
      %v2016 = vpop.f32.mrb[0].mxu0
      %2017 = vmatprep.mubr.bf16.mxu0 0
      %2018 = vmatmul.mubr.bf16.gmra.mrb[0].mxu0 %v1828
      %v2019 = vpop.f32.mrb[0].mxu0
      %v2020 = vadd.f32 0.0, %v2019
      %v2021 = vpop.f32.mrb[0].mxu0
      %v2022 = vpop.f32.mrb[0].mxu0
      %v2023 = vadd.f32 0.0, %v2022
      %v2024 = vpop.f32.mrb[0].mxu0
      %2025 = vmatprep.mubr.bf16.mxu0 0
      %2026 = vmatmul.mubr.bf16.gmra.mrb[0].mxu0 %v1829
      %v2027 = vpop.f32.mrb[0].mxu0
      %v2028 = vadd.f32 0.0, %v2027
      %v2029 = vpop.f32.mrb[0].mxu0
      %v2030 = vpop.f32.mrb[0].mxu0
      %v2031 = vadd.f32 0.0, %v2030
      %v2032 = vpop.f32.mrb[0].mxu0
      %2033 = vmatprep.mubr.bf16.mxu0 0
      %2034 = vmatmul.mubr.bf16.gmra.mrb[0].mxu0 %v1830
      %v2035 = vpop.f32.mrb[0].mxu0
      %v2036 = vadd.f32 0.0, %v2035
      %v2037 = vpop.f32.mrb[0].mxu0
      %v2038 = vpop.f32.mrb[0].mxu0
      %v2039 = vadd.f32 0.0, %v2038
      %v2040 = vpop.f32.mrb[0].mxu0
      %2041 = vmatprep.mubr.bf16.mxu0 0
      %2042 = vmatmul.mubr.bf16.gmra.mrb[0].mxu0 %v1831
      %v2043 = vpop.f32.mrb[0].mxu0
      %v2044 = vadd.f32 0.0, %v2043
      %v2045 = vpop.f32.mrb[0].mxu0
      %v2046 = vpop.f32.mrb[0].mxu0
      %v2047 = vadd.f32 0.0, %v2046
      %v2048 = vpop.f32.mrb[0].mxu0
      %2049 = vmatprep.mubr.bf16.mxu0 0
      %2050 = vmatmul.mubr.bf16.gmra.mrb[0].mxu0 %v1832
      %v2051 = vpop.f32.mrb[0].mxu0
      %v2052 = vadd.f32 0.0, %v2051
      %v2053 = vpop.f32.mrb[0].mxu0
      %v2054 = vpop.f32.mrb[0].mxu0
      %v2055 = vadd.f32 0.0, %v2054
      %v2056 = vpop.f32.mrb[0].mxu0
      %2057 = vdwg.mxu0
      %v2058 = vadd.f32 %v1736, %v1932
      %v2059 = vadd.f32 %v1737, %v1935
      %v2060 = vadd.f32 %v1738, %v1940
      %v2061 = vadd.f32 %v1739, %v1943
      %v2062 = vadd.f32 %v1740, %v1948
      %v2063 = vadd.f32 %v1741, %v1951
      %v2064 = vadd.f32 %v1742, %v1956
      %v2065 = vadd.f32 %v1743, %v1959
      %v2066 = vadd.f32 %v1744, %v1964
      %v2067 = vadd.f32 %v1745, %v1967
      %v2068 = vadd.f32 %v1746, %v1972
      %v2069 = vadd.f32 %v1747, %v1975
      %v2070 = vadd.f32 %v1748, %v1980
      %v2071 = vadd.f32 %v1749, %v1983
      %v2072 = vadd.f32 %v1750, %v1988
      %v2073 = vadd.f32 %v1751, %v1991
      %v2074 = vadd.f32 %v1752, %v1996
      %v2075 = vadd.f32 %v1753, %v1999
      %v2076 = vadd.f32 %v1754, %v2004
      %v2077 = vadd.f32 %v1755, %v2007
      %v2078 = vadd.f32 %v1756, %v2012
      %v2079 = vadd.f32 %v1757, %v2015
      %v2080 = vadd.f32 %v1758, %v2020
      %v2081 = vadd.f32 %v1759, %v2023
      %v2082 = vadd.f32 %v1760, %v2028
      %v2083 = vadd.f32 %v1761, %v2031
      %v2084 = vadd.f32 %v1762, %v2036
      %v2085 = vadd.f32 %v1763, %v2039
      %v2086 = vadd.f32 %v1764, %v2044
      %v2087 = vadd.f32 %v1765, %v2047
      %v2088 = vadd.f32 %v1766, %v2052
      %v2089 = vadd.f32 %v1767, %v2055
      %2090 = vst [vmem:[#allocation2] sm:$0xff] %v2058
      %2091 = vst [vmem:[#allocation2 + $0x8] sm:$0xff] %v2059
      %2092 = vst [vmem:[#allocation2 + $0x10] sm:$0xff] %v2060
      %2093 = vst [vmem:[#allocation2 + $0x18] sm:$0xff] %v2061
      %2094 = vst [vmem:[#allocation2 + $0x20] sm:$0xff] %v2062
      %2095 = vst [vmem:[#allocation2 + $0x28] sm:$0xff] %v2063
      %2096 = vst [vmem:[#allocation2 + $0x30] sm:$0xff] %v2064
      %2097 = vst [vmem:[#allocation2 + $0x38] sm:$0xff] %v2065
      %2098 = vst [vmem:[#allocation2 + $0x40] sm:$0xff] %v2066
      %2099 = vst [vmem:[#allocation2 + $0x48] sm:$0xff] %v2067
      %2100 = vst [vmem:[#allocation2 + $0x50] sm:$0xff] %v2068
      %2101 = vst [vmem:[#allocation2 + $0x58] sm:$0xff] %v2069
      %2102 = vst [vmem:[#allocation2 + $0x60] sm:$0xff] %v2070
      %2103 = vst [vmem:[#allocation2 + $0x68] sm:$0xff] %v2071
      %2104 = vst [vmem:[#allocation2 + $0x70] sm:$0xff] %v2072
      %2105 = vst [vmem:[#allocation2 + $0x78] sm:$0xff] %v2073
      %2106 = vst [vmem:[#allocation2 + $0x80] sm:$0xff] %v2074
      %2107 = vst [vmem:[#allocation2 + $0x88] sm:$0xff] %v2075
      %2108 = vst [vmem:[#allocation2 + $0x90] sm:$0xff] %v2076
      %2109 = vst [vmem:[#allocation2 + $0x98] sm:$0xff] %v2077
      %2110 = vst [vmem:[#allocation2 + $0xa0] sm:$0xff] %v2078
      %2111 = vst [vmem:[#allocation2 + $0xa8] sm:$0xff] %v2079
      %2112 = vst [vmem:[#allocation2 + $0xb0] sm:$0xff] %v2080
      %2113 = vst [vmem:[#allocation2 + $0xb8] sm:$0xff] %v2081
      %2114 = vst [vmem:[#allocation2 + $0xc0] sm:$0xff] %v2082
      %2115 = vst [vmem:[#allocation2 + $0xc8] sm:$0xff] %v2083
      %2116 = vst [vmem:[#allocation2 + $0xd0] sm:$0xff] %v2084
      %2117 = vst [vmem:[#allocation2 + $0xd8] sm:$0xff] %v2085
      %2118 = vst [vmem:[#allocation2 + $0xe0] sm:$0xff] %v2086
      %2119 = vst [vmem:[#allocation2 + $0xe8] sm:$0xff] %v2087
      %2120 = vst [vmem:[#allocation2 + $0xf0] sm:$0xff] %v2088
      %2121 = vst [vmem:[#allocation2 + $0xf8] sm:$0xff] %v2089
      %s2122 = scalar_lea.vmem %s206, 12
      %v2123 = vld [vmem:[%s2122] sm:$0xf]
      %v2124 = vld [vmem:[%s2122 + $0x4] sm:$0xf]
      %v2125 = vld [vmem:[%s2122 + $0xc] sm:$0xf]
      %v2126 = vld [vmem:[%s2122 + $0x10] sm:$0xf]
      %v2127 = vld [vmem:[%s2122 + $0x18] sm:$0xf]
      %v2128 = vld [vmem:[%s2122 + $0x1c] sm:$0xf]
      %v2129 = vld [vmem:[%s2122 + $0x24] sm:$0xf]
      %v2130 = vld [vmem:[%s2122 + $0x28] sm:$0xf]
      %v2131 = vld [vmem:[%s2122 + $0x30] sm:$0xf]
      %v2132 = vld [vmem:[%s2122 + $0x34] sm:$0xf]
      %v2133 = vld [vmem:[%s2122 + $0x3c] sm:$0xf]
      %v2134 = vld [vmem:[%s2122 + $0x40] sm:$0xf]
      %v2135 = vld [vmem:[%s2122 + $0x48] sm:$0xf]
      %v2136 = vld [vmem:[%s2122 + $0x4c] sm:$0xf]
      %v2137 = vld [vmem:[%s2122 + $0x54] sm:$0xf]
      %v2138 = vld [vmem:[%s2122 + $0x58] sm:$0xf]
      %v2139 = vld [vmem:[%s2122 + $0x60] sm:$0xf]
      %v2140 = vld [vmem:[%s2122 + $0x64] sm:$0xf]
      %v2141 = vld [vmem:[%s2122 + $0x6c] sm:$0xf]
      %v2142 = vld [vmem:[%s2122 + $0x70] sm:$0xf]
      %v2143 = vld [vmem:[%s2122 + $0x78] sm:$0xf]
      %v2144 = vld [vmem:[%s2122 + $0x7c] sm:$0xf]
      %v2145 = vld [vmem:[%s2122 + $0x84] sm:$0xf]
      %v2146 = vld [vmem:[%s2122 + $0x88] sm:$0xf]
      %v2147 = vld [vmem:[%s2122 + $0x90] sm:$0xf]
      %v2148 = vld [vmem:[%s2122 + $0x94] sm:$0xf]
      %v2149 = vld [vmem:[%s2122 + $0x9c] sm:$0xf]
      %v2150 = vld [vmem:[%s2122 + $0xa0] sm:$0xf]
      %v2151 = vld [vmem:[%s2122 + $0xa8] sm:$0xf]
      %v2152 = vld [vmem:[%s2122 + $0xac] sm:$0xf]
      %v2153 = vld [vmem:[%s2122 + $0xb4] sm:$0xf]
      %v2154 = vld [vmem:[%s2122 + $0xb8] sm:$0xf]
      %v2155 = vld [vmem:[#allocation2] sm:$0xff]
      %v2156 = vld [vmem:[#allocation2 + $0x8] sm:$0xff]
      %v2157 = vld [vmem:[#allocation2 + $0x10] sm:$0xff]
      %v2158 = vld [vmem:[#allocation2 + $0x18] sm:$0xff]
      %v2159 = vld [vmem:[#allocation2 + $0x20] sm:$0xff]
      %v2160 = vld [vmem:[#allocation2 + $0x28] sm:$0xff]
      %v2161 = vld [vmem:[#allocation2 + $0x30] sm:$0xff]
      %v2162 = vld [vmem:[#allocation2 + $0x38] sm:$0xff]
      %v2163 = vld [vmem:[#allocation2 + $0x40] sm:$0xff]
      %v2164 = vld [vmem:[#allocation2 + $0x48] sm:$0xff]
      %v2165 = vld [vmem:[#allocation2 + $0x50] sm:$0xff]
      %v2166 = vld [vmem:[#allocation2 + $0x58] sm:$0xff]
      %v2167 = vld [vmem:[#allocation2 + $0x60] sm:$0xff]
      %v2168 = vld [vmem:[#allocation2 + $0x68] sm:$0xff]
      %v2169 = vld [vmem:[#allocation2 + $0x70] sm:$0xff]
      %v2170 = vld [vmem:[#allocation2 + $0x78] sm:$0xff]
      %v2171 = vld [vmem:[#allocation2 + $0x80] sm:$0xff]
      %v2172 = vld [vmem:[#allocation2 + $0x88] sm:$0xff]
      %v2173 = vld [vmem:[#allocation2 + $0x90] sm:$0xff]
      %v2174 = vld [vmem:[#allocation2 + $0x98] sm:$0xff]
      %v2175 = vld [vmem:[#allocation2 + $0xa0] sm:$0xff]
      %v2176 = vld [vmem:[#allocation2 + $0xa8] sm:$0xff]
      %v2177 = vld [vmem:[#allocation2 + $0xb0] sm:$0xff]
      %v2178 = vld [vmem:[#allocation2 + $0xb8] sm:$0xff]
      %v2179 = vld [vmem:[#allocation2 + $0xc0] sm:$0xff]
      %v2180 = vld [vmem:[#allocation2 + $0xc8] sm:$0xff]
      %v2181 = vld [vmem:[#allocation2 + $0xd0] sm:$0xff]
      %v2182 = vld [vmem:[#allocation2 + $0xd8] sm:$0xff]
      %v2183 = vld [vmem:[#allocation2 + $0xe0] sm:$0xff]
      %v2184 = vld [vmem:[#allocation2 + $0xe8] sm:$0xff]
      %v2185 = vld [vmem:[#allocation2 + $0xf0] sm:$0xff]
      %v2186 = vld [vmem:[#allocation2 + $0xf8] sm:$0xff]
      %s2187 = scalar_lea.vmem %s210, 192
      %v2188 = vld [vmem:[%s2187] sm:$0xf]
      %v2189 = vld [vmem:[%s2187 + $0x4] sm:$0xf]
      %v2190 = vld [vmem:[%s2187 + $0x8] sm:$0xf]
      %v2191 = vld [vmem:[%s2187 + $0xc] sm:$0xf]
      %v2192 = vld [vmem:[%s2187 + $0x10] sm:$0xf]
      %v2193 = vld [vmem:[%s2187 + $0x14] sm:$0xf]
      %v2194 = vld [vmem:[%s2187 + $0x18] sm:$0xf]
      %v2195 = vld [vmem:[%s2187 + $0x1c] sm:$0xf]
      %v2196 = vld [vmem:[%s2187 + $0x20] sm:$0xf]
      %v2197 = vld [vmem:[%s2187 + $0x24] sm:$0xf]
      %v2198 = vld [vmem:[%s2187 + $0x28] sm:$0xf]
      %v2199 = vld [vmem:[%s2187 + $0x2c] sm:$0xf]
      %v2200 = vld [vmem:[%s2187 + $0x30] sm:$0xf]
      %v2201 = vld [vmem:[%s2187 + $0x34] sm:$0xf]
      %v2202 = vld [vmem:[%s2187 + $0x38] sm:$0xf]
      %v2203 = vld [vmem:[%s2187 + $0x3c] sm:$0xf]
      %v2236 = vunpack.c.l.b16 %v2123
      %v2237 = vunpack.c.l.b16 %v2124
      %v2238 = vunpack.c.l.b16 %v2125
      %v2239 = vunpack.c.l.b16 %v2126
      %v2240 = vunpack.c.l.b16 %v2127
      %v2241 = vunpack.c.l.b16 %v2128
      %v2242 = vunpack.c.l.b16 %v2129
      %v2243 = vunpack.c.l.b16 %v2130
      %v2244 = vunpack.c.l.b16 %v2131
      %v2245 = vunpack.c.l.b16 %v2132
      %v2246 = vunpack.c.l.b16 %v2133
      %v2247 = vunpack.c.l.b16 %v2134
      %v2248 = vunpack.c.l.b16 %v2135
      %v2249 = vunpack.c.l.b16 %v2136
      %v2250 = vunpack.c.l.b16 %v2137
      %v2251 = vunpack.c.l.b16 %v2138
      %v2252 = vunpack.c.l.b16 %v2139
      %v2253 = vunpack.c.l.b16 %v2140
      %v2254 = vunpack.c.l.b16 %v2141
      %v2255 = vunpack.c.l.b16 %v2142
      %v2256 = vunpack.c.l.b16 %v2143
      %v2257 = vunpack.c.l.b16 %v2144
      %v2258 = vunpack.c.l.b16 %v2145
      %v2259 = vunpack.c.l.b16 %v2146
      %v2260 = vunpack.c.l.b16 %v2147
      %v2261 = vunpack.c.l.b16 %v2148
      %v2262 = vunpack.c.l.b16 %v2149
      %v2263 = vunpack.c.l.b16 %v2150
      %v2264 = vunpack.c.l.b16 %v2151
      %v2265 = vunpack.c.l.b16 %v2152
      %v2266 = vunpack.c.l.b16 %v2153
      %v2267 = vunpack.c.l.b16 %v2154
      %v2268 = vpack.c.b16 %v2237, %v2236
      %v2269 = vpack.c.b16 %v2239, %v2238
      %v2270 = vpack.c.b16 %v2241, %v2240
      %v2271 = vpack.c.b16 %v2243, %v2242
      %v2272 = vpack.c.b16 %v2245, %v2244
      %v2273 = vpack.c.b16 %v2247, %v2246
      %v2274 = vpack.c.b16 %v2249, %v2248
      %v2275 = vpack.c.b16 %v2251, %v2250
      %v2276 = vpack.c.b16 %v2253, %v2252
      %v2277 = vpack.c.b16 %v2255, %v2254
      %v2278 = vpack.c.b16 %v2257, %v2256
      %v2279 = vpack.c.b16 %v2259, %v2258
      %v2280 = vpack.c.b16 %v2261, %v2260
      %v2281 = vpack.c.b16 %v2263, %v2262
      %v2282 = vpack.c.b16 %v2265, %v2264
      %v2283 = vpack.c.b16 %v2267, %v2266
      %v2316 = vunpack.c.l.b16 %v2188
      %v2317 = vunpack.c.l.b16 %v2189
      %v2318 = vunpack.c.l.b16 %v2190
      %v2319 = vunpack.c.l.b16 %v2191
      %v2320 = vunpack.c.l.b16 %v2192
      %v2321 = vunpack.c.l.b16 %v2193
      %v2322 = vunpack.c.l.b16 %v2194
      %v2323 = vunpack.c.l.b16 %v2195
      %v2324 = vunpack.c.l.b16 %v2196
      %v2325 = vunpack.c.l.b16 %v2197
      %v2326 = vunpack.c.l.b16 %v2198
      %v2327 = vunpack.c.l.b16 %v2199
      %v2328 = vunpack.c.l.b16 %v2200
      %v2329 = vunpack.c.l.b16 %v2201
      %v2330 = vunpack.c.l.b16 %v2202
      %v2331 = vunpack.c.l.b16 %v2203
      %v2332 = vpack.c.b16 %v2317, %v2316
      %v2333 = vpack.c.b16 %v2319, %v2318
      %v2334 = vpack.c.b16 %v2321, %v2320
      %v2335 = vpack.c.b16 %v2323, %v2322
      %v2336 = vpack.c.b16 %v2325, %v2324
      %v2337 = vpack.c.b16 %v2327, %v2326
      %v2338 = vpack.c.b16 %v2329, %v2328
      %v2339 = vpack.c.b16 %v2331, %v2330
      %2348 = vmatprep.subr.bf16.mxu0 0
      %2349 = vmatpush1.bf16.msra.mxu0 %v2332
      %2350 = vmatprep.subr.bf16.mxu0 0
      %2351 = vmatpush1.bf16.msra.mxu0 %v2333
      %2352 = vmatprep.subr.bf16.mxu0 0
      %2353 = vmatpush1.bf16.msra.mxu0 %v2334
      %2354 = vmatprep.subr.bf16.mxu0 0
      %2355 = vmatpush1.bf16.msra.mxu0 %v2335
      %2356 = vmatprep.subr.bf16.mxu0 0
      %2357 = vmatpush1.bf16.msra.mxu0 %v2336
      %2358 = vmatprep.subr.bf16.mxu0 0
      %2359 = vmatpush1.bf16.msra.mxu0 %v2337
      %2360 = vmatprep.subr.bf16.mxu0 0
      %2361 = vmatpush1.bf16.msra.mxu0 %v2338
      %2362 = vmatprep.subr.bf16.mxu0 0
      %2363 = vmatpush1.bf16.msra.mxu0 %v2339
      %2364 = vmatprep.subr.bf16.mxu0 0
      %2365 = vmatpush1.bf16.msra.mxu0 0
      %2366 = vmatprep.subr.bf16.mxu0 0
      %2367 = vmatpush1.bf16.msra.mxu0 0
      %2368 = vmatprep.subr.bf16.mxu0 0
      %2369 = vmatpush1.bf16.msra.mxu0 0
      %2370 = vmatprep.subr.bf16.mxu0 0
      %2371 = vmatpush1.bf16.msra.mxu0 0
      %2372 = vmatprep.subr.bf16.mxu0 0
      %2373 = vmatpush1.bf16.msra.mxu0 0
      %2374 = vmatprep.subr.bf16.mxu0 0
      %2375 = vmatpush1.bf16.msra.mxu0 0
      %2376 = vmatprep.subr.bf16.mxu0 0
      %2377 = vmatpush1.bf16.msra.mxu0 0
      %2378 = vmatprep.subr.bf16.mxu0 0
      %2379 = vmatpush1.bf16.msra.mxu0 0
      %2380 = vmatprep.mubr.bf16.mxu0 0
      %2381 = vmatmul.mubr.bf16.gmra.mrb[0].mxu0 %v2268
      %v2382 = vpop.f32.mrb[0].mxu0
      %v2383 = vadd.f32 0.0, %v2382
      %v2384 = vpop.f32.mrb[0].mxu0
      %v2385 = vpop.f32.mrb[0].mxu0
      %v2386 = vadd.f32 0.0, %v2385
      %v2387 = vpop.f32.mrb[0].mxu0
      %2388 = vmatprep.mubr.bf16.mxu0 0
      %2389 = vmatmul.mubr.bf16.gmra.mrb[0].mxu0 %v2269
      %v2390 = vpop.f32.mrb[0].mxu0
      %v2391 = vadd.f32 0.0, %v2390
      %v2392 = vpop.f32.mrb[0].mxu0
      %v2393 = vpop.f32.mrb[0].mxu0
      %v2394 = vadd.f32 0.0, %v2393
      %v2395 = vpop.f32.mrb[0].mxu0
      %2396 = vmatprep.mubr.bf16.mxu0 0
      %2397 = vmatmul.mubr.bf16.gmra.mrb[0].mxu0 %v2270
      %v2398 = vpop.f32.mrb[0].mxu0
      %v2399 = vadd.f32 0.0, %v2398
      %v2400 = vpop.f32.mrb[0].mxu0
      %v2401 = vpop.f32.mrb[0].mxu0
      %v2402 = vadd.f32 0.0, %v2401
      %v2403 = vpop.f32.mrb[0].mxu0
      %2404 = vmatprep.mubr.bf16.mxu0 0
      %2405 = vmatmul.mubr.bf16.gmra.mrb[0].mxu0 %v2271
      %v2406 = vpop.f32.mrb[0].mxu0
      %v2407 = vadd.f32 0.0, %v2406
      %v2408 = vpop.f32.mrb[0].mxu0
      %v2409 = vpop.f32.mrb[0].mxu0
      %v2410 = vadd.f32 0.0, %v2409
      %v2411 = vpop.f32.mrb[0].mxu0
      %2412 = vmatprep.mubr.bf16.mxu0 0
      %2413 = vmatmul.mubr.bf16.gmra.mrb[0].mxu0 %v2272
      %v2414 = vpop.f32.mrb[0].mxu0
      %v2415 = vadd.f32 0.0, %v2414
      %v2416 = vpop.f32.mrb[0].mxu0
      %v2417 = vpop.f32.mrb[0].mxu0
      %v2418 = vadd.f32 0.0, %v2417
      %v2419 = vpop.f32.mrb[0].mxu0
      %2420 = vmatprep.mubr.bf16.mxu0 0
      %2421 = vmatmul.mubr.bf16.gmra.mrb[0].mxu0 %v2273
      %v2422 = vpop.f32.mrb[0].mxu0
      %v2423 = vadd.f32 0.0, %v2422
      %v2424 = vpop.f32.mrb[0].mxu0
      %v2425 = vpop.f32.mrb[0].mxu0
      %v2426 = vadd.f32 0.0, %v2425
      %v2427 = vpop.f32.mrb[0].mxu0
      %2428 = vmatprep.mubr.bf16.mxu0 0
      %2429 = vmatmul.mubr.bf16.gmra.mrb[0].mxu0 %v2274
      %v2430 = vpop.f32.mrb[0].mxu0
      %v2431 = vadd.f32 0.0, %v2430
      %v2432 = vpop.f32.mrb[0].mxu0
      %v2433 = vpop.f32.mrb[0].mxu0
      %v2434 = vadd.f32 0.0, %v2433
      %v2435 = vpop.f32.mrb[0].mxu0
      %2436 = vmatprep.mubr.bf16.mxu0 0
      %2437 = vmatmul.mubr.bf16.gmra.mrb[0].mxu0 %v2275
      %v2438 = vpop.f32.mrb[0].mxu0
      %v2439 = vadd.f32 0.0, %v2438
      %v2440 = vpop.f32.mrb[0].mxu0
      %v2441 = vpop.f32.mrb[0].mxu0
      %v2442 = vadd.f32 0.0, %v2441
      %v2443 = vpop.f32.mrb[0].mxu0
      %2444 = vmatprep.mubr.bf16.mxu0 0
      %2445 = vmatmul.mubr.bf16.gmra.mrb[0].mxu0 %v2276
      %v2446 = vpop.f32.mrb[0].mxu0
      %v2447 = vadd.f32 0.0, %v2446
      %v2448 = vpop.f32.mrb[0].mxu0
      %v2449 = vpop.f32.mrb[0].mxu0
      %v2450 = vadd.f32 0.0, %v2449
      %v2451 = vpop.f32.mrb[0].mxu0
      %2452 = vmatprep.mubr.bf16.mxu0 0
      %2453 = vmatmul.mubr.bf16.gmra.mrb[0].mxu0 %v2277
      %v2454 = vpop.f32.mrb[0].mxu0
      %v2455 = vadd.f32 0.0, %v2454
      %v2456 = vpop.f32.mrb[0].mxu0
      %v2457 = vpop.f32.mrb[0].mxu0
      %v2458 = vadd.f32 0.0, %v2457
      %v2459 = vpop.f32.mrb[0].mxu0
      %2460 = vmatprep.mubr.bf16.mxu0 0
      %2461 = vmatmul.mubr.bf16.gmra.mrb[0].mxu0 %v2278
      %v2462 = vpop.f32.mrb[0].mxu0
      %v2463 = vadd.f32 0.0, %v2462
      %v2464 = vpop.f32.mrb[0].mxu0
      %v2465 = vpop.f32.mrb[0].mxu0
      %v2466 = vadd.f32 0.0, %v2465
      %v2467 = vpop.f32.mrb[0].mxu0
      %2468 = vmatprep.mubr.bf16.mxu0 0
      %2469 = vmatmul.mubr.bf16.gmra.mrb[0].mxu0 %v2279
      %v2470 = vpop.f32.mrb[0].mxu0
      %v2471 = vadd.f32 0.0, %v2470
      %v2472 = vpop.f32.mrb[0].mxu0
      %v2473 = vpop.f32.mrb[0].mxu0
      %v2474 = vadd.f32 0.0, %v2473
      %v2475 = vpop.f32.mrb[0].mxu0
      %2476 = vmatprep.mubr.bf16.mxu0 0
      %2477 = vmatmul.mubr.bf16.gmra.mrb[0].mxu0 %v2280
      %v2478 = vpop.f32.mrb[0].mxu0
      %v2479 = vadd.f32 0.0, %v2478
      %v2480 = vpop.f32.mrb[0].mxu0
      %v2481 = vpop.f32.mrb[0].mxu0
      %v2482 = vadd.f32 0.0, %v2481
      %v2483 = vpop.f32.mrb[0].mxu0
      %2484 = vmatprep.mubr.bf16.mxu0 0
      %2485 = vmatmul.mubr.bf16.gmra.mrb[0].mxu0 %v2281
      %v2486 = vpop.f32.mrb[0].mxu0
      %v2487 = vadd.f32 0.0, %v2486
      %v2488 = vpop.f32.mrb[0].mxu0
      %v2489 = vpop.f32.mrb[0].mxu0
      %v2490 = vadd.f32 0.0, %v2489
      %v2491 = vpop.f32.mrb[0].mxu0
      %2492 = vmatprep.mubr.bf16.mxu0 0
      %2493 = vmatmul.mubr.bf16.gmra.mrb[0].mxu0 %v2282
      %v2494 = vpop.f32.mrb[0].mxu0
      %v2495 = vadd.f32 0.0, %v2494
      %v2496 = vpop.f32.mrb[0].mxu0
      %v2497 = vpop.f32.mrb[0].mxu0
      %v2498 = vadd.f32 0.0, %v2497
      %v2499 = vpop.f32.mrb[0].mxu0
      %2500 = vmatprep.mubr.bf16.mxu0 0
      %2501 = vmatmul.mubr.bf16.gmra.mrb[0].mxu0 %v2283
      %v2502 = vpop.f32.mrb[0].mxu0
      %v2503 = vadd.f32 0.0, %v2502
      %v2504 = vpop.f32.mrb[0].mxu0
      %v2505 = vpop.f32.mrb[0].mxu0
      %v2506 = vadd.f32 0.0, %v2505
      %v2507 = vpop.f32.mrb[0].mxu0
      %2508 = vdwg.mxu0
      %v2509 = vadd.f32 %v2155, %v2383
      %v2510 = vadd.f32 %v2156, %v2386
      %v2511 = vadd.f32 %v2157, %v2391
      %v2512 = vadd.f32 %v2158, %v2394
      %v2513 = vadd.f32 %v2159, %v2399
      %v2514 = vadd.f32 %v2160, %v2402
      %v2515 = vadd.f32 %v2161, %v2407
      %v2516 = vadd.f32 %v2162, %v2410
      %v2517 = vadd.f32 %v2163, %v2415
      %v2518 = vadd.f32 %v2164, %v2418
      %v2519 = vadd.f32 %v2165, %v2423
      %v2520 = vadd.f32 %v2166, %v2426
      %v2521 = vadd.f32 %v2167, %v2431
      %v2522 = vadd.f32 %v2168, %v2434
      %v2523 = vadd.f32 %v2169, %v2439
      %v2524 = vadd.f32 %v2170, %v2442
      %v2525 = vadd.f32 %v2171, %v2447
      %v2526 = vadd.f32 %v2172, %v2450
      %v2527 = vadd.f32 %v2173, %v2455
      %v2528 = vadd.f32 %v2174, %v2458
      %v2529 = vadd.f32 %v2175, %v2463
      %v2530 = vadd.f32 %v2176, %v2466
      %v2531 = vadd.f32 %v2177, %v2471
      %v2532 = vadd.f32 %v2178, %v2474
      %v2533 = vadd.f32 %v2179, %v2479
      %v2534 = vadd.f32 %v2180, %v2482
      %v2535 = vadd.f32 %v2181, %v2487
      %v2536 = vadd.f32 %v2182, %v2490
      %v2537 = vadd.f32 %v2183, %v2495
      %v2538 = vadd.f32 %v2184, %v2498
      %v2539 = vadd.f32 %v2185, %v2503
      %v2540 = vadd.f32 %v2186, %v2506
      %2541 = vst [vmem:[#allocation2] sm:$0xff] %v2509
      %2542 = vst [vmem:[#allocation2 + $0x8] sm:$0xff] %v2510
      %2543 = vst [vmem:[#allocation2 + $0x10] sm:$0xff] %v2511
      %2544 = vst [vmem:[#allocation2 + $0x18] sm:$0xff] %v2512
      %2545 = vst [vmem:[#allocation2 + $0x20] sm:$0xff] %v2513
      %2546 = vst [vmem:[#allocation2 + $0x28] sm:$0xff] %v2514
      %2547 = vst [vmem:[#allocation2 + $0x30] sm:$0xff] %v2515
      %2548 = vst [vmem:[#allocation2 + $0x38] sm:$0xff] %v2516
      %2549 = vst [vmem:[#allocation2 + $0x40] sm:$0xff] %v2517
      %2550 = vst [vmem:[#allocation2 + $0x48] sm:$0xff] %v2518
      %2551 = vst [vmem:[#allocation2 + $0x50] sm:$0xff] %v2519
      %2552 = vst [vmem:[#allocation2 + $0x58] sm:$0xff] %v2520
      %2553 = vst [vmem:[#allocation2 + $0x60] sm:$0xff] %v2521
      %2554 = vst [vmem:[#allocation2 + $0x68] sm:$0xff] %v2522
      %2555 = vst [vmem:[#allocation2 + $0x70] sm:$0xff] %v2523
      %2556 = vst [vmem:[#allocation2 + $0x78] sm:$0xff] %v2524
      %2557 = vst [vmem:[#allocation2 + $0x80] sm:$0xff] %v2525
      %2558 = vst [vmem:[#allocation2 + $0x88] sm:$0xff] %v2526
      %2559 = vst [vmem:[#allocation2 + $0x90] sm:$0xff] %v2527
      %2560 = vst [vmem:[#allocation2 + $0x98] sm:$0xff] %v2528
      %2561 = vst [vmem:[#allocation2 + $0xa0] sm:$0xff] %v2529
      %2562 = vst [vmem:[#allocation2 + $0xa8] sm:$0xff] %v2530
      %2563 = vst [vmem:[#allocation2 + $0xb0] sm:$0xff] %v2531
      %2564 = vst [vmem:[#allocation2 + $0xb8] sm:$0xff] %v2532
      %2565 = vst [vmem:[#allocation2 + $0xc0] sm:$0xff] %v2533
      %2566 = vst [vmem:[#allocation2 + $0xc8] sm:$0xff] %v2534
      %2567 = vst [vmem:[#allocation2 + $0xd0] sm:$0xff] %v2535
      %2568 = vst [vmem:[#allocation2 + $0xd8] sm:$0xff] %v2536
      %2569 = vst [vmem:[#allocation2 + $0xe0] sm:$0xff] %v2537
      %2570 = vst [vmem:[#allocation2 + $0xe8] sm:$0xff] %v2538
      %2571 = vst [vmem:[#allocation2 + $0xf0] sm:$0xff] %v2539
      %2572 = vst [vmem:[#allocation2 + $0xf8] sm:$0xff] %v2540
      %v2573 = vld [vmem:[%s2122] sm:$0xf]
      %v2574 = vld [vmem:[%s2122 + $0x4] sm:$0xf]
      %v2575 = vld [vmem:[%s2122 + $0x8] sm:$0x1]
      %v2576 = vld [vmem:[%s2122 + $0xc] sm:$0xf]
      %v2577 = vld [vmem:[%s2122 + $0x10] sm:$0xf]
      %v2578 = vld [vmem:[%s2122 + $0x14] sm:$0x1]
      %v2579 = vld [vmem:[%s2122 + $0x18] sm:$0xf]
      %v2580 = vld [vmem:[%s2122 + $0x1c] sm:$0xf]
      %v2581 = vld [vmem:[%s2122 + $0x20] sm:$0x1]
      %v2582 = vld [vmem:[%s2122 + $0x24] sm:$0xf]
      %v2583 = vld [vmem:[%s2122 + $0x28] sm:$0xf]
      %v2584 = vld [vmem:[%s2122 + $0x2c] sm:$0x1]
      %v2585 = vld [vmem:[%s2122 + $0x30] sm:$0xf]
      %v2586 = vld [vmem:[%s2122 + $0x34] sm:$0xf]
      %v2587 = vld [vmem:[%s2122 + $0x38] sm:$0x1]
      %v2588 = vld [vmem:[%s2122 + $0x3c] sm:$0xf]
      %v2589 = vld [vmem:[%s2122 + $0x40] sm:$0xf]
      %v2590 = vld [vmem:[%s2122 + $0x44] sm:$0x1]
      %v2591 = vld [vmem:[%s2122 + $0x48] sm:$0xf]
      %v2592 = vld [vmem:[%s2122 + $0x4c] sm:$0xf]
      %v2593 = vld [vmem:[%s2122 + $0x50] sm:$0x1]
      %v2594 = vld [vmem:[%s2122 + $0x54] sm:$0xf]
      %v2595 = vld [vmem:[%s2122 + $0x58] sm:$0xf]
      %v2596 = vld [vmem:[%s2122 + $0x5c] sm:$0x1]
      %v2597 = vld [vmem:[%s2122 + $0x60] sm:$0xf]
      %v2598 = vld [vmem:[%s2122 + $0x64] sm:$0xf]
      %v2599 = vld [vmem:[%s2122 + $0x68] sm:$0x1]
      %v2600 = vld [vmem:[%s2122 + $0x6c] sm:$0xf]
      %v2601 = vld [vmem:[%s2122 + $0x70] sm:$0xf]
      %v2602 = vld [vmem:[%s2122 + $0x74] sm:$0x1]
      %v2603 = vld [vmem:[%s2122 + $0x78] sm:$0xf]
      %v2604 = vld [vmem:[%s2122 + $0x7c] sm:$0xf]
      %v2605 = vld [vmem:[%s2122 + $0x80] sm:$0x1]
      %v2606 = vld [vmem:[%s2122 + $0x84] sm:$0xf]
      %v2607 = vld [vmem:[%s2122 + $0x88] sm:$0xf]
      %v2608 = vld [vmem:[%s2122 + $0x8c] sm:$0x1]
      %v2609 = vld [vmem:[%s2122 + $0x90] sm:$0xf]
      %v2610 = vld [vmem:[%s2122 + $0x94] sm:$0xf]
      %v2611 = vld [vmem:[%s2122 + $0x98] sm:$0x1]
      %v2612 = vld [vmem:[%s2122 + $0x9c] sm:$0xf]
      %v2613 = vld [vmem:[%s2122 + $0xa0] sm:$0xf]
      %v2614 = vld [vmem:[%s2122 + $0xa4] sm:$0x1]
      %v2615 = vld [vmem:[%s2122 + $0xa8] sm:$0xf]
      %v2616 = vld [vmem:[%s2122 + $0xac] sm:$0xf]
      %v2617 = vld [vmem:[%s2122 + $0xb0] sm:$0x1]
      %v2618 = vld [vmem:[%s2122 + $0xb4] sm:$0xf]
      %v2619 = vld [vmem:[%s2122 + $0xb8] sm:$0xf]
      %v2620 = vld [vmem:[%s2122 + $0xbc] sm:$0x1]
      %v2622 = vshrl.u32 %v2573, 16
      %v2624 = vrot.slane %v2622, 4
      %v2625 = vshll.u32 %v2573, 16
      %v2627 = vrot.slane %v2625, 5
      %v2628 = vor.u32 %v2624, %v2627
      %v2629 = vrot.slane %v2628, 4
      %v2631 = vshll.u32 %v2574, 16
      %v2633 = vrot.slane %v2631, 5
      %v2634 = vsel %vm754, %v2629, %v2633
      %v2635 = vshrl.u32 %v2574, 16
      %v2637 = vrot.slane %v2635, 4
      %v2638 = vor.u32 %v2637, %v2633
      %v2639 = vrot.slane %v2638, 4
      %v2641 = vshll.u32 %v2575, 16
      %v2643 = vrot.slane %v2641, 5
      %v2644 = vsel %vm754, %v2639, %v2643
      %v2646 = vshrl.u32 %v2576, 16
      %v2648 = vrot.slane %v2646, 4
      %v2649 = vshll.u32 %v2576, 16
      %v2651 = vrot.slane %v2649, 5
      %v2652 = vor.u32 %v2648, %v2651
      %v2653 = vrot.slane %v2652, 4
      %v2655 = vshll.u32 %v2577, 16
      %v2657 = vrot.slane %v2655, 5
      %v2658 = vsel %vm754, %v2653, %v2657
      %v2659 = vshrl.u32 %v2577, 16
      %v2661 = vrot.slane %v2659, 4
      %v2662 = vor.u32 %v2661, %v2657
      %v2663 = vrot.slane %v2662, 4
      %v2665 = vshll.u32 %v2578, 16
      %v2667 = vrot.slane %v2665, 5
      %v2668 = vsel %vm754, %v2663, %v2667
      %v2670 = vshrl.u32 %v2579, 16
      %v2672 = vrot.slane %v2670, 4
      %v2673 = vshll.u32 %v2579, 16
      %v2675 = vrot.slane %v2673, 5
      %v2676 = vor.u32 %v2672, %v2675
      %v2677 = vrot.slane %v2676, 4
      %v2679 = vshll.u32 %v2580, 16
      %v2681 = vrot.slane %v2679, 5
      %v2682 = vsel %vm754, %v2677, %v2681
      %v2683 = vshrl.u32 %v2580, 16
      %v2685 = vrot.slane %v2683, 4
      %v2686 = vor.u32 %v2685, %v2681
      %v2687 = vrot.slane %v2686, 4
      %v2689 = vshll.u32 %v2581, 16
      %v2691 = vrot.slane %v2689, 5
      %v2692 = vsel %vm754, %v2687, %v2691
      %v2694 = vshrl.u32 %v2582, 16
      %v2696 = vrot.slane %v2694, 4
      %v2697 = vshll.u32 %v2582, 16
      %v2699 = vrot.slane %v2697, 5
      %v2700 = vor.u32 %v2696, %v2699
      %v2701 = vrot.slane %v2700, 4
      %v2703 = vshll.u32 %v2583, 16
      %v2705 = vrot.slane %v2703, 5
      %v2706 = vsel %vm754, %v2701, %v2705
      %v2707 = vshrl.u32 %v2583, 16
      %v2709 = vrot.slane %v2707, 4
      %v2710 = vor.u32 %v2709, %v2705
      %v2711 = vrot.slane %v2710, 4
      %v2713 = vshll.u32 %v2584, 16
      %v2715 = vrot.slane %v2713, 5
      %v2716 = vsel %vm754, %v2711, %v2715
      %v2718 = vshrl.u32 %v2585, 16
      %v2720 = vrot.slane %v2718, 4
      %v2721 = vshll.u32 %v2585, 16
      %v2723 = vrot.slane %v2721, 5
      %v2724 = vor.u32 %v2720, %v2723
      %v2725 = vrot.slane %v2724, 4
      %v2727 = vshll.u32 %v2586, 16
      %v2729 = vrot.slane %v2727, 5
      %v2730 = vsel %vm754, %v2725, %v2729
      %v2731 = vshrl.u32 %v2586, 16
      %v2733 = vrot.slane %v2731, 4
      %v2734 = vor.u32 %v2733, %v2729
      %v2735 = vrot.slane %v2734, 4
      %v2737 = vshll.u32 %v2587, 16
      %v2739 = vrot.slane %v2737, 5
      %v2740 = vsel %vm754, %v2735, %v2739
      %v2742 = vshrl.u32 %v2588, 16
      %v2744 = vrot.slane %v2742, 4
      %v2745 = vshll.u32 %v2588, 16
      %v2747 = vrot.slane %v2745, 5
      %v2748 = vor.u32 %v2744, %v2747
      %v2749 = vrot.slane %v2748, 4
      %v2751 = vshll.u32 %v2589, 16
      %v2753 = vrot.slane %v2751, 5
      %v2754 = vsel %vm754, %v2749, %v2753
      %v2755 = vshrl.u32 %v2589, 16
      %v2757 = vrot.slane %v2755, 4
      %v2758 = vor.u32 %v2757, %v2753
      %v2759 = vrot.slane %v2758, 4
      %v2761 = vshll.u32 %v2590, 16
      %v2763 = vrot.slane %v2761, 5
      %v2764 = vsel %vm754, %v2759, %v2763
      %v2766 = vshrl.u32 %v2591, 16
      %v2768 = vrot.slane %v2766, 4
      %v2769 = vshll.u32 %v2591, 16
      %v2771 = vrot.slane %v2769, 5
      %v2772 = vor.u32 %v2768, %v2771
      %v2773 = vrot.slane %v2772, 4
      %v2775 = vshll.u32 %v2592, 16
      %v2777 = vrot.slane %v2775, 5
      %v2778 = vsel %vm754, %v2773, %v2777
      %v2779 = vshrl.u32 %v2592, 16
      %v2781 = vrot.slane %v2779, 4
      %v2782 = vor.u32 %v2781, %v2777
      %v2783 = vrot.slane %v2782, 4
      %v2785 = vshll.u32 %v2593, 16
      %v2787 = vrot.slane %v2785, 5
      %v2788 = vsel %vm754, %v2783, %v2787
      %v2790 = vshrl.u32 %v2594, 16
      %v2792 = vrot.slane %v2790, 4
      %v2793 = vshll.u32 %v2594, 16
      %v2795 = vrot.slane %v2793, 5
      %v2796 = vor.u32 %v2792, %v2795
      %v2797 = vrot.slane %v2796, 4
      %v2799 = vshll.u32 %v2595, 16
      %v2801 = vrot.slane %v2799, 5
      %v2802 = vsel %vm754, %v2797, %v2801
      %v2803 = vshrl.u32 %v2595, 16
      %v2805 = vrot.slane %v2803, 4
      %v2806 = vor.u32 %v2805, %v2801
      %v2807 = vrot.slane %v2806, 4
      %v2809 = vshll.u32 %v2596, 16
      %v2811 = vrot.slane %v2809, 5
      %v2812 = vsel %vm754, %v2807, %v2811
      %v2814 = vshrl.u32 %v2597, 16
      %v2816 = vrot.slane %v2814, 4
      %v2817 = vshll.u32 %v2597, 16
      %v2819 = vrot.slane %v2817, 5
      %v2820 = vor.u32 %v2816, %v2819
      %v2821 = vrot.slane %v2820, 4
      %v2823 = vshll.u32 %v2598, 16
      %v2825 = vrot.slane %v2823, 5
      %v2826 = vsel %vm754, %v2821, %v2825
      %v2827 = vshrl.u32 %v2598, 16
      %v2829 = vrot.slane %v2827, 4
      %v2830 = vor.u32 %v2829, %v2825
      %v2831 = vrot.slane %v2830, 4
      %v2833 = vshll.u32 %v2599, 16
      %v2835 = vrot.slane %v2833, 5
      %v2836 = vsel %vm754, %v2831, %v2835
      %v2838 = vshrl.u32 %v2600, 16
      %v2840 = vrot.slane %v2838, 4
      %v2841 = vshll.u32 %v2600, 16
      %v2843 = vrot.slane %v2841, 5
      %v2844 = vor.u32 %v2840, %v2843
      %v2845 = vrot.slane %v2844, 4
      %v2847 = vshll.u32 %v2601, 16
      %v2849 = vrot.slane %v2847, 5
      %v2850 = vsel %vm754, %v2845, %v2849
      %v2851 = vshrl.u32 %v2601, 16
      %v2853 = vrot.slane %v2851, 4
      %v2854 = vor.u32 %v2853, %v2849
      %v2855 = vrot.slane %v2854, 4
      %v2857 = vshll.u32 %v2602, 16
      %v2859 = vrot.slane %v2857, 5
      %v2860 = vsel %vm754, %v2855, %v2859
      %v2862 = vshrl.u32 %v2603, 16
      %v2864 = vrot.slane %v2862, 4
      %v2865 = vshll.u32 %v2603, 16
      %v2867 = vrot.slane %v2865, 5
      %v2868 = vor.u32 %v2864, %v2867
      %v2869 = vrot.slane %v2868, 4
      %v2871 = vshll.u32 %v2604, 16
      %v2873 = vrot.slane %v2871, 5
      %v2874 = vsel %vm754, %v2869, %v2873
      %v2875 = vshrl.u32 %v2604, 16
      %v2877 = vrot.slane %v2875, 4
      %v2878 = vor.u32 %v2877, %v2873
      %v2879 = vrot.slane %v2878, 4
      %v2881 = vshll.u32 %v2605, 16
      %v2883 = vrot.slane %v2881, 5
      %v2884 = vsel %vm754, %v2879, %v2883
      %v2886 = vshrl.u32 %v2606, 16
      %v2888 = vrot.slane %v2886, 4
      %v2889 = vshll.u32 %v2606, 16
      %v2891 = vrot.slane %v2889, 5
      %v2892 = vor.u32 %v2888, %v2891
      %v2893 = vrot.slane %v2892, 4
      %v2895 = vshll.u32 %v2607, 16
      %v2897 = vrot.slane %v2895, 5
      %v2898 = vsel %vm754, %v2893, %v2897
      %v2899 = vshrl.u32 %v2607, 16
      %v2901 = vrot.slane %v2899, 4
      %v2902 = vor.u32 %v2901, %v2897
      %v2903 = vrot.slane %v2902, 4
      %v2905 = vshll.u32 %v2608, 16
      %v2907 = vrot.slane %v2905, 5
      %v2908 = vsel %vm754, %v2903, %v2907
      %v2910 = vshrl.u32 %v2609, 16
      %v2912 = vrot.slane %v2910, 4
      %v2913 = vshll.u32 %v2609, 16
      %v2915 = vrot.slane %v2913, 5
      %v2916 = vor.u32 %v2912, %v2915
      %v2917 = vrot.slane %v2916, 4
      %v2919 = vshll.u32 %v2610, 16
      %v2921 = vrot.slane %v2919, 5
      %v2922 = vsel %vm754, %v2917, %v2921
      %v2923 = vshrl.u32 %v2610, 16
      %v2925 = vrot.slane %v2923, 4
      %v2926 = vor.u32 %v2925, %v2921
      %v2927 = vrot.slane %v2926, 4
      %v2929 = vshll.u32 %v2611, 16
      %v2931 = vrot.slane %v2929, 5
      %v2932 = vsel %vm754, %v2927, %v2931
      %v2934 = vshrl.u32 %v2612, 16
      %v2936 = vrot.slane %v2934, 4
      %v2937 = vshll.u32 %v2612, 16
      %v2939 = vrot.slane %v2937, 5
      %v2940 = vor.u32 %v2936, %v2939
      %v2941 = vrot.slane %v2940, 4
      %v2943 = vshll.u32 %v2613, 16
      %v2945 = vrot.slane %v2943, 5
      %v2946 = vsel %vm754, %v2941, %v2945
      %v2947 = vshrl.u32 %v2613, 16
      %v2949 = vrot.slane %v2947, 4
      %v2950 = vor.u32 %v2949, %v2945
      %v2951 = vrot.slane %v2950, 4
      %v2953 = vshll.u32 %v2614, 16
      %v2955 = vrot.slane %v2953, 5
      %v2956 = vsel %vm754, %v2951, %v2955
      %v2958 = vshrl.u32 %v2615, 16
      %v2960 = vrot.slane %v2958, 4
      %v2961 = vshll.u32 %v2615, 16
      %v2963 = vrot.slane %v2961, 5
      %v2964 = vor.u32 %v2960, %v2963
      %v2965 = vrot.slane %v2964, 4
      %v2967 = vshll.u32 %v2616, 16
      %v2969 = vrot.slane %v2967, 5
      %v2970 = vsel %vm754, %v2965, %v2969
      %v2971 = vshrl.u32 %v2616, 16
      %v2973 = vrot.slane %v2971, 4
      %v2974 = vor.u32 %v2973, %v2969
      %v2975 = vrot.slane %v2974, 4
      %v2977 = vshll.u32 %v2617, 16
      %v2979 = vrot.slane %v2977, 5
      %v2980 = vsel %vm754, %v2975, %v2979
      %v2982 = vshrl.u32 %v2618, 16
      %v2984 = vrot.slane %v2982, 4
      %v2985 = vshll.u32 %v2618, 16
      %v2987 = vrot.slane %v2985, 5
      %v2988 = vor.u32 %v2984, %v2987
      %v2989 = vrot.slane %v2988, 4
      %v2991 = vshll.u32 %v2619, 16
      %v2993 = vrot.slane %v2991, 5
      %v2994 = vsel %vm754, %v2989, %v2993
      %v2995 = vshrl.u32 %v2619, 16
      %v2997 = vrot.slane %v2995, 4
      %v2998 = vor.u32 %v2997, %v2993
      %v2999 = vrot.slane %v2998, 4
      %v3001 = vshll.u32 %v2620, 16
      %v3003 = vrot.slane %v3001, 5
      %v3004 = vsel %vm754, %v2999, %v3003
      %v3005 = vld [vmem:[#allocation2] sm:$0xff]
      %v3006 = vld [vmem:[#allocation2 + $0x8] sm:$0xff]
      %v3007 = vld [vmem:[#allocation2 + $0x10] sm:$0xff]
      %v3008 = vld [vmem:[#allocation2 + $0x18] sm:$0xff]
      %v3009 = vld [vmem:[#allocation2 + $0x20] sm:$0xff]
      %v3010 = vld [vmem:[#allocation2 + $0x28] sm:$0xff]
      %v3011 = vld [vmem:[#allocation2 + $0x30] sm:$0xff]
      %v3012 = vld [vmem:[#allocation2 + $0x38] sm:$0xff]
      %v3013 = vld [vmem:[#allocation2 + $0x40] sm:$0xff]
      %v3014 = vld [vmem:[#allocation2 + $0x48] sm:$0xff]
      %v3015 = vld [vmem:[#allocation2 + $0x50] sm:$0xff]
      %v3016 = vld [vmem:[#allocation2 + $0x58] sm:$0xff]
      %v3017 = vld [vmem:[#allocation2 + $0x60] sm:$0xff]
      %v3018 = vld [vmem:[#allocation2 + $0x68] sm:$0xff]
      %v3019 = vld [vmem:[#allocation2 + $0x70] sm:$0xff]
      %v3020 = vld [vmem:[#allocation2 + $0x78] sm:$0xff]
      %v3021 = vld [vmem:[#allocation2 + $0x80] sm:$0xff]
      %v3022 = vld [vmem:[#allocation2 + $0x88] sm:$0xff]
      %v3023 = vld [vmem:[#allocation2 + $0x90] sm:$0xff]
      %v3024 = vld [vmem:[#allocation2 + $0x98] sm:$0xff]
      %v3025 = vld [vmem:[#allocation2 + $0xa0] sm:$0xff]
      %v3026 = vld [vmem:[#allocation2 + $0xa8] sm:$0xff]
      %v3027 = vld [vmem:[#allocation2 + $0xb0] sm:$0xff]
      %v3028 = vld [vmem:[#allocation2 + $0xb8] sm:$0xff]
      %v3029 = vld [vmem:[#allocation2 + $0xc0] sm:$0xff]
      %v3030 = vld [vmem:[#allocation2 + $0xc8] sm:$0xff]
      %v3031 = vld [vmem:[#allocation2 + $0xd0] sm:$0xff]
      %v3032 = vld [vmem:[#allocation2 + $0xd8] sm:$0xff]
      %v3033 = vld [vmem:[#allocation2 + $0xe0] sm:$0xff]
      %v3034 = vld [vmem:[#allocation2 + $0xe8] sm:$0xff]
      %v3035 = vld [vmem:[#allocation2 + $0xf0] sm:$0xff]
      %v3036 = vld [vmem:[#allocation2 + $0xf8] sm:$0xff]
      %s3037 = scalar_lea.vmem %s210, 256
      %v3038 = vld [vmem:[%s3037] sm:$0xf]
      %v3039 = vld [vmem:[%s3037 + $0x4] sm:$0xf]
      %v3040 = vld [vmem:[%s3037 + $0x8] sm:$0xf]
      %v3041 = vld [vmem:[%s3037 + $0xc] sm:$0xf]
      %v3042 = vld [vmem:[%s3037 + $0x10] sm:$0xf]
      %v3043 = vld [vmem:[%s3037 + $0x14] sm:$0xf]
      %v3044 = vld [vmem:[%s3037 + $0x18] sm:$0xf]
      %v3045 = vld [vmem:[%s3037 + $0x1c] sm:$0xf]
      %v3046 = vld [vmem:[%s3037 + $0x20] sm:$0xf]
      %v3047 = vld [vmem:[%s3037 + $0x24] sm:$0xf]
      %v3048 = vld [vmem:[%s3037 + $0x28] sm:$0xf]
      %v3049 = vld [vmem:[%s3037 + $0x2c] sm:$0xf]
      %v3050 = vld [vmem:[%s3037 + $0x30] sm:$0xf]
      %v3051 = vld [vmem:[%s3037 + $0x34] sm:$0xf]
      %v3052 = vld [vmem:[%s3037 + $0x38] sm:$0xf]
      %v3053 = vld [vmem:[%s3037 + $0x3c] sm:$0xf]
      %v3054 = vunpack.c.l.b16 %v2634
      %v3055 = vunpack.c.l.b16 %v2644
      %v3056 = vunpack.c.l.b16 %v2658
      %v3057 = vunpack.c.l.b16 %v2668
      %v3058 = vunpack.c.l.b16 %v2682
      %v3059 = vunpack.c.l.b16 %v2692
      %v3060 = vunpack.c.l.b16 %v2706
      %v3061 = vunpack.c.l.b16 %v2716
      %v3062 = vunpack.c.l.b16 %v2730
      %v3063 = vunpack.c.l.b16 %v2740
      %v3064 = vunpack.c.l.b16 %v2754
      %v3065 = vunpack.c.l.b16 %v2764
      %v3066 = vunpack.c.l.b16 %v2778
      %v3067 = vunpack.c.l.b16 %v2788
      %v3068 = vunpack.c.l.b16 %v2802
      %v3069 = vunpack.c.l.b16 %v2812
      %v3070 = vunpack.c.l.b16 %v2826
      %v3071 = vunpack.c.l.b16 %v2836
      %v3072 = vunpack.c.l.b16 %v2850
      %v3073 = vunpack.c.l.b16 %v2860
      %v3074 = vunpack.c.l.b16 %v2874
      %v3075 = vunpack.c.l.b16 %v2884
      %v3076 = vunpack.c.l.b16 %v2898
      %v3077 = vunpack.c.l.b16 %v2908
      %v3078 = vunpack.c.l.b16 %v2922
      %v3079 = vunpack.c.l.b16 %v2932
      %v3080 = vunpack.c.l.b16 %v2946
      %v3081 = vunpack.c.l.b16 %v2956
      %v3082 = vunpack.c.l.b16 %v2970
      %v3083 = vunpack.c.l.b16 %v2980
      %v3084 = vunpack.c.l.b16 %v2994
      %v3085 = vunpack.c.l.b16 %v3004
      %v3086 = vpack.c.b16 %v3055, %v3054
      %v3087 = vpack.c.b16 %v3057, %v3056
      %v3088 = vpack.c.b16 %v3059, %v3058
      %v3089 = vpack.c.b16 %v3061, %v3060
      %v3090 = vpack.c.b16 %v3063, %v3062
      %v3091 = vpack.c.b16 %v3065, %v3064
      %v3092 = vpack.c.b16 %v3067, %v3066
      %v3093 = vpack.c.b16 %v3069, %v3068
      %v3094 = vpack.c.b16 %v3071, %v3070
      %v3095 = vpack.c.b16 %v3073, %v3072
      %v3096 = vpack.c.b16 %v3075, %v3074
      %v3097 = vpack.c.b16 %v3077, %v3076
      %v3098 = vpack.c.b16 %v3079, %v3078
      %v3099 = vpack.c.b16 %v3081, %v3080
      %v3100 = vpack.c.b16 %v3083, %v3082
      %v3101 = vpack.c.b16 %v3085, %v3084
      %v3134 = vunpack.c.l.b16 %v3038
      %v3135 = vunpack.c.l.b16 %v3039
      %v3136 = vunpack.c.l.b16 %v3040
      %v3137 = vunpack.c.l.b16 %v3041
      %v3138 = vunpack.c.l.b16 %v3042
      %v3139 = vunpack.c.l.b16 %v3043
      %v3140 = vunpack.c.l.b16 %v3044
      %v3141 = vunpack.c.l.b16 %v3045
      %v3142 = vunpack.c.l.b16 %v3046
      %v3143 = vunpack.c.l.b16 %v3047
      %v3144 = vunpack.c.l.b16 %v3048
      %v3145 = vunpack.c.l.b16 %v3049
      %v3146 = vunpack.c.l.b16 %v3050
      %v3147 = vunpack.c.l.b16 %v3051
      %v3148 = vunpack.c.l.b16 %v3052
      %v3149 = vunpack.c.l.b16 %v3053
      %v3150 = vpack.c.b16 %v3135, %v3134
      %v3151 = vpack.c.b16 %v3137, %v3136
      %v3152 = vpack.c.b16 %v3139, %v3138
      %v3153 = vpack.c.b16 %v3141, %v3140
      %v3154 = vpack.c.b16 %v3143, %v3142
      %v3155 = vpack.c.b16 %v3145, %v3144
      %v3156 = vpack.c.b16 %v3147, %v3146
      %v3157 = vpack.c.b16 %v3149, %v3148
      %3166 = vmatprep.subr.bf16.mxu0 0
      %3167 = vmatpush1.bf16.msra.mxu0 %v3150
      %3168 = vmatprep.subr.bf16.mxu0 0
      %3169 = vmatpush1.bf16.msra.mxu0 %v3151
      %3170 = vmatprep.subr.bf16.mxu0 0
      %3171 = vmatpush1.bf16.msra.mxu0 %v3152
      %3172 = vmatprep.subr.bf16.mxu0 0
      %3173 = vmatpush1.bf16.msra.mxu0 %v3153
      %3174 = vmatprep.subr.bf16.mxu0 0
      %3175 = vmatpush1.bf16.msra.mxu0 %v3154
      %3176 = vmatprep.subr.bf16.mxu0 0
      %3177 = vmatpush1.bf16.msra.mxu0 %v3155
      %3178 = vmatprep.subr.bf16.mxu0 0
      %3179 = vmatpush1.bf16.msra.mxu0 %v3156
      %3180 = vmatprep.subr.bf16.mxu0 0
      %3181 = vmatpush1.bf16.msra.mxu0 %v3157
      %3182 = vmatprep.subr.bf16.mxu0 0
      %3183 = vmatpush1.bf16.msra.mxu0 0
      %3184 = vmatprep.subr.bf16.mxu0 0
      %3185 = vmatpush1.bf16.msra.mxu0 0
      %3186 = vmatprep.subr.bf16.mxu0 0
      %3187 = vmatpush1.bf16.msra.mxu0 0
      %3188 = vmatprep.subr.bf16.mxu0 0
      %3189 = vmatpush1.bf16.msra.mxu0 0
      %3190 = vmatprep.subr.bf16.mxu0 0
      %3191 = vmatpush1.bf16.msra.mxu0 0
      %3192 = vmatprep.subr.bf16.mxu0 0
      %3193 = vmatpush1.bf16.msra.mxu0 0
      %3194 = vmatprep.subr.bf16.mxu0 0
      %3195 = vmatpush1.bf16.msra.mxu0 0
      %3196 = vmatprep.subr.bf16.mxu0 0
      %3197 = vmatpush1.bf16.msra.mxu0 0
      %3198 = vmatprep.mubr.bf16.mxu0 0
      %3199 = vmatmul.mubr.bf16.gmra.mrb[0].mxu0 %v3086
      %v3200 = vpop.f32.mrb[0].mxu0
      %v3201 = vadd.f32 0.0, %v3200
      %v3202 = vpop.f32.mrb[0].mxu0
      %v3203 = vpop.f32.mrb[0].mxu0
      %v3204 = vadd.f32 0.0, %v3203
      %v3205 = vpop.f32.mrb[0].mxu0
      %3206 = vmatprep.mubr.bf16.mxu0 0
      %3207 = vmatmul.mubr.bf16.gmra.mrb[0].mxu0 %v3087
      %v3208 = vpop.f32.mrb[0].mxu0
      %v3209 = vadd.f32 0.0, %v3208
      %v3210 = vpop.f32.mrb[0].mxu0
      %v3211 = vpop.f32.mrb[0].mxu0
      %v3212 = vadd.f32 0.0, %v3211
      %v3213 = vpop.f32.mrb[0].mxu0
      %3214 = vmatprep.mubr.bf16.mxu0 0
      %3215 = vmatmul.mubr.bf16.gmra.mrb[0].mxu0 %v3088
      %v3216 = vpop.f32.mrb[0].mxu0
      %v3217 = vadd.f32 0.0, %v3216
      %v3218 = vpop.f32.mrb[0].mxu0
      %v3219 = vpop.f32.mrb[0].mxu0
      %v3220 = vadd.f32 0.0, %v3219
      %v3221 = vpop.f32.mrb[0].mxu0
      %3222 = vmatprep.mubr.bf16.mxu0 0
      %3223 = vmatmul.mubr.bf16.gmra.mrb[0].mxu0 %v3089
      %v3224 = vpop.f32.mrb[0].mxu0
      %v3225 = vadd.f32 0.0, %v3224
      %v3226 = vpop.f32.mrb[0].mxu0
      %v3227 = vpop.f32.mrb[0].mxu0
      %v3228 = vadd.f32 0.0, %v3227
      %v3229 = vpop.f32.mrb[0].mxu0
      %3230 = vmatprep.mubr.bf16.mxu0 0
      %3231 = vmatmul.mubr.bf16.gmra.mrb[0].mxu0 %v3090
      %v3232 = vpop.f32.mrb[0].mxu0
      %v3233 = vadd.f32 0.0, %v3232
      %v3234 = vpop.f32.mrb[0].mxu0
      %v3235 = vpop.f32.mrb[0].mxu0
      %v3236 = vadd.f32 0.0, %v3235
      %v3237 = vpop.f32.mrb[0].mxu0
      %3238 = vmatprep.mubr.bf16.mxu0 0
      %3239 = vmatmul.mubr.bf16.gmra.mrb[0].mxu0 %v3091
      %v3240 = vpop.f32.mrb[0].mxu0
      %v3241 = vadd.f32 0.0, %v3240
      %v3242 = vpop.f32.mrb[0].mxu0
      %v3243 = vpop.f32.mrb[0].mxu0
      %v3244 = vadd.f32 0.0, %v3243
      %v3245 = vpop.f32.mrb[0].mxu0
      %3246 = vmatprep.mubr.bf16.mxu0 0
      %3247 = vmatmul.mubr.bf16.gmra.mrb[0].mxu0 %v3092
      %v3248 = vpop.f32.mrb[0].mxu0
      %v3249 = vadd.f32 0.0, %v3248
      %v3250 = vpop.f32.mrb[0].mxu0
      %v3251 = vpop.f32.mrb[0].mxu0
      %v3252 = vadd.f32 0.0, %v3251
      %v3253 = vpop.f32.mrb[0].mxu0
      %3254 = vmatprep.mubr.bf16.mxu0 0
      %3255 = vmatmul.mubr.bf16.gmra.mrb[0].mxu0 %v3093
      %v3256 = vpop.f32.mrb[0].mxu0
      %v3257 = vadd.f32 0.0, %v3256
      %v3258 = vpop.f32.mrb[0].mxu0
      %v3259 = vpop.f32.mrb[0].mxu0
      %v3260 = vadd.f32 0.0, %v3259
      %v3261 = vpop.f32.mrb[0].mxu0
      %3262 = vmatprep.mubr.bf16.mxu0 0
      %3263 = vmatmul.mubr.bf16.gmra.mrb[0].mxu0 %v3094
      %v3264 = vpop.f32.mrb[0].mxu0
      %v3265 = vadd.f32 0.0, %v3264
      %v3266 = vpop.f32.mrb[0].mxu0
      %v3267 = vpop.f32.mrb[0].mxu0
      %v3268 = vadd.f32 0.0, %v3267
      %v3269 = vpop.f32.mrb[0].mxu0
      %3270 = vmatprep.mubr.bf16.mxu0 0
      %3271 = vmatmul.mubr.bf16.gmra.mrb[0].mxu0 %v3095
      %v3272 = vpop.f32.mrb[0].mxu0
      %v3273 = vadd.f32 0.0, %v3272
      %v3274 = vpop.f32.mrb[0].mxu0
      %v3275 = vpop.f32.mrb[0].mxu0
      %v3276 = vadd.f32 0.0, %v3275
      %v3277 = vpop.f32.mrb[0].mxu0
      %3278 = vmatprep.mubr.bf16.mxu0 0
      %3279 = vmatmul.mubr.bf16.gmra.mrb[0].mxu0 %v3096
      %v3280 = vpop.f32.mrb[0].mxu0
      %v3281 = vadd.f32 0.0, %v3280
      %v3282 = vpop.f32.mrb[0].mxu0
      %v3283 = vpop.f32.mrb[0].mxu0
      %v3284 = vadd.f32 0.0, %v3283
      %v3285 = vpop.f32.mrb[0].mxu0
      %3286 = vmatprep.mubr.bf16.mxu0 0
      %3287 = vmatmul.mubr.bf16.gmra.mrb[0].mxu0 %v3097
      %v3288 = vpop.f32.mrb[0].mxu0
      %v3289 = vadd.f32 0.0, %v3288
      %v3290 = vpop.f32.mrb[0].mxu0
      %v3291 = vpop.f32.mrb[0].mxu0
      %v3292 = vadd.f32 0.0, %v3291
      %v3293 = vpop.f32.mrb[0].mxu0
      %3294 = vmatprep.mubr.bf16.mxu0 0
      %3295 = vmatmul.mubr.bf16.gmra.mrb[0].mxu0 %v3098
      %v3296 = vpop.f32.mrb[0].mxu0
      %v3297 = vadd.f32 0.0, %v3296
      %v3298 = vpop.f32.mrb[0].mxu0
      %v3299 = vpop.f32.mrb[0].mxu0
      %v3300 = vadd.f32 0.0, %v3299
      %v3301 = vpop.f32.mrb[0].mxu0
      %3302 = vmatprep.mubr.bf16.mxu0 0
      %3303 = vmatmul.mubr.bf16.gmra.mrb[0].mxu0 %v3099
      %v3304 = vpop.f32.mrb[0].mxu0
      %v3305 = vadd.f32 0.0, %v3304
      %v3306 = vpop.f32.mrb[0].mxu0
      %v3307 = vpop.f32.mrb[0].mxu0
      %v3308 = vadd.f32 0.0, %v3307
      %v3309 = vpop.f32.mrb[0].mxu0
      %3310 = vmatprep.mubr.bf16.mxu0 0
      %3311 = vmatmul.mubr.bf16.gmra.mrb[0].mxu0 %v3100
      %v3312 = vpop.f32.mrb[0].mxu0
      %v3313 = vadd.f32 0.0, %v3312
      %v3314 = vpop.f32.mrb[0].mxu0
      %v3315 = vpop.f32.mrb[0].mxu0
      %v3316 = vadd.f32 0.0, %v3315
      %v3317 = vpop.f32.mrb[0].mxu0
      %3318 = vmatprep.mubr.bf16.mxu0 0
      %3319 = vmatmul.mubr.bf16.gmra.mrb[0].mxu0 %v3101
      %v3320 = vpop.f32.mrb[0].mxu0
      %v3321 = vadd.f32 0.0, %v3320
      %v3322 = vpop.f32.mrb[0].mxu0
      %v3323 = vpop.f32.mrb[0].mxu0
      %v3324 = vadd.f32 0.0, %v3323
      %v3325 = vpop.f32.mrb[0].mxu0
      %3326 = vdwg.mxu0
      %v3327 = vadd.f32 %v3005, %v3201
      %v3328 = vadd.f32 %v3006, %v3204
      %v3329 = vadd.f32 %v3007, %v3209
      %v3330 = vadd.f32 %v3008, %v3212
      %v3331 = vadd.f32 %v3009, %v3217
      %v3332 = vadd.f32 %v3010, %v3220
      %v3333 = vadd.f32 %v3011, %v3225
      %v3334 = vadd.f32 %v3012, %v3228
      %v3335 = vadd.f32 %v3013, %v3233
      %v3336 = vadd.f32 %v3014, %v3236
      %v3337 = vadd.f32 %v3015, %v3241
      %v3338 = vadd.f32 %v3016, %v3244
      %v3339 = vadd.f32 %v3017, %v3249
      %v3340 = vadd.f32 %v3018, %v3252
      %v3341 = vadd.f32 %v3019, %v3257
      %v3342 = vadd.f32 %v3020, %v3260
      %v3343 = vadd.f32 %v3021, %v3265
      %v3344 = vadd.f32 %v3022, %v3268
      %v3345 = vadd.f32 %v3023, %v3273
      %v3346 = vadd.f32 %v3024, %v3276
      %v3347 = vadd.f32 %v3025, %v3281
      %v3348 = vadd.f32 %v3026, %v3284
      %v3349 = vadd.f32 %v3027, %v3289
      %v3350 = vadd.f32 %v3028, %v3292
      %v3351 = vadd.f32 %v3029, %v3297
      %v3352 = vadd.f32 %v3030, %v3300
      %v3353 = vadd.f32 %v3031, %v3305
      %v3354 = vadd.f32 %v3032, %v3308
      %v3355 = vadd.f32 %v3033, %v3313
      %v3356 = vadd.f32 %v3034, %v3316
      %v3357 = vadd.f32 %v3035, %v3321
      %v3358 = vadd.f32 %v3036, %v3324
      %3359 = vst [vmem:[#allocation2] sm:$0xff] %v3327
      %3360 = vst [vmem:[#allocation2 + $0x8] sm:$0xff] %v3328
      %3361 = vst [vmem:[#allocation2 + $0x10] sm:$0xff] %v3329
      %3362 = vst [vmem:[#allocation2 + $0x18] sm:$0xff] %v3330
      %3363 = vst [vmem:[#allocation2 + $0x20] sm:$0xff] %v3331
      %3364 = vst [vmem:[#allocation2 + $0x28] sm:$0xff] %v3332
      %3365 = vst [vmem:[#allocation2 + $0x30] sm:$0xff] %v3333
      %3366 = vst [vmem:[#allocation2 + $0x38] sm:$0xff] %v3334
      %3367 = vst [vmem:[#allocation2 + $0x40] sm:$0xff] %v3335
      %3368 = vst [vmem:[#allocation2 + $0x48] sm:$0xff] %v3336
      %3369 = vst [vmem:[#allocation2 + $0x50] sm:$0xff] %v3337
      %3370 = vst [vmem:[#allocation2 + $0x58] sm:$0xff] %v3338
      %3371 = vst [vmem:[#allocation2 + $0x60] sm:$0xff] %v3339
      %3372 = vst [vmem:[#allocation2 + $0x68] sm:$0xff] %v3340
      %3373 = vst [vmem:[#allocation2 + $0x70] sm:$0xff] %v3341
      %3374 = vst [vmem:[#allocation2 + $0x78] sm:$0xff] %v3342
      %3375 = vst [vmem:[#allocation2 + $0x80] sm:$0xff] %v3343
      %3376 = vst [vmem:[#allocation2 + $0x88] sm:$0xff] %v3344
      %3377 = vst [vmem:[#allocation2 + $0x90] sm:$0xff] %v3345
      %3378 = vst [vmem:[#allocation2 + $0x98] sm:$0xff] %v3346
      %3379 = vst [vmem:[#allocation2 + $0xa0] sm:$0xff] %v3347
      %3380 = vst [vmem:[#allocation2 + $0xa8] sm:$0xff] %v3348
      %3381 = vst [vmem:[#allocation2 + $0xb0] sm:$0xff] %v3349
      %3382 = vst [vmem:[#allocation2 + $0xb8] sm:$0xff] %v3350
      %3383 = vst [vmem:[#allocation2 + $0xc0] sm:$0xff] %v3351
      %3384 = vst [vmem:[#allocation2 + $0xc8] sm:$0xff] %v3352
      %3385 = vst [vmem:[#allocation2 + $0xd0] sm:$0xff] %v3353
      %3386 = vst [vmem:[#allocation2 + $0xd8] sm:$0xff] %v3354
      %3387 = vst [vmem:[#allocation2 + $0xe0] sm:$0xff] %v3355
      %3388 = vst [vmem:[#allocation2 + $0xe8] sm:$0xff] %v3356
      %3389 = vst [vmem:[#allocation2 + $0xf0] sm:$0xff] %v3357
      %3390 = vst [vmem:[#allocation2 + $0xf8] sm:$0xff] %v3358
      %v3391 = vld [vmem:[%s2122] sm:$0xe]
      %v3392 = vld [vmem:[%s2122 + $0x4] sm:$0xf]
      %v3393 = vld [vmem:[%s2122 + $0x8] sm:$0x1]
      %v3394 = vld [vmem:[%s2122 + $0xc] sm:$0xe]
      %v3395 = vld [vmem:[%s2122 + $0x10] sm:$0xf]
      %v3396 = vld [vmem:[%s2122 + $0x14] sm:$0x1]
      %v3397 = vld [vmem:[%s2122 + $0x18] sm:$0xe]
      %v3398 = vld [vmem:[%s2122 + $0x1c] sm:$0xf]
      %v3399 = vld [vmem:[%s2122 + $0x20] sm:$0x1]
      %v3400 = vld [vmem:[%s2122 + $0x24] sm:$0xe]
      %v3401 = vld [vmem:[%s2122 + $0x28] sm:$0xf]
      %v3402 = vld [vmem:[%s2122 + $0x2c] sm:$0x1]
      %v3403 = vld [vmem:[%s2122 + $0x30] sm:$0xe]
      %v3404 = vld [vmem:[%s2122 + $0x34] sm:$0xf]
      %v3405 = vld [vmem:[%s2122 + $0x38] sm:$0x1]
      %v3406 = vld [vmem:[%s2122 + $0x3c] sm:$0xe]
      %v3407 = vld [vmem:[%s2122 + $0x40] sm:$0xf]
      %v3408 = vld [vmem:[%s2122 + $0x44] sm:$0x1]
      %v3409 = vld [vmem:[%s2122 + $0x48] sm:$0xe]
      %v3410 = vld [vmem:[%s2122 + $0x4c] sm:$0xf]
      %v3411 = vld [vmem:[%s2122 + $0x50] sm:$0x1]
      %v3412 = vld [vmem:[%s2122 + $0x54] sm:$0xe]
      %v3413 = vld [vmem:[%s2122 + $0x58] sm:$0xf]
      %v3414 = vld [vmem:[%s2122 + $0x5c] sm:$0x1]
      %v3415 = vld [vmem:[%s2122 + $0x60] sm:$0xe]
      %v3416 = vld [vmem:[%s2122 + $0x64] sm:$0xf]
      %v3417 = vld [vmem:[%s2122 + $0x68] sm:$0x1]
      %v3418 = vld [vmem:[%s2122 + $0x6c] sm:$0xe]
      %v3419 = vld [vmem:[%s2122 + $0x70] sm:$0xf]
      %v3420 = vld [vmem:[%s2122 + $0x74] sm:$0x1]
      %v3421 = vld [vmem:[%s2122 + $0x78] sm:$0xe]
      %v3422 = vld [vmem:[%s2122 + $0x7c] sm:$0xf]
      %v3423 = vld [vmem:[%s2122 + $0x80] sm:$0x1]
      %v3424 = vld [vmem:[%s2122 + $0x84] sm:$0xe]
      %v3425 = vld [vmem:[%s2122 + $0x88] sm:$0xf]
      %v3426 = vld [vmem:[%s2122 + $0x8c] sm:$0x1]
      %v3427 = vld [vmem:[%s2122 + $0x90] sm:$0xe]
      %v3428 = vld [vmem:[%s2122 + $0x94] sm:$0xf]
      %v3429 = vld [vmem:[%s2122 + $0x98] sm:$0x1]
      %v3430 = vld [vmem:[%s2122 + $0x9c] sm:$0xe]
      %v3431 = vld [vmem:[%s2122 + $0xa0] sm:$0xf]
      %v3432 = vld [vmem:[%s2122 + $0xa4] sm:$0x1]
      %v3433 = vld [vmem:[%s2122 + $0xa8] sm:$0xe]
      %v3434 = vld [vmem:[%s2122 + $0xac] sm:$0xf]
      %v3435 = vld [vmem:[%s2122 + $0xb0] sm:$0x1]
      %v3436 = vld [vmem:[%s2122 + $0xb4] sm:$0xe]
      %v3437 = vld [vmem:[%s2122 + $0xb8] sm:$0xf]
      %v3438 = vld [vmem:[%s2122 + $0xbc] sm:$0x1]
      %v3487 = vrot.slane %v3391, 5
      %v3488 = vrot.slane %v3487, 4
      %v3489 = vrot.slane %v3392, 5
      %v3490 = vsel %vm1623, %v3488, %v3489
      %v3491 = vrot.slane %v3489, 4
      %v3492 = vrot.slane %v3393, 5
      %v3493 = vsel %vm1623, %v3491, %v3492
      %v3494 = vrot.slane %v3394, 5
      %v3495 = vrot.slane %v3494, 4
      %v3496 = vrot.slane %v3395, 5
      %v3497 = vsel %vm1623, %v3495, %v3496
      %v3498 = vrot.slane %v3496, 4
      %v3499 = vrot.slane %v3396, 5
      %v3500 = vsel %vm1623, %v3498, %v3499
      %v3501 = vrot.slane %v3397, 5
      %v3502 = vrot.slane %v3501, 4
      %v3503 = vrot.slane %v3398, 5
      %v3504 = vsel %vm1623, %v3502, %v3503
      %v3505 = vrot.slane %v3503, 4
      %v3506 = vrot.slane %v3399, 5
      %v3507 = vsel %vm1623, %v3505, %v3506
      %v3508 = vrot.slane %v3400, 5
      %v3509 = vrot.slane %v3508, 4
      %v3510 = vrot.slane %v3401, 5
      %v3511 = vsel %vm1623, %v3509, %v3510
      %v3512 = vrot.slane %v3510, 4
      %v3513 = vrot.slane %v3402, 5
      %v3514 = vsel %vm1623, %v3512, %v3513
      %v3515 = vrot.slane %v3403, 5
      %v3516 = vrot.slane %v3515, 4
      %v3517 = vrot.slane %v3404, 5
      %v3518 = vsel %vm1623, %v3516, %v3517
      %v3519 = vrot.slane %v3517, 4
      %v3520 = vrot.slane %v3405, 5
      %v3521 = vsel %vm1623, %v3519, %v3520
      %v3522 = vrot.slane %v3406, 5
      %v3523 = vrot.slane %v3522, 4
      %v3524 = vrot.slane %v3407, 5
      %v3525 = vsel %vm1623, %v3523, %v3524
      %v3526 = vrot.slane %v3524, 4
      %v3527 = vrot.slane %v3408, 5
      %v3528 = vsel %vm1623, %v3526, %v3527
      %v3529 = vrot.slane %v3409, 5
      %v3530 = vrot.slane %v3529, 4
      %v3531 = vrot.slane %v3410, 5
      %v3532 = vsel %vm1623, %v3530, %v3531
      %v3533 = vrot.slane %v3531, 4
      %v3534 = vrot.slane %v3411, 5
      %v3535 = vsel %vm1623, %v3533, %v3534
      %v3536 = vrot.slane %v3412, 5
      %v3537 = vrot.slane %v3536, 4
      %v3538 = vrot.slane %v3413, 5
      %v3539 = vsel %vm1623, %v3537, %v3538
      %v3540 = vrot.slane %v3538, 4
      %v3541 = vrot.slane %v3414, 5
      %v3542 = vsel %vm1623, %v3540, %v3541
      %v3543 = vrot.slane %v3415, 5
      %v3544 = vrot.slane %v3543, 4
      %v3545 = vrot.slane %v3416, 5
      %v3546 = vsel %vm1623, %v3544, %v3545
      %v3547 = vrot.slane %v3545, 4
      %v3548 = vrot.slane %v3417, 5
      %v3549 = vsel %vm1623, %v3547, %v3548
      %v3550 = vrot.slane %v3418, 5
      %v3551 = vrot.slane %v3550, 4
      %v3552 = vrot.slane %v3419, 5
      %v3553 = vsel %vm1623, %v3551, %v3552
      %v3554 = vrot.slane %v3552, 4
      %v3555 = vrot.slane %v3420, 5
      %v3556 = vsel %vm1623, %v3554, %v3555
      %v3557 = vrot.slane %v3421, 5
      %v3558 = vrot.slane %v3557, 4
      %v3559 = vrot.slane %v3422, 5
      %v3560 = vsel %vm1623, %v3558, %v3559
      %v3561 = vrot.slane %v3559, 4
      %v3562 = vrot.slane %v3423, 5
      %v3563 = vsel %vm1623, %v3561, %v3562
      %v3564 = vrot.slane %v3424, 5
      %v3565 = vrot.slane %v3564, 4
      %v3566 = vrot.slane %v3425, 5
      %v3567 = vsel %vm1623, %v3565, %v3566
      %v3568 = vrot.slane %v3566, 4
      %v3569 = vrot.slane %v3426, 5
      %v3570 = vsel %vm1623, %v3568, %v3569
      %v3571 = vrot.slane %v3427, 5
      %v3572 = vrot.slane %v3571, 4
      %v3573 = vrot.slane %v3428, 5
      %v3574 = vsel %vm1623, %v3572, %v3573
      %v3575 = vrot.slane %v3573, 4
      %v3576 = vrot.slane %v3429, 5
      %v3577 = vsel %vm1623, %v3575, %v3576
      %v3578 = vrot.slane %v3430, 5
      %v3579 = vrot.slane %v3578, 4
      %v3580 = vrot.slane %v3431, 5
      %v3581 = vsel %vm1623, %v3579, %v3580
      %v3582 = vrot.slane %v3580, 4
      %v3583 = vrot.slane %v3432, 5
      %v3584 = vsel %vm1623, %v3582, %v3583
      %v3585 = vrot.slane %v3433, 5
      %v3586 = vrot.slane %v3585, 4
      %v3587 = vrot.slane %v3434, 5
      %v3588 = vsel %vm1623, %v3586, %v3587
      %v3589 = vrot.slane %v3587, 4
      %v3590 = vrot.slane %v3435, 5
      %v3591 = vsel %vm1623, %v3589, %v3590
      %v3592 = vrot.slane %v3436, 5
      %v3593 = vrot.slane %v3592, 4
      %v3594 = vrot.slane %v3437, 5
      %v3595 = vsel %vm1623, %v3593, %v3594
      %v3596 = vrot.slane %v3594, 4
      %v3597 = vrot.slane %v3438, 5
      %v3598 = vsel %vm1623, %v3596, %v3597
      %v3599 = vld [vmem:[#allocation2] sm:$0xff]
      %v3600 = vld [vmem:[#allocation2 + $0x8] sm:$0xff]
      %v3601 = vld [vmem:[#allocation2 + $0x10] sm:$0xff]
      %v3602 = vld [vmem:[#allocation2 + $0x18] sm:$0xff]
      %v3603 = vld [vmem:[#allocation2 + $0x20] sm:$0xff]
      %v3604 = vld [vmem:[#allocation2 + $0x28] sm:$0xff]
      %v3605 = vld [vmem:[#allocation2 + $0x30] sm:$0xff]
      %v3606 = vld [vmem:[#allocation2 + $0x38] sm:$0xff]
      %v3607 = vld [vmem:[#allocation2 + $0x40] sm:$0xff]
      %v3608 = vld [vmem:[#allocation2 + $0x48] sm:$0xff]
      %v3609 = vld [vmem:[#allocation2 + $0x50] sm:$0xff]
      %v3610 = vld [vmem:[#allocation2 + $0x58] sm:$0xff]
      %v3611 = vld [vmem:[#allocation2 + $0x60] sm:$0xff]
      %v3612 = vld [vmem:[#allocation2 + $0x68] sm:$0xff]
      %v3613 = vld [vmem:[#allocation2 + $0x70] sm:$0xff]
      %v3614 = vld [vmem:[#allocation2 + $0x78] sm:$0xff]
      %v3615 = vld [vmem:[#allocation2 + $0x80] sm:$0xff]
      %v3616 = vld [vmem:[#allocation2 + $0x88] sm:$0xff]
      %v3617 = vld [vmem:[#allocation2 + $0x90] sm:$0xff]
      %v3618 = vld [vmem:[#allocation2 + $0x98] sm:$0xff]
      %v3619 = vld [vmem:[#allocation2 + $0xa0] sm:$0xff]
      %v3620 = vld [vmem:[#allocation2 + $0xa8] sm:$0xff]
      %v3621 = vld [vmem:[#allocation2 + $0xb0] sm:$0xff]
      %v3622 = vld [vmem:[#allocation2 + $0xb8] sm:$0xff]
      %v3623 = vld [vmem:[#allocation2 + $0xc0] sm:$0xff]
      %v3624 = vld [vmem:[#allocation2 + $0xc8] sm:$0xff]
      %v3625 = vld [vmem:[#allocation2 + $0xd0] sm:$0xff]
      %v3626 = vld [vmem:[#allocation2 + $0xd8] sm:$0xff]
      %v3627 = vld [vmem:[#allocation2 + $0xe0] sm:$0xff]
      %v3628 = vld [vmem:[#allocation2 + $0xe8] sm:$0xff]
      %v3629 = vld [vmem:[#allocation2 + $0xf0] sm:$0xff]
      %v3630 = vld [vmem:[#allocation2 + $0xf8] sm:$0xff]
      %s3631 = scalar_lea.vmem %s210, 320
      %v3632 = vld [vmem:[%s3631] sm:$0xf]
      %v3633 = vld [vmem:[%s3631 + $0x4] sm:$0xf]
      %v3634 = vld [vmem:[%s3631 + $0x8] sm:$0xf]
      %v3635 = vld [vmem:[%s3631 + $0xc] sm:$0xf]
      %v3636 = vld [vmem:[%s3631 + $0x10] sm:$0xf]
      %v3637 = vld [vmem:[%s3631 + $0x14] sm:$0xf]
      %v3638 = vld [vmem:[%s3631 + $0x18] sm:$0xf]
      %v3639 = vld [vmem:[%s3631 + $0x1c] sm:$0xf]
      %v3640 = vld [vmem:[%s3631 + $0x20] sm:$0xf]
      %v3641 = vld [vmem:[%s3631 + $0x24] sm:$0xf]
      %v3642 = vld [vmem:[%s3631 + $0x28] sm:$0xf]
      %v3643 = vld [vmem:[%s3631 + $0x2c] sm:$0xf]
      %v3644 = vld [vmem:[%s3631 + $0x30] sm:$0xf]
      %v3645 = vld [vmem:[%s3631 + $0x34] sm:$0xf]
      %v3646 = vld [vmem:[%s3631 + $0x38] sm:$0xf]
      %v3647 = vld [vmem:[%s3631 + $0x3c] sm:$0xf]
      %v3648 = vunpack.c.l.b16 %v3490
      %v3649 = vunpack.c.l.b16 %v3493
      %v3650 = vunpack.c.l.b16 %v3497
      %v3651 = vunpack.c.l.b16 %v3500
      %v3652 = vunpack.c.l.b16 %v3504
      %v3653 = vunpack.c.l.b16 %v3507
      %v3654 = vunpack.c.l.b16 %v3511
      %v3655 = vunpack.c.l.b16 %v3514
      %v3656 = vunpack.c.l.b16 %v3518
      %v3657 = vunpack.c.l.b16 %v3521
      %v3658 = vunpack.c.l.b16 %v3525
      %v3659 = vunpack.c.l.b16 %v3528
      %v3660 = vunpack.c.l.b16 %v3532
      %v3661 = vunpack.c.l.b16 %v3535
      %v3662 = vunpack.c.l.b16 %v3539
      %v3663 = vunpack.c.l.b16 %v3542
      %v3664 = vunpack.c.l.b16 %v3546
      %v3665 = vunpack.c.l.b16 %v3549
      %v3666 = vunpack.c.l.b16 %v3553
      %v3667 = vunpack.c.l.b16 %v3556
      %v3668 = vunpack.c.l.b16 %v3560
      %v3669 = vunpack.c.l.b16 %v3563
      %v3670 = vunpack.c.l.b16 %v3567
      %v3671 = vunpack.c.l.b16 %v3570
      %v3672 = vunpack.c.l.b16 %v3574
      %v3673 = vunpack.c.l.b16 %v3577
      %v3674 = vunpack.c.l.b16 %v3581
      %v3675 = vunpack.c.l.b16 %v3584
      %v3676 = vunpack.c.l.b16 %v3588
      %v3677 = vunpack.c.l.b16 %v3591
      %v3678 = vunpack.c.l.b16 %v3595
      %v3679 = vunpack.c.l.b16 %v3598
      %v3680 = vpack.c.b16 %v3649, %v3648
      %v3681 = vpack.c.b16 %v3651, %v3650
      %v3682 = vpack.c.b16 %v3653, %v3652
      %v3683 = vpack.c.b16 %v3655, %v3654
      %v3684 = vpack.c.b16 %v3657, %v3656
      %v3685 = vpack.c.b16 %v3659, %v3658
      %v3686 = vpack.c.b16 %v3661, %v3660
      %v3687 = vpack.c.b16 %v3663, %v3662
      %v3688 = vpack.c.b16 %v3665, %v3664
      %v3689 = vpack.c.b16 %v3667, %v3666
      %v3690 = vpack.c.b16 %v3669, %v3668
      %v3691 = vpack.c.b16 %v3671, %v3670
      %v3692 = vpack.c.b16 %v3673, %v3672
      %v3693 = vpack.c.b16 %v3675, %v3674
      %v3694 = vpack.c.b16 %v3677, %v3676
      %v3695 = vpack.c.b16 %v3679, %v3678
      %v3728 = vunpack.c.l.b16 %v3632
      %v3729 = vunpack.c.l.b16 %v3633
      %v3730 = vunpack.c.l.b16 %v3634
      %v3731 = vunpack.c.l.b16 %v3635
      %v3732 = vunpack.c.l.b16 %v3636
      %v3733 = vunpack.c.l.b16 %v3637
      %v3734 = vunpack.c.l.b16 %v3638
      %v3735 = vunpack.c.l.b16 %v3639
      %v3736 = vunpack.c.l.b16 %v3640
      %v3737 = vunpack.c.l.b16 %v3641
      %v3738 = vunpack.c.l.b16 %v3642
      %v3739 = vunpack.c.l.b16 %v3643
      %v3740 = vunpack.c.l.b16 %v3644
      %v3741 = vunpack.c.l.b16 %v3645
      %v3742 = vunpack.c.l.b16 %v3646
      %v3743 = vunpack.c.l.b16 %v3647
      %v3744 = vpack.c.b16 %v3729, %v3728
      %v3745 = vpack.c.b16 %v3731, %v3730
      %v3746 = vpack.c.b16 %v3733, %v3732
      %v3747 = vpack.c.b16 %v3735, %v3734
      %v3748 = vpack.c.b16 %v3737, %v3736
      %v3749 = vpack.c.b16 %v3739, %v3738
      %v3750 = vpack.c.b16 %v3741, %v3740
      %v3751 = vpack.c.b16 %v3743, %v3742
      %3760 = vmatprep.subr.bf16.mxu0 0
      %3761 = vmatpush1.bf16.msra.mxu0 %v3744
      %3762 = vmatprep.subr.bf16.mxu0 0
      %3763 = vmatpush1.bf16.msra.mxu0 %v3745
      %3764 = vmatprep.subr.bf16.mxu0 0
      %3765 = vmatpush1.bf16.msra.mxu0 %v3746
      %3766 = vmatprep.subr.bf16.mxu0 0
      %3767 = vmatpush1.bf16.msra.mxu0 %v3747
      %3768 = vmatprep.subr.bf16.mxu0 0
      %3769 = vmatpush1.bf16.msra.mxu0 %v3748
      %3770 = vmatprep.subr.bf16.mxu0 0
      %3771 = vmatpush1.bf16.msra.mxu0 %v3749
      %3772 = vmatprep.subr.bf16.mxu0 0
      %3773 = vmatpush1.bf16.msra.mxu0 %v3750
      %3774 = vmatprep.subr.bf16.mxu0 0
      %3775 = vmatpush1.bf16.msra.mxu0 %v3751
      %3776 = vmatprep.subr.bf16.mxu0 0
      %3777 = vmatpush1.bf16.msra.mxu0 0
      %3778 = vmatprep.subr.bf16.mxu0 0
      %3779 = vmatpush1.bf16.msra.mxu0 0
      %3780 = vmatprep.subr.bf16.mxu0 0
      %3781 = vmatpush1.bf16.msra.mxu0 0
      %3782 = vmatprep.subr.bf16.mxu0 0
      %3783 = vmatpush1.bf16.msra.mxu0 0
      %3784 = vmatprep.subr.bf16.mxu0 0
      %3785 = vmatpush1.bf16.msra.mxu0 0
      %3786 = vmatprep.subr.bf16.mxu0 0
      %3787 = vmatpush1.bf16.msra.mxu0 0
      %3788 = vmatprep.subr.bf16.mxu0 0
      %3789 = vmatpush1.bf16.msra.mxu0 0
      %3790 = vmatprep.subr.bf16.mxu0 0
      %3791 = vmatpush1.bf16.msra.mxu0 0
      %3792 = vmatprep.mubr.bf16.mxu0 0
      %3793 = vmatmul.mubr.bf16.gmra.mrb[0].mxu0 %v3680
      %v3794 = vpop.f32.mrb[0].mxu0
      %v3795 = vadd.f32 0.0, %v3794
      %v3796 = vpop.f32.mrb[0].mxu0
      %v3797 = vpop.f32.mrb[0].mxu0
      %v3798 = vadd.f32 0.0, %v3797
      %v3799 = vpop.f32.mrb[0].mxu0
      %3800 = vmatprep.mubr.bf16.mxu0 0
      %3801 = vmatmul.mubr.bf16.gmra.mrb[0].mxu0 %v3681
      %v3802 = vpop.f32.mrb[0].mxu0
      %v3803 = vadd.f32 0.0, %v3802
      %v3804 = vpop.f32.mrb[0].mxu0
      %v3805 = vpop.f32.mrb[0].mxu0
      %v3806 = vadd.f32 0.0, %v3805
      %v3807 = vpop.f32.mrb[0].mxu0
      %3808 = vmatprep.mubr.bf16.mxu0 0
      %3809 = vmatmul.mubr.bf16.gmra.mrb[0].mxu0 %v3682
      %v3810 = vpop.f32.mrb[0].mxu0
      %v3811 = vadd.f32 0.0, %v3810
      %v3812 = vpop.f32.mrb[0].mxu0
      %v3813 = vpop.f32.mrb[0].mxu0
      %v3814 = vadd.f32 0.0, %v3813
      %v3815 = vpop.f32.mrb[0].mxu0
      %3816 = vmatprep.mubr.bf16.mxu0 0
      %3817 = vmatmul.mubr.bf16.gmra.mrb[0].mxu0 %v3683
      %v3818 = vpop.f32.mrb[0].mxu0
      %v3819 = vadd.f32 0.0, %v3818
      %v3820 = vpop.f32.mrb[0].mxu0
      %v3821 = vpop.f32.mrb[0].mxu0
      %v3822 = vadd.f32 0.0, %v3821
      %v3823 = vpop.f32.mrb[0].mxu0
      %3824 = vmatprep.mubr.bf16.mxu0 0
      %3825 = vmatmul.mubr.bf16.gmra.mrb[0].mxu0 %v3684
      %v3826 = vpop.f32.mrb[0].mxu0
      %v3827 = vadd.f32 0.0, %v3826
      %v3828 = vpop.f32.mrb[0].mxu0
      %v3829 = vpop.f32.mrb[0].mxu0
      %v3830 = vadd.f32 0.0, %v3829
      %v3831 = vpop.f32.mrb[0].mxu0
      %3832 = vmatprep.mubr.bf16.mxu0 0
      %3833 = vmatmul.mubr.bf16.gmra.mrb[0].mxu0 %v3685
      %v3834 = vpop.f32.mrb[0].mxu0
      %v3835 = vadd.f32 0.0, %v3834
      %v3836 = vpop.f32.mrb[0].mxu0
      %v3837 = vpop.f32.mrb[0].mxu0
      %v3838 = vadd.f32 0.0, %v3837
      %v3839 = vpop.f32.mrb[0].mxu0
      %3840 = vmatprep.mubr.bf16.mxu0 0
      %3841 = vmatmul.mubr.bf16.gmra.mrb[0].mxu0 %v3686
      %v3842 = vpop.f32.mrb[0].mxu0
      %v3843 = vadd.f32 0.0, %v3842
      %v3844 = vpop.f32.mrb[0].mxu0
      %v3845 = vpop.f32.mrb[0].mxu0
      %v3846 = vadd.f32 0.0, %v3845
      %v3847 = vpop.f32.mrb[0].mxu0
      %3848 = vmatprep.mubr.bf16.mxu0 0
      %3849 = vmatmul.mubr.bf16.gmra.mrb[0].mxu0 %v3687
      %v3850 = vpop.f32.mrb[0].mxu0
      %v3851 = vadd.f32 0.0, %v3850
      %v3852 = vpop.f32.mrb[0].mxu0
      %v3853 = vpop.f32.mrb[0].mxu0
      %v3854 = vadd.f32 0.0, %v3853
      %v3855 = vpop.f32.mrb[0].mxu0
      %3856 = vmatprep.mubr.bf16.mxu0 0
      %3857 = vmatmul.mubr.bf16.gmra.mrb[0].mxu0 %v3688
      %v3858 = vpop.f32.mrb[0].mxu0
      %v3859 = vadd.f32 0.0, %v3858
      %v3860 = vpop.f32.mrb[0].mxu0
      %v3861 = vpop.f32.mrb[0].mxu0
      %v3862 = vadd.f32 0.0, %v3861
      %v3863 = vpop.f32.mrb[0].mxu0
      %3864 = vmatprep.mubr.bf16.mxu0 0
      %3865 = vmatmul.mubr.bf16.gmra.mrb[0].mxu0 %v3689
      %v3866 = vpop.f32.mrb[0].mxu0
      %v3867 = vadd.f32 0.0, %v3866
      %v3868 = vpop.f32.mrb[0].mxu0
      %v3869 = vpop.f32.mrb[0].mxu0
      %v3870 = vadd.f32 0.0, %v3869
      %v3871 = vpop.f32.mrb[0].mxu0
      %3872 = vmatprep.mubr.bf16.mxu0 0
      %3873 = vmatmul.mubr.bf16.gmra.mrb[0].mxu0 %v3690
      %v3874 = vpop.f32.mrb[0].mxu0
      %v3875 = vadd.f32 0.0, %v3874
      %v3876 = vpop.f32.mrb[0].mxu0
      %v3877 = vpop.f32.mrb[0].mxu0
      %v3878 = vadd.f32 0.0, %v3877
      %v3879 = vpop.f32.mrb[0].mxu0
      %3880 = vmatprep.mubr.bf16.mxu0 0
      %3881 = vmatmul.mubr.bf16.gmra.mrb[0].mxu0 %v3691
      %v3882 = vpop.f32.mrb[0].mxu0
      %v3883 = vadd.f32 0.0, %v3882
      %v3884 = vpop.f32.mrb[0].mxu0
      %v3885 = vpop.f32.mrb[0].mxu0
      %v3886 = vadd.f32 0.0, %v3885
      %v3887 = vpop.f32.mrb[0].mxu0
      %3888 = vmatprep.mubr.bf16.mxu0 0
      %3889 = vmatmul.mubr.bf16.gmra.mrb[0].mxu0 %v3692
      %v3890 = vpop.f32.mrb[0].mxu0
      %v3891 = vadd.f32 0.0, %v3890
      %v3892 = vpop.f32.mrb[0].mxu0
      %v3893 = vpop.f32.mrb[0].mxu0
      %v3894 = vadd.f32 0.0, %v3893
      %v3895 = vpop.f32.mrb[0].mxu0
      %3896 = vmatprep.mubr.bf16.mxu0 0
      %3897 = vmatmul.mubr.bf16.gmra.mrb[0].mxu0 %v3693
      %v3898 = vpop.f32.mrb[0].mxu0
      %v3899 = vadd.f32 0.0, %v3898
      %v3900 = vpop.f32.mrb[0].mxu0
      %v3901 = vpop.f32.mrb[0].mxu0
      %v3902 = vadd.f32 0.0, %v3901
      %v3903 = vpop.f32.mrb[0].mxu0
      %3904 = vmatprep.mubr.bf16.mxu0 0
      %3905 = vmatmul.mubr.bf16.gmra.mrb[0].mxu0 %v3694
      %v3906 = vpop.f32.mrb[0].mxu0
      %v3907 = vadd.f32 0.0, %v3906
      %v3908 = vpop.f32.mrb[0].mxu0
      %v3909 = vpop.f32.mrb[0].mxu0
      %v3910 = vadd.f32 0.0, %v3909
      %v3911 = vpop.f32.mrb[0].mxu0
      %3912 = vmatprep.mubr.bf16.mxu0 0
      %3913 = vmatmul.mubr.bf16.gmra.mrb[0].mxu0 %v3695
      %v3914 = vpop.f32.mrb[0].mxu0
      %v3915 = vadd.f32 0.0, %v3914
      %v3916 = vpop.f32.mrb[0].mxu0
      %v3917 = vpop.f32.mrb[0].mxu0
      %v3918 = vadd.f32 0.0, %v3917
      %v3919 = vpop.f32.mrb[0].mxu0
      %3920 = vdwg.mxu0
      %v3921 = vadd.f32 %v3599, %v3795
      %v3922 = vadd.f32 %v3600, %v3798
      %v3923 = vadd.f32 %v3601, %v3803
      %v3924 = vadd.f32 %v3602, %v3806
      %v3925 = vadd.f32 %v3603, %v3811
      %v3926 = vadd.f32 %v3604, %v3814
      %v3927 = vadd.f32 %v3605, %v3819
      %v3928 = vadd.f32 %v3606, %v3822
      %v3929 = vadd.f32 %v3607, %v3827
      %v3930 = vadd.f32 %v3608, %v3830
      %v3931 = vadd.f32 %v3609, %v3835
      %v3932 = vadd.f32 %v3610, %v3838
      %v3933 = vadd.f32 %v3611, %v3843
      %v3934 = vadd.f32 %v3612, %v3846
      %v3935 = vadd.f32 %v3613, %v3851
      %v3936 = vadd.f32 %v3614, %v3854
      %v3937 = vadd.f32 %v3615, %v3859
      %v3938 = vadd.f32 %v3616, %v3862
      %v3939 = vadd.f32 %v3617, %v3867
      %v3940 = vadd.f32 %v3618, %v3870
      %v3941 = vadd.f32 %v3619, %v3875
      %v3942 = vadd.f32 %v3620, %v3878
      %v3943 = vadd.f32 %v3621, %v3883
      %v3944 = vadd.f32 %v3622, %v3886
      %v3945 = vadd.f32 %v3623, %v3891
      %v3946 = vadd.f32 %v3624, %v3894
      %v3947 = vadd.f32 %v3625, %v3899
      %v3948 = vadd.f32 %v3626, %v3902
      %v3949 = vadd.f32 %v3627, %v3907
      %v3950 = vadd.f32 %v3628, %v3910
      %v3951 = vadd.f32 %v3629, %v3915
      %v3952 = vadd.f32 %v3630, %v3918
      %3953 = vst [vmem:[#allocation2] sm:$0xff] %v3921
      %3954 = vst [vmem:[#allocation2 + $0x8] sm:$0xff] %v3922
      %3955 = vst [vmem:[#allocation2 + $0x10] sm:$0xff] %v3923
      %3956 = vst [vmem:[#allocation2 + $0x18] sm:$0xff] %v3924
      %3957 = vst [vmem:[#allocation2 + $0x20] sm:$0xff] %v3925
      %3958 = vst [vmem:[#allocation2 + $0x28] sm:$0xff] %v3926
      %3959 = vst [vmem:[#allocation2 + $0x30] sm:$0xff] %v3927
      %3960 = vst [vmem:[#allocation2 + $0x38] sm:$0xff] %v3928
      %3961 = vst [vmem:[#allocation2 + $0x40] sm:$0xff] %v3929
      %3962 = vst [vmem:[#allocation2 + $0x48] sm:$0xff] %v3930
      %3963 = vst [vmem:[#allocation2 + $0x50] sm:$0xff] %v3931
      %3964 = vst [vmem:[#allocation2 + $0x58] sm:$0xff] %v3932
      %3965 = vst [vmem:[#allocation2 + $0x60] sm:$0xff] %v3933
      %3966 = vst [vmem:[#allocation2 + $0x68] sm:$0xff] %v3934
      %3967 = vst [vmem:[#allocation2 + $0x70] sm:$0xff] %v3935
      %3968 = vst [vmem:[#allocation2 + $0x78] sm:$0xff] %v3936
      %3969 = vst [vmem:[#allocation2 + $0x80] sm:$0xff] %v3937
      %3970 = vst [vmem:[#allocation2 + $0x88] sm:$0xff] %v3938
      %3971 = vst [vmem:[#allocation2 + $0x90] sm:$0xff] %v3939
      %3972 = vst [vmem:[#allocation2 + $0x98] sm:$0xff] %v3940
      %3973 = vst [vmem:[#allocation2 + $0xa0] sm:$0xff] %v3941
      %3974 = vst [vmem:[#allocation2 + $0xa8] sm:$0xff] %v3942
      %3975 = vst [vmem:[#allocation2 + $0xb0] sm:$0xff] %v3943
      %3976 = vst [vmem:[#allocation2 + $0xb8] sm:$0xff] %v3944
      %3977 = vst [vmem:[#allocation2 + $0xc0] sm:$0xff] %v3945
      %3978 = vst [vmem:[#allocation2 + $0xc8] sm:$0xff] %v3946
      %3979 = vst [vmem:[#allocation2 + $0xd0] sm:$0xff] %v3947
      %3980 = vst [vmem:[#allocation2 + $0xd8] sm:$0xff] %v3948
      %3981 = vst [vmem:[#allocation2 + $0xe0] sm:$0xff] %v3949
      %3982 = vst [vmem:[#allocation2 + $0xe8] sm:$0xff] %v3950
      %3983 = vst [vmem:[#allocation2 + $0xf0] sm:$0xff] %v3951
      %3984 = vst [vmem:[#allocation2 + $0xf8] sm:$0xff] %v3952
      %s3985 = scalar_lea.vmem %s206, 24
      %v3986 = vld [vmem:[%s3985] sm:$0xf]
      %v3987 = vld [vmem:[%s3985 + $0x4] sm:$0xf]
      %v3988 = vld [vmem:[%s3985 + $0xc] sm:$0xf]
      %v3989 = vld [vmem:[%s3985 + $0x10] sm:$0xf]
      %v3990 = vld [vmem:[%s3985 + $0x18] sm:$0xf]
      %v3991 = vld [vmem:[%s3985 + $0x1c] sm:$0xf]
      %v3992 = vld [vmem:[%s3985 + $0x24] sm:$0xf]
      %v3993 = vld [vmem:[%s3985 + $0x28] sm:$0xf]
      %v3994 = vld [vmem:[%s3985 + $0x30] sm:$0xf]
      %v3995 = vld [vmem:[%s3985 + $0x34] sm:$0xf]
      %v3996 = vld [vmem:[%s3985 + $0x3c] sm:$0xf]
      %v3997 = vld [vmem:[%s3985 + $0x40] sm:$0xf]
      %v3998 = vld [vmem:[%s3985 + $0x48] sm:$0xf]
      %v3999 = vld [vmem:[%s3985 + $0x4c] sm:$0xf]
      %v4000 = vld [vmem:[%s3985 + $0x54] sm:$0xf]
      %v4001 = vld [vmem:[%s3985 + $0x58] sm:$0xf]
      %v4002 = vld [vmem:[%s3985 + $0x60] sm:$0xf]
      %v4003 = vld [vmem:[%s3985 + $0x64] sm:$0xf]
      %v4004 = vld [vmem:[%s3985 + $0x6c] sm:$0xf]
      %v4005 = vld [vmem:[%s3985 + $0x70] sm:$0xf]
      %v4006 = vld [vmem:[%s3985 + $0x78] sm:$0xf]
      %v4007 = vld [vmem:[%s3985 + $0x7c] sm:$0xf]
      %v4008 = vld [vmem:[%s3985 + $0x84] sm:$0xf]
      %v4009 = vld [vmem:[%s3985 + $0x88] sm:$0xf]
      %v4010 = vld [vmem:[%s3985 + $0x90] sm:$0xf]
      %v4011 = vld [vmem:[%s3985 + $0x94] sm:$0xf]
      %v4012 = vld [vmem:[%s3985 + $0x9c] sm:$0xf]
      %v4013 = vld [vmem:[%s3985 + $0xa0] sm:$0xf]
      %v4014 = vld [vmem:[%s3985 + $0xa8] sm:$0xf]
      %v4015 = vld [vmem:[%s3985 + $0xac] sm:$0xf]
      %v4016 = vld [vmem:[%s3985 + $0xb4] sm:$0xf]
      %v4017 = vld [vmem:[%s3985 + $0xb8] sm:$0xf]
      %v4018 = vld [vmem:[#allocation2] sm:$0xff]
      %v4019 = vld [vmem:[#allocation2 + $0x8] sm:$0xff]
      %v4020 = vld [vmem:[#allocation2 + $0x10] sm:$0xff]
      %v4021 = vld [vmem:[#allocation2 + $0x18] sm:$0xff]
      %v4022 = vld [vmem:[#allocation2 + $0x20] sm:$0xff]
      %v4023 = vld [vmem:[#allocation2 + $0x28] sm:$0xff]
      %v4024 = vld [vmem:[#allocation2 + $0x30] sm:$0xff]
      %v4025 = vld [vmem:[#allocation2 + $0x38] sm:$0xff]
      %v4026 = vld [vmem:[#allocation2 + $0x40] sm:$0xff]
      %v4027 = vld [vmem:[#allocation2 + $0x48] sm:$0xff]
      %v4028 = vld [vmem:[#allocation2 + $0x50] sm:$0xff]
      %v4029 = vld [vmem:[#allocation2 + $0x58] sm:$0xff]
      %v4030 = vld [vmem:[#allocation2 + $0x60] sm:$0xff]
      %v4031 = vld [vmem:[#allocation2 + $0x68] sm:$0xff]
      %v4032 = vld [vmem:[#allocation2 + $0x70] sm:$0xff]
      %v4033 = vld [vmem:[#allocation2 + $0x78] sm:$0xff]
      %v4034 = vld [vmem:[#allocation2 + $0x80] sm:$0xff]
      %v4035 = vld [vmem:[#allocation2 + $0x88] sm:$0xff]
      %v4036 = vld [vmem:[#allocation2 + $0x90] sm:$0xff]
      %v4037 = vld [vmem:[#allocation2 + $0x98] sm:$0xff]
      %v4038 = vld [vmem:[#allocation2 + $0xa0] sm:$0xff]
      %v4039 = vld [vmem:[#allocation2 + $0xa8] sm:$0xff]
      %v4040 = vld [vmem:[#allocation2 + $0xb0] sm:$0xff]
      %v4041 = vld [vmem:[#allocation2 + $0xb8] sm:$0xff]
      %v4042 = vld [vmem:[#allocation2 + $0xc0] sm:$0xff]
      %v4043 = vld [vmem:[#allocation2 + $0xc8] sm:$0xff]
      %v4044 = vld [vmem:[#allocation2 + $0xd0] sm:$0xff]
      %v4045 = vld [vmem:[#allocation2 + $0xd8] sm:$0xff]
      %v4046 = vld [vmem:[#allocation2 + $0xe0] sm:$0xff]
      %v4047 = vld [vmem:[#allocation2 + $0xe8] sm:$0xff]
      %v4048 = vld [vmem:[#allocation2 + $0xf0] sm:$0xff]
      %v4049 = vld [vmem:[#allocation2 + $0xf8] sm:$0xff]
      %s4050 = scalar_lea.vmem %s210, 384
      %v4051 = vld [vmem:[%s4050] sm:$0xf]
      %v4052 = vld [vmem:[%s4050 + $0x4] sm:$0xf]
      %v4053 = vld [vmem:[%s4050 + $0x8] sm:$0xf]
      %v4054 = vld [vmem:[%s4050 + $0xc] sm:$0xf]
      %v4055 = vld [vmem:[%s4050 + $0x10] sm:$0xf]
      %v4056 = vld [vmem:[%s4050 + $0x14] sm:$0xf]
      %v4057 = vld [vmem:[%s4050 + $0x18] sm:$0xf]
      %v4058 = vld [vmem:[%s4050 + $0x1c] sm:$0xf]
      %v4059 = vld [vmem:[%s4050 + $0x20] sm:$0xf]
      %v4060 = vld [vmem:[%s4050 + $0x24] sm:$0xf]
      %v4061 = vld [vmem:[%s4050 + $0x28] sm:$0xf]
      %v4062 = vld [vmem:[%s4050 + $0x2c] sm:$0xf]
      %v4063 = vld [vmem:[%s4050 + $0x30] sm:$0xf]
      %v4064 = vld [vmem:[%s4050 + $0x34] sm:$0xf]
      %v4065 = vld [vmem:[%s4050 + $0x38] sm:$0xf]
      %v4066 = vld [vmem:[%s4050 + $0x3c] sm:$0xf]
      %v4099 = vunpack.c.l.b16 %v3986
      %v4100 = vunpack.c.l.b16 %v3987
      %v4101 = vunpack.c.l.b16 %v3988
      %v4102 = vunpack.c.l.b16 %v3989
      %v4103 = vunpack.c.l.b16 %v3990
      %v4104 = vunpack.c.l.b16 %v3991
      %v4105 = vunpack.c.l.b16 %v3992
      %v4106 = vunpack.c.l.b16 %v3993
      %v4107 = vunpack.c.l.b16 %v3994
      %v4108 = vunpack.c.l.b16 %v3995
      %v4109 = vunpack.c.l.b16 %v3996
      %v4110 = vunpack.c.l.b16 %v3997
      %v4111 = vunpack.c.l.b16 %v3998
      %v4112 = vunpack.c.l.b16 %v3999
      %v4113 = vunpack.c.l.b16 %v4000
      %v4114 = vunpack.c.l.b16 %v4001
      %v4115 = vunpack.c.l.b16 %v4002
      %v4116 = vunpack.c.l.b16 %v4003
      %v4117 = vunpack.c.l.b16 %v4004
      %v4118 = vunpack.c.l.b16 %v4005
      %v4119 = vunpack.c.l.b16 %v4006
      %v4120 = vunpack.c.l.b16 %v4007
      %v4121 = vunpack.c.l.b16 %v4008
      %v4122 = vunpack.c.l.b16 %v4009
      %v4123 = vunpack.c.l.b16 %v4010
      %v4124 = vunpack.c.l.b16 %v4011
      %v4125 = vunpack.c.l.b16 %v4012
      %v4126 = vunpack.c.l.b16 %v4013
      %v4127 = vunpack.c.l.b16 %v4014
      %v4128 = vunpack.c.l.b16 %v4015
      %v4129 = vunpack.c.l.b16 %v4016
      %v4130 = vunpack.c.l.b16 %v4017
      %v4131 = vpack.c.b16 %v4100, %v4099
      %v4132 = vpack.c.b16 %v4102, %v4101
      %v4133 = vpack.c.b16 %v4104, %v4103
      %v4134 = vpack.c.b16 %v4106, %v4105
      %v4135 = vpack.c.b16 %v4108, %v4107
      %v4136 = vpack.c.b16 %v4110, %v4109
      %v4137 = vpack.c.b16 %v4112, %v4111
      %v4138 = vpack.c.b16 %v4114, %v4113
      %v4139 = vpack.c.b16 %v4116, %v4115
      %v4140 = vpack.c.b16 %v4118, %v4117
      %v4141 = vpack.c.b16 %v4120, %v4119
      %v4142 = vpack.c.b16 %v4122, %v4121
      %v4143 = vpack.c.b16 %v4124, %v4123
      %v4144 = vpack.c.b16 %v4126, %v4125
      %v4145 = vpack.c.b16 %v4128, %v4127
      %v4146 = vpack.c.b16 %v4130, %v4129
      %v4179 = vunpack.c.l.b16 %v4051
      %v4180 = vunpack.c.l.b16 %v4052
      %v4181 = vunpack.c.l.b16 %v4053
      %v4182 = vunpack.c.l.b16 %v4054
      %v4183 = vunpack.c.l.b16 %v4055
      %v4184 = vunpack.c.l.b16 %v4056
      %v4185 = vunpack.c.l.b16 %v4057
      %v4186 = vunpack.c.l.b16 %v4058
      %v4187 = vunpack.c.l.b16 %v4059
      %v4188 = vunpack.c.l.b16 %v4060
      %v4189 = vunpack.c.l.b16 %v4061
      %v4190 = vunpack.c.l.b16 %v4062
      %v4191 = vunpack.c.l.b16 %v4063
      %v4192 = vunpack.c.l.b16 %v4064
      %v4193 = vunpack.c.l.b16 %v4065
      %v4194 = vunpack.c.l.b16 %v4066
      %v4195 = vpack.c.b16 %v4180, %v4179
      %v4196 = vpack.c.b16 %v4182, %v4181
      %v4197 = vpack.c.b16 %v4184, %v4183
      %v4198 = vpack.c.b16 %v4186, %v4185
      %v4199 = vpack.c.b16 %v4188, %v4187
      %v4200 = vpack.c.b16 %v4190, %v4189
      %v4201 = vpack.c.b16 %v4192, %v4191
      %v4202 = vpack.c.b16 %v4194, %v4193
      %4211 = vmatprep.subr.bf16.mxu0 0
      %4212 = vmatpush1.bf16.msra.mxu0 %v4195
      %4213 = vmatprep.subr.bf16.mxu0 0
      %4214 = vmatpush1.bf16.msra.mxu0 %v4196
      %4215 = vmatprep.subr.bf16.mxu0 0
      %4216 = vmatpush1.bf16.msra.mxu0 %v4197
      %4217 = vmatprep.subr.bf16.mxu0 0
      %4218 = vmatpush1.bf16.msra.mxu0 %v4198
      %4219 = vmatprep.subr.bf16.mxu0 0
      %4220 = vmatpush1.bf16.msra.mxu0 %v4199
      %4221 = vmatprep.subr.bf16.mxu0 0
      %4222 = vmatpush1.bf16.msra.mxu0 %v4200
      %4223 = vmatprep.subr.bf16.mxu0 0
      %4224 = vmatpush1.bf16.msra.mxu0 %v4201
      %4225 = vmatprep.subr.bf16.mxu0 0
      %4226 = vmatpush1.bf16.msra.mxu0 %v4202
      %4227 = vmatprep.subr.bf16.mxu0 0
      %4228 = vmatpush1.bf16.msra.mxu0 0
      %4229 = vmatprep.subr.bf16.mxu0 0
      %4230 = vmatpush1.bf16.msra.mxu0 0
      %4231 = vmatprep.subr.bf16.mxu0 0
      %4232 = vmatpush1.bf16.msra.mxu0 0
      %4233 = vmatprep.subr.bf16.mxu0 0
      %4234 = vmatpush1.bf16.msra.mxu0 0
      %4235 = vmatprep.subr.bf16.mxu0 0
      %4236 = vmatpush1.bf16.msra.mxu0 0
      %4237 = vmatprep.subr.bf16.mxu0 0
      %4238 = vmatpush1.bf16.msra.mxu0 0
      %4239 = vmatprep.subr.bf16.mxu0 0
      %4240 = vmatpush1.bf16.msra.mxu0 0
      %4241 = vmatprep.subr.bf16.mxu0 0
      %4242 = vmatpush1.bf16.msra.mxu0 0
      %4243 = vmatprep.mubr.bf16.mxu0 0
      %4244 = vmatmul.mubr.bf16.gmra.mrb[0].mxu0 %v4131
      %v4245 = vpop.f32.mrb[0].mxu0
      %v4246 = vadd.f32 0.0, %v4245
      %v4247 = vpop.f32.mrb[0].mxu0
      %v4248 = vpop.f32.mrb[0].mxu0
      %v4249 = vadd.f32 0.0, %v4248
      %v4250 = vpop.f32.mrb[0].mxu0
      %4251 = vmatprep.mubr.bf16.mxu0 0
      %4252 = vmatmul.mubr.bf16.gmra.mrb[0].mxu0 %v4132
      %v4253 = vpop.f32.mrb[0].mxu0
      %v4254 = vadd.f32 0.0, %v4253
      %v4255 = vpop.f32.mrb[0].mxu0
      %v4256 = vpop.f32.mrb[0].mxu0
      %v4257 = vadd.f32 0.0, %v4256
      %v4258 = vpop.f32.mrb[0].mxu0
      %4259 = vmatprep.mubr.bf16.mxu0 0
      %4260 = vmatmul.mubr.bf16.gmra.mrb[0].mxu0 %v4133
      %v4261 = vpop.f32.mrb[0].mxu0
      %v4262 = vadd.f32 0.0, %v4261
      %v4263 = vpop.f32.mrb[0].mxu0
      %v4264 = vpop.f32.mrb[0].mxu0
      %v4265 = vadd.f32 0.0, %v4264
      %v4266 = vpop.f32.mrb[0].mxu0
      %4267 = vmatprep.mubr.bf16.mxu0 0
      %4268 = vmatmul.mubr.bf16.gmra.mrb[0].mxu0 %v4134
      %v4269 = vpop.f32.mrb[0].mxu0
      %v4270 = vadd.f32 0.0, %v4269
      %v4271 = vpop.f32.mrb[0].mxu0
      %v4272 = vpop.f32.mrb[0].mxu0
      %v4273 = vadd.f32 0.0, %v4272
      %v4274 = vpop.f32.mrb[0].mxu0
      %4275 = vmatprep.mubr.bf16.mxu0 0
      %4276 = vmatmul.mubr.bf16.gmra.mrb[0].mxu0 %v4135
      %v4277 = vpop.f32.mrb[0].mxu0
      %v4278 = vadd.f32 0.0, %v4277
      %v4279 = vpop.f32.mrb[0].mxu0
      %v4280 = vpop.f32.mrb[0].mxu0
      %v4281 = vadd.f32 0.0, %v4280
      %v4282 = vpop.f32.mrb[0].mxu0
      %4283 = vmatprep.mubr.bf16.mxu0 0
      %4284 = vmatmul.mubr.bf16.gmra.mrb[0].mxu0 %v4136
      %v4285 = vpop.f32.mrb[0].mxu0
      %v4286 = vadd.f32 0.0, %v4285
      %v4287 = vpop.f32.mrb[0].mxu0
      %v4288 = vpop.f32.mrb[0].mxu0
      %v4289 = vadd.f32 0.0, %v4288
      %v4290 = vpop.f32.mrb[0].mxu0
      %4291 = vmatprep.mubr.bf16.mxu0 0
      %4292 = vmatmul.mubr.bf16.gmra.mrb[0].mxu0 %v4137
      %v4293 = vpop.f32.mrb[0].mxu0
      %v4294 = vadd.f32 0.0, %v4293
      %v4295 = vpop.f32.mrb[0].mxu0
      %v4296 = vpop.f32.mrb[0].mxu0
      %v4297 = vadd.f32 0.0, %v4296
      %v4298 = vpop.f32.mrb[0].mxu0
      %4299 = vmatprep.mubr.bf16.mxu0 0
      %4300 = vmatmul.mubr.bf16.gmra.mrb[0].mxu0 %v4138
      %v4301 = vpop.f32.mrb[0].mxu0
      %v4302 = vadd.f32 0.0, %v4301
      %v4303 = vpop.f32.mrb[0].mxu0
      %v4304 = vpop.f32.mrb[0].mxu0
      %v4305 = vadd.f32 0.0, %v4304
      %v4306 = vpop.f32.mrb[0].mxu0
      %4307 = vmatprep.mubr.bf16.mxu0 0
      %4308 = vmatmul.mubr.bf16.gmra.mrb[0].mxu0 %v4139
      %v4309 = vpop.f32.mrb[0].mxu0
      %v4310 = vadd.f32 0.0, %v4309
      %v4311 = vpop.f32.mrb[0].mxu0
      %v4312 = vpop.f32.mrb[0].mxu0
      %v4313 = vadd.f32 0.0, %v4312
      %v4314 = vpop.f32.mrb[0].mxu0
      %4315 = vmatprep.mubr.bf16.mxu0 0
      %4316 = vmatmul.mubr.bf16.gmra.mrb[0].mxu0 %v4140
      %v4317 = vpop.f32.mrb[0].mxu0
      %v4318 = vadd.f32 0.0, %v4317
      %v4319 = vpop.f32.mrb[0].mxu0
      %v4320 = vpop.f32.mrb[0].mxu0
      %v4321 = vadd.f32 0.0, %v4320
      %v4322 = vpop.f32.mrb[0].mxu0
      %4323 = vmatprep.mubr.bf16.mxu0 0
      %4324 = vmatmul.mubr.bf16.gmra.mrb[0].mxu0 %v4141
      %v4325 = vpop.f32.mrb[0].mxu0
      %v4326 = vadd.f32 0.0, %v4325
      %v4327 = vpop.f32.mrb[0].mxu0
      %v4328 = vpop.f32.mrb[0].mxu0
      %v4329 = vadd.f32 0.0, %v4328
      %v4330 = vpop.f32.mrb[0].mxu0
      %4331 = vmatprep.mubr.bf16.mxu0 0
      %4332 = vmatmul.mubr.bf16.gmra.mrb[0].mxu0 %v4142
      %v4333 = vpop.f32.mrb[0].mxu0
      %v4334 = vadd.f32 0.0, %v4333
      %v4335 = vpop.f32.mrb[0].mxu0
      %v4336 = vpop.f32.mrb[0].mxu0
      %v4337 = vadd.f32 0.0, %v4336
      %v4338 = vpop.f32.mrb[0].mxu0
      %4339 = vmatprep.mubr.bf16.mxu0 0
      %4340 = vmatmul.mubr.bf16.gmra.mrb[0].mxu0 %v4143
      %v4341 = vpop.f32.mrb[0].mxu0
      %v4342 = vadd.f32 0.0, %v4341
      %v4343 = vpop.f32.mrb[0].mxu0
      %v4344 = vpop.f32.mrb[0].mxu0
      %v4345 = vadd.f32 0.0, %v4344
      %v4346 = vpop.f32.mrb[0].mxu0
      %4347 = vmatprep.mubr.bf16.mxu0 0
      %4348 = vmatmul.mubr.bf16.gmra.mrb[0].mxu0 %v4144
      %v4349 = vpop.f32.mrb[0].mxu0
      %v4350 = vadd.f32 0.0, %v4349
      %v4351 = vpop.f32.mrb[0].mxu0
      %v4352 = vpop.f32.mrb[0].mxu0
      %v4353 = vadd.f32 0.0, %v4352
      %v4354 = vpop.f32.mrb[0].mxu0
      %4355 = vmatprep.mubr.bf16.mxu0 0
      %4356 = vmatmul.mubr.bf16.gmra.mrb[0].mxu0 %v4145
      %v4357 = vpop.f32.mrb[0].mxu0
      %v4358 = vadd.f32 0.0, %v4357
      %v4359 = vpop.f32.mrb[0].mxu0
      %v4360 = vpop.f32.mrb[0].mxu0
      %v4361 = vadd.f32 0.0, %v4360
      %v4362 = vpop.f32.mrb[0].mxu0
      %4363 = vmatprep.mubr.bf16.mxu0 0
      %4364 = vmatmul.mubr.bf16.gmra.mrb[0].mxu0 %v4146
      %v4365 = vpop.f32.mrb[0].mxu0
      %v4366 = vadd.f32 0.0, %v4365
      %v4367 = vpop.f32.mrb[0].mxu0
      %v4368 = vpop.f32.mrb[0].mxu0
      %v4369 = vadd.f32 0.0, %v4368
      %v4370 = vpop.f32.mrb[0].mxu0
      %4371 = vdwg.mxu0
      %v4372 = vadd.f32 %v4018, %v4246
      %v4373 = vadd.f32 %v4019, %v4249
      %v4374 = vadd.f32 %v4020, %v4254
      %v4375 = vadd.f32 %v4021, %v4257
      %v4376 = vadd.f32 %v4022, %v4262
      %v4377 = vadd.f32 %v4023, %v4265
      %v4378 = vadd.f32 %v4024, %v4270
      %v4379 = vadd.f32 %v4025, %v4273
      %v4380 = vadd.f32 %v4026, %v4278
      %v4381 = vadd.f32 %v4027, %v4281
      %v4382 = vadd.f32 %v4028, %v4286
      %v4383 = vadd.f32 %v4029, %v4289
      %v4384 = vadd.f32 %v4030, %v4294
      %v4385 = vadd.f32 %v4031, %v4297
      %v4386 = vadd.f32 %v4032, %v4302
      %v4387 = vadd.f32 %v4033, %v4305
      %v4388 = vadd.f32 %v4034, %v4310
      %v4389 = vadd.f32 %v4035, %v4313
      %v4390 = vadd.f32 %v4036, %v4318
      %v4391 = vadd.f32 %v4037, %v4321
      %v4392 = vadd.f32 %v4038, %v4326
      %v4393 = vadd.f32 %v4039, %v4329
      %v4394 = vadd.f32 %v4040, %v4334
      %v4395 = vadd.f32 %v4041, %v4337
      %v4396 = vadd.f32 %v4042, %v4342
      %v4397 = vadd.f32 %v4043, %v4345
      %v4398 = vadd.f32 %v4044, %v4350
      %v4399 = vadd.f32 %v4045, %v4353
      %v4400 = vadd.f32 %v4046, %v4358
      %v4401 = vadd.f32 %v4047, %v4361
      %v4402 = vadd.f32 %v4048, %v4366
      %v4403 = vadd.f32 %v4049, %v4369
      %4404 = vst [vmem:[#allocation2] sm:$0xff] %v4372
      %4405 = vst [vmem:[#allocation2 + $0x8] sm:$0xff] %v4373
      %4406 = vst [vmem:[#allocation2 + $0x10] sm:$0xff] %v4374
      %4407 = vst [vmem:[#allocation2 + $0x18] sm:$0xff] %v4375
      %4408 = vst [vmem:[#allocation2 + $0x20] sm:$0xff] %v4376
      %4409 = vst [vmem:[#allocation2 + $0x28] sm:$0xff] %v4377
      %4410 = vst [vmem:[#allocation2 + $0x30] sm:$0xff] %v4378
      %4411 = vst [vmem:[#allocation2 + $0x38] sm:$0xff] %v4379
      %4412 = vst [vmem:[#allocation2 + $0x40] sm:$0xff] %v4380
      %4413 = vst [vmem:[#allocation2 + $0x48] sm:$0xff] %v4381
      %4414 = vst [vmem:[#allocation2 + $0x50] sm:$0xff] %v4382
      %4415 = vst [vmem:[#allocation2 + $0x58] sm:$0xff] %v4383
      %4416 = vst [vmem:[#allocation2 + $0x60] sm:$0xff] %v4384
      %4417 = vst [vmem:[#allocation2 + $0x68] sm:$0xff] %v4385
      %4418 = vst [vmem:[#allocation2 + $0x70] sm:$0xff] %v4386
      %4419 = vst [vmem:[#allocation2 + $0x78] sm:$0xff] %v4387
      %4420 = vst [vmem:[#allocation2 + $0x80] sm:$0xff] %v4388
      %4421 = vst [vmem:[#allocation2 + $0x88] sm:$0xff] %v4389
      %4422 = vst [vmem:[#allocation2 + $0x90] sm:$0xff] %v4390
      %4423 = vst [vmem:[#allocation2 + $0x98] sm:$0xff] %v4391
      %4424 = vst [vmem:[#allocation2 + $0xa0] sm:$0xff] %v4392
      %4425 = vst [vmem:[#allocation2 + $0xa8] sm:$0xff] %v4393
      %4426 = vst [vmem:[#allocation2 + $0xb0] sm:$0xff] %v4394
      %4427 = vst [vmem:[#allocation2 + $0xb8] sm:$0xff] %v4395
      %4428 = vst [vmem:[#allocation2 + $0xc0] sm:$0xff] %v4396
      %4429 = vst [vmem:[#allocation2 + $0xc8] sm:$0xff] %v4397
      %4430 = vst [vmem:[#allocation2 + $0xd0] sm:$0xff] %v4398
      %4431 = vst [vmem:[#allocation2 + $0xd8] sm:$0xff] %v4399
      %4432 = vst [vmem:[#allocation2 + $0xe0] sm:$0xff] %v4400
      %4433 = vst [vmem:[#allocation2 + $0xe8] sm:$0xff] %v4401
      %4434 = vst [vmem:[#allocation2 + $0xf0] sm:$0xff] %v4402
      %4435 = vst [vmem:[#allocation2 + $0xf8] sm:$0xff] %v4403
      %v4436 = vld [vmem:[%s3985] sm:$0xf]
      %v4437 = vld [vmem:[%s3985 + $0x4] sm:$0xf]
      %v4438 = vld [vmem:[%s3985 + $0x8] sm:$0x1]
      %v4439 = vld [vmem:[%s3985 + $0xc] sm:$0xf]
      %v4440 = vld [vmem:[%s3985 + $0x10] sm:$0xf]
      %v4441 = vld [vmem:[%s3985 + $0x14] sm:$0x1]
      %v4442 = vld [vmem:[%s3985 + $0x18] sm:$0xf]
      %v4443 = vld [vmem:[%s3985 + $0x1c] sm:$0xf]
      %v4444 = vld [vmem:[%s3985 + $0x20] sm:$0x1]
      %v4445 = vld [vmem:[%s3985 + $0x24] sm:$0xf]
      %v4446 = vld [vmem:[%s3985 + $0x28] sm:$0xf]
      %v4447 = vld [vmem:[%s3985 + $0x2c] sm:$0x1]
      %v4448 = vld [vmem:[%s3985 + $0x30] sm:$0xf]
      %v4449 = vld [vmem:[%s3985 + $0x34] sm:$0xf]
      %v4450 = vld [vmem:[%s3985 + $0x38] sm:$0x1]
      %v4451 = vld [vmem:[%s3985 + $0x3c] sm:$0xf]
      %v4452 = vld [vmem:[%s3985 + $0x40] sm:$0xf]
      %v4453 = vld [vmem:[%s3985 + $0x44] sm:$0x1]
      %v4454 = vld [vmem:[%s3985 + $0x48] sm:$0xf]
      %v4455 = vld [vmem:[%s3985 + $0x4c] sm:$0xf]
      %v4456 = vld [vmem:[%s3985 + $0x50] sm:$0x1]
      %v4457 = vld [vmem:[%s3985 + $0x54] sm:$0xf]
      %v4458 = vld [vmem:[%s3985 + $0x58] sm:$0xf]
      %v4459 = vld [vmem:[%s3985 + $0x5c] sm:$0x1]
      %v4460 = vld [vmem:[%s3985 + $0x60] sm:$0xf]
      %v4461 = vld [vmem:[%s3985 + $0x64] sm:$0xf]
      %v4462 = vld [vmem:[%s3985 + $0x68] sm:$0x1]
      %v4463 = vld [vmem:[%s3985 + $0x6c] sm:$0xf]
      %v4464 = vld [vmem:[%s3985 + $0x70] sm:$0xf]
      %v4465 = vld [vmem:[%s3985 + $0x74] sm:$0x1]
      %v4466 = vld [vmem:[%s3985 + $0x78] sm:$0xf]
      %v4467 = vld [vmem:[%s3985 + $0x7c] sm:$0xf]
      %v4468 = vld [vmem:[%s3985 + $0x80] sm:$0x1]
      %v4469 = vld [vmem:[%s3985 + $0x84] sm:$0xf]
      %v4470 = vld [vmem:[%s3985 + $0x88] sm:$0xf]
      %v4471 = vld [vmem:[%s3985 + $0x8c] sm:$0x1]
      %v4472 = vld [vmem:[%s3985 + $0x90] sm:$0xf]
      %v4473 = vld [vmem:[%s3985 + $0x94] sm:$0xf]
      %v4474 = vld [vmem:[%s3985 + $0x98] sm:$0x1]
      %v4475 = vld [vmem:[%s3985 + $0x9c] sm:$0xf]
      %v4476 = vld [vmem:[%s3985 + $0xa0] sm:$0xf]
      %v4477 = vld [vmem:[%s3985 + $0xa4] sm:$0x1]
      %v4478 = vld [vmem:[%s3985 + $0xa8] sm:$0xf]
      %v4479 = vld [vmem:[%s3985 + $0xac] sm:$0xf]
      %v4480 = vld [vmem:[%s3985 + $0xb0] sm:$0x1]
      %v4481 = vld [vmem:[%s3985 + $0xb4] sm:$0xf]
      %v4482 = vld [vmem:[%s3985 + $0xb8] sm:$0xf]
      %v4483 = vld [vmem:[%s3985 + $0xbc] sm:$0x1]
      %v4485 = vshrl.u32 %v4436, 16
      %v4487 = vrot.slane %v4485, 4
      %v4488 = vshll.u32 %v4436, 16
      %v4490 = vrot.slane %v4488, 5
      %v4491 = vor.u32 %v4487, %v4490
      %v4492 = vrot.slane %v4491, 4
      %v4494 = vshll.u32 %v4437, 16
      %v4496 = vrot.slane %v4494, 5
      %v4497 = vsel %vm754, %v4492, %v4496
      %v4498 = vshrl.u32 %v4437, 16
      %v4500 = vrot.slane %v4498, 4
      %v4501 = vor.u32 %v4500, %v4496
      %v4502 = vrot.slane %v4501, 4
      %v4504 = vshll.u32 %v4438, 16
      %v4506 = vrot.slane %v4504, 5
      %v4507 = vsel %vm754, %v4502, %v4506
      %v4509 = vshrl.u32 %v4439, 16
      %v4511 = vrot.slane %v4509, 4
      %v4512 = vshll.u32 %v4439, 16
      %v4514 = vrot.slane %v4512, 5
      %v4515 = vor.u32 %v4511, %v4514
      %v4516 = vrot.slane %v4515, 4
      %v4518 = vshll.u32 %v4440, 16
      %v4520 = vrot.slane %v4518, 5
      %v4521 = vsel %vm754, %v4516, %v4520
      %v4522 = vshrl.u32 %v4440, 16
      %v4524 = vrot.slane %v4522, 4
      %v4525 = vor.u32 %v4524, %v4520
      %v4526 = vrot.slane %v4525, 4
      %v4528 = vshll.u32 %v4441, 16
      %v4530 = vrot.slane %v4528, 5
      %v4531 = vsel %vm754, %v4526, %v4530
      %v4533 = vshrl.u32 %v4442, 16
      %v4535 = vrot.slane %v4533, 4
      %v4536 = vshll.u32 %v4442, 16
      %v4538 = vrot.slane %v4536, 5
      %v4539 = vor.u32 %v4535, %v4538
      %v4540 = vrot.slane %v4539, 4
      %v4542 = vshll.u32 %v4443, 16
      %v4544 = vrot.slane %v4542, 5
      %v4545 = vsel %vm754, %v4540, %v4544
      %v4546 = vshrl.u32 %v4443, 16
      %v4548 = vrot.slane %v4546, 4
      %v4549 = vor.u32 %v4548, %v4544
      %v4550 = vrot.slane %v4549, 4
      %v4552 = vshll.u32 %v4444, 16
      %v4554 = vrot.slane %v4552, 5
      %v4555 = vsel %vm754, %v4550, %v4554
      %v4557 = vshrl.u32 %v4445, 16
      %v4559 = vrot.slane %v4557, 4
      %v4560 = vshll.u32 %v4445, 16
      %v4562 = vrot.slane %v4560, 5
      %v4563 = vor.u32 %v4559, %v4562
      %v4564 = vrot.slane %v4563, 4
      %v4566 = vshll.u32 %v4446, 16
      %v4568 = vrot.slane %v4566, 5
      %v4569 = vsel %vm754, %v4564, %v4568
      %v4570 = vshrl.u32 %v4446, 16
      %v4572 = vrot.slane %v4570, 4
      %v4573 = vor.u32 %v4572, %v4568
      %v4574 = vrot.slane %v4573, 4
      %v4576 = vshll.u32 %v4447, 16
      %v4578 = vrot.slane %v4576, 5
      %v4579 = vsel %vm754, %v4574, %v4578
      %v4581 = vshrl.u32 %v4448, 16
      %v4583 = vrot.slane %v4581, 4
      %v4584 = vshll.u32 %v4448, 16
      %v4586 = vrot.slane %v4584, 5
      %v4587 = vor.u32 %v4583, %v4586
      %v4588 = vrot.slane %v4587, 4
      %v4590 = vshll.u32 %v4449, 16
      %v4592 = vrot.slane %v4590, 5
      %v4593 = vsel %vm754, %v4588, %v4592
      %v4594 = vshrl.u32 %v4449, 16
      %v4596 = vrot.slane %v4594, 4
      %v4597 = vor.u32 %v4596, %v4592
      %v4598 = vrot.slane %v4597, 4
      %v4600 = vshll.u32 %v4450, 16
      %v4602 = vrot.slane %v4600, 5
      %v4603 = vsel %vm754, %v4598, %v4602
      %v4605 = vshrl.u32 %v4451, 16
      %v4607 = vrot.slane %v4605, 4
      %v4608 = vshll.u32 %v4451, 16
      %v4610 = vrot.slane %v4608, 5
      %v4611 = vor.u32 %v4607, %v4610
      %v4612 = vrot.slane %v4611, 4
      %v4614 = vshll.u32 %v4452, 16
      %v4616 = vrot.slane %v4614, 5
      %v4617 = vsel %vm754, %v4612, %v4616
      %v4618 = vshrl.u32 %v4452, 16
      %v4620 = vrot.slane %v4618, 4
      %v4621 = vor.u32 %v4620, %v4616
      %v4622 = vrot.slane %v4621, 4
      %v4624 = vshll.u32 %v4453, 16
      %v4626 = vrot.slane %v4624, 5
      %v4627 = vsel %vm754, %v4622, %v4626
      %v4629 = vshrl.u32 %v4454, 16
      %v4631 = vrot.slane %v4629, 4
      %v4632 = vshll.u32 %v4454, 16
      %v4634 = vrot.slane %v4632, 5
      %v4635 = vor.u32 %v4631, %v4634
      %v4636 = vrot.slane %v4635, 4
      %v4638 = vshll.u32 %v4455, 16
      %v4640 = vrot.slane %v4638, 5
      %v4641 = vsel %vm754, %v4636, %v4640
      %v4642 = vshrl.u32 %v4455, 16
      %v4644 = vrot.slane %v4642, 4
      %v4645 = vor.u32 %v4644, %v4640
      %v4646 = vrot.slane %v4645, 4
      %v4648 = vshll.u32 %v4456, 16
      %v4650 = vrot.slane %v4648, 5
      %v4651 = vsel %vm754, %v4646, %v4650
      %v4653 = vshrl.u32 %v4457, 16
      %v4655 = vrot.slane %v4653, 4
      %v4656 = vshll.u32 %v4457, 16
      %v4658 = vrot.slane %v4656, 5
      %v4659 = vor.u32 %v4655, %v4658
      %v4660 = vrot.slane %v4659, 4
      %v4662 = vshll.u32 %v4458, 16
      %v4664 = vrot.slane %v4662, 5
      %v4665 = vsel %vm754, %v4660, %v4664
      %v4666 = vshrl.u32 %v4458, 16
      %v4668 = vrot.slane %v4666, 4
      %v4669 = vor.u32 %v4668, %v4664
      %v4670 = vrot.slane %v4669, 4
      %v4672 = vshll.u32 %v4459, 16
      %v4674 = vrot.slane %v4672, 5
      %v4675 = vsel %vm754, %v4670, %v4674
      %v4677 = vshrl.u32 %v4460, 16
      %v4679 = vrot.slane %v4677, 4
      %v4680 = vshll.u32 %v4460, 16
      %v4682 = vrot.slane %v4680, 5
      %v4683 = vor.u32 %v4679, %v4682
      %v4684 = vrot.slane %v4683, 4
      %v4686 = vshll.u32 %v4461, 16
      %v4688 = vrot.slane %v4686, 5
      %v4689 = vsel %vm754, %v4684, %v4688
      %v4690 = vshrl.u32 %v4461, 16
      %v4692 = vrot.slane %v4690, 4
      %v4693 = vor.u32 %v4692, %v4688
      %v4694 = vrot.slane %v4693, 4
      %v4696 = vshll.u32 %v4462, 16
      %v4698 = vrot.slane %v4696, 5
      %v4699 = vsel %vm754, %v4694, %v4698
      %v4701 = vshrl.u32 %v4463, 16
      %v4703 = vrot.slane %v4701, 4
      %v4704 = vshll.u32 %v4463, 16
      %v4706 = vrot.slane %v4704, 5
      %v4707 = vor.u32 %v4703, %v4706
      %v4708 = vrot.slane %v4707, 4
      %v4710 = vshll.u32 %v4464, 16
      %v4712 = vrot.slane %v4710, 5
      %v4713 = vsel %vm754, %v4708, %v4712
      %v4714 = vshrl.u32 %v4464, 16
      %v4716 = vrot.slane %v4714, 4
      %v4717 = vor.u32 %v4716, %v4712
      %v4718 = vrot.slane %v4717, 4
      %v4720 = vshll.u32 %v4465, 16
      %v4722 = vrot.slane %v4720, 5
      %v4723 = vsel %vm754, %v4718, %v4722
      %v4725 = vshrl.u32 %v4466, 16
      %v4727 = vrot.slane %v4725, 4
      %v4728 = vshll.u32 %v4466, 16
      %v4730 = vrot.slane %v4728, 5
      %v4731 = vor.u32 %v4727, %v4730
      %v4732 = vrot.slane %v4731, 4
      %v4734 = vshll.u32 %v4467, 16
      %v4736 = vrot.slane %v4734, 5
      %v4737 = vsel %vm754, %v4732, %v4736
      %v4738 = vshrl.u32 %v4467, 16
      %v4740 = vrot.slane %v4738, 4
      %v4741 = vor.u32 %v4740, %v4736
      %v4742 = vrot.slane %v4741, 4
      %v4744 = vshll.u32 %v4468, 16
      %v4746 = vrot.slane %v4744, 5
      %v4747 = vsel %vm754, %v4742, %v4746
      %v4749 = vshrl.u32 %v4469, 16
      %v4751 = vrot.slane %v4749, 4
      %v4752 = vshll.u32 %v4469, 16
      %v4754 = vrot.slane %v4752, 5
      %v4755 = vor.u32 %v4751, %v4754
      %v4756 = vrot.slane %v4755, 4
      %v4758 = vshll.u32 %v4470, 16
      %v4760 = vrot.slane %v4758, 5
      %v4761 = vsel %vm754, %v4756, %v4760
      %v4762 = vshrl.u32 %v4470, 16
      %v4764 = vrot.slane %v4762, 4
      %v4765 = vor.u32 %v4764, %v4760
      %v4766 = vrot.slane %v4765, 4
      %v4768 = vshll.u32 %v4471, 16
      %v4770 = vrot.slane %v4768, 5
      %v4771 = vsel %vm754, %v4766, %v4770
      %v4773 = vshrl.u32 %v4472, 16
      %v4775 = vrot.slane %v4773, 4
      %v4776 = vshll.u32 %v4472, 16
      %v4778 = vrot.slane %v4776, 5
      %v4779 = vor.u32 %v4775, %v4778
      %v4780 = vrot.slane %v4779, 4
      %v4782 = vshll.u32 %v4473, 16
      %v4784 = vrot.slane %v4782, 5
      %v4785 = vsel %vm754, %v4780, %v4784
      %v4786 = vshrl.u32 %v4473, 16
      %v4788 = vrot.slane %v4786, 4
      %v4789 = vor.u32 %v4788, %v4784
      %v4790 = vrot.slane %v4789, 4
      %v4792 = vshll.u32 %v4474, 16
      %v4794 = vrot.slane %v4792, 5
      %v4795 = vsel %vm754, %v4790, %v4794
      %v4797 = vshrl.u32 %v4475, 16
      %v4799 = vrot.slane %v4797, 4
      %v4800 = vshll.u32 %v4475, 16
      %v4802 = vrot.slane %v4800, 5
      %v4803 = vor.u32 %v4799, %v4802
      %v4804 = vrot.slane %v4803, 4
      %v4806 = vshll.u32 %v4476, 16
      %v4808 = vrot.slane %v4806, 5
      %v4809 = vsel %vm754, %v4804, %v4808
      %v4810 = vshrl.u32 %v4476, 16
      %v4812 = vrot.slane %v4810, 4
      %v4813 = vor.u32 %v4812, %v4808
      %v4814 = vrot.slane %v4813, 4
      %v4816 = vshll.u32 %v4477, 16
      %v4818 = vrot.slane %v4816, 5
      %v4819 = vsel %vm754, %v4814, %v4818
      %v4821 = vshrl.u32 %v4478, 16
      %v4823 = vrot.slane %v4821, 4
      %v4824 = vshll.u32 %v4478, 16
      %v4826 = vrot.slane %v4824, 5
      %v4827 = vor.u32 %v4823, %v4826
      %v4828 = vrot.slane %v4827, 4
      %v4830 = vshll.u32 %v4479, 16
      %v4832 = vrot.slane %v4830, 5
      %v4833 = vsel %vm754, %v4828, %v4832
      %v4834 = vshrl.u32 %v4479, 16
      %v4836 = vrot.slane %v4834, 4
      %v4837 = vor.u32 %v4836, %v4832
      %v4838 = vrot.slane %v4837, 4
      %v4840 = vshll.u32 %v4480, 16
      %v4842 = vrot.slane %v4840, 5
      %v4843 = vsel %vm754, %v4838, %v4842
      %v4845 = vshrl.u32 %v4481, 16
      %v4847 = vrot.slane %v4845, 4
      %v4848 = vshll.u32 %v4481, 16
      %v4850 = vrot.slane %v4848, 5
      %v4851 = vor.u32 %v4847, %v4850
      %v4852 = vrot.slane %v4851, 4
      %v4854 = vshll.u32 %v4482, 16
      %v4856 = vrot.slane %v4854, 5
      %v4857 = vsel %vm754, %v4852, %v4856
      %v4858 = vshrl.u32 %v4482, 16
      %v4860 = vrot.slane %v4858, 4
      %v4861 = vor.u32 %v4860, %v4856
      %v4862 = vrot.slane %v4861, 4
      %v4864 = vshll.u32 %v4483, 16
      %v4866 = vrot.slane %v4864, 5
      %v4867 = vsel %vm754, %v4862, %v4866
      %v4868 = vld [vmem:[#allocation2] sm:$0xff]
      %v4869 = vld [vmem:[#allocation2 + $0x8] sm:$0xff]
      %v4870 = vld [vmem:[#allocation2 + $0x10] sm:$0xff]
      %v4871 = vld [vmem:[#allocation2 + $0x18] sm:$0xff]
      %v4872 = vld [vmem:[#allocation2 + $0x20] sm:$0xff]
      %v4873 = vld [vmem:[#allocation2 + $0x28] sm:$0xff]
      %v4874 = vld [vmem:[#allocation2 + $0x30] sm:$0xff]
      %v4875 = vld [vmem:[#allocation2 + $0x38] sm:$0xff]
      %v4876 = vld [vmem:[#allocation2 + $0x40] sm:$0xff]
      %v4877 = vld [vmem:[#allocation2 + $0x48] sm:$0xff]
      %v4878 = vld [vmem:[#allocation2 + $0x50] sm:$0xff]
      %v4879 = vld [vmem:[#allocation2 + $0x58] sm:$0xff]
      %v4880 = vld [vmem:[#allocation2 + $0x60] sm:$0xff]
      %v4881 = vld [vmem:[#allocation2 + $0x68] sm:$0xff]
      %v4882 = vld [vmem:[#allocation2 + $0x70] sm:$0xff]
      %v4883 = vld [vmem:[#allocation2 + $0x78] sm:$0xff]
      %v4884 = vld [vmem:[#allocation2 + $0x80] sm:$0xff]
      %v4885 = vld [vmem:[#allocation2 + $0x88] sm:$0xff]
      %v4886 = vld [vmem:[#allocation2 + $0x90] sm:$0xff]
      %v4887 = vld [vmem:[#allocation2 + $0x98] sm:$0xff]
      %v4888 = vld [vmem:[#allocation2 + $0xa0] sm:$0xff]
      %v4889 = vld [vmem:[#allocation2 + $0xa8] sm:$0xff]
      %v4890 = vld [vmem:[#allocation2 + $0xb0] sm:$0xff]
      %v4891 = vld [vmem:[#allocation2 + $0xb8] sm:$0xff]
      %v4892 = vld [vmem:[#allocation2 + $0xc0] sm:$0xff]
      %v4893 = vld [vmem:[#allocation2 + $0xc8] sm:$0xff]
      %v4894 = vld [vmem:[#allocation2 + $0xd0] sm:$0xff]
      %v4895 = vld [vmem:[#allocation2 + $0xd8] sm:$0xff]
      %v4896 = vld [vmem:[#allocation2 + $0xe0] sm:$0xff]
      %v4897 = vld [vmem:[#allocation2 + $0xe8] sm:$0xff]
      %v4898 = vld [vmem:[#allocation2 + $0xf0] sm:$0xff]
      %v4899 = vld [vmem:[#allocation2 + $0xf8] sm:$0xff]
      %s4900 = scalar_lea.vmem %s210, 448
      %v4901 = vld [vmem:[%s4900] sm:$0xf]
      %v4902 = vld [vmem:[%s4900 + $0x4] sm:$0xf]
      %v4903 = vld [vmem:[%s4900 + $0x8] sm:$0xf]
      %v4904 = vld [vmem:[%s4900 + $0xc] sm:$0xf]
      %v4905 = vld [vmem:[%s4900 + $0x10] sm:$0xf]
      %v4906 = vld [vmem:[%s4900 + $0x14] sm:$0xf]
      %v4907 = vld [vmem:[%s4900 + $0x18] sm:$0xf]
      %v4908 = vld [vmem:[%s4900 + $0x1c] sm:$0xf]
      %v4909 = vld [vmem:[%s4900 + $0x20] sm:$0xf]
      %v4910 = vld [vmem:[%s4900 + $0x24] sm:$0xf]
      %v4911 = vld [vmem:[%s4900 + $0x28] sm:$0xf]
      %v4912 = vld [vmem:[%s4900 + $0x2c] sm:$0xf]
      %v4913 = vld [vmem:[%s4900 + $0x30] sm:$0xf]
      %v4914 = vld [vmem:[%s4900 + $0x34] sm:$0xf]
      %v4915 = vld [vmem:[%s4900 + $0x38] sm:$0xf]
      %v4916 = vld [vmem:[%s4900 + $0x3c] sm:$0xf]
      %v4917 = vunpack.c.l.b16 %v4497
      %v4918 = vunpack.c.l.b16 %v4507
      %v4919 = vunpack.c.l.b16 %v4521
      %v4920 = vunpack.c.l.b16 %v4531
      %v4921 = vunpack.c.l.b16 %v4545
      %v4922 = vunpack.c.l.b16 %v4555
      %v4923 = vunpack.c.l.b16 %v4569
      %v4924 = vunpack.c.l.b16 %v4579
      %v4925 = vunpack.c.l.b16 %v4593
      %v4926 = vunpack.c.l.b16 %v4603
      %v4927 = vunpack.c.l.b16 %v4617
      %v4928 = vunpack.c.l.b16 %v4627
      %v4929 = vunpack.c.l.b16 %v4641
      %v4930 = vunpack.c.l.b16 %v4651
      %v4931 = vunpack.c.l.b16 %v4665
      %v4932 = vunpack.c.l.b16 %v4675
      %v4933 = vunpack.c.l.b16 %v4689
      %v4934 = vunpack.c.l.b16 %v4699
      %v4935 = vunpack.c.l.b16 %v4713
      %v4936 = vunpack.c.l.b16 %v4723
      %v4937 = vunpack.c.l.b16 %v4737
      %v4938 = vunpack.c.l.b16 %v4747
      %v4939 = vunpack.c.l.b16 %v4761
      %v4940 = vunpack.c.l.b16 %v4771
      %v4941 = vunpack.c.l.b16 %v4785
      %v4942 = vunpack.c.l.b16 %v4795
      %v4943 = vunpack.c.l.b16 %v4809
      %v4944 = vunpack.c.l.b16 %v4819
      %v4945 = vunpack.c.l.b16 %v4833
      %v4946 = vunpack.c.l.b16 %v4843
      %v4947 = vunpack.c.l.b16 %v4857
      %v4948 = vunpack.c.l.b16 %v4867
      %v4949 = vpack.c.b16 %v4918, %v4917
      %v4950 = vpack.c.b16 %v4920, %v4919
      %v4951 = vpack.c.b16 %v4922, %v4921
      %v4952 = vpack.c.b16 %v4924, %v4923
      %v4953 = vpack.c.b16 %v4926, %v4925
      %v4954 = vpack.c.b16 %v4928, %v4927
      %v4955 = vpack.c.b16 %v4930, %v4929
      %v4956 = vpack.c.b16 %v4932, %v4931
      %v4957 = vpack.c.b16 %v4934, %v4933
      %v4958 = vpack.c.b16 %v4936, %v4935
      %v4959 = vpack.c.b16 %v4938, %v4937
      %v4960 = vpack.c.b16 %v4940, %v4939
      %v4961 = vpack.c.b16 %v4942, %v4941
      %v4962 = vpack.c.b16 %v4944, %v4943
      %v4963 = vpack.c.b16 %v4946, %v4945
      %v4964 = vpack.c.b16 %v4948, %v4947
      %v4997 = vunpack.c.l.b16 %v4901
      %v4998 = vunpack.c.l.b16 %v4902
      %v4999 = vunpack.c.l.b16 %v4903
      %v5000 = vunpack.c.l.b16 %v4904
      %v5001 = vunpack.c.l.b16 %v4905
      %v5002 = vunpack.c.l.b16 %v4906
      %v5003 = vunpack.c.l.b16 %v4907
      %v5004 = vunpack.c.l.b16 %v4908
      %v5005 = vunpack.c.l.b16 %v4909
      %v5006 = vunpack.c.l.b16 %v4910
      %v5007 = vunpack.c.l.b16 %v4911
      %v5008 = vunpack.c.l.b16 %v4912
      %v5009 = vunpack.c.l.b16 %v4913
      %v5010 = vunpack.c.l.b16 %v4914
      %v5011 = vunpack.c.l.b16 %v4915
      %v5012 = vunpack.c.l.b16 %v4916
      %v5013 = vpack.c.b16 %v4998, %v4997
      %v5014 = vpack.c.b16 %v5000, %v4999
      %v5015 = vpack.c.b16 %v5002, %v5001
      %v5016 = vpack.c.b16 %v5004, %v5003
      %v5017 = vpack.c.b16 %v5006, %v5005
      %v5018 = vpack.c.b16 %v5008, %v5007
      %v5019 = vpack.c.b16 %v5010, %v5009
      %v5020 = vpack.c.b16 %v5012, %v5011
      %5029 = vmatprep.subr.bf16.mxu0 0
      %5030 = vmatpush1.bf16.msra.mxu0 %v5013
      %5031 = vmatprep.subr.bf16.mxu0 0
      %5032 = vmatpush1.bf16.msra.mxu0 %v5014
      %5033 = vmatprep.subr.bf16.mxu0 0
      %5034 = vmatpush1.bf16.msra.mxu0 %v5015
      %5035 = vmatprep.subr.bf16.mxu0 0
      %5036 = vmatpush1.bf16.msra.mxu0 %v5016
      %5037 = vmatprep.subr.bf16.mxu0 0
      %5038 = vmatpush1.bf16.msra.mxu0 %v5017
      %5039 = vmatprep.subr.bf16.mxu0 0
      %5040 = vmatpush1.bf16.msra.mxu0 %v5018
      %5041 = vmatprep.subr.bf16.mxu0 0
      %5042 = vmatpush1.bf16.msra.mxu0 %v5019
      %5043 = vmatprep.subr.bf16.mxu0 0
      %5044 = vmatpush1.bf16.msra.mxu0 %v5020
      %5045 = vmatprep.subr.bf16.mxu0 0
      %5046 = vmatpush1.bf16.msra.mxu0 0
      %5047 = vmatprep.subr.bf16.mxu0 0
      %5048 = vmatpush1.bf16.msra.mxu0 0
      %5049 = vmatprep.subr.bf16.mxu0 0
      %5050 = vmatpush1.bf16.msra.mxu0 0
      %5051 = vmatprep.subr.bf16.mxu0 0
      %5052 = vmatpush1.bf16.msra.mxu0 0
      %5053 = vmatprep.subr.bf16.mxu0 0
      %5054 = vmatpush1.bf16.msra.mxu0 0
      %5055 = vmatprep.subr.bf16.mxu0 0
      %5056 = vmatpush1.bf16.msra.mxu0 0
      %5057 = vmatprep.subr.bf16.mxu0 0
      %5058 = vmatpush1.bf16.msra.mxu0 0
      %5059 = vmatprep.subr.bf16.mxu0 0
      %5060 = vmatpush1.bf16.msra.mxu0 0
      %5061 = vmatprep.mubr.bf16.mxu0 0
      %5062 = vmatmul.mubr.bf16.gmra.mrb[0].mxu0 %v4949
      %v5063 = vpop.f32.mrb[0].mxu0
      %v5064 = vadd.f32 0.0, %v5063
      %v5065 = vpop.f32.mrb[0].mxu0
      %v5066 = vpop.f32.mrb[0].mxu0
      %v5067 = vadd.f32 0.0, %v5066
      %v5068 = vpop.f32.mrb[0].mxu0
      %5069 = vmatprep.mubr.bf16.mxu0 0
      %5070 = vmatmul.mubr.bf16.gmra.mrb[0].mxu0 %v4950
      %v5071 = vpop.f32.mrb[0].mxu0
      %v5072 = vadd.f32 0.0, %v5071
      %v5073 = vpop.f32.mrb[0].mxu0
      %v5074 = vpop.f32.mrb[0].mxu0
      %v5075 = vadd.f32 0.0, %v5074
      %v5076 = vpop.f32.mrb[0].mxu0
      %5077 = vmatprep.mubr.bf16.mxu0 0
      %5078 = vmatmul.mubr.bf16.gmra.mrb[0].mxu0 %v4951
      %v5079 = vpop.f32.mrb[0].mxu0
      %v5080 = vadd.f32 0.0, %v5079
      %v5081 = vpop.f32.mrb[0].mxu0
      %v5082 = vpop.f32.mrb[0].mxu0
      %v5083 = vadd.f32 0.0, %v5082
      %v5084 = vpop.f32.mrb[0].mxu0
      %5085 = vmatprep.mubr.bf16.mxu0 0
      %5086 = vmatmul.mubr.bf16.gmra.mrb[0].mxu0 %v4952
      %v5087 = vpop.f32.mrb[0].mxu0
      %v5088 = vadd.f32 0.0, %v5087
      %v5089 = vpop.f32.mrb[0].mxu0
      %v5090 = vpop.f32.mrb[0].mxu0
      %v5091 = vadd.f32 0.0, %v5090
      %v5092 = vpop.f32.mrb[0].mxu0
      %5093 = vmatprep.mubr.bf16.mxu0 0
      %5094 = vmatmul.mubr.bf16.gmra.mrb[0].mxu0 %v4953
      %v5095 = vpop.f32.mrb[0].mxu0
      %v5096 = vadd.f32 0.0, %v5095
      %v5097 = vpop.f32.mrb[0].mxu0
      %v5098 = vpop.f32.mrb[0].mxu0
      %v5099 = vadd.f32 0.0, %v5098
      %v5100 = vpop.f32.mrb[0].mxu0
      %5101 = vmatprep.mubr.bf16.mxu0 0
      %5102 = vmatmul.mubr.bf16.gmra.mrb[0].mxu0 %v4954
      %v5103 = vpop.f32.mrb[0].mxu0
      %v5104 = vadd.f32 0.0, %v5103
      %v5105 = vpop.f32.mrb[0].mxu0
      %v5106 = vpop.f32.mrb[0].mxu0
      %v5107 = vadd.f32 0.0, %v5106
      %v5108 = vpop.f32.mrb[0].mxu0
      %5109 = vmatprep.mubr.bf16.mxu0 0
      %5110 = vmatmul.mubr.bf16.gmra.mrb[0].mxu0 %v4955
      %v5111 = vpop.f32.mrb[0].mxu0
      %v5112 = vadd.f32 0.0, %v5111
      %v5113 = vpop.f32.mrb[0].mxu0
      %v5114 = vpop.f32.mrb[0].mxu0
      %v5115 = vadd.f32 0.0, %v5114
      %v5116 = vpop.f32.mrb[0].mxu0
      %5117 = vmatprep.mubr.bf16.mxu0 0
      %5118 = vmatmul.mubr.bf16.gmra.mrb[0].mxu0 %v4956
      %v5119 = vpop.f32.mrb[0].mxu0
      %v5120 = vadd.f32 0.0, %v5119
      %v5121 = vpop.f32.mrb[0].mxu0
      %v5122 = vpop.f32.mrb[0].mxu0
      %v5123 = vadd.f32 0.0, %v5122
      %v5124 = vpop.f32.mrb[0].mxu0
      %5125 = vmatprep.mubr.bf16.mxu0 0
      %5126 = vmatmul.mubr.bf16.gmra.mrb[0].mxu0 %v4957
      %v5127 = vpop.f32.mrb[0].mxu0
      %v5128 = vadd.f32 0.0, %v5127
      %v5129 = vpop.f32.mrb[0].mxu0
      %v5130 = vpop.f32.mrb[0].mxu0
      %v5131 = vadd.f32 0.0, %v5130
      %v5132 = vpop.f32.mrb[0].mxu0
      %5133 = vmatprep.mubr.bf16.mxu0 0
      %5134 = vmatmul.mubr.bf16.gmra.mrb[0].mxu0 %v4958
      %v5135 = vpop.f32.mrb[0].mxu0
      %v5136 = vadd.f32 0.0, %v5135
      %v5137 = vpop.f32.mrb[0].mxu0
      %v5138 = vpop.f32.mrb[0].mxu0
      %v5139 = vadd.f32 0.0, %v5138
      %v5140 = vpop.f32.mrb[0].mxu0
      %5141 = vmatprep.mubr.bf16.mxu0 0
      %5142 = vmatmul.mubr.bf16.gmra.mrb[0].mxu0 %v4959
      %v5143 = vpop.f32.mrb[0].mxu0
      %v5144 = vadd.f32 0.0, %v5143
      %v5145 = vpop.f32.mrb[0].mxu0
      %v5146 = vpop.f32.mrb[0].mxu0
      %v5147 = vadd.f32 0.0, %v5146
      %v5148 = vpop.f32.mrb[0].mxu0
      %5149 = vmatprep.mubr.bf16.mxu0 0
      %5150 = vmatmul.mubr.bf16.gmra.mrb[0].mxu0 %v4960
      %v5151 = vpop.f32.mrb[0].mxu0
      %v5152 = vadd.f32 0.0, %v5151
      %v5153 = vpop.f32.mrb[0].mxu0
      %v5154 = vpop.f32.mrb[0].mxu0
      %v5155 = vadd.f32 0.0, %v5154
      %v5156 = vpop.f32.mrb[0].mxu0
      %5157 = vmatprep.mubr.bf16.mxu0 0
      %5158 = vmatmul.mubr.bf16.gmra.mrb[0].mxu0 %v4961
      %v5159 = vpop.f32.mrb[0].mxu0
      %v5160 = vadd.f32 0.0, %v5159
      %v5161 = vpop.f32.mrb[0].mxu0
      %v5162 = vpop.f32.mrb[0].mxu0
      %v5163 = vadd.f32 0.0, %v5162
      %v5164 = vpop.f32.mrb[0].mxu0
      %5165 = vmatprep.mubr.bf16.mxu0 0
      %5166 = vmatmul.mubr.bf16.gmra.mrb[0].mxu0 %v4962
      %v5167 = vpop.f32.mrb[0].mxu0
      %v5168 = vadd.f32 0.0, %v5167
      %v5169 = vpop.f32.mrb[0].mxu0
      %v5170 = vpop.f32.mrb[0].mxu0
      %v5171 = vadd.f32 0.0, %v5170
      %v5172 = vpop.f32.mrb[0].mxu0
      %5173 = vmatprep.mubr.bf16.mxu0 0
      %5174 = vmatmul.mubr.bf16.gmra.mrb[0].mxu0 %v4963
      %v5175 = vpop.f32.mrb[0].mxu0
      %v5176 = vadd.f32 0.0, %v5175
      %v5177 = vpop.f32.mrb[0].mxu0
      %v5178 = vpop.f32.mrb[0].mxu0
      %v5179 = vadd.f32 0.0, %v5178
      %v5180 = vpop.f32.mrb[0].mxu0
      %5181 = vmatprep.mubr.bf16.mxu0 0
      %5182 = vmatmul.mubr.bf16.gmra.mrb[0].mxu0 %v4964
      %v5183 = vpop.f32.mrb[0].mxu0
      %v5184 = vadd.f32 0.0, %v5183
      %v5185 = vpop.f32.mrb[0].mxu0
      %v5186 = vpop.f32.mrb[0].mxu0
      %v5187 = vadd.f32 0.0, %v5186
      %v5188 = vpop.f32.mrb[0].mxu0
      %5189 = vdwg.mxu0
      %v5190 = vadd.f32 %v4868, %v5064
      %v5191 = vadd.f32 %v4869, %v5067
      %v5192 = vadd.f32 %v4870, %v5072
      %v5193 = vadd.f32 %v4871, %v5075
      %v5194 = vadd.f32 %v4872, %v5080
      %v5195 = vadd.f32 %v4873, %v5083
      %v5196 = vadd.f32 %v4874, %v5088
      %v5197 = vadd.f32 %v4875, %v5091
      %v5198 = vadd.f32 %v4876, %v5096
      %v5199 = vadd.f32 %v4877, %v5099
      %v5200 = vadd.f32 %v4878, %v5104
      %v5201 = vadd.f32 %v4879, %v5107
      %v5202 = vadd.f32 %v4880, %v5112
      %v5203 = vadd.f32 %v4881, %v5115
      %v5204 = vadd.f32 %v4882, %v5120
      %v5205 = vadd.f32 %v4883, %v5123
      %v5206 = vadd.f32 %v4884, %v5128
      %v5207 = vadd.f32 %v4885, %v5131
      %v5208 = vadd.f32 %v4886, %v5136
      %v5209 = vadd.f32 %v4887, %v5139
      %v5210 = vadd.f32 %v4888, %v5144
      %v5211 = vadd.f32 %v4889, %v5147
      %v5212 = vadd.f32 %v4890, %v5152
      %v5213 = vadd.f32 %v4891, %v5155
      %v5214 = vadd.f32 %v4892, %v5160
      %v5215 = vadd.f32 %v4893, %v5163
      %v5216 = vadd.f32 %v4894, %v5168
      %v5217 = vadd.f32 %v4895, %v5171
      %v5218 = vadd.f32 %v4896, %v5176
      %v5219 = vadd.f32 %v4897, %v5179
      %v5220 = vadd.f32 %v4898, %v5184
      %v5221 = vadd.f32 %v4899, %v5187
      %5222 = vst [vmem:[#allocation2] sm:$0xff] %v5190
      %5223 = vst [vmem:[#allocation2 + $0x8] sm:$0xff] %v5191
      %5224 = vst [vmem:[#allocation2 + $0x10] sm:$0xff] %v5192
      %5225 = vst [vmem:[#allocation2 + $0x18] sm:$0xff] %v5193
      %5226 = vst [vmem:[#allocation2 + $0x20] sm:$0xff] %v5194
      %5227 = vst [vmem:[#allocation2 + $0x28] sm:$0xff] %v5195
      %5228 = vst [vmem:[#allocation2 + $0x30] sm:$0xff] %v5196
      %5229 = vst [vmem:[#allocation2 + $0x38] sm:$0xff] %v5197
      %5230 = vst [vmem:[#allocation2 + $0x40] sm:$0xff] %v5198
      %5231 = vst [vmem:[#allocation2 + $0x48] sm:$0xff] %v5199
      %5232 = vst [vmem:[#allocation2 + $0x50] sm:$0xff] %v5200
      %5233 = vst [vmem:[#allocation2 + $0x58] sm:$0xff] %v5201
      %5234 = vst [vmem:[#allocation2 + $0x60] sm:$0xff] %v5202
      %5235 = vst [vmem:[#allocation2 + $0x68] sm:$0xff] %v5203
      %5236 = vst [vmem:[#allocation2 + $0x70] sm:$0xff] %v5204
      %5237 = vst [vmem:[#allocation2 + $0x78] sm:$0xff] %v5205
      %5238 = vst [vmem:[#allocation2 + $0x80] sm:$0xff] %v5206
      %5239 = vst [vmem:[#allocation2 + $0x88] sm:$0xff] %v5207
      %5240 = vst [vmem:[#allocation2 + $0x90] sm:$0xff] %v5208
      %5241 = vst [vmem:[#allocation2 + $0x98] sm:$0xff] %v5209
      %5242 = vst [vmem:[#allocation2 + $0xa0] sm:$0xff] %v5210
      %5243 = vst [vmem:[#allocation2 + $0xa8] sm:$0xff] %v5211
      %5244 = vst [vmem:[#allocation2 + $0xb0] sm:$0xff] %v5212
      %5245 = vst [vmem:[#allocation2 + $0xb8] sm:$0xff] %v5213
      %5246 = vst [vmem:[#allocation2 + $0xc0] sm:$0xff] %v5214
      %5247 = vst [vmem:[#allocation2 + $0xc8] sm:$0xff] %v5215
      %5248 = vst [vmem:[#allocation2 + $0xd0] sm:$0xff] %v5216
      %5249 = vst [vmem:[#allocation2 + $0xd8] sm:$0xff] %v5217
      %5250 = vst [vmem:[#allocation2 + $0xe0] sm:$0xff] %v5218
      %5251 = vst [vmem:[#allocation2 + $0xe8] sm:$0xff] %v5219
      %5252 = vst [vmem:[#allocation2 + $0xf0] sm:$0xff] %v5220
      %5253 = vst [vmem:[#allocation2 + $0xf8] sm:$0xff] %v5221
      %v5254 = vld [vmem:[%s3985] sm:$0xe]
      %v5255 = vld [vmem:[%s3985 + $0x4] sm:$0xf]
      %v5256 = vld [vmem:[%s3985 + $0x8] sm:$0x1]
      %v5257 = vld [vmem:[%s3985 + $0xc] sm:$0xe]
      %v5258 = vld [vmem:[%s3985 + $0x10] sm:$0xf]
      %v5259 = vld [vmem:[%s3985 + $0x14] sm:$0x1]
      %v5260 = vld [vmem:[%s3985 + $0x18] sm:$0xe]
      %v5261 = vld [vmem:[%s3985 + $0x1c] sm:$0xf]
      %v5262 = vld [vmem:[%s3985 + $0x20] sm:$0x1]
      %v5263 = vld [vmem:[%s3985 + $0x24] sm:$0xe]
      %v5264 = vld [vmem:[%s3985 + $0x28] sm:$0xf]
      %v5265 = vld [vmem:[%s3985 + $0x2c] sm:$0x1]
      %v5266 = vld [vmem:[%s3985 + $0x30] sm:$0xe]
      %v5267 = vld [vmem:[%s3985 + $0x34] sm:$0xf]
      %v5268 = vld [vmem:[%s3985 + $0x38] sm:$0x1]
      %v5269 = vld [vmem:[%s3985 + $0x3c] sm:$0xe]
      %v5270 = vld [vmem:[%s3985 + $0x40] sm:$0xf]
      %v5271 = vld [vmem:[%s3985 + $0x44] sm:$0x1]
      %v5272 = vld [vmem:[%s3985 + $0x48] sm:$0xe]
      %v5273 = vld [vmem:[%s3985 + $0x4c] sm:$0xf]
      %v5274 = vld [vmem:[%s3985 + $0x50] sm:$0x1]
      %v5275 = vld [vmem:[%s3985 + $0x54] sm:$0xe]
      %v5276 = vld [vmem:[%s3985 + $0x58] sm:$0xf]
      %v5277 = vld [vmem:[%s3985 + $0x5c] sm:$0x1]
      %v5278 = vld [vmem:[%s3985 + $0x60] sm:$0xe]
      %v5279 = vld [vmem:[%s3985 + $0x64] sm:$0xf]
      %v5280 = vld [vmem:[%s3985 + $0x68] sm:$0x1]
      %v5281 = vld [vmem:[%s3985 + $0x6c] sm:$0xe]
      %v5282 = vld [vmem:[%s3985 + $0x70] sm:$0xf]
      %v5283 = vld [vmem:[%s3985 + $0x74] sm:$0x1]
      %v5284 = vld [vmem:[%s3985 + $0x78] sm:$0xe]
      %v5285 = vld [vmem:[%s3985 + $0x7c] sm:$0xf]
      %v5286 = vld [vmem:[%s3985 + $0x80] sm:$0x1]
      %v5287 = vld [vmem:[%s3985 + $0x84] sm:$0xe]
      %v5288 = vld [vmem:[%s3985 + $0x88] sm:$0xf]
      %v5289 = vld [vmem:[%s3985 + $0x8c] sm:$0x1]
      %v5290 = vld [vmem:[%s3985 + $0x90] sm:$0xe]
      %v5291 = vld [vmem:[%s3985 + $0x94] sm:$0xf]
      %v5292 = vld [vmem:[%s3985 + $0x98] sm:$0x1]
      %v5293 = vld [vmem:[%s3985 + $0x9c] sm:$0xe]
      %v5294 = vld [vmem:[%s3985 + $0xa0] sm:$0xf]
      %v5295 = vld [vmem:[%s3985 + $0xa4] sm:$0x1]
      %v5296 = vld [vmem:[%s3985 + $0xa8] sm:$0xe]
      %v5297 = vld [vmem:[%s3985 + $0xac] sm:$0xf]
      %v5298 = vld [vmem:[%s3985 + $0xb0] sm:$0x1]
      %v5299 = vld [vmem:[%s3985 + $0xb4] sm:$0xe]
      %v5300 = vld [vmem:[%s3985 + $0xb8] sm:$0xf]
      %v5301 = vld [vmem:[%s3985 + $0xbc] sm:$0x1]
      %v5350 = vrot.slane %v5254, 5
      %v5351 = vrot.slane %v5350, 4
      %v5352 = vrot.slane %v5255, 5
      %v5353 = vsel %vm1623, %v5351, %v5352
      %v5354 = vrot.slane %v5352, 4
      %v5355 = vrot.slane %v5256, 5
      %v5356 = vsel %vm1623, %v5354, %v5355
      %v5357 = vrot.slane %v5257, 5
      %v5358 = vrot.slane %v5357, 4
      %v5359 = vrot.slane %v5258, 5
      %v5360 = vsel %vm1623, %v5358, %v5359
      %v5361 = vrot.slane %v5359, 4
      %v5362 = vrot.slane %v5259, 5
      %v5363 = vsel %vm1623, %v5361, %v5362
      %v5364 = vrot.slane %v5260, 5
      %v5365 = vrot.slane %v5364, 4
      %v5366 = vrot.slane %v5261, 5
      %v5367 = vsel %vm1623, %v5365, %v5366
      %v5368 = vrot.slane %v5366, 4
      %v5369 = vrot.slane %v5262, 5
      %v5370 = vsel %vm1623, %v5368, %v5369
      %v5371 = vrot.slane %v5263, 5
      %v5372 = vrot.slane %v5371, 4
      %v5373 = vrot.slane %v5264, 5
      %v5374 = vsel %vm1623, %v5372, %v5373
      %v5375 = vrot.slane %v5373, 4
      %v5376 = vrot.slane %v5265, 5
      %v5377 = vsel %vm1623, %v5375, %v5376
      %v5378 = vrot.slane %v5266, 5
      %v5379 = vrot.slane %v5378, 4
      %v5380 = vrot.slane %v5267, 5
      %v5381 = vsel %vm1623, %v5379, %v5380
      %v5382 = vrot.slane %v5380, 4
      %v5383 = vrot.slane %v5268, 5
      %v5384 = vsel %vm1623, %v5382, %v5383
      %v5385 = vrot.slane %v5269, 5
      %v5386 = vrot.slane %v5385, 4
      %v5387 = vrot.slane %v5270, 5
      %v5388 = vsel %vm1623, %v5386, %v5387
      %v5389 = vrot.slane %v5387, 4
      %v5390 = vrot.slane %v5271, 5
      %v5391 = vsel %vm1623, %v5389, %v5390
      %v5392 = vrot.slane %v5272, 5
      %v5393 = vrot.slane %v5392, 4
      %v5394 = vrot.slane %v5273, 5
      %v5395 = vsel %vm1623, %v5393, %v5394
      %v5396 = vrot.slane %v5394, 4
      %v5397 = vrot.slane %v5274, 5
      %v5398 = vsel %vm1623, %v5396, %v5397
      %v5399 = vrot.slane %v5275, 5
      %v5400 = vrot.slane %v5399, 4
      %v5401 = vrot.slane %v5276, 5
      %v5402 = vsel %vm1623, %v5400, %v5401
      %v5403 = vrot.slane %v5401, 4
      %v5404 = vrot.slane %v5277, 5
      %v5405 = vsel %vm1623, %v5403, %v5404
      %v5406 = vrot.slane %v5278, 5
      %v5407 = vrot.slane %v5406, 4
      %v5408 = vrot.slane %v5279, 5
      %v5409 = vsel %vm1623, %v5407, %v5408
      %v5410 = vrot.slane %v5408, 4
      %v5411 = vrot.slane %v5280, 5
      %v5412 = vsel %vm1623, %v5410, %v5411
      %v5413 = vrot.slane %v5281, 5
      %v5414 = vrot.slane %v5413, 4
      %v5415 = vrot.slane %v5282, 5
      %v5416 = vsel %vm1623, %v5414, %v5415
      %v5417 = vrot.slane %v5415, 4
      %v5418 = vrot.slane %v5283, 5
      %v5419 = vsel %vm1623, %v5417, %v5418
      %v5420 = vrot.slane %v5284, 5
      %v5421 = vrot.slane %v5420, 4
      %v5422 = vrot.slane %v5285, 5
      %v5423 = vsel %vm1623, %v5421, %v5422
      %v5424 = vrot.slane %v5422, 4
      %v5425 = vrot.slane %v5286, 5
      %v5426 = vsel %vm1623, %v5424, %v5425
      %v5427 = vrot.slane %v5287, 5
      %v5428 = vrot.slane %v5427, 4
      %v5429 = vrot.slane %v5288, 5
      %v5430 = vsel %vm1623, %v5428, %v5429
      %v5431 = vrot.slane %v5429, 4
      %v5432 = vrot.slane %v5289, 5
      %v5433 = vsel %vm1623, %v5431, %v5432
      %v5434 = vrot.slane %v5290, 5
      %v5435 = vrot.slane %v5434, 4
      %v5436 = vrot.slane %v5291, 5
      %v5437 = vsel %vm1623, %v5435, %v5436
      %v5438 = vrot.slane %v5436, 4
      %v5439 = vrot.slane %v5292, 5
      %v5440 = vsel %vm1623, %v5438, %v5439
      %v5441 = vrot.slane %v5293, 5
      %v5442 = vrot.slane %v5441, 4
      %v5443 = vrot.slane %v5294, 5
      %v5444 = vsel %vm1623, %v5442, %v5443
      %v5445 = vrot.slane %v5443, 4
      %v5446 = vrot.slane %v5295, 5
      %v5447 = vsel %vm1623, %v5445, %v5446
      %v5448 = vrot.slane %v5296, 5
      %v5449 = vrot.slane %v5448, 4
      %v5450 = vrot.slane %v5297, 5
      %v5451 = vsel %vm1623, %v5449, %v5450
      %v5452 = vrot.slane %v5450, 4
      %v5453 = vrot.slane %v5298, 5
      %v5454 = vsel %vm1623, %v5452, %v5453
      %v5455 = vrot.slane %v5299, 5
      %v5456 = vrot.slane %v5455, 4
      %v5457 = vrot.slane %v5300, 5
      %v5458 = vsel %vm1623, %v5456, %v5457
      %v5459 = vrot.slane %v5457, 4
      %v5460 = vrot.slane %v5301, 5
      %v5461 = vsel %vm1623, %v5459, %v5460
      %v5462 = vld [vmem:[#allocation2] sm:$0xff]
      %v5463 = vld [vmem:[#allocation2 + $0x8] sm:$0xff]
      %v5464 = vld [vmem:[#allocation2 + $0x10] sm:$0xff]
      %v5465 = vld [vmem:[#allocation2 + $0x18] sm:$0xff]
      %v5466 = vld [vmem:[#allocation2 + $0x20] sm:$0xff]
      %v5467 = vld [vmem:[#allocation2 + $0x28] sm:$0xff]
      %v5468 = vld [vmem:[#allocation2 + $0x30] sm:$0xff]
      %v5469 = vld [vmem:[#allocation2 + $0x38] sm:$0xff]
      %v5470 = vld [vmem:[#allocation2 + $0x40] sm:$0xff]
      %v5471 = vld [vmem:[#allocation2 + $0x48] sm:$0xff]
      %v5472 = vld [vmem:[#allocation2 + $0x50] sm:$0xff]
      %v5473 = vld [vmem:[#allocation2 + $0x58] sm:$0xff]
      %v5474 = vld [vmem:[#allocation2 + $0x60] sm:$0xff]
      %v5475 = vld [vmem:[#allocation2 + $0x68] sm:$0xff]
      %v5476 = vld [vmem:[#allocation2 + $0x70] sm:$0xff]
      %v5477 = vld [vmem:[#allocation2 + $0x78] sm:$0xff]
      %v5478 = vld [vmem:[#allocation2 + $0x80] sm:$0xff]
      %v5479 = vld [vmem:[#allocation2 + $0x88] sm:$0xff]
      %v5480 = vld [vmem:[#allocation2 + $0x90] sm:$0xff]
      %v5481 = vld [vmem:[#allocation2 + $0x98] sm:$0xff]
      %v5482 = vld [vmem:[#allocation2 + $0xa0] sm:$0xff]
      %v5483 = vld [vmem:[#allocation2 + $0xa8] sm:$0xff]
      %v5484 = vld [vmem:[#allocation2 + $0xb0] sm:$0xff]
      %v5485 = vld [vmem:[#allocation2 + $0xb8] sm:$0xff]
      %v5486 = vld [vmem:[#allocation2 + $0xc0] sm:$0xff]
      %v5487 = vld [vmem:[#allocation2 + $0xc8] sm:$0xff]
      %v5488 = vld [vmem:[#allocation2 + $0xd0] sm:$0xff]
      %v5489 = vld [vmem:[#allocation2 + $0xd8] sm:$0xff]
      %v5490 = vld [vmem:[#allocation2 + $0xe0] sm:$0xff]
      %v5491 = vld [vmem:[#allocation2 + $0xe8] sm:$0xff]
      %v5492 = vld [vmem:[#allocation2 + $0xf0] sm:$0xff]
      %v5493 = vld [vmem:[#allocation2 + $0xf8] sm:$0xff]
      %s5494 = scalar_lea.vmem %s210, 512
      %v5495 = vld [vmem:[%s5494] sm:$0xf]
      %v5496 = vld [vmem:[%s5494 + $0x4] sm:$0xf]
      %v5497 = vld [vmem:[%s5494 + $0x8] sm:$0xf]
      %v5498 = vld [vmem:[%s5494 + $0xc] sm:$0xf]
      %v5499 = vld [vmem:[%s5494 + $0x10] sm:$0xf]
      %v5500 = vld [vmem:[%s5494 + $0x14] sm:$0xf]
      %v5501 = vld [vmem:[%s5494 + $0x18] sm:$0xf]
      %v5502 = vld [vmem:[%s5494 + $0x1c] sm:$0xf]
      %v5503 = vld [vmem:[%s5494 + $0x20] sm:$0xf]
      %v5504 = vld [vmem:[%s5494 + $0x24] sm:$0xf]
      %v5505 = vld [vmem:[%s5494 + $0x28] sm:$0xf]
      %v5506 = vld [vmem:[%s5494 + $0x2c] sm:$0xf]
      %v5507 = vld [vmem:[%s5494 + $0x30] sm:$0xf]
      %v5508 = vld [vmem:[%s5494 + $0x34] sm:$0xf]
      %v5509 = vld [vmem:[%s5494 + $0x38] sm:$0xf]
      %v5510 = vld [vmem:[%s5494 + $0x3c] sm:$0xf]
      %v5511 = vunpack.c.l.b16 %v5353
      %v5512 = vunpack.c.l.b16 %v5356
      %v5513 = vunpack.c.l.b16 %v5360
      %v5514 = vunpack.c.l.b16 %v5363
      %v5515 = vunpack.c.l.b16 %v5367
      %v5516 = vunpack.c.l.b16 %v5370
      %v5517 = vunpack.c.l.b16 %v5374
      %v5518 = vunpack.c.l.b16 %v5377
      %v5519 = vunpack.c.l.b16 %v5381
      %v5520 = vunpack.c.l.b16 %v5384
      %v5521 = vunpack.c.l.b16 %v5388
      %v5522 = vunpack.c.l.b16 %v5391
      %v5523 = vunpack.c.l.b16 %v5395
      %v5524 = vunpack.c.l.b16 %v5398
      %v5525 = vunpack.c.l.b16 %v5402
      %v5526 = vunpack.c.l.b16 %v5405
      %v5527 = vunpack.c.l.b16 %v5409
      %v5528 = vunpack.c.l.b16 %v5412
      %v5529 = vunpack.c.l.b16 %v5416
      %v5530 = vunpack.c.l.b16 %v5419
      %v5531 = vunpack.c.l.b16 %v5423
      %v5532 = vunpack.c.l.b16 %v5426
      %v5533 = vunpack.c.l.b16 %v5430
      %v5534 = vunpack.c.l.b16 %v5433
      %v5535 = vunpack.c.l.b16 %v5437
      %v5536 = vunpack.c.l.b16 %v5440
      %v5537 = vunpack.c.l.b16 %v5444
      %v5538 = vunpack.c.l.b16 %v5447
      %v5539 = vunpack.c.l.b16 %v5451
      %v5540 = vunpack.c.l.b16 %v5454
      %v5541 = vunpack.c.l.b16 %v5458
      %v5542 = vunpack.c.l.b16 %v5461
      %v5543 = vpack.c.b16 %v5512, %v5511
      %v5544 = vpack.c.b16 %v5514, %v5513
      %v5545 = vpack.c.b16 %v5516, %v5515
      %v5546 = vpack.c.b16 %v5518, %v5517
      %v5547 = vpack.c.b16 %v5520, %v5519
      %v5548 = vpack.c.b16 %v5522, %v5521
      %v5549 = vpack.c.b16 %v5524, %v5523
      %v5550 = vpack.c.b16 %v5526, %v5525
      %v5551 = vpack.c.b16 %v5528, %v5527
      %v5552 = vpack.c.b16 %v5530, %v5529
      %v5553 = vpack.c.b16 %v5532, %v5531
      %v5554 = vpack.c.b16 %v5534, %v5533
      %v5555 = vpack.c.b16 %v5536, %v5535
      %v5556 = vpack.c.b16 %v5538, %v5537
      %v5557 = vpack.c.b16 %v5540, %v5539
      %v5558 = vpack.c.b16 %v5542, %v5541
      %v5591 = vunpack.c.l.b16 %v5495
      %v5592 = vunpack.c.l.b16 %v5496
      %v5593 = vunpack.c.l.b16 %v5497
      %v5594 = vunpack.c.l.b16 %v5498
      %v5595 = vunpack.c.l.b16 %v5499
      %v5596 = vunpack.c.l.b16 %v5500
      %v5597 = vunpack.c.l.b16 %v5501
      %v5598 = vunpack.c.l.b16 %v5502
      %v5599 = vunpack.c.l.b16 %v5503
      %v5600 = vunpack.c.l.b16 %v5504
      %v5601 = vunpack.c.l.b16 %v5505
      %v5602 = vunpack.c.l.b16 %v5506
      %v5603 = vunpack.c.l.b16 %v5507
      %v5604 = vunpack.c.l.b16 %v5508
      %v5605 = vunpack.c.l.b16 %v5509
      %v5606 = vunpack.c.l.b16 %v5510
      %v5607 = vpack.c.b16 %v5592, %v5591
      %v5608 = vpack.c.b16 %v5594, %v5593
      %v5609 = vpack.c.b16 %v5596, %v5595
      %v5610 = vpack.c.b16 %v5598, %v5597
      %v5611 = vpack.c.b16 %v5600, %v5599
      %v5612 = vpack.c.b16 %v5602, %v5601
      %v5613 = vpack.c.b16 %v5604, %v5603
      %v5614 = vpack.c.b16 %v5606, %v5605
      %5623 = vmatprep.subr.bf16.mxu0 0
      %5624 = vmatpush1.bf16.msra.mxu0 %v5607
      %5625 = vmatprep.subr.bf16.mxu0 0
      %5626 = vmatpush1.bf16.msra.mxu0 %v5608
      %5627 = vmatprep.subr.bf16.mxu0 0
      %5628 = vmatpush1.bf16.msra.mxu0 %v5609
      %5629 = vmatprep.subr.bf16.mxu0 0
      %5630 = vmatpush1.bf16.msra.mxu0 %v5610
      %5631 = vmatprep.subr.bf16.mxu0 0
      %5632 = vmatpush1.bf16.msra.mxu0 %v5611
      %5633 = vmatprep.subr.bf16.mxu0 0
      %5634 = vmatpush1.bf16.msra.mxu0 %v5612
      %5635 = vmatprep.subr.bf16.mxu0 0
      %5636 = vmatpush1.bf16.msra.mxu0 %v5613
      %5637 = vmatprep.subr.bf16.mxu0 0
      %5638 = vmatpush1.bf16.msra.mxu0 %v5614
      %5639 = vmatprep.subr.bf16.mxu0 0
      %5640 = vmatpush1.bf16.msra.mxu0 0
      %5641 = vmatprep.subr.bf16.mxu0 0
      %5642 = vmatpush1.bf16.msra.mxu0 0
      %5643 = vmatprep.subr.bf16.mxu0 0
      %5644 = vmatpush1.bf16.msra.mxu0 0
      %5645 = vmatprep.subr.bf16.mxu0 0
      %5646 = vmatpush1.bf16.msra.mxu0 0
      %5647 = vmatprep.subr.bf16.mxu0 0
      %5648 = vmatpush1.bf16.msra.mxu0 0
      %5649 = vmatprep.subr.bf16.mxu0 0
      %5650 = vmatpush1.bf16.msra.mxu0 0
      %5651 = vmatprep.subr.bf16.mxu0 0
      %5652 = vmatpush1.bf16.msra.mxu0 0
      %5653 = vmatprep.subr.bf16.mxu0 0
      %5654 = vmatpush1.bf16.msra.mxu0 0
      %5655 = vmatprep.mubr.bf16.mxu0 0
      %5656 = vmatmul.mubr.bf16.gmra.mrb[0].mxu0 %v5543
      %v5657 = vpop.f32.mrb[0].mxu0
      %v5658 = vadd.f32 0.0, %v5657
      %v5659 = vpop.f32.mrb[0].mxu0
      %v5660 = vpop.f32.mrb[0].mxu0
      %v5661 = vadd.f32 0.0, %v5660
      %v5662 = vpop.f32.mrb[0].mxu0
      %5663 = vmatprep.mubr.bf16.mxu0 0
      %5664 = vmatmul.mubr.bf16.gmra.mrb[0].mxu0 %v5544
      %v5665 = vpop.f32.mrb[0].mxu0
      %v5666 = vadd.f32 0.0, %v5665
      %v5667 = vpop.f32.mrb[0].mxu0
      %v5668 = vpop.f32.mrb[0].mxu0
      %v5669 = vadd.f32 0.0, %v5668
      %v5670 = vpop.f32.mrb[0].mxu0
      %5671 = vmatprep.mubr.bf16.mxu0 0
      %5672 = vmatmul.mubr.bf16.gmra.mrb[0].mxu0 %v5545
      %v5673 = vpop.f32.mrb[0].mxu0
      %v5674 = vadd.f32 0.0, %v5673
      %v5675 = vpop.f32.mrb[0].mxu0
      %v5676 = vpop.f32.mrb[0].mxu0
      %v5677 = vadd.f32 0.0, %v5676
      %v5678 = vpop.f32.mrb[0].mxu0
      %5679 = vmatprep.mubr.bf16.mxu0 0
      %5680 = vmatmul.mubr.bf16.gmra.mrb[0].mxu0 %v5546
      %v5681 = vpop.f32.mrb[0].mxu0
      %v5682 = vadd.f32 0.0, %v5681
      %v5683 = vpop.f32.mrb[0].mxu0
      %v5684 = vpop.f32.mrb[0].mxu0
      %v5685 = vadd.f32 0.0, %v5684
      %v5686 = vpop.f32.mrb[0].mxu0
      %5687 = vmatprep.mubr.bf16.mxu0 0
      %5688 = vmatmul.mubr.bf16.gmra.mrb[0].mxu0 %v5547
      %v5689 = vpop.f32.mrb[0].mxu0
      %v5690 = vadd.f32 0.0, %v5689
      %v5691 = vpop.f32.mrb[0].mxu0
      %v5692 = vpop.f32.mrb[0].mxu0
      %v5693 = vadd.f32 0.0, %v5692
      %v5694 = vpop.f32.mrb[0].mxu0
      %5695 = vmatprep.mubr.bf16.mxu0 0
      %5696 = vmatmul.mubr.bf16.gmra.mrb[0].mxu0 %v5548
      %v5697 = vpop.f32.mrb[0].mxu0
      %v5698 = vadd.f32 0.0, %v5697
      %v5699 = vpop.f32.mrb[0].mxu0
      %v5700 = vpop.f32.mrb[0].mxu0
      %v5701 = vadd.f32 0.0, %v5700
      %v5702 = vpop.f32.mrb[0].mxu0
      %5703 = vmatprep.mubr.bf16.mxu0 0
      %5704 = vmatmul.mubr.bf16.gmra.mrb[0].mxu0 %v5549
      %v5705 = vpop.f32.mrb[0].mxu0
      %v5706 = vadd.f32 0.0, %v5705
      %v5707 = vpop.f32.mrb[0].mxu0
      %v5708 = vpop.f32.mrb[0].mxu0
      %v5709 = vadd.f32 0.0, %v5708
      %v5710 = vpop.f32.mrb[0].mxu0
      %5711 = vmatprep.mubr.bf16.mxu0 0
      %5712 = vmatmul.mubr.bf16.gmra.mrb[0].mxu0 %v5550
      %v5713 = vpop.f32.mrb[0].mxu0
      %v5714 = vadd.f32 0.0, %v5713
      %v5715 = vpop.f32.mrb[0].mxu0
      %v5716 = vpop.f32.mrb[0].mxu0
      %v5717 = vadd.f32 0.0, %v5716
      %v5718 = vpop.f32.mrb[0].mxu0
      %5719 = vmatprep.mubr.bf16.mxu0 0
      %5720 = vmatmul.mubr.bf16.gmra.mrb[0].mxu0 %v5551
      %v5721 = vpop.f32.mrb[0].mxu0
      %v5722 = vadd.f32 0.0, %v5721
      %v5723 = vpop.f32.mrb[0].mxu0
      %v5724 = vpop.f32.mrb[0].mxu0
      %v5725 = vadd.f32 0.0, %v5724
      %v5726 = vpop.f32.mrb[0].mxu0
      %5727 = vmatprep.mubr.bf16.mxu0 0
      %5728 = vmatmul.mubr.bf16.gmra.mrb[0].mxu0 %v5552
      %v5729 = vpop.f32.mrb[0].mxu0
      %v5730 = vadd.f32 0.0, %v5729
      %v5731 = vpop.f32.mrb[0].mxu0
      %v5732 = vpop.f32.mrb[0].mxu0
      %v5733 = vadd.f32 0.0, %v5732
      %v5734 = vpop.f32.mrb[0].mxu0
      %5735 = vmatprep.mubr.bf16.mxu0 0
      %5736 = vmatmul.mubr.bf16.gmra.mrb[0].mxu0 %v5553
      %v5737 = vpop.f32.mrb[0].mxu0
      %v5738 = vadd.f32 0.0, %v5737
      %v5739 = vpop.f32.mrb[0].mxu0
      %v5740 = vpop.f32.mrb[0].mxu0
      %v5741 = vadd.f32 0.0, %v5740
      %v5742 = vpop.f32.mrb[0].mxu0
      %5743 = vmatprep.mubr.bf16.mxu0 0
      %5744 = vmatmul.mubr.bf16.gmra.mrb[0].mxu0 %v5554
      %v5745 = vpop.f32.mrb[0].mxu0
      %v5746 = vadd.f32 0.0, %v5745
      %v5747 = vpop.f32.mrb[0].mxu0
      %v5748 = vpop.f32.mrb[0].mxu0
      %v5749 = vadd.f32 0.0, %v5748
      %v5750 = vpop.f32.mrb[0].mxu0
      %5751 = vmatprep.mubr.bf16.mxu0 0
      %5752 = vmatmul.mubr.bf16.gmra.mrb[0].mxu0 %v5555
      %v5753 = vpop.f32.mrb[0].mxu0
      %v5754 = vadd.f32 0.0, %v5753
      %v5755 = vpop.f32.mrb[0].mxu0
      %v5756 = vpop.f32.mrb[0].mxu0
      %v5757 = vadd.f32 0.0, %v5756
      %v5758 = vpop.f32.mrb[0].mxu0
      %5759 = vmatprep.mubr.bf16.mxu0 0
      %5760 = vmatmul.mubr.bf16.gmra.mrb[0].mxu0 %v5556
      %v5761 = vpop.f32.mrb[0].mxu0
      %v5762 = vadd.f32 0.0, %v5761
      %v5763 = vpop.f32.mrb[0].mxu0
      %v5764 = vpop.f32.mrb[0].mxu0
      %v5765 = vadd.f32 0.0, %v5764
      %v5766 = vpop.f32.mrb[0].mxu0
      %5767 = vmatprep.mubr.bf16.mxu0 0
      %5768 = vmatmul.mubr.bf16.gmra.mrb[0].mxu0 %v5557
      %v5769 = vpop.f32.mrb[0].mxu0
      %v5770 = vadd.f32 0.0, %v5769
      %v5771 = vpop.f32.mrb[0].mxu0
      %v5772 = vpop.f32.mrb[0].mxu0
      %v5773 = vadd.f32 0.0, %v5772
      %v5774 = vpop.f32.mrb[0].mxu0
      %5775 = vmatprep.mubr.bf16.mxu0 0
      %5776 = vmatmul.mubr.bf16.gmra.mrb[0].mxu0 %v5558
      %v5777 = vpop.f32.mrb[0].mxu0
      %v5778 = vadd.f32 0.0, %v5777
      %v5779 = vpop.f32.mrb[0].mxu0
      %v5780 = vpop.f32.mrb[0].mxu0
      %v5781 = vadd.f32 0.0, %v5780
      %v5782 = vpop.f32.mrb[0].mxu0
      %5783 = vdwg.mxu0
      %v5784 = vadd.f32 %v5462, %v5658
      %v5785 = vadd.f32 %v5463, %v5661
      %v5786 = vadd.f32 %v5464, %v5666
      %v5787 = vadd.f32 %v5465, %v5669
      %v5788 = vadd.f32 %v5466, %v5674
      %v5789 = vadd.f32 %v5467, %v5677
      %v5790 = vadd.f32 %v5468, %v5682
      %v5791 = vadd.f32 %v5469, %v5685
      %v5792 = vadd.f32 %v5470, %v5690
      %v5793 = vadd.f32 %v5471, %v5693
      %v5794 = vadd.f32 %v5472, %v5698
      %v5795 = vadd.f32 %v5473, %v5701
      %v5796 = vadd.f32 %v5474, %v5706
      %v5797 = vadd.f32 %v5475, %v5709
      %v5798 = vadd.f32 %v5476, %v5714
      %v5799 = vadd.f32 %v5477, %v5717
      %v5800 = vadd.f32 %v5478, %v5722
      %v5801 = vadd.f32 %v5479, %v5725
      %v5802 = vadd.f32 %v5480, %v5730
      %v5803 = vadd.f32 %v5481, %v5733
      %v5804 = vadd.f32 %v5482, %v5738
      %v5805 = vadd.f32 %v5483, %v5741
      %v5806 = vadd.f32 %v5484, %v5746
      %v5807 = vadd.f32 %v5485, %v5749
      %v5808 = vadd.f32 %v5486, %v5754
      %v5809 = vadd.f32 %v5487, %v5757
      %v5810 = vadd.f32 %v5488, %v5762
      %v5811 = vadd.f32 %v5489, %v5765
      %v5812 = vadd.f32 %v5490, %v5770
      %v5813 = vadd.f32 %v5491, %v5773
      %v5814 = vadd.f32 %v5492, %v5778
      %v5815 = vadd.f32 %v5493, %v5781
      %5816 = vst [vmem:[#allocation2] sm:$0xff] %v5784
      %5817 = vst [vmem:[#allocation2 + $0x8] sm:$0xff] %v5785
      %5818 = vst [vmem:[#allocation2 + $0x10] sm:$0xff] %v5786
      %5819 = vst [vmem:[#allocation2 + $0x18] sm:$0xff] %v5787
      %5820 = vst [vmem:[#allocation2 + $0x20] sm:$0xff] %v5788
      %5821 = vst [vmem:[#allocation2 + $0x28] sm:$0xff] %v5789
      %5822 = vst [vmem:[#allocation2 + $0x30] sm:$0xff] %v5790
      %5823 = vst [vmem:[#allocation2 + $0x38] sm:$0xff] %v5791
      %5824 = vst [vmem:[#allocation2 + $0x40] sm:$0xff] %v5792
      %5825 = vst [vmem:[#allocation2 + $0x48] sm:$0xff] %v5793
      %5826 = vst [vmem:[#allocation2 + $0x50] sm:$0xff] %v5794
      %5827 = vst [vmem:[#allocation2 + $0x58] sm:$0xff] %v5795
      %5828 = vst [vmem:[#allocation2 + $0x60] sm:$0xff] %v5796
      %5829 = vst [vmem:[#allocation2 + $0x68] sm:$0xff] %v5797
      %5830 = vst [vmem:[#allocation2 + $0x70] sm:$0xff] %v5798
      %5831 = vst [vmem:[#allocation2 + $0x78] sm:$0xff] %v5799
      %5832 = vst [vmem:[#allocation2 + $0x80] sm:$0xff] %v5800
      %5833 = vst [vmem:[#allocation2 + $0x88] sm:$0xff] %v5801
      %5834 = vst [vmem:[#allocation2 + $0x90] sm:$0xff] %v5802
      %5835 = vst [vmem:[#allocation2 + $0x98] sm:$0xff] %v5803
      %5836 = vst [vmem:[#allocation2 + $0xa0] sm:$0xff] %v5804
      %5837 = vst [vmem:[#allocation2 + $0xa8] sm:$0xff] %v5805
      %5838 = vst [vmem:[#allocation2 + $0xb0] sm:$0xff] %v5806
      %5839 = vst [vmem:[#allocation2 + $0xb8] sm:$0xff] %v5807
      %5840 = vst [vmem:[#allocation2 + $0xc0] sm:$0xff] %v5808
      %5841 = vst [vmem:[#allocation2 + $0xc8] sm:$0xff] %v5809
      %5842 = vst [vmem:[#allocation2 + $0xd0] sm:$0xff] %v5810
      %5843 = vst [vmem:[#allocation2 + $0xd8] sm:$0xff] %v5811
      %5844 = vst [vmem:[#allocation2 + $0xe0] sm:$0xff] %v5812
      %5845 = vst [vmem:[#allocation2 + $0xe8] sm:$0xff] %v5813
      %5846 = vst [vmem:[#allocation2 + $0xf0] sm:$0xff] %v5814
      %5847 = vst [vmem:[#allocation2 + $0xf8] sm:$0xff] %v5815
      %v5848 = vld [vmem:[#allocation2] sm:$0xff]
      %v5849 = vld [vmem:[#allocation2 + $0x8] sm:$0xff]
      %v5850 = vld [vmem:[#allocation2 + $0x10] sm:$0xff]
      %v5851 = vld [vmem:[#allocation2 + $0x18] sm:$0xff]
      %v5852 = vld [vmem:[#allocation2 + $0x20] sm:$0xff]
      %v5853 = vld [vmem:[#allocation2 + $0x28] sm:$0xff]
      %v5854 = vld [vmem:[#allocation2 + $0x30] sm:$0xff]
      %v5855 = vld [vmem:[#allocation2 + $0x38] sm:$0xff]
      %v5856 = vld [vmem:[#allocation2 + $0x40] sm:$0xff]
      %v5857 = vld [vmem:[#allocation2 + $0x48] sm:$0xff]
      %v5858 = vld [vmem:[#allocation2 + $0x50] sm:$0xff]
      %v5859 = vld [vmem:[#allocation2 + $0x58] sm:$0xff]
      %v5860 = vld [vmem:[#allocation2 + $0x60] sm:$0xff]
      %v5861 = vld [vmem:[#allocation2 + $0x68] sm:$0xff]
      %v5862 = vld [vmem:[#allocation2 + $0x70] sm:$0xff]
      %v5863 = vld [vmem:[#allocation2 + $0x78] sm:$0xff]
      %v5864 = vld [vmem:[#allocation2 + $0x80] sm:$0xff]
      %v5865 = vld [vmem:[#allocation2 + $0x88] sm:$0xff]
      %v5866 = vld [vmem:[#allocation2 + $0x90] sm:$0xff]
      %v5867 = vld [vmem:[#allocation2 + $0x98] sm:$0xff]
      %v5868 = vld [vmem:[#allocation2 + $0xa0] sm:$0xff]
      %v5869 = vld [vmem:[#allocation2 + $0xa8] sm:$0xff]
      %v5870 = vld [vmem:[#allocation2 + $0xb0] sm:$0xff]
      %v5871 = vld [vmem:[#allocation2 + $0xb8] sm:$0xff]
      %v5872 = vld [vmem:[#allocation2 + $0xc0] sm:$0xff]
      %v5873 = vld [vmem:[#allocation2 + $0xc8] sm:$0xff]
      %v5874 = vld [vmem:[#allocation2 + $0xd0] sm:$0xff]
      %v5875 = vld [vmem:[#allocation2 + $0xd8] sm:$0xff]
      %v5876 = vld [vmem:[#allocation2 + $0xe0] sm:$0xff]
      %v5877 = vld [vmem:[#allocation2 + $0xe8] sm:$0xff]
      %v5878 = vld [vmem:[#allocation2 + $0xf0] sm:$0xff]
      %v5879 = vld [vmem:[#allocation2 + $0xf8] sm:$0xff]
      %v5880 = vld [vmem:[%s213] sm:$0x1]
      %v5882 = vlaneseq
      %v5883 = vshrl.u32 %v5882, 7
      %v5884 = vsub.s32 0, %v5883
      %v5885 = vrot.slane %v5880, %v5884
      %v5887 = vadd.f32 %v5848, %v5885
      %v5888 = vadd.f32 %v5849, %v5885
      %v5889 = vadd.f32 %v5850, %v5885
      %v5890 = vadd.f32 %v5851, %v5885
      %v5891 = vadd.f32 %v5852, %v5885
      %v5892 = vadd.f32 %v5853, %v5885
      %v5893 = vadd.f32 %v5854, %v5885
      %v5894 = vadd.f32 %v5855, %v5885
      %v5895 = vadd.f32 %v5856, %v5885
      %v5896 = vadd.f32 %v5857, %v5885
      %v5897 = vadd.f32 %v5858, %v5885
      %v5898 = vadd.f32 %v5859, %v5885
      %v5899 = vadd.f32 %v5860, %v5885
      %v5900 = vadd.f32 %v5861, %v5885
      %v5901 = vadd.f32 %v5862, %v5885
      %v5902 = vadd.f32 %v5863, %v5885
      %v5903 = vadd.f32 %v5864, %v5885
      %v5904 = vadd.f32 %v5865, %v5885
      %v5905 = vadd.f32 %v5866, %v5885
      %v5906 = vadd.f32 %v5867, %v5885
      %v5907 = vadd.f32 %v5868, %v5885
      %v5908 = vadd.f32 %v5869, %v5885
      %v5909 = vadd.f32 %v5870, %v5885
      %v5910 = vadd.f32 %v5871, %v5885
      %v5911 = vadd.f32 %v5872, %v5885
      %v5912 = vadd.f32 %v5873, %v5885
      %v5913 = vadd.f32 %v5874, %v5885
      %v5914 = vadd.f32 %v5875, %v5885
      %v5915 = vadd.f32 %v5876, %v5885
      %v5916 = vadd.f32 %v5877, %v5885
      %v5917 = vadd.f32 %v5878, %v5885
      %v5918 = vadd.f32 %v5879, %v5885
      %v5919 = vmax.f32 %v5887, 0.0
      %v5920 = vmax.f32 %v5888, 0.0
      %v5921 = vmax.f32 %v5889, 0.0
      %v5922 = vmax.f32 %v5890, 0.0
      %v5923 = vmax.f32 %v5891, 0.0
      %v5924 = vmax.f32 %v5892, 0.0
      %v5925 = vmax.f32 %v5893, 0.0
      %v5926 = vmax.f32 %v5894, 0.0
      %v5927 = vmax.f32 %v5895, 0.0
      %v5928 = vmax.f32 %v5896, 0.0
      %v5929 = vmax.f32 %v5897, 0.0
      %v5930 = vmax.f32 %v5898, 0.0
      %v5931 = vmax.f32 %v5899, 0.0
      %v5932 = vmax.f32 %v5900, 0.0
      %v5933 = vmax.f32 %v5901, 0.0
      %v5934 = vmax.f32 %v5902, 0.0
      %v5935 = vmax.f32 %v5903, 0.0
      %v5936 = vmax.f32 %v5904, 0.0
      %v5937 = vmax.f32 %v5905, 0.0
      %v5938 = vmax.f32 %v5906, 0.0
      %v5939 = vmax.f32 %v5907, 0.0
      %v5940 = vmax.f32 %v5908, 0.0
      %v5941 = vmax.f32 %v5909, 0.0
      %v5942 = vmax.f32 %v5910, 0.0
      %v5943 = vmax.f32 %v5911, 0.0
      %v5944 = vmax.f32 %v5912, 0.0
      %v5945 = vmax.f32 %v5913, 0.0
      %v5946 = vmax.f32 %v5914, 0.0
      %v5947 = vmax.f32 %v5915, 0.0
      %v5948 = vmax.f32 %v5916, 0.0
      %v5949 = vmax.f32 %v5917, 0.0
      %v5950 = vmax.f32 %v5918, 0.0
      %v5951 = vpack.c.bf16 %v5920, %v5919
      %v5952 = vpack.c.bf16 %v5922, %v5921
      %v5953 = vpack.c.bf16 %v5924, %v5923
      %v5954 = vpack.c.bf16 %v5926, %v5925
      %v5955 = vpack.c.bf16 %v5928, %v5927
      %v5956 = vpack.c.bf16 %v5930, %v5929
      %v5957 = vpack.c.bf16 %v5932, %v5931
      %v5958 = vpack.c.bf16 %v5934, %v5933
      %v5959 = vpack.c.bf16 %v5936, %v5935
      %v5960 = vpack.c.bf16 %v5938, %v5937
      %v5961 = vpack.c.bf16 %v5940, %v5939
      %v5962 = vpack.c.bf16 %v5942, %v5941
      %v5963 = vpack.c.bf16 %v5944, %v5943
      %v5964 = vpack.c.bf16 %v5946, %v5945
      %v5965 = vpack.c.bf16 %v5948, %v5947
      %v5966 = vpack.c.bf16 %v5950, %v5949
      %v5983 = vunpack.c.l.b16 %v5951
      %v5984 = vunpack.c.h.b16 %v5951
      %v5985 = vunpack.c.l.b16 %v5952
      %v5986 = vunpack.c.h.b16 %v5952
      %v5987 = vunpack.c.l.b16 %v5953
      %v5988 = vunpack.c.h.b16 %v5953
      %v5989 = vunpack.c.l.b16 %v5954
      %v5990 = vunpack.c.h.b16 %v5954
      %v5991 = vunpack.c.l.b16 %v5955
      %v5992 = vunpack.c.h.b16 %v5955
      %v5993 = vunpack.c.l.b16 %v5956
      %v5994 = vunpack.c.h.b16 %v5956
      %v5995 = vunpack.c.l.b16 %v5957
      %v5996 = vunpack.c.h.b16 %v5957
      %v5997 = vunpack.c.l.b16 %v5958
      %v5998 = vunpack.c.h.b16 %v5958
      %v5999 = vunpack.c.l.b16 %v5959
      %v6000 = vunpack.c.h.b16 %v5959
      %v6001 = vunpack.c.l.b16 %v5960
      %v6002 = vunpack.c.h.b16 %v5960
      %v6003 = vunpack.c.l.b16 %v5961
      %v6004 = vunpack.c.h.b16 %v5961
      %v6005 = vunpack.c.l.b16 %v5962
      %v6006 = vunpack.c.h.b16 %v5962
      %v6007 = vunpack.c.l.b16 %v5963
      %v6008 = vunpack.c.h.b16 %v5963
      %v6009 = vunpack.c.l.b16 %v5964
      %v6010 = vunpack.c.h.b16 %v5964
      %v6011 = vunpack.c.l.b16 %v5965
      %v6012 = vunpack.c.h.b16 %v5965
      %v6013 = vunpack.c.l.b16 %v5966
      %v6014 = vunpack.c.h.b16 %v5966
      %v6015 = vpack.c.b16 %v5983, %v5983
      %v6016 = vpack.c.b16 %v5984, %v5984
      %v6017 = vpack.c.b16 %v5985, %v5985
      %v6018 = vpack.c.b16 %v5986, %v5986
      %v6019 = vpack.c.b16 %v5987, %v5987
      %v6020 = vpack.c.b16 %v5988, %v5988
      %v6021 = vpack.c.b16 %v5989, %v5989
      %v6022 = vpack.c.b16 %v5990, %v5990
      %v6023 = vpack.c.b16 %v5991, %v5991
      %v6024 = vpack.c.b16 %v5992, %v5992
      %v6025 = vpack.c.b16 %v5993, %v5993
      %v6026 = vpack.c.b16 %v5994, %v5994
      %v6027 = vpack.c.b16 %v5995, %v5995
      %v6028 = vpack.c.b16 %v5996, %v5996
      %v6029 = vpack.c.b16 %v5997, %v5997
      %v6030 = vpack.c.b16 %v5998, %v5998
      %v6031 = vpack.c.b16 %v5999, %v5999
      %v6032 = vpack.c.b16 %v6000, %v6000
      %v6033 = vpack.c.b16 %v6001, %v6001
      %v6034 = vpack.c.b16 %v6002, %v6002
      %v6035 = vpack.c.b16 %v6003, %v6003
      %v6036 = vpack.c.b16 %v6004, %v6004
      %v6037 = vpack.c.b16 %v6005, %v6005
      %v6038 = vpack.c.b16 %v6006, %v6006
      %v6039 = vpack.c.b16 %v6007, %v6007
      %v6040 = vpack.c.b16 %v6008, %v6008
      %v6041 = vpack.c.b16 %v6009, %v6009
      %v6042 = vpack.c.b16 %v6010, %v6010
      %v6043 = vpack.c.b16 %v6011, %v6011
      %v6044 = vpack.c.b16 %v6012, %v6012
      %v6045 = vpack.c.b16 %v6013, %v6013
      %v6046 = vpack.c.b16 %v6014, %v6014
      %6079 = vst [vmem:[%s221] sm:$0xf] %v6015
      %6080 = vst [vmem:[%s221 + $0x4] sm:$0xf] %v6016
      %6081 = vst [vmem:[%s221 + $0x8] sm:$0xf] %v6017
      %6082 = vst [vmem:[%s221 + $0xc] sm:$0xf] %v6018
      %6083 = vst [vmem:[%s221 + $0x10] sm:$0xf] %v6019
      %6084 = vst [vmem:[%s221 + $0x14] sm:$0xf] %v6020
      %6085 = vst [vmem:[%s221 + $0x18] sm:$0xf] %v6021
      %6086 = vst [vmem:[%s221 + $0x1c] sm:$0xf] %v6022
      %6087 = vst [vmem:[%s221 + $0x20] sm:$0xf] %v6023
      %6088 = vst [vmem:[%s221 + $0x24] sm:$0xf] %v6024
      %6089 = vst [vmem:[%s221 + $0x28] sm:$0xf] %v6025
      %6090 = vst [vmem:[%s221 + $0x2c] sm:$0xf] %v6026
      %6091 = vst [vmem:[%s221 + $0x30] sm:$0xf] %v6027
      %6092 = vst [vmem:[%s221 + $0x34] sm:$0xf] %v6028
      %6093 = vst [vmem:[%s221 + $0x38] sm:$0xf] %v6029
      %6094 = vst [vmem:[%s221 + $0x3c] sm:$0xf] %v6030
      %6095 = vst [vmem:[%s221 + $0x40] sm:$0xf] %v6031
      %6096 = vst [vmem:[%s221 + $0x44] sm:$0xf] %v6032
      %6097 = vst [vmem:[%s221 + $0x48] sm:$0xf] %v6033
      %6098 = vst [vmem:[%s221 + $0x4c] sm:$0xf] %v6034
      %6099 = vst [vmem:[%s221 + $0x50] sm:$0xf] %v6035
      %6100 = vst [vmem:[%s221 + $0x54] sm:$0xf] %v6036
      %6101 = vst [vmem:[%s221 + $0x58] sm:$0xf] %v6037
      %6102 = vst [vmem:[%s221 + $0x5c] sm:$0xf] %v6038
      %6103 = vst [vmem:[%s221 + $0x60] sm:$0xf] %v6039
      %6104 = vst [vmem:[%s221 + $0x64] sm:$0xf] %v6040
      %6105 = vst [vmem:[%s221 + $0x68] sm:$0xf] %v6041
      %6106 = vst [vmem:[%s221 + $0x6c] sm:$0xf] %v6042
      %6107 = vst [vmem:[%s221 + $0x70] sm:$0xf] %v6043
      %6108 = vst [vmem:[%s221 + $0x74] sm:$0xf] %v6044
      %6109 = vst [vmem:[%s221 + $0x78] sm:$0xf] %v6045
      %6110 = vst [vmem:[%s221 + $0x7c] sm:$0xf] %v6046
      %p6111 = scmp.lt.s32.totalorder %s18, 1
      %s6112 = scalar_select %p6111, %s18, 1
      %p6113 = scmp.lt.s32.totalorder %s19, 0
      %s6114 = scalar_select %p6113, %s19, 0
      %s6115 = smul.addr %s6112, 32
      %s6116 = sadd.s32 %s6114, %s6115
      %s6117 = smul.addr %s6116, 4
      %s6118 = scalar_lea.vmem %s3, %s6117
      // Predicated region
      $region33: #{se_bottleneck_forward.6} parent=31 // pred_check
        %p6119 = pneg %p124
      $region34: #{se_bottleneck_forward.6} parent=31 // pred_check_branch
        %6121 = sbr.rel (%p6119) target = $region36
      $region35: #{se_bottleneck_forward.6} parent=31 // pred_region
        _
      $region36: #{se_bottleneck_forward.6} parent=31 // pred_fallthru
        _
    $region32: #{se_bottleneck_forward.6} parent=5 // pred_fallthru
      _
    %p6122 = scmp.le.s32.totalorder 2, %s9
    // Predicated region
    $region37: #{se_bottleneck_forward.6} parent=5 // pred_check
      %p6123 = pneg %p6122
    $region38: #{se_bottleneck_forward.6} parent=5 // pred_check_branch
      %6125 = sbr.rel (%p6123) target = $region40
    $region39: #{se_bottleneck_forward.6} parent=5 // pred_region
      %s6126 = ssub.s32 %s9, 2
      // Predicated region
      $region41: #{se_bottleneck_forward.6} parent=39 // pred_check
        %p6127 = pneg %p130
      $region42: #{se_bottleneck_forward.6} parent=39 // pred_check_branch
        %6129 = sbr.rel (%p6127) target = $region44
      $region43: #{se_bottleneck_forward.6} parent=39 // pred_region
        %p6130 = scmp.lt.s32.totalorder %s20, 1
        %s6131 = scalar_select %p6130, %s20, 1
        %p6132 = scmp.lt.s32.totalorder %s21, 0
        %s6133 = scalar_select %p6132, %s21, 0
        %s6134 = smul.addr %s6131, 32
        %s6135 = sadd.s32 %s6133, %s6134
        %s6136 = smul.addr %s6135, 4
        %s6137 = scalar_lea.vmem %s3, %s6136
      $region44: #{se_bottleneck_forward.6} parent=39 // pred_fallthru
        _
    $region40: #{se_bottleneck_forward.6} parent=5 // pred_fallthru
      _
  $region6: #{se_bottleneck_forward.6} parent=0 // loop_footer
    %s13 = sadd.s32 1, %s9
  $region7: #{se_bottleneck_forward.6} parent=0 // loop_footer_branch
    %8 = sbr.rel target = $region3
  $region8: #{se_bottleneck_forward.6} parent=0 // loop_exit
    _

</llo_original>
